<compile_context>
chip_gen: v5e
topology: v5e:2x2
jax: 0.10.0
libtpu: 0.0.40
codegen_flags: <defaults>
</compile_context>

<pallas_src>
import functools

import jax
import jax.numpy as jnp
from jax.experimental import pallas as pl
from jax.experimental.pallas import tpu as pltpu

# Encoder: D -> 512 -> 256 -> 128 -> 64 -> 32   (LeakyReLU after each)
# Decoder: 32 -> 64 -> 128 -> 256 -> 512 -> D   (LeakyReLU after each except last)
NEG_SLOPE = 0.01  # PyTorch nn.LeakyReLU default negative_slope


def _leaky_relu(x):
    return jnp.where(x > 0, x, NEG_SLOPE * x)


def _round_up(n, m):
    return (n + m - 1) // m * m


def autoencoder_kernel(x_ref, *refs):
    """Fused forward: 10x (bf16 matmul -> f32 acc -> f32 bias -> bf16 LeakyReLU).

    refs layout: w0..w9 (bf16, [in_pad, out_pad]), b0..b9 (f32, [1, out_pad]),
                 o_ref (output tile, [batch_tile, D_out_pad]).
    """
    n_layers = (len(refs) - 1) // 2
    w_refs = refs[:n_layers]
    b_refs = refs[n_layers:2 * n_layers]
    o_ref = refs[2 * n_layers]

    h = x_ref[...]  # bf16 tile straight from DMA — no f32 upcast
    for li in range(n_layers):
        # bf16 MXU inputs, f32 accumulation.
        acc = jnp.dot(h, w_refs[li][...], preferred_element_type=jnp.float32)
        # Bias add in f32 on the fresh accumulator.
        acc = acc + b_refs[li][...]
        if li != n_layers - 1:
            # Downcast once; LeakyReLU runs in bf16 and the next matmul LHS is
            # already bf16 (halves vld/vst bytes for the 256x512 intermediates).
            h = _leaky_relu(acc.astype(jnp.bfloat16))
        else:
            h = acc  # final decoder Linear has no activation
    o_ref[...] = h.astype(o_ref.dtype)


def init_params(key, in_dim):
    """Deterministic PyTorch-style init: U(-1/sqrt(fan_in), 1/sqrt(fan_in))."""
    dims = [in_dim, 512, 256, 128, 64, 32, 64, 128, 256, 512, in_dim]
    weights, biases = [], []
    for i in range(len(dims) - 1):
        fan_in, fan_out = dims[i], dims[i + 1]
        key, kw, kb = jax.random.split(key, 3)
        bound = 1.0 / jnp.sqrt(jnp.float32(fan_in))
        # stored already transposed: [in, out]
        w = jax.random.uniform(kw, (fan_in, fan_out), jnp.float32, -bound, bound)
        b = jax.random.uniform(kb, (1, fan_out), jnp.float32, -bound, bound)
        weights.append(w)
        biases.append(b)
    return weights, biases


def prepare_params(weights, biases):
    """One-time (outside the jitted forward) padding + bf16 weight cast.

    Every feature dim is zero-padded up to a multiple of 128 (lane-dense loads,
    unmasked stores). Zero weight rows/cols and zero bias entries are exact
    no-ops through Linear + LeakyReLU (LeakyReLU(0) == 0), so results on the
    original feature dims are unchanged. Weights are cast to bf16 once here
    (half the HBM->VMEM DMA bytes, bf16 MXU rate); biases stay f32.
    """
    n_layers = len(weights)
    dims = [w.shape[0] for w in weights] + [weights[-1].shape[1]]
    pdims = [_round_up(d, 128) for d in dims]

    w_p, b_p = [], []
    for i in range(n_layers):
        w, b = weights[i], biases[i]
        wp = jnp.zeros((pdims[i], pdims[i + 1]), jnp.float32)
        wp = wp.at[:w.shape[0], :w.shape[1]].set(w)
        bp = jnp.zeros((1, pdims[i + 1]), jnp.float32)
        bp = bp.at[:, :b.shape[1]].set(b)
        w_p.append(wp.astype(jnp.bfloat16))
        b_p.append(bp)
    return w_p, b_p


@functools.partial(jax.jit, static_argnames=("batch_tile",))
def autoencoder_forward(x, w_p, b_p, batch_tile=256):
    """x: [B, D] f32; w_p/b_p: pre-padded/pre-cast params from prepare_params()."""
    B, D = x.shape
    d_in = w_p[0].shape[0]
    d_out = w_p[-1].shape[1]

    # Pad batch to a multiple of batch_tile so M fills the MXU; padded rows are
    # cropped after the call. For single-TC v5e/v6e with large B, pass a larger
    # batch_tile (512-1024) to amortize the ~0.35us/step grid overhead; keep at
    # least 2 grid steps on v7x so both TensorCores get work.
    B_pad = _round_up(B, batch_tile)

    # Ship x as bf16 (its f32 bits are never used by the kernel). Fuse pad +
    # cast into one op; skip the pad copy entirely when shapes are aligned.
    if B_pad == B and d_in == D:
        x_p = x.astype(jnp.bfloat16)
    else:
        x_p = jnp.zeros((B_pad, d_in), jnp.bfloat16).at[:B, :D].set(
            x.astype(jnp.bfloat16))

    grid = (B_pad // batch_tile,)

    # x / out: tiled over the (parallel) batch axis.
    x_spec = pl.BlockSpec((batch_tile, d_in), lambda i: (i, 0))
    o_spec = pl.BlockSpec((batch_tile, d_out), lambda i: (i, 0))
    # Weights / biases: full array, constant block index -> DMA'd once and
    # reused across all grid steps; single-buffered to halve their VMEM
    # footprint (no pipelining needed for grid-invariant operands).
    w_specs = [pl.BlockSpec(w.shape, lambda i: (0, 0),
                            pipeline_mode=pl.Buffered(1)) for w in w_p]
    b_specs = [pl.BlockSpec(b.shape, lambda i: (0, 0),
                            pipeline_mode=pl.Buffered(1)) for b in b_p]

    # Explicit VMEM budget (all shapes static at trace time):
    #   double-buffered bf16 x tiles + double-buffered f32 out tiles
    #   + single-buffered bf16 weights / f32 biases
    #   + f32 accumulator working set + compiler scratch headroom.
    vmem_bytes = (
        2 * batch_tile * d_in * 2
        + 2 * batch_tile * d_out * 4
        + sum(w.size * 2 for w in w_p)
        + sum(b.size * 4 for b in b_p)
        + 4 * batch_tile * 512 * 4
        + (4 << 20))
    # Floor at the 32 MiB scoped default, cap at 48 MiB so the all-resident
    # design stays inside v7x's 64 MiB physical VMEM. For very large in_dim,
    # shrink batch_tile first rather than raising this cap.
    vmem_limit = int(min(max(_round_up(vmem_bytes, 1 << 20), 32 << 20), 48 << 20))

    out_p = pl.pallas_call(
        autoencoder_kernel,
        out_shape=jax.ShapeDtypeStruct((B_pad, d_out), x.dtype),
        grid_spec=pltpu.PrefetchScalarGridSpec(
            num_scalar_prefetch=0,
            grid=grid,
            in_specs=[x_spec] + w_specs + b_specs,
            out_specs=o_spec,
        ),
        compiler_params=pltpu.CompilerParams(
            # Independent batch tiles -> megacore sharding on v7x.
            dimension_semantics=("parallel",),
            vmem_limit_bytes=vmem_limit,
        ),
    )(x_p, *w_p, *b_p)

    # Skip the crop copy when no padding was applied.
    if B_pad == B and d_out == D:
        return out_p
    return out_p[:B, :D]


def autoencoder_ref(x, weights, biases):
    """Pure-JAX reference mirroring the kernel's math exactly:
    bf16 matmul inputs, f32 accumulation, f32 bias add, bf16 LeakyReLU.
    (Zero padding in the kernel is numerically exact, so unpadded params here.)
    """
    h = x.astype(jnp.bfloat16)
    n = len(weights)
    for i, (w, b) in enumerate(zip(weights, biases)):
        acc = jnp.dot(h, w.astype(jnp.bfloat16),
                      preferred_element_type=jnp.float32) + b
        if i != n - 1:
            h = _leaky_relu(acc.astype(jnp.bfloat16))
        else:
            h = acc
    return h


if __name__ == "__main__":
    key = jax.random.PRNGKey(0)
    in_dim = 64   # stands in for len(states[0])
    batch = 512   # padded/tiled into batch_tile=256 rows -> grid of 2 parallel steps

    key, kx = jax.random.split(key)
    x = jax.random.normal(kx, (batch, in_dim), jnp.float32)
    weights, biases = init_params(key, in_dim)

    # One-time param prep (padding + bf16 cast) OUTSIDE the jitted forward.
    w_p, b_p = prepare_params(weights, biases)

    out = autoencoder_forward(x, w_p, b_p, batch_tile=256)
    out = jax.block_until_ready(out)
    assert out.shape == (batch, in_dim)

    # Check against a reference using the same bf16/f32 mixed-precision math.
    # NOTE: bf16 matmul inputs/activations deviate from a pure-f32 PyTorch
    # forward by ~1e-2 relative error by design (MXU bf16 rate, half the DMA).
    ref = autoencoder_ref(x, weights, biases)
    assert jnp.allclose(out, ref, atol=1e-2, rtol=1e-2), "mismatch vs reference"

    print("KERNEL_OK")
</pallas_src>

<mosaic_0001>
module attributes {stable_mosaic.version = 11 : i64} {
  func.func @autoencoder_kernel(%arg0: i32, %arg1: memref<256x128xbf16, #tpu.memory_space<vmem>>, %arg2: memref<128x512xbf16, #tpu.memory_space<vmem>>, %arg3: memref<512x256xbf16, #tpu.memory_space<vmem>>, %arg4: memref<256x128xbf16, #tpu.memory_space<vmem>>, %arg5: memref<128x128xbf16, #tpu.memory_space<vmem>>, %arg6: memref<128x128xbf16, #tpu.memory_space<vmem>>, %arg7: memref<128x128xbf16, #tpu.memory_space<vmem>>, %arg8: memref<128x128xbf16, #tpu.memory_space<vmem>>, %arg9: memref<128x256xbf16, #tpu.memory_space<vmem>>, %arg10: memref<256x512xbf16, #tpu.memory_space<vmem>>, %arg11: memref<512x128xbf16, #tpu.memory_space<vmem>>, %arg12: memref<1x512xf32, #tpu.memory_space<vmem>>, %arg13: memref<1x256xf32, #tpu.memory_space<vmem>>, %arg14: memref<1x128xf32, #tpu.memory_space<vmem>>, %arg15: memref<1x128xf32, #tpu.memory_space<vmem>>, %arg16: memref<1x128xf32, #tpu.memory_space<vmem>>, %arg17: memref<1x128xf32, #tpu.memory_space<vmem>>, %arg18: memref<1x128xf32, #tpu.memory_space<vmem>>, %arg19: memref<1x256xf32, #tpu.memory_space<vmem>>, %arg20: memref<1x512xf32, #tpu.memory_space<vmem>>, %arg21: memref<1x128xf32, #tpu.memory_space<vmem>>, %arg22: memref<256x128xf32, #tpu.memory_space<vmem>>) attributes {dimension_semantics = [#tpu.dimension_semantics<parallel>], iteration_bounds = array<i64: 2>, scalar_prefetch = 0 : i64, scratch_operands = 0 : i64, tpu.core_type = #tpu.core_type<tc>, window_params = [{transform_indices = @transform_0, window_bounds = array<i64: 256, 128>}, {pipeline_mode = #tpu.pipeline_mode<synchronous>, transform_indices = @transform_1, window_bounds = array<i64: 128, 512>}, {pipeline_mode = #tpu.pipeline_mode<synchronous>, transform_indices = @transform_2, window_bounds = array<i64: 512, 256>}, {pipeline_mode = #tpu.pipeline_mode<synchronous>, transform_indices = @transform_3, window_bounds = array<i64: 256, 128>}, {pipeline_mode = #tpu.pipeline_mode<synchronous>, transform_indices = @transform_4, window_bounds = array<i64: 128, 128>}, {pipeline_mode = #tpu.pipeline_mode<synchronous>, transform_indices = @transform_5, window_bounds = array<i64: 128, 128>}, {pipeline_mode = #tpu.pipeline_mode<synchronous>, transform_indices = @transform_6, window_bounds = array<i64: 128, 128>}, {pipeline_mode = #tpu.pipeline_mode<synchronous>, transform_indices = @transform_7, window_bounds = array<i64: 128, 128>}, {pipeline_mode = #tpu.pipeline_mode<synchronous>, transform_indices = @transform_8, window_bounds = array<i64: 128, 256>}, {pipeline_mode = #tpu.pipeline_mode<synchronous>, transform_indices = @transform_9, window_bounds = array<i64: 256, 512>}, {pipeline_mode = #tpu.pipeline_mode<synchronous>, transform_indices = @transform_10, window_bounds = array<i64: 512, 128>}, {pipeline_mode = #tpu.pipeline_mode<synchronous>, transform_indices = @transform_11, window_bounds = array<i64: 1, 512>}, {pipeline_mode = #tpu.pipeline_mode<synchronous>, transform_indices = @transform_12, window_bounds = array<i64: 1, 256>}, {pipeline_mode = #tpu.pipeline_mode<synchronous>, transform_indices = @transform_13, window_bounds = array<i64: 1, 128>}, {pipeline_mode = #tpu.pipeline_mode<synchronous>, transform_indices = @transform_14, window_bounds = array<i64: 1, 128>}, {pipeline_mode = #tpu.pipeline_mode<synchronous>, transform_indices = @transform_15, window_bounds = array<i64: 1, 128>}, {pipeline_mode = #tpu.pipeline_mode<synchronous>, transform_indices = @transform_16, window_bounds = array<i64: 1, 128>}, {pipeline_mode = #tpu.pipeline_mode<synchronous>, transform_indices = @transform_17, window_bounds = array<i64: 1, 128>}, {pipeline_mode = #tpu.pipeline_mode<synchronous>, transform_indices = @transform_18, window_bounds = array<i64: 1, 256>}, {pipeline_mode = #tpu.pipeline_mode<synchronous>, transform_indices = @transform_19, window_bounds = array<i64: 1, 512>}, {pipeline_mode = #tpu.pipeline_mode<synchronous>, transform_indices = @transform_20, window_bounds = array<i64: 1, 128>}, {transform_indices = @transform_21, window_bounds = array<i64: 256, 128>}]} {
    %c0 = arith.constant 0 : index
    %c0_0 = arith.constant 0 : index
    %0 = vector.load %arg1[%c0, %c0_0] : memref<256x128xbf16, #tpu.memory_space<vmem>>, vector<256x128xbf16>
    %c0_1 = arith.constant 0 : index
    %c0_2 = arith.constant 0 : index
    %1 = vector.load %arg2[%c0_1, %c0_2] : memref<128x512xbf16, #tpu.memory_space<vmem>>, vector<128x512xbf16>
    %cst = arith.constant dense<0.000000e+00> : vector<256x512xf32>
    %2 = tpu.matmul %0, %1, %cst {dimension_numbers = #tpu.dot_dimension_numbers<[1], [0], [0], [1], [0, 0, 1, 1], [], []>} : vector<256x128xbf16>, vector<128x512xbf16>, vector<256x512xf32> -> vector<256x512xf32>
    %c0_3 = arith.constant 0 : index
    %c0_4 = arith.constant 0 : index
    %3 = vector.load %arg12[%c0_3, %c0_4] : memref<1x512xf32, #tpu.memory_space<vmem>>, vector<1x512xf32>
    %4 = vector.broadcast %3 : vector<1x512xf32> to vector<256x512xf32>
    %5 = arith.addf %2, %4 : vector<256x512xf32>
    %6 = arith.truncf %5 : vector<256x512xf32> to vector<256x512xbf16>
    %cst_5 = arith.constant 0.000000e+00 : bf16
    %7 = vector.broadcast %cst_5 : bf16 to vector<256x512xbf16>
    %8 = arith.cmpf ogt, %6, %7 : vector<256x512xbf16>
    %cst_6 = arith.constant 1.000980e-02 : bf16
    %9 = vector.broadcast %cst_6 : bf16 to vector<256x512xbf16>
    %10 = arith.mulf %9, %6 : vector<256x512xbf16>
    %11 = arith.select %8, %6, %10 : vector<256x512xi1>, vector<256x512xbf16>
    %c0_7 = arith.constant 0 : index
    %c0_8 = arith.constant 0 : index
    %12 = vector.load %arg3[%c0_7, %c0_8] : memref<512x256xbf16, #tpu.memory_space<vmem>>, vector<512x256xbf16>
    %cst_9 = arith.constant dense<0.000000e+00> : vector<256x256xf32>
    %13 = tpu.matmul %11, %12, %cst_9 {dimension_numbers = #tpu.dot_dimension_numbers<[1], [0], [0], [1], [0, 0, 1, 1], [], []>} : vector<256x512xbf16>, vector<512x256xbf16>, vector<256x256xf32> -> vector<256x256xf32>
    %c0_10 = arith.constant 0 : index
    %c0_11 = arith.constant 0 : index
    %14 = vector.load %arg13[%c0_10, %c0_11] : memref<1x256xf32, #tpu.memory_space<vmem>>, vector<1x256xf32>
    %15 = vector.broadcast %14 : vector<1x256xf32> to vector<256x256xf32>
    %16 = arith.addf %13, %15 : vector<256x256xf32>
    %17 = arith.truncf %16 : vector<256x256xf32> to vector<256x256xbf16>
    %cst_12 = arith.constant 0.000000e+00 : bf16
    %18 = vector.broadcast %cst_12 : bf16 to vector<256x256xbf16>
    %19 = arith.cmpf ogt, %17, %18 : vector<256x256xbf16>
    %cst_13 = arith.constant 1.000980e-02 : bf16
    %20 = vector.broadcast %cst_13 : bf16 to vector<256x256xbf16>
    %21 = arith.mulf %20, %17 : vector<256x256xbf16>
    %22 = arith.select %19, %17, %21 : vector<256x256xi1>, vector<256x256xbf16>
    %c0_14 = arith.constant 0 : index
    %c0_15 = arith.constant 0 : index
    %23 = vector.load %arg4[%c0_14, %c0_15] : memref<256x128xbf16, #tpu.memory_space<vmem>>, vector<256x128xbf16>
    %cst_16 = arith.constant dense<0.000000e+00> : vector<256x128xf32>
    %24 = tpu.matmul %22, %23, %cst_16 {dimension_numbers = #tpu.dot_dimension_numbers<[1], [0], [0], [1], [0, 0, 1, 1], [], []>} : vector<256x256xbf16>, vector<256x128xbf16>, vector<256x128xf32> -> vector<256x128xf32>
    %c0_17 = arith.constant 0 : index
    %c0_18 = arith.constant 0 : index
    %25 = vector.load %arg14[%c0_17, %c0_18] : memref<1x128xf32, #tpu.memory_space<vmem>>, vector<1x128xf32>
    %26 = vector.broadcast %25 : vector<1x128xf32> to vector<256x128xf32>
    %27 = arith.addf %24, %26 : vector<256x128xf32>
    %28 = arith.truncf %27 : vector<256x128xf32> to vector<256x128xbf16>
    %cst_19 = arith.constant 0.000000e+00 : bf16
    %29 = vector.broadcast %cst_19 : bf16 to vector<256x128xbf16>
    %30 = arith.cmpf ogt, %28, %29 : vector<256x128xbf16>
    %cst_20 = arith.constant 1.000980e-02 : bf16
    %31 = vector.broadcast %cst_20 : bf16 to vector<256x128xbf16>
    %32 = arith.mulf %31, %28 : vector<256x128xbf16>
    %33 = arith.select %30, %28, %32 : vector<256x128xi1>, vector<256x128xbf16>
    %c0_21 = arith.constant 0 : index
    %c0_22 = arith.constant 0 : index
    %34 = vector.load %arg5[%c0_21, %c0_22] : memref<128x128xbf16, #tpu.memory_space<vmem>>, vector<128x128xbf16>
    %cst_23 = arith.constant dense<0.000000e+00> : vector<256x128xf32>
    %35 = tpu.matmul %33, %34, %cst_23 {dimension_numbers = #tpu.dot_dimension_numbers<[1], [0], [0], [1], [0, 0, 1, 1], [], []>} : vector<256x128xbf16>, vector<128x128xbf16>, vector<256x128xf32> -> vector<256x128xf32>
    %c0_24 = arith.constant 0 : index
    %c0_25 = arith.constant 0 : index
    %36 = vector.load %arg15[%c0_24, %c0_25] : memref<1x128xf32, #tpu.memory_space<vmem>>, vector<1x128xf32>
    %37 = vector.broadcast %36 : vector<1x128xf32> to vector<256x128xf32>
    %38 = arith.addf %35, %37 : vector<256x128xf32>
    %39 = arith.truncf %38 : vector<256x128xf32> to vector<256x128xbf16>
    %cst_26 = arith.constant 0.000000e+00 : bf16
    %40 = vector.broadcast %cst_26 : bf16 to vector<256x128xbf16>
    %41 = arith.cmpf ogt, %39, %40 : vector<256x128xbf16>
    %cst_27 = arith.constant 1.000980e-02 : bf16
    %42 = vector.broadcast %cst_27 : bf16 to vector<256x128xbf16>
    %43 = arith.mulf %42, %39 : vector<256x128xbf16>
    %44 = arith.select %41, %39, %43 : vector<256x128xi1>, vector<256x128xbf16>
    %c0_28 = arith.constant 0 : index
    %c0_29 = arith.constant 0 : index
    %45 = vector.load %arg6[%c0_28, %c0_29] : memref<128x128xbf16, #tpu.memory_space<vmem>>, vector<128x128xbf16>
    %cst_30 = arith.constant dense<0.000000e+00> : vector<256x128xf32>
    %46 = tpu.matmul %44, %45, %cst_30 {dimension_numbers = #tpu.dot_dimension_numbers<[1], [0], [0], [1], [0, 0, 1, 1], [], []>} : vector<256x128xbf16>, vector<128x128xbf16>, vector<256x128xf32> -> vector<256x128xf32>
    %c0_31 = arith.constant 0 : index
    %c0_32 = arith.constant 0 : index
    %47 = vector.load %arg16[%c0_31, %c0_32] : memref<1x128xf32, #tpu.memory_space<vmem>>, vector<1x128xf32>
    %48 = vector.broadcast %47 : vector<1x128xf32> to vector<256x128xf32>
    %49 = arith.addf %46, %48 : vector<256x128xf32>
    %50 = arith.truncf %49 : vector<256x128xf32> to vector<256x128xbf16>
    %cst_33 = arith.constant 0.000000e+00 : bf16
    %51 = vector.broadcast %cst_33 : bf16 to vector<256x128xbf16>
    %52 = arith.cmpf ogt, %50, %51 : vector<256x128xbf16>
    %cst_34 = arith.constant 1.000980e-02 : bf16
    %53 = vector.broadcast %cst_34 : bf16 to vector<256x128xbf16>
    %54 = arith.mulf %53, %50 : vector<256x128xbf16>
    %55 = arith.select %52, %50, %54 : vector<256x128xi1>, vector<256x128xbf16>
    %c0_35 = arith.constant 0 : index
    %c0_36 = arith.constant 0 : index
    %56 = vector.load %arg7[%c0_35, %c0_36] : memref<128x128xbf16, #tpu.memory_space<vmem>>, vector<128x128xbf16>
    %cst_37 = arith.constant dense<0.000000e+00> : vector<256x128xf32>
    %57 = tpu.matmul %55, %56, %cst_37 {dimension_numbers = #tpu.dot_dimension_numbers<[1], [0], [0], [1], [0, 0, 1, 1], [], []>} : vector<256x128xbf16>, vector<128x128xbf16>, vector<256x128xf32> -> vector<256x128xf32>
    %c0_38 = arith.constant 0 : index
    %c0_39 = arith.constant 0 : index
    %58 = vector.load %arg17[%c0_38, %c0_39] : memref<1x128xf32, #tpu.memory_space<vmem>>, vector<1x128xf32>
    %59 = vector.broadcast %58 : vector<1x128xf32> to vector<256x128xf32>
    %60 = arith.addf %57, %59 : vector<256x128xf32>
    %61 = arith.truncf %60 : vector<256x128xf32> to vector<256x128xbf16>
    %cst_40 = arith.constant 0.000000e+00 : bf16
    %62 = vector.broadcast %cst_40 : bf16 to vector<256x128xbf16>
    %63 = arith.cmpf ogt, %61, %62 : vector<256x128xbf16>
    %cst_41 = arith.constant 1.000980e-02 : bf16
    %64 = vector.broadcast %cst_41 : bf16 to vector<256x128xbf16>
    %65 = arith.mulf %64, %61 : vector<256x128xbf16>
    %66 = arith.select %63, %61, %65 : vector<256x128xi1>, vector<256x128xbf16>
    %c0_42 = arith.constant 0 : index
    %c0_43 = arith.constant 0 : index
    %67 = vector.load %arg8[%c0_42, %c0_43] : memref<128x128xbf16, #tpu.memory_space<vmem>>, vector<128x128xbf16>
    %cst_44 = arith.constant dense<0.000000e+00> : vector<256x128xf32>
    %68 = tpu.matmul %66, %67, %cst_44 {dimension_numbers = #tpu.dot_dimension_numbers<[1], [0], [0], [1], [0, 0, 1, 1], [], []>} : vector<256x128xbf16>, vector<128x128xbf16>, vector<256x128xf32> -> vector<256x128xf32>
    %c0_45 = arith.constant 0 : index
    %c0_46 = arith.constant 0 : index
    %69 = vector.load %arg18[%c0_45, %c0_46] : memref<1x128xf32, #tpu.memory_space<vmem>>, vector<1x128xf32>
    %70 = vector.broadcast %69 : vector<1x128xf32> to vector<256x128xf32>
    %71 = arith.addf %68, %70 : vector<256x128xf32>
    %72 = arith.truncf %71 : vector<256x128xf32> to vector<256x128xbf16>
    %cst_47 = arith.constant 0.000000e+00 : bf16
    %73 = vector.broadcast %cst_47 : bf16 to vector<256x128xbf16>
    %74 = arith.cmpf ogt, %72, %73 : vector<256x128xbf16>
    %cst_48 = arith.constant 1.000980e-02 : bf16
    %75 = vector.broadcast %cst_48 : bf16 to vector<256x128xbf16>
    %76 = arith.mulf %75, %72 : vector<256x128xbf16>
    %77 = arith.select %74, %72, %76 : vector<256x128xi1>, vector<256x128xbf16>
    %c0_49 = arith.constant 0 : index
    %c0_50 = arith.constant 0 : index
    %78 = vector.load %arg9[%c0_49, %c0_50] : memref<128x256xbf16, #tpu.memory_space<vmem>>, vector<128x256xbf16>
    %cst_51 = arith.constant dense<0.000000e+00> : vector<256x256xf32>
    %79 = tpu.matmul %77, %78, %cst_51 {dimension_numbers = #tpu.dot_dimension_numbers<[1], [0], [0], [1], [0, 0, 1, 1], [], []>} : vector<256x128xbf16>, vector<128x256xbf16>, vector<256x256xf32> -> vector<256x256xf32>
    %c0_52 = arith.constant 0 : index
    %c0_53 = arith.constant 0 : index
    %80 = vector.load %arg19[%c0_52, %c0_53] : memref<1x256xf32, #tpu.memory_space<vmem>>, vector<1x256xf32>
    %81 = vector.broadcast %80 : vector<1x256xf32> to vector<256x256xf32>
    %82 = arith.addf %79, %81 : vector<256x256xf32>
    %83 = arith.truncf %82 : vector<256x256xf32> to vector<256x256xbf16>
    %cst_54 = arith.constant 0.000000e+00 : bf16
    %84 = vector.broadcast %cst_54 : bf16 to vector<256x256xbf16>
    %85 = arith.cmpf ogt, %83, %84 : vector<256x256xbf16>
    %cst_55 = arith.constant 1.000980e-02 : bf16
    %86 = vector.broadcast %cst_55 : bf16 to vector<256x256xbf16>
    %87 = arith.mulf %86, %83 : vector<256x256xbf16>
    %88 = arith.select %85, %83, %87 : vector<256x256xi1>, vector<256x256xbf16>
    %c0_56 = arith.constant 0 : index
    %c0_57 = arith.constant 0 : index
    %89 = vector.load %arg10[%c0_56, %c0_57] : memref<256x512xbf16, #tpu.memory_space<vmem>>, vector<256x512xbf16>
    %cst_58 = arith.constant dense<0.000000e+00> : vector<256x512xf32>
    %90 = tpu.matmul %88, %89, %cst_58 {dimension_numbers = #tpu.dot_dimension_numbers<[1], [0], [0], [1], [0, 0, 1, 1], [], []>} : vector<256x256xbf16>, vector<256x512xbf16>, vector<256x512xf32> -> vector<256x512xf32>
    %c0_59 = arith.constant 0 : index
    %c0_60 = arith.constant 0 : index
    %91 = vector.load %arg20[%c0_59, %c0_60] : memref<1x512xf32, #tpu.memory_space<vmem>>, vector<1x512xf32>
    %92 = vector.broadcast %91 : vector<1x512xf32> to vector<256x512xf32>
    %93 = arith.addf %90, %92 : vector<256x512xf32>
    %94 = arith.truncf %93 : vector<256x512xf32> to vector<256x512xbf16>
    %cst_61 = arith.constant 0.000000e+00 : bf16
    %95 = vector.broadcast %cst_61 : bf16 to vector<256x512xbf16>
    %96 = arith.cmpf ogt, %94, %95 : vector<256x512xbf16>
    %cst_62 = arith.constant 1.000980e-02 : bf16
    %97 = vector.broadcast %cst_62 : bf16 to vector<256x512xbf16>
    %98 = arith.mulf %97, %94 : vector<256x512xbf16>
    %99 = arith.select %96, %94, %98 : vector<256x512xi1>, vector<256x512xbf16>
    %c0_63 = arith.constant 0 : index
    %c0_64 = arith.constant 0 : index
    %100 = vector.load %arg11[%c0_63, %c0_64] : memref<512x128xbf16, #tpu.memory_space<vmem>>, vector<512x128xbf16>
    %cst_65 = arith.constant dense<0.000000e+00> : vector<256x128xf32>
    %101 = tpu.matmul %99, %100, %cst_65 {dimension_numbers = #tpu.dot_dimension_numbers<[1], [0], [0], [1], [0, 0, 1, 1], [], []>} : vector<256x512xbf16>, vector<512x128xbf16>, vector<256x128xf32> -> vector<256x128xf32>
    %c0_66 = arith.constant 0 : index
    %c0_67 = arith.constant 0 : index
    %102 = vector.load %arg21[%c0_66, %c0_67] : memref<1x128xf32, #tpu.memory_space<vmem>>, vector<1x128xf32>
    %103 = vector.broadcast %102 : vector<1x128xf32> to vector<256x128xf32>
    %104 = arith.addf %101, %103 : vector<256x128xf32>
    %c0_68 = arith.constant 0 : index
    %c0_69 = arith.constant 0 : index
    %105 = vector.load %arg22[%c0_68, %c0_69] : memref<256x128xf32, #tpu.memory_space<vmem>>, vector<256x128xf32>
    tpu.vector_store %arg22[%c0_68, %c0_69], %104 {strides = array<i32>} : memref<256x128xf32, #tpu.memory_space<vmem>>, vector<256x128xf32>,
    return
  }
  func.func @transform_0(%arg0: i32) -> (i32, i32) {
    %c0_i32 = arith.constant 0 : i32
    %c0_i32_0 = arith.constant 0 : i32
    return %arg0, %c0_i32 : i32, i32
  }
  func.func @transform_1(%arg0: i32) -> (i32, i32) {
    %c0_i32 = arith.constant 0 : i32
    %c0_i32_0 = arith.constant 0 : i32
    %c0_i32_1 = arith.constant 0 : i32
    return %c0_i32, %c0_i32_0 : i32, i32
  }
  func.func @transform_2(%arg0: i32) -> (i32, i32) {
    %c0_i32 = arith.constant 0 : i32
    %c0_i32_0 = arith.constant 0 : i32
    %c0_i32_1 = arith.constant 0 : i32
    return %c0_i32, %c0_i32_0 : i32, i32
  }
  func.func @transform_3(%arg0: i32) -> (i32, i32) {
    %c0_i32 = arith.constant 0 : i32
    %c0_i32_0 = arith.constant 0 : i32
    %c0_i32_1 = arith.constant 0 : i32
    return %c0_i32, %c0_i32_0 : i32, i32
  }
  func.func @transform_4(%arg0: i32) -> (i32, i32) {
    %c0_i32 = arith.constant 0 : i32
    %c0_i32_0 = arith.constant 0 : i32
    %c0_i32_1 = arith.constant 0 : i32
    return %c0_i32, %c0_i32_0 : i32, i32
  }
  func.func @transform_5(%arg0: i32) -> (i32, i32) {
    %c0_i32 = arith.constant 0 : i32
    %c0_i32_0 = arith.constant 0 : i32
    %c0_i32_1 = arith.constant 0 : i32
    return %c0_i32, %c0_i32_0 : i32, i32
  }
  func.func @transform_6(%arg0: i32) -> (i32, i32) {
    %c0_i32 = arith.constant 0 : i32
    %c0_i32_0 = arith.constant 0 : i32
    %c0_i32_1 = arith.constant 0 : i32
    return %c0_i32, %c0_i32_0 : i32, i32
  }
  func.func @transform_7(%arg0: i32) -> (i32, i32) {
    %c0_i32 = arith.constant 0 : i32
    %c0_i32_0 = arith.constant 0 : i32
    %c0_i32_1 = arith.constant 0 : i32
    return %c0_i32, %c0_i32_0 : i32, i32
  }
  func.func @transform_8(%arg0: i32) -> (i32, i32) {
    %c0_i32 = arith.constant 0 : i32
    %c0_i32_0 = arith.constant 0 : i32
    %c0_i32_1 = arith.constant 0 : i32
    return %c0_i32, %c0_i32_0 : i32, i32
  }
  func.func @transform_9(%arg0: i32) -> (i32, i32) {
    %c0_i32 = arith.constant 0 : i32
    %c0_i32_0 = arith.constant 0 : i32
    %c0_i32_1 = arith.constant 0 : i32
    return %c0_i32, %c0_i32_0 : i32, i32
  }
  func.func @transform_10(%arg0: i32) -> (i32, i32) {
    %c0_i32 = arith.constant 0 : i32
    %c0_i32_0 = arith.constant 0 : i32
    %c0_i32_1 = arith.constant 0 : i32
    return %c0_i32, %c0_i32_0 : i32, i32
  }
  func.func @transform_11(%arg0: i32) -> (i32, i32) {
    %c0_i32 = arith.constant 0 : i32
    %c0_i32_0 = arith.constant 0 : i32
    %c0_i32_1 = arith.constant 0 : i32
    return %c0_i32, %c0_i32_0 : i32, i32
  }
  func.func @transform_12(%arg0: i32) -> (i32, i32) {
    %c0_i32 = arith.constant 0 : i32
    %c0_i32_0 = arith.constant 0 : i32
    %c0_i32_1 = arith.constant 0 : i32
    return %c0_i32, %c0_i32_0 : i32, i32
  }
  func.func @transform_13(%arg0: i32) -> (i32, i32) {
    %c0_i32 = arith.constant 0 : i32
    %c0_i32_0 = arith.constant 0 : i32
    %c0_i32_1 = arith.constant 0 : i32
    return %c0_i32, %c0_i32_0 : i32, i32
  }
  func.func @transform_14(%arg0: i32) -> (i32, i32) {
    %c0_i32 = arith.constant 0 : i32
    %c0_i32_0 = arith.constant 0 : i32
    %c0_i32_1 = arith.constant 0 : i32
    return %c0_i32, %c0_i32_0 : i32, i32
  }
  func.func @transform_15(%arg0: i32) -> (i32, i32) {
    %c0_i32 = arith.constant 0 : i32
    %c0_i32_0 = arith.constant 0 : i32
    %c0_i32_1 = arith.constant 0 : i32
    return %c0_i32, %c0_i32_0 : i32, i32
  }
  func.func @transform_16(%arg0: i32) -> (i32, i32) {
    %c0_i32 = arith.constant 0 : i32
    %c0_i32_0 = arith.constant 0 : i32
    %c0_i32_1 = arith.constant 0 : i32
    return %c0_i32, %c0_i32_0 : i32, i32
  }
  func.func @transform_17(%arg0: i32) -> (i32, i32) {
    %c0_i32 = arith.constant 0 : i32
    %c0_i32_0 = arith.constant 0 : i32
    %c0_i32_1 = arith.constant 0 : i32
    return %c0_i32, %c0_i32_0 : i32, i32
  }
  func.func @transform_18(%arg0: i32) -> (i32, i32) {
    %c0_i32 = arith.constant 0 : i32
    %c0_i32_0 = arith.constant 0 : i32
    %c0_i32_1 = arith.constant 0 : i32
    return %c0_i32, %c0_i32_0 : i32, i32
  }
  func.func @transform_19(%arg0: i32) -> (i32, i32) {
    %c0_i32 = arith.constant 0 : i32
    %c0_i32_0 = arith.constant 0 : i32
    %c0_i32_1 = arith.constant 0 : i32
    return %c0_i32, %c0_i32_0 : i32, i32
  }
  func.func @transform_20(%arg0: i32) -> (i32, i32) {
    %c0_i32 = arith.constant 0 : i32
    %c0_i32_0 = arith.constant 0 : i32
    %c0_i32_1 = arith.constant 0 : i32
    return %c0_i32, %c0_i32_0 : i32, i32
  }
  func.func @transform_21(%arg0: i32) -> (i32, i32) {
    %c0_i32 = arith.constant 0 : i32
    %c0_i32_0 = arith.constant 0 : i32
    return %arg0, %c0_i32 : i32, i32
  }
}

</mosaic_0001>

<llo_original>
// kernel: autoencoder_forward.1
$region0: #{autoencoder_forward.1}
  #allocation0 [shape = 'u32[]', space=smem, size = 0x4, offset = 0x4, fixed_abs, tag = 'smem constant byte address 0x4 - core index']
  #allocation1 [shape = 'u32[72,128]{1,0:T(1,128)}', space=vmem, size = 0x9000, scoped, tag = 'internal scratch']
  %s0 = inlined_call_operand.vmem [shape: bf16[512,128], index: 0, kind: input, shape index: {}]
  %s1 = inlined_call_operand.vmem [shape: bf16[128,512], index: 1, kind: input, shape index: {}]
  %s2 = inlined_call_operand.vmem [shape: bf16[512,256], index: 2, kind: input, shape index: {}]
  %s3 = inlined_call_operand.hbm [shape: bf16[256,128], index: 3, kind: input, shape index: {}]
  %s4 = inlined_call_operand.hbm [shape: bf16[128,128], index: 4, kind: input, shape index: {}]
  %s5 = inlined_call_operand.hbm [shape: bf16[128,128], index: 5, kind: input, shape index: {}]
  %s6 = inlined_call_operand.hbm [shape: bf16[128,128], index: 6, kind: input, shape index: {}]
  %s7 = inlined_call_operand.hbm [shape: bf16[128,128], index: 7, kind: input, shape index: {}]
  %s8 = inlined_call_operand.hbm [shape: bf16[128,256], index: 8, kind: input, shape index: {}]
  %s9 = inlined_call_operand.vmem [shape: bf16[256,512], index: 9, kind: input, shape index: {}]
  %s10 = inlined_call_operand.vmem [shape: bf16[512,128], index: 10, kind: input, shape index: {}]
  %s11 = inlined_call_operand.hbm [shape: f32[1,512], index: 11, kind: input, shape index: {}]
  %s12 = inlined_call_operand.vmem [shape: f32[1,256], index: 12, kind: input, shape index: {}]
  %s13 = inlined_call_operand.hbm [shape: f32[1,128], index: 13, kind: input, shape index: {}]
  %s14 = inlined_call_operand.hbm [shape: f32[1,128], index: 14, kind: input, shape index: {}]
  %s15 = inlined_call_operand.hbm [shape: f32[1,128], index: 15, kind: input, shape index: {}]
  %s16 = inlined_call_operand.vmem [shape: f32[1,128], index: 16, kind: input, shape index: {}]
  %s17 = inlined_call_operand.vmem [shape: f32[1,128], index: 17, kind: input, shape index: {}]
  %s18 = inlined_call_operand.vmem [shape: f32[1,256], index: 18, kind: input, shape index: {}]
  %s19 = inlined_call_operand.vmem [shape: f32[1,512], index: 19, kind: input, shape index: {}]
  %s20 = inlined_call_operand.vmem [shape: f32[1,128], index: 20, kind: input, shape index: {}]
  %s21 = inlined_call_operand.vmem [shape: f32[512,128], index: 21, kind: output, shape index: {}]
  %s22 = sld [smem:[#allocation0]]
  $region157: #{autoencoder_forward.1} parent=0
    _
  %s24 = ssub.s32 1, %s22
  %s25 = scalar_select 0, %s24, %s22
  $region1: #{autoencoder_forward.1} parent=0
    #allocation2 [shape = 'u8[65536]{0}', space=vmem, size = 0x10000, scoped, tag = 'input window, operand 3, single buffered']
    #allocation3 [shape = 's32[2]{0}', space=sflag, size = 0x8, scoped, tag = 'scoped memory for autoencoder_forward.1']
    #allocation4 [shape = 'u8[32768]{0}', space=vmem, size = 0x8000, scoped, tag = 'input window, operand 4, single buffered']
    #allocation5 [shape = 's32[1]{0}', space=sflag, size = 0x4, scoped, tag = 'scoped memory for autoencoder_forward.1']
    #allocation6 [shape = 'u8[32768]{0}', space=vmem, size = 0x8000, scoped, tag = 'input window, operand 5, single buffered']
    #allocation7 [shape = 'u8[32768]{0}', space=vmem, size = 0x8000, scoped, tag = 'input window, operand 6, single buffered']
    #allocation8 [shape = 's32[1]{0}', space=sflag, size = 0x4, scoped, tag = 'scoped memory for autoencoder_forward.1']
    #allocation9 [shape = 'u8[32768]{0}', space=vmem, size = 0x8000, scoped, tag = 'input window, operand 7, single buffered']
    #allocation10 [shape = 'u8[65536]{0}', space=vmem, size = 0x10000, scoped, tag = 'input window, operand 8, single buffered']
    #allocation11 [shape = 's32[1]{0}', space=sflag, size = 0x4, scoped, tag = 'scoped memory for autoencoder_forward.1']
    #allocation12 [shape = 'u8[2048]{0}', space=vmem, size = 0x800, scoped, tag = 'input window, operand 11, single buffered']
    #allocation13 [shape = 'u8[512]{0}', space=vmem, size = 0x400, scoped, tag = 'input window, operand 13, single buffered']
    #allocation14 [shape = 's32[1]{0}', space=sflag, size = 0x4, scoped, tag = 'scoped memory for autoencoder_forward.1']
    #allocation15 [shape = 'u8[512]{0}', space=vmem, size = 0x400, scoped, tag = 'input window, operand 14, single buffered']
    #allocation16 [shape = 'u8[512]{0}', space=vmem, size = 0x400, scoped, tag = 'input window, operand 15, single buffered']
    #allocation17 [shape = 's32[1]{0}', space=sflag, size = 0x4, scoped, tag = 'scoped memory for autoencoder_forward.1']
    %26 = vsyncpa [#allocation3], 0
    %27 = vsyncpa [#allocation5], 0
    %28 = vsyncpa [#allocation8], 0
    %29 = vsyncpa [#allocation11], 0
    %30 = vsyncpa [#allocation14], 0
    %31 = vsyncpa [#allocation17], 0
    loop: start=0, step=1, limit=4
    $region2: #{autoencoder_forward.1} parent=1 // loop_pre_header
      _
    $region3: #{autoencoder_forward.1} parent=1 // loop_header
      %s33 = sphi 0, %s37
      %p34 = scmp.ge.s32.totalorder %s33, 4
      %s43 = sphi 0, %s45
      %s46 = sphi 0, %s43
      %s47 = sphi 0, %s46
      %s63 = sphi 0, %s47
      %s67 = sphi 0, %s67
      %s69 = sphi 0, %s67
      %s70 = sphi 0, %s69
      %s84 = sphi 0, %s70
      %s88 = sphi 0, %s88
      %s90 = sphi 0, %s88
      %s91 = sphi 0, %s90
      %s105 = sphi 0, %s91
      %s109 = sphi 0, %s109
      %s111 = sphi 0, %s109
      %s112 = sphi 0, %s111
      %s126 = sphi 0, %s112
      %s130 = sphi 0, %s130
      %s132 = sphi 0, %s130
      %s133 = sphi 0, %s132
      %s147 = sphi 0, %s133
      %s151 = sphi 0, %s151
      %s153 = sphi 0, %s151
      %s154 = sphi 0, %s153
      %s168 = sphi 0, %s154
      %s172 = sphi 0, %s172
      %s174 = sphi 0, %s172
      %s175 = sphi 0, %s174
      %s189 = sphi 0, %s175
      %s193 = sphi 0, %s193
      %s195 = sphi 0, %s193
      %s196 = sphi 0, %s195
      %s210 = sphi 0, %s196
      %s214 = sphi 0, %s214
      %s216 = sphi 0, %s214
      %s217 = sphi 0, %s216
      %s231 = sphi 0, %s217
      %s235 = sphi 0, %s235
      %s237 = sphi 0, %s235
      %s238 = sphi 0, %s237
      %s252 = sphi 0, %s238
      %s256 = sphi 0, %s256
      %s258 = sphi 0, %s256
      %s259 = sphi 0, %s258
      %s273 = sphi 0, %s259
      %s277 = sphi 0, %s277
      %s279 = sphi 0, %s277
      %s280 = sphi 0, %s279
      %s294 = sphi 0, %s280
      %s298 = sphi 0, %s298
      %s300 = sphi 0, %s298
      %s301 = sphi 0, %s300
      %s315 = sphi 0, %s301
      %s319 = sphi 0, %s319
      %s321 = sphi 0, %s319
      %s322 = sphi 0, %s321
      %s336 = sphi 0, %s322
      %s340 = sphi 0, %s340
      %s342 = sphi 0, %s340
      %s343 = sphi 0, %s342
      %s357 = sphi 0, %s343
      %s361 = sphi 0, %s361
      %s363 = sphi 0, %s361
      %s364 = sphi 0, %s363
      %s378 = sphi 0, %s364
      %s382 = sphi 0, %s382
      %s384 = sphi 0, %s382
      %s385 = sphi 0, %s384
      %s399 = sphi 0, %s385
      %s403 = sphi 0, %s403
      %s405 = sphi 0, %s403
      %s406 = sphi 0, %s405
      %s420 = sphi 0, %s406
      %s424 = sphi 0, %s424
      %s426 = sphi 0, %s424
      %s427 = sphi 0, %s426
      %s441 = sphi 0, %s427
      %s445 = sphi 0, %s445
      %s447 = sphi 0, %s445
      %s448 = sphi 0, %s447
      %s462 = sphi 0, %s448
      %s466 = sphi 0, %s466
      %s468 = sphi 0, %s466
      %s469 = sphi 0, %s468
      %s483 = sphi 0, %s469
      %s489 = sphi 0, %s491
      %s492 = sphi 0, %s489
      %s493 = sphi 0, %s492
      %s509 = sphi 0, %s493
    $region4: #{autoencoder_forward.1} parent=1 // loop_header_branch
      %36 = sbr.rel (%p34) target = $region8
    $region5: #{autoencoder_forward.1} parent=1 // loop_body
      %s38 = ssub.s32 %s33, 1
      %s39 = ssub.s32 %s33, 2
      %s40 = sadd.s32 %s33, 1
      %s41 = ssub.s32 %s33, %s40
      %p42 = scmp.eq.s32.totalorder %s41, 0
      %s44 = sadd.s32 %s43, 1
      %s45 = scalar_select %p42, %s43, %s44
      %p48 = pneg %p42
      %p49 = scmp.eq.s32.totalorder %s33, 1
      %p50 = por %p48, %p49
      %p51 = scmp.ne.s32.totalorder %s43, %s46
      %p52 = scmp.eq.s32.totalorder %s33, 0
      %p53 = por %p51, %p52
      %p54 = scmp.ne.s32.totalorder %s43, %s46
      %p55 = scmp.eq.s32.totalorder %s38, 1
      %p56 = por %p54, %p55
      %p57 = scmp.ne.s32.totalorder %s46, %s47
      %p58 = scmp.eq.s32.totalorder %s38, 0
      %p59 = por %p57, %p58
      %p60 = scmp.ne.s32.totalorder %s46, %s47
      %p61 = scmp.eq.s32.totalorder %s39, 1
      %p62 = por %p60, %p61
      %p64 = scmp.ne.s32.totalorder %s47, %s63
      %p65 = scmp.eq.s32.totalorder %s39, 0
      %p66 = por %p64, %p65
      %s68 = sadd.s32 %s67, 1
      %p71 = scmp.eq.s32.totalorder %s33, 1
      %p72 = scmp.ne.s32.totalorder %s67, %s69
      %p73 = scmp.eq.s32.totalorder %s33, 0
      %p74 = por %p72, %p73
      %p75 = scmp.ne.s32.totalorder %s67, %s69
      %p76 = scmp.eq.s32.totalorder %s38, 1
      %p77 = por %p75, %p76
      %p78 = scmp.ne.s32.totalorder %s69, %s70
      %p79 = scmp.eq.s32.totalorder %s38, 0
      %p80 = por %p78, %p79
      %p81 = scmp.ne.s32.totalorder %s69, %s70
      %p82 = scmp.eq.s32.totalorder %s39, 1
      %p83 = por %p81, %p82
      %p85 = scmp.ne.s32.totalorder %s70, %s84
      %p86 = scmp.eq.s32.totalorder %s39, 0
      %p87 = por %p85, %p86
      %s89 = sadd.s32 %s88, 1
      %p92 = scmp.eq.s32.totalorder %s33, 1
      %p93 = scmp.ne.s32.totalorder %s88, %s90
      %p94 = scmp.eq.s32.totalorder %s33, 0
      %p95 = por %p93, %p94
      %p96 = scmp.ne.s32.totalorder %s88, %s90
      %p97 = scmp.eq.s32.totalorder %s38, 1
      %p98 = por %p96, %p97
      %p99 = scmp.ne.s32.totalorder %s90, %s91
      %p100 = scmp.eq.s32.totalorder %s38, 0
      %p101 = por %p99, %p100
      %p102 = scmp.ne.s32.totalorder %s90, %s91
      %p103 = scmp.eq.s32.totalorder %s39, 1
      %p104 = por %p102, %p103
      %p106 = scmp.ne.s32.totalorder %s91, %s105
      %p107 = scmp.eq.s32.totalorder %s39, 0
      %p108 = por %p106, %p107
      %s110 = sadd.s32 %s109, 1
      %p113 = scmp.eq.s32.totalorder %s33, 1
      %p114 = scmp.ne.s32.totalorder %s109, %s111
      %p115 = scmp.eq.s32.totalorder %s33, 0
      %p116 = por %p114, %p115
      %p117 = scmp.ne.s32.totalorder %s109, %s111
      %p118 = scmp.eq.s32.totalorder %s38, 1
      %p119 = por %p117, %p118
      %p120 = scmp.ne.s32.totalorder %s111, %s112
      %p121 = scmp.eq.s32.totalorder %s38, 0
      %p122 = por %p120, %p121
      %p123 = scmp.ne.s32.totalorder %s111, %s112
      %p124 = scmp.eq.s32.totalorder %s39, 1
      %p125 = por %p123, %p124
      %p127 = scmp.ne.s32.totalorder %s112, %s126
      %p128 = scmp.eq.s32.totalorder %s39, 0
      %p129 = por %p127, %p128
      %s131 = sadd.s32 %s130, 1
      %p134 = scmp.eq.s32.totalorder %s33, 1
      %p135 = scmp.ne.s32.totalorder %s130, %s132
      %p136 = scmp.eq.s32.totalorder %s33, 0
      %p137 = por %p135, %p136
      %p138 = scmp.ne.s32.totalorder %s130, %s132
      %p139 = scmp.eq.s32.totalorder %s38, 1
      %p140 = por %p138, %p139
      %p141 = scmp.ne.s32.totalorder %s132, %s133
      %p142 = scmp.eq.s32.totalorder %s38, 0
      %p143 = por %p141, %p142
      %p144 = scmp.ne.s32.totalorder %s132, %s133
      %p145 = scmp.eq.s32.totalorder %s39, 1
      %p146 = por %p144, %p145
      %p148 = scmp.ne.s32.totalorder %s133, %s147
      %p149 = scmp.eq.s32.totalorder %s39, 0
      %p150 = por %p148, %p149
      %s152 = sadd.s32 %s151, 1
      %p155 = scmp.eq.s32.totalorder %s33, 1
      %p156 = scmp.ne.s32.totalorder %s151, %s153
      %p157 = scmp.eq.s32.totalorder %s33, 0
      %p158 = por %p156, %p157
      %p159 = scmp.ne.s32.totalorder %s151, %s153
      %p160 = scmp.eq.s32.totalorder %s38, 1
      %p161 = por %p159, %p160
      %p162 = scmp.ne.s32.totalorder %s153, %s154
      %p163 = scmp.eq.s32.totalorder %s38, 0
      %p164 = por %p162, %p163
      %p165 = scmp.ne.s32.totalorder %s153, %s154
      %p166 = scmp.eq.s32.totalorder %s39, 1
      %p167 = por %p165, %p166
      %p169 = scmp.ne.s32.totalorder %s154, %s168
      %p170 = scmp.eq.s32.totalorder %s39, 0
      %p171 = por %p169, %p170
      %s173 = sadd.s32 %s172, 1
      %p176 = scmp.eq.s32.totalorder %s33, 1
      %p177 = scmp.ne.s32.totalorder %s172, %s174
      %p178 = scmp.eq.s32.totalorder %s33, 0
      %p179 = por %p177, %p178
      %p180 = scmp.ne.s32.totalorder %s172, %s174
      %p181 = scmp.eq.s32.totalorder %s38, 1
      %p182 = por %p180, %p181
      %p183 = scmp.ne.s32.totalorder %s174, %s175
      %p184 = scmp.eq.s32.totalorder %s38, 0
      %p185 = por %p183, %p184
      %p186 = scmp.ne.s32.totalorder %s174, %s175
      %p187 = scmp.eq.s32.totalorder %s39, 1
      %p188 = por %p186, %p187
      %p190 = scmp.ne.s32.totalorder %s175, %s189
      %p191 = scmp.eq.s32.totalorder %s39, 0
      %p192 = por %p190, %p191
      %s194 = sadd.s32 %s193, 1
      %p197 = scmp.eq.s32.totalorder %s33, 1
      %p198 = scmp.ne.s32.totalorder %s193, %s195
      %p199 = scmp.eq.s32.totalorder %s33, 0
      %p200 = por %p198, %p199
      %p201 = scmp.ne.s32.totalorder %s193, %s195
      %p202 = scmp.eq.s32.totalorder %s38, 1
      %p203 = por %p201, %p202
      %p204 = scmp.ne.s32.totalorder %s195, %s196
      %p205 = scmp.eq.s32.totalorder %s38, 0
      %p206 = por %p204, %p205
      %p207 = scmp.ne.s32.totalorder %s195, %s196
      %p208 = scmp.eq.s32.totalorder %s39, 1
      %p209 = por %p207, %p208
      %p211 = scmp.ne.s32.totalorder %s196, %s210
      %p212 = scmp.eq.s32.totalorder %s39, 0
      %p213 = por %p211, %p212
      %s215 = sadd.s32 %s214, 1
      %p218 = scmp.eq.s32.totalorder %s33, 1
      %p219 = scmp.ne.s32.totalorder %s214, %s216
      %p220 = scmp.eq.s32.totalorder %s33, 0
      %p221 = por %p219, %p220
      %p222 = scmp.ne.s32.totalorder %s214, %s216
      %p223 = scmp.eq.s32.totalorder %s38, 1
      %p224 = por %p222, %p223
      %p225 = scmp.ne.s32.totalorder %s216, %s217
      %p226 = scmp.eq.s32.totalorder %s38, 0
      %p227 = por %p225, %p226
      %p228 = scmp.ne.s32.totalorder %s216, %s217
      %p229 = scmp.eq.s32.totalorder %s39, 1
      %p230 = por %p228, %p229
      %p232 = scmp.ne.s32.totalorder %s217, %s231
      %p233 = scmp.eq.s32.totalorder %s39, 0
      %p234 = por %p232, %p233
      %s236 = sadd.s32 %s235, 1
      %p239 = scmp.eq.s32.totalorder %s33, 1
      %p240 = scmp.ne.s32.totalorder %s235, %s237
      %p241 = scmp.eq.s32.totalorder %s33, 0
      %p242 = por %p240, %p241
      %p243 = scmp.ne.s32.totalorder %s235, %s237
      %p244 = scmp.eq.s32.totalorder %s38, 1
      %p245 = por %p243, %p244
      %p246 = scmp.ne.s32.totalorder %s237, %s238
      %p247 = scmp.eq.s32.totalorder %s38, 0
      %p248 = por %p246, %p247
      %p249 = scmp.ne.s32.totalorder %s237, %s238
      %p250 = scmp.eq.s32.totalorder %s39, 1
      %p251 = por %p249, %p250
      %p253 = scmp.ne.s32.totalorder %s238, %s252
      %p254 = scmp.eq.s32.totalorder %s39, 0
      %p255 = por %p253, %p254
      %s257 = sadd.s32 %s256, 1
      %p260 = scmp.eq.s32.totalorder %s33, 1
      %p261 = scmp.ne.s32.totalorder %s256, %s258
      %p262 = scmp.eq.s32.totalorder %s33, 0
      %p263 = por %p261, %p262
      %p264 = scmp.ne.s32.totalorder %s256, %s258
      %p265 = scmp.eq.s32.totalorder %s38, 1
      %p266 = por %p264, %p265
      %p267 = scmp.ne.s32.totalorder %s258, %s259
      %p268 = scmp.eq.s32.totalorder %s38, 0
      %p269 = por %p267, %p268
      %p270 = scmp.ne.s32.totalorder %s258, %s259
      %p271 = scmp.eq.s32.totalorder %s39, 1
      %p272 = por %p270, %p271
      %p274 = scmp.ne.s32.totalorder %s259, %s273
      %p275 = scmp.eq.s32.totalorder %s39, 0
      %p276 = por %p274, %p275
      %s278 = sadd.s32 %s277, 1
      %p281 = scmp.eq.s32.totalorder %s33, 1
      %p282 = scmp.ne.s32.totalorder %s277, %s279
      %p283 = scmp.eq.s32.totalorder %s33, 0
      %p284 = por %p282, %p283
      %p285 = scmp.ne.s32.totalorder %s277, %s279
      %p286 = scmp.eq.s32.totalorder %s38, 1
      %p287 = por %p285, %p286
      %p288 = scmp.ne.s32.totalorder %s279, %s280
      %p289 = scmp.eq.s32.totalorder %s38, 0
      %p290 = por %p288, %p289
      %p291 = scmp.ne.s32.totalorder %s279, %s280
      %p292 = scmp.eq.s32.totalorder %s39, 1
      %p293 = por %p291, %p292
      %p295 = scmp.ne.s32.totalorder %s280, %s294
      %p296 = scmp.eq.s32.totalorder %s39, 0
      %p297 = por %p295, %p296
      %s299 = sadd.s32 %s298, 1
      %p302 = scmp.eq.s32.totalorder %s33, 1
      %p303 = scmp.ne.s32.totalorder %s298, %s300
      %p304 = scmp.eq.s32.totalorder %s33, 0
      %p305 = por %p303, %p304
      %p306 = scmp.ne.s32.totalorder %s298, %s300
      %p307 = scmp.eq.s32.totalorder %s38, 1
      %p308 = por %p306, %p307
      %p309 = scmp.ne.s32.totalorder %s300, %s301
      %p310 = scmp.eq.s32.totalorder %s38, 0
      %p311 = por %p309, %p310
      %p312 = scmp.ne.s32.totalorder %s300, %s301
      %p313 = scmp.eq.s32.totalorder %s39, 1
      %p314 = por %p312, %p313
      %p316 = scmp.ne.s32.totalorder %s301, %s315
      %p317 = scmp.eq.s32.totalorder %s39, 0
      %p318 = por %p316, %p317
      %s320 = sadd.s32 %s319, 1
      %p323 = scmp.eq.s32.totalorder %s33, 1
      %p324 = scmp.ne.s32.totalorder %s319, %s321
      %p325 = scmp.eq.s32.totalorder %s33, 0
      %p326 = por %p324, %p325
      %p327 = scmp.ne.s32.totalorder %s319, %s321
      %p328 = scmp.eq.s32.totalorder %s38, 1
      %p329 = por %p327, %p328
      %p330 = scmp.ne.s32.totalorder %s321, %s322
      %p331 = scmp.eq.s32.totalorder %s38, 0
      %p332 = por %p330, %p331
      %p333 = scmp.ne.s32.totalorder %s321, %s322
      %p334 = scmp.eq.s32.totalorder %s39, 1
      %p335 = por %p333, %p334
      %p337 = scmp.ne.s32.totalorder %s322, %s336
      %p338 = scmp.eq.s32.totalorder %s39, 0
      %p339 = por %p337, %p338
      %s341 = sadd.s32 %s340, 1
      %p344 = scmp.eq.s32.totalorder %s33, 1
      %p345 = scmp.ne.s32.totalorder %s340, %s342
      %p346 = scmp.eq.s32.totalorder %s33, 0
      %p347 = por %p345, %p346
      %p348 = scmp.ne.s32.totalorder %s340, %s342
      %p349 = scmp.eq.s32.totalorder %s38, 1
      %p350 = por %p348, %p349
      %p351 = scmp.ne.s32.totalorder %s342, %s343
      %p352 = scmp.eq.s32.totalorder %s38, 0
      %p353 = por %p351, %p352
      %p354 = scmp.ne.s32.totalorder %s342, %s343
      %p355 = scmp.eq.s32.totalorder %s39, 1
      %p356 = por %p354, %p355
      %p358 = scmp.ne.s32.totalorder %s343, %s357
      %p359 = scmp.eq.s32.totalorder %s39, 0
      %p360 = por %p358, %p359
      %s362 = sadd.s32 %s361, 1
      %p365 = scmp.eq.s32.totalorder %s33, 1
      %p366 = scmp.ne.s32.totalorder %s361, %s363
      %p367 = scmp.eq.s32.totalorder %s33, 0
      %p368 = por %p366, %p367
      %p369 = scmp.ne.s32.totalorder %s361, %s363
      %p370 = scmp.eq.s32.totalorder %s38, 1
      %p371 = por %p369, %p370
      %p372 = scmp.ne.s32.totalorder %s363, %s364
      %p373 = scmp.eq.s32.totalorder %s38, 0
      %p374 = por %p372, %p373
      %p375 = scmp.ne.s32.totalorder %s363, %s364
      %p376 = scmp.eq.s32.totalorder %s39, 1
      %p377 = por %p375, %p376
      %p379 = scmp.ne.s32.totalorder %s364, %s378
      %p380 = scmp.eq.s32.totalorder %s39, 0
      %p381 = por %p379, %p380
      %s383 = sadd.s32 %s382, 1
      %p386 = scmp.eq.s32.totalorder %s33, 1
      %p387 = scmp.ne.s32.totalorder %s382, %s384
      %p388 = scmp.eq.s32.totalorder %s33, 0
      %p389 = por %p387, %p388
      %p390 = scmp.ne.s32.totalorder %s382, %s384
      %p391 = scmp.eq.s32.totalorder %s38, 1
      %p392 = por %p390, %p391
      %p393 = scmp.ne.s32.totalorder %s384, %s385
      %p394 = scmp.eq.s32.totalorder %s38, 0
      %p395 = por %p393, %p394
      %p396 = scmp.ne.s32.totalorder %s384, %s385
      %p397 = scmp.eq.s32.totalorder %s39, 1
      %p398 = por %p396, %p397
      %p400 = scmp.ne.s32.totalorder %s385, %s399
      %p401 = scmp.eq.s32.totalorder %s39, 0
      %p402 = por %p400, %p401
      %s404 = sadd.s32 %s403, 1
      %p407 = scmp.eq.s32.totalorder %s33, 1
      %p408 = scmp.ne.s32.totalorder %s403, %s405
      %p409 = scmp.eq.s32.totalorder %s33, 0
      %p410 = por %p408, %p409
      %p411 = scmp.ne.s32.totalorder %s403, %s405
      %p412 = scmp.eq.s32.totalorder %s38, 1
      %p413 = por %p411, %p412
      %p414 = scmp.ne.s32.totalorder %s405, %s406
      %p415 = scmp.eq.s32.totalorder %s38, 0
      %p416 = por %p414, %p415
      %p417 = scmp.ne.s32.totalorder %s405, %s406
      %p418 = scmp.eq.s32.totalorder %s39, 1
      %p419 = por %p417, %p418
      %p421 = scmp.ne.s32.totalorder %s406, %s420
      %p422 = scmp.eq.s32.totalorder %s39, 0
      %p423 = por %p421, %p422
      %s425 = sadd.s32 %s424, 1
      %p428 = scmp.eq.s32.totalorder %s33, 1
      %p429 = scmp.ne.s32.totalorder %s424, %s426
      %p430 = scmp.eq.s32.totalorder %s33, 0
      %p431 = por %p429, %p430
      %p432 = scmp.ne.s32.totalorder %s424, %s426
      %p433 = scmp.eq.s32.totalorder %s38, 1
      %p434 = por %p432, %p433
      %p435 = scmp.ne.s32.totalorder %s426, %s427
      %p436 = scmp.eq.s32.totalorder %s38, 0
      %p437 = por %p435, %p436
      %p438 = scmp.ne.s32.totalorder %s426, %s427
      %p439 = scmp.eq.s32.totalorder %s39, 1
      %p440 = por %p438, %p439
      %p442 = scmp.ne.s32.totalorder %s427, %s441
      %p443 = scmp.eq.s32.totalorder %s39, 0
      %p444 = por %p442, %p443
      %s446 = sadd.s32 %s445, 1
      %p449 = scmp.eq.s32.totalorder %s33, 1
      %p450 = scmp.ne.s32.totalorder %s445, %s447
      %p451 = scmp.eq.s32.totalorder %s33, 0
      %p452 = por %p450, %p451
      %p453 = scmp.ne.s32.totalorder %s445, %s447
      %p454 = scmp.eq.s32.totalorder %s38, 1
      %p455 = por %p453, %p454
      %p456 = scmp.ne.s32.totalorder %s447, %s448
      %p457 = scmp.eq.s32.totalorder %s38, 0
      %p458 = por %p456, %p457
      %p459 = scmp.ne.s32.totalorder %s447, %s448
      %p460 = scmp.eq.s32.totalorder %s39, 1
      %p461 = por %p459, %p460
      %p463 = scmp.ne.s32.totalorder %s448, %s462
      %p464 = scmp.eq.s32.totalorder %s39, 0
      %p465 = por %p463, %p464
      %s467 = sadd.s32 %s466, 1
      %p470 = scmp.eq.s32.totalorder %s33, 1
      %p471 = scmp.ne.s32.totalorder %s466, %s468
      %p472 = scmp.eq.s32.totalorder %s33, 0
      %p473 = por %p471, %p472
      %p474 = scmp.ne.s32.totalorder %s466, %s468
      %p475 = scmp.eq.s32.totalorder %s38, 1
      %p476 = por %p474, %p475
      %p477 = scmp.ne.s32.totalorder %s468, %s469
      %p478 = scmp.eq.s32.totalorder %s38, 0
      %p479 = por %p477, %p478
      %p480 = scmp.ne.s32.totalorder %s468, %s469
      %p481 = scmp.eq.s32.totalorder %s39, 1
      %p482 = por %p480, %p481
      %p484 = scmp.ne.s32.totalorder %s469, %s483
      %p485 = scmp.eq.s32.totalorder %s39, 0
      %p486 = por %p484, %p485
      %s487 = ssub.s32 %s33, %s40
      %p488 = scmp.eq.s32.totalorder %s487, 0
      %s490 = sadd.s32 %s489, 1
      %s491 = scalar_select %p488, %s489, %s490
      %p494 = pneg %p488
      %p495 = scmp.eq.s32.totalorder %s33, 1
      %p496 = por %p494, %p495
      %p497 = scmp.ne.s32.totalorder %s489, %s492
      %p498 = scmp.eq.s32.totalorder %s33, 0
      %p499 = por %p497, %p498
      %p500 = scmp.ne.s32.totalorder %s489, %s492
      %p501 = scmp.eq.s32.totalorder %s38, 1
      %p502 = por %p500, %p501
      %p503 = scmp.ne.s32.totalorder %s492, %s493
      %p504 = scmp.eq.s32.totalorder %s38, 0
      %p505 = por %p503, %p504
      %p506 = scmp.ne.s32.totalorder %s492, %s493
      %p507 = scmp.eq.s32.totalorder %s39, 1
      %p508 = por %p506, %p507
      %p510 = scmp.ne.s32.totalorder %s493, %s509
      %p511 = scmp.eq.s32.totalorder %s39, 0
      %p512 = por %p510, %p511
      %p513 = scmp.le.s32.totalorder 1, %s33
      %p514 = scmp.lt.s32.totalorder %s33, 3
      %p515 = pnand %p513, %p514
      %p516 = pneg %p515
      // Predicated region
      $region9: #{autoencoder_forward.1} parent=5 // pred_check
        _
      $region10: #{autoencoder_forward.1} parent=5 // pred_check_branch
        %518 = sbr.rel (%p515) target = $region12
      $region11: #{autoencoder_forward.1} parent=5 // pred_region
        %s519 = ssub.s32 %s33, 1
        // Predicated region
        $region13: #{autoencoder_forward.1} parent=11 // pred_check
          %p520 = pneg %p80
        $region14: #{autoencoder_forward.1} parent=11 // pred_check_branch
          %522 = sbr.rel (%p520) target = $region16
        $region15: #{autoencoder_forward.1} parent=11 // pred_region
          _
        $region16: #{autoencoder_forward.1} parent=11 // pred_fallthru
          _
        // Predicated region
        $region17: #{autoencoder_forward.1} parent=11 // pred_check
          %p523 = pneg %p101
        $region18: #{autoencoder_forward.1} parent=11 // pred_check_branch
          %525 = sbr.rel (%p523) target = $region20
        $region19: #{autoencoder_forward.1} parent=11 // pred_region
          _
        $region20: #{autoencoder_forward.1} parent=11 // pred_fallthru
          _
        // Predicated region
        $region21: #{autoencoder_forward.1} parent=11 // pred_check
          %p526 = pneg %p122
        $region22: #{autoencoder_forward.1} parent=11 // pred_check_branch
          %528 = sbr.rel (%p526) target = $region24
        $region23: #{autoencoder_forward.1} parent=11 // pred_region
          %530 = vsyncadd [#allocation3], 0
          %s531 = sshll.u32 %s3, 4
          %s532 = int_to_ptr.hbm [resolvable:$true] %s531
          %s533 = sshll.u32 [#allocation2], 4
          %s534 = int_to_ptr.vmem [resolvable:$true] %s533
          %539 = dma.hbm_to_vmem [thread:$0]  %s532, 2048, %s534, [#allocation3], 64, 64, 4
        $region24: #{autoencoder_forward.1} parent=11 // pred_fallthru
          _
        // Predicated region
        $region25: #{autoencoder_forward.1} parent=11 // pred_check
          %p540 = pneg %p143
        $region26: #{autoencoder_forward.1} parent=11 // pred_check_branch
          %542 = sbr.rel (%p540) target = $region28
        $region27: #{autoencoder_forward.1} parent=11 // pred_region
          %544 = vsyncadd [#allocation5], 0
          %s545 = sshll.u32 %s4, 4
          %s546 = int_to_ptr.hbm [resolvable:$true] %s545
          %s547 = sshll.u32 [#allocation4], 4
          %s548 = int_to_ptr.vmem [resolvable:$true] %s547
          %553 = dma.hbm_to_vmem [thread:$0]  %s546, 1024, %s548, [#allocation5], 64, 64, 4
        $region28: #{autoencoder_forward.1} parent=11 // pred_fallthru
          _
        // Predicated region
        $region29: #{autoencoder_forward.1} parent=11 // pred_check
          %p554 = pneg %p164
        $region30: #{autoencoder_forward.1} parent=11 // pred_check_branch
          %556 = sbr.rel (%p554) target = $region32
        $region31: #{autoencoder_forward.1} parent=11 // pred_region
          %558 = vsyncadd [#allocation5], 0
          %s559 = sshll.u32 %s5, 4
          %s560 = int_to_ptr.hbm [resolvable:$true] %s559
          %s561 = sshll.u32 [#allocation6], 4
          %s562 = int_to_ptr.vmem [resolvable:$true] %s561
          %567 = dma.hbm_to_vmem [thread:$0]  %s560, 1024, %s562, [#allocation5], 64, 64, 4
        $region32: #{autoencoder_forward.1} parent=11 // pred_fallthru
          _
        // Predicated region
        $region33: #{autoencoder_forward.1} parent=11 // pred_check
          %p568 = pneg %p185
        $region34: #{autoencoder_forward.1} parent=11 // pred_check_branch
          %570 = sbr.rel (%p568) target = $region36
        $region35: #{autoencoder_forward.1} parent=11 // pred_region
          %572 = vsyncadd [#allocation8], 0
          %s573 = sshll.u32 %s6, 4
          %s574 = int_to_ptr.hbm [resolvable:$true] %s573
          %s575 = sshll.u32 [#allocation7], 4
          %s576 = int_to_ptr.vmem [resolvable:$true] %s575
          %581 = dma.hbm_to_vmem [thread:$0]  %s574, 1024, %s576, [#allocation8], 64, 64, 4
        $region36: #{autoencoder_forward.1} parent=11 // pred_fallthru
          _
        // Predicated region
        $region37: #{autoencoder_forward.1} parent=11 // pred_check
          %p582 = pneg %p206
        $region38: #{autoencoder_forward.1} parent=11 // pred_check_branch
          %584 = sbr.rel (%p582) target = $region40
        $region39: #{autoencoder_forward.1} parent=11 // pred_region
          %586 = vsyncadd [#allocation8], 0
          %s587 = sshll.u32 %s7, 4
          %s588 = int_to_ptr.hbm [resolvable:$true] %s587
          %s589 = sshll.u32 [#allocation9], 4
          %s590 = int_to_ptr.vmem [resolvable:$true] %s589
          %595 = dma.hbm_to_vmem [thread:$0]  %s588, 1024, %s590, [#allocation8], 64, 64, 4
        $region40: #{autoencoder_forward.1} parent=11 // pred_fallthru
          _
        // Predicated region
        $region41: #{autoencoder_forward.1} parent=11 // pred_check
          %p596 = pneg %p227
        $region42: #{autoencoder_forward.1} parent=11 // pred_check_branch
          %598 = sbr.rel (%p596) target = $region44
        $region43: #{autoencoder_forward.1} parent=11 // pred_region
          %600 = vsyncadd [#allocation11], 0
          %s601 = sshll.u32 %s8, 4
          %s602 = int_to_ptr.hbm [resolvable:$true] %s601
          %s603 = sshll.u32 [#allocation10], 4
          %s604 = int_to_ptr.vmem [resolvable:$true] %s603
          %609 = dma.hbm_to_vmem [thread:$0]  %s602, 2048, %s604, [#allocation11], 128, 128, 8
        $region44: #{autoencoder_forward.1} parent=11 // pred_fallthru
          _
        // Predicated region
        $region45: #{autoencoder_forward.1} parent=11 // pred_check
          %p610 = pneg %p248
        $region46: #{autoencoder_forward.1} parent=11 // pred_check_branch
          %612 = sbr.rel (%p610) target = $region48
        $region47: #{autoencoder_forward.1} parent=11 // pred_region
          _
        $region48: #{autoencoder_forward.1} parent=11 // pred_fallthru
          _
        // Predicated region
        $region49: #{autoencoder_forward.1} parent=11 // pred_check
          %p613 = pneg %p269
        $region50: #{autoencoder_forward.1} parent=11 // pred_check_branch
          %615 = sbr.rel (%p613) target = $region52
        $region51: #{autoencoder_forward.1} parent=11 // pred_region
          _
        $region52: #{autoencoder_forward.1} parent=11 // pred_fallthru
          _
        // Predicated region
        $region53: #{autoencoder_forward.1} parent=11 // pred_check
          %p616 = pneg %p290
        $region54: #{autoencoder_forward.1} parent=11 // pred_check_branch
          %618 = sbr.rel (%p616) target = $region56
        $region55: #{autoencoder_forward.1} parent=11 // pred_region
          %620 = vsyncadd [#allocation11], 0
          %s622 = sshll.u32 %s11, 4
          %s623 = int_to_ptr.hbm [resolvable:$true] %s622
          %s624 = sshll.u32 [#allocation12], 4
          %s625 = int_to_ptr.vmem [resolvable:$true] %s624
          %627 = dma.hbm_to_vmem [thread:$0]  %s623, 64, %s625, [#allocation11]
        $region56: #{autoencoder_forward.1} parent=11 // pred_fallthru
          _
        // Predicated region
        $region57: #{autoencoder_forward.1} parent=11 // pred_check
          %p628 = pneg %p311
        $region58: #{autoencoder_forward.1} parent=11 // pred_check_branch
          %630 = sbr.rel (%p628) target = $region60
        $region59: #{autoencoder_forward.1} parent=11 // pred_region
          _
        $region60: #{autoencoder_forward.1} parent=11 // pred_fallthru
          _
        // Predicated region
        $region61: #{autoencoder_forward.1} parent=11 // pred_check
          %p631 = pneg %p332
        $region62: #{autoencoder_forward.1} parent=11 // pred_check_branch
          %633 = sbr.rel (%p631) target = $region64
        $region63: #{autoencoder_forward.1} parent=11 // pred_region
          %635 = vsyncadd [#allocation14], 0
          %s637 = sshll.u32 %s13, 4
          %s638 = int_to_ptr.hbm [resolvable:$true] %s637
          %s639 = sshll.u32 [#allocation13], 4
          %s640 = int_to_ptr.vmem [resolvable:$true] %s639
          %642 = dma.hbm_to_vmem [thread:$0]  %s638, 16, %s640, [#allocation14]
        $region64: #{autoencoder_forward.1} parent=11 // pred_fallthru
          _
        // Predicated region
        $region65: #{autoencoder_forward.1} parent=11 // pred_check
          %p643 = pneg %p353
        $region66: #{autoencoder_forward.1} parent=11 // pred_check_branch
          %645 = sbr.rel (%p643) target = $region68
        $region67: #{autoencoder_forward.1} parent=11 // pred_region
          %647 = vsyncadd [#allocation14], 0
          %s649 = sshll.u32 %s14, 4
          %s650 = int_to_ptr.hbm [resolvable:$true] %s649
          %s651 = sshll.u32 [#allocation15], 4
          %s652 = int_to_ptr.vmem [resolvable:$true] %s651
          %654 = dma.hbm_to_vmem [thread:$0]  %s650, 16, %s652, [#allocation14]
        $region68: #{autoencoder_forward.1} parent=11 // pred_fallthru
          _
        // Predicated region
        $region69: #{autoencoder_forward.1} parent=11 // pred_check
          %p655 = pneg %p374
        $region70: #{autoencoder_forward.1} parent=11 // pred_check_branch
          %657 = sbr.rel (%p655) target = $region72
        $region71: #{autoencoder_forward.1} parent=11 // pred_region
          %659 = vsyncadd [#allocation17], 0
          %s661 = sshll.u32 %s15, 4
          %s662 = int_to_ptr.hbm [resolvable:$true] %s661
          %s663 = sshll.u32 [#allocation16], 4
          %s664 = int_to_ptr.vmem [resolvable:$true] %s663
          %666 = dma.hbm_to_vmem [thread:$0]  %s662, 16, %s664, [#allocation17]
        $region72: #{autoencoder_forward.1} parent=11 // pred_fallthru
          _
        // Predicated region
        $region73: #{autoencoder_forward.1} parent=11 // pred_check
          %p667 = pneg %p395
        $region74: #{autoencoder_forward.1} parent=11 // pred_check_branch
          %669 = sbr.rel (%p667) target = $region76
        $region75: #{autoencoder_forward.1} parent=11 // pred_region
          _
        $region76: #{autoencoder_forward.1} parent=11 // pred_fallthru
          _
        // Predicated region
        $region77: #{autoencoder_forward.1} parent=11 // pred_check
          %p670 = pneg %p416
        $region78: #{autoencoder_forward.1} parent=11 // pred_check_branch
          %672 = sbr.rel (%p670) target = $region80
        $region79: #{autoencoder_forward.1} parent=11 // pred_region
          _
        $region80: #{autoencoder_forward.1} parent=11 // pred_fallthru
          _
        // Predicated region
        $region81: #{autoencoder_forward.1} parent=11 // pred_check
          %p673 = pneg %p437
        $region82: #{autoencoder_forward.1} parent=11 // pred_check_branch
          %675 = sbr.rel (%p673) target = $region84
        $region83: #{autoencoder_forward.1} parent=11 // pred_region
          _
        $region84: #{autoencoder_forward.1} parent=11 // pred_fallthru
          _
        // Predicated region
        $region85: #{autoencoder_forward.1} parent=11 // pred_check
          %p676 = pneg %p458
        $region86: #{autoencoder_forward.1} parent=11 // pred_check_branch
          %678 = sbr.rel (%p676) target = $region88
        $region87: #{autoencoder_forward.1} parent=11 // pred_region
          _
        $region88: #{autoencoder_forward.1} parent=11 // pred_fallthru
          _
        // Predicated region
        $region89: #{autoencoder_forward.1} parent=11 // pred_check
          %p679 = pneg %p479
        $region90: #{autoencoder_forward.1} parent=11 // pred_check_branch
          %681 = sbr.rel (%p679) target = $region92
        $region91: #{autoencoder_forward.1} parent=11 // pred_region
          _
        $region92: #{autoencoder_forward.1} parent=11 // pred_fallthru
          _
      $region12: #{autoencoder_forward.1} parent=5 // pred_fallthru
        _
      %p682 = scmp.lt.s32.totalorder %s33, 2
      // Predicated region
      $region93: #{autoencoder_forward.1} parent=5 // pred_check
        %p683 = pneg %p682
      $region94: #{autoencoder_forward.1} parent=5 // pred_check_branch
        %685 = sbr.rel (%p683) target = $region96
      $region95: #{autoencoder_forward.1} parent=5 // pred_region
        // Predicated region
        $region97: #{autoencoder_forward.1} parent=95 // pred_check
          %p686 = pneg %p53
        $region98: #{autoencoder_forward.1} parent=95 // pred_check_branch
          %688 = sbr.rel (%p686) target = $region100
        $region99: #{autoencoder_forward.1} parent=95 // pred_region
          %s689 = smul.u32 32, %s33
          %p690 = scmp.lt.s32.totalorder %s689, 63
          %s691 = scalar_select %p690, %s689, 63
          %s692 = smul.addr %s691, 4
          %s693 = scalar_lea.vmem %s0, %s692
          %s694 = smul.u32 32, %s33
        $region100: #{autoencoder_forward.1} parent=95 // pred_fallthru
          _
      $region96: #{autoencoder_forward.1} parent=5 // pred_fallthru
        _
      %p695 = scmp.le.s32.totalorder 1, %s33
      %p696 = scmp.lt.s32.totalorder %s33, 3
      %p697 = pnand %p695, %p696
      %p698 = pneg %p697
      // Predicated region
      $region101: #{autoencoder_forward.1} parent=5 // pred_check
        _
      $region102: #{autoencoder_forward.1} parent=5 // pred_check_branch
        %700 = sbr.rel (%p697) target = $region104
      $region103: #{autoencoder_forward.1} parent=5 // pred_region
        %s701 = ssub.s32 %s33, 1
        // Predicated region
        $region105: #{autoencoder_forward.1} parent=103 // pred_check
          %p702 = pneg %p122
        $region106: #{autoencoder_forward.1} parent=103 // pred_check_branch
          %704 = sbr.rel (%p702) target = $region108
        $region107: #{autoencoder_forward.1} parent=103 // pred_region
          %706 = dma.done [#allocation3], 2048
        $region108: #{autoencoder_forward.1} parent=103 // pred_fallthru
          _
        // Predicated region
        $region109: #{autoencoder_forward.1} parent=103 // pred_check
          %p707 = pneg %p143
        $region110: #{autoencoder_forward.1} parent=103 // pred_check_branch
          %709 = sbr.rel (%p707) target = $region112
        $region111: #{autoencoder_forward.1} parent=103 // pred_region
          %711 = dma.done [#allocation5], 1024
        $region112: #{autoencoder_forward.1} parent=103 // pred_fallthru
          _
        // Predicated region
        $region113: #{autoencoder_forward.1} parent=103 // pred_check
          %p712 = pneg %p164
        $region114: #{autoencoder_forward.1} parent=103 // pred_check_branch
          %714 = sbr.rel (%p712) target = $region116
        $region115: #{autoencoder_forward.1} parent=103 // pred_region
          %716 = dma.done [#allocation5], 1024
        $region116: #{autoencoder_forward.1} parent=103 // pred_fallthru
          _
        // Predicated region
        $region117: #{autoencoder_forward.1} parent=103 // pred_check
          %p717 = pneg %p185
        $region118: #{autoencoder_forward.1} parent=103 // pred_check_branch
          %719 = sbr.rel (%p717) target = $region120
        $region119: #{autoencoder_forward.1} parent=103 // pred_region
          %721 = dma.done [#allocation8], 1024
        $region120: #{autoencoder_forward.1} parent=103 // pred_fallthru
          _
        // Predicated region
        $region121: #{autoencoder_forward.1} parent=103 // pred_check
          %p722 = pneg %p206
        $region122: #{autoencoder_forward.1} parent=103 // pred_check_branch
          %724 = sbr.rel (%p722) target = $region124
        $region123: #{autoencoder_forward.1} parent=103 // pred_region
          %726 = dma.done [#allocation8], 1024
        $region124: #{autoencoder_forward.1} parent=103 // pred_fallthru
          _
        // Predicated region
        $region125: #{autoencoder_forward.1} parent=103 // pred_check
          %p727 = pneg %p227
        $region126: #{autoencoder_forward.1} parent=103 // pred_check_branch
          %729 = sbr.rel (%p727) target = $region128
        $region127: #{autoencoder_forward.1} parent=103 // pred_region
          %731 = dma.done [#allocation11], 2048
        $region128: #{autoencoder_forward.1} parent=103 // pred_fallthru
          _
        // Predicated region
        $region129: #{autoencoder_forward.1} parent=103 // pred_check
          %p732 = pneg %p290
        $region130: #{autoencoder_forward.1} parent=103 // pred_check_branch
          %734 = sbr.rel (%p732) target = $region132
        $region131: #{autoencoder_forward.1} parent=103 // pred_region
          %736 = dma.done [#allocation11], 64
        $region132: #{autoencoder_forward.1} parent=103 // pred_fallthru
          _
        // Predicated region
        $region133: #{autoencoder_forward.1} parent=103 // pred_check
          %p737 = pneg %p332
        $region134: #{autoencoder_forward.1} parent=103 // pred_check_branch
          %739 = sbr.rel (%p737) target = $region136
        $region135: #{autoencoder_forward.1} parent=103 // pred_region
          %741 = dma.done [#allocation14], 16
        $region136: #{autoencoder_forward.1} parent=103 // pred_fallthru
          _
        // Predicated region
        $region137: #{autoencoder_forward.1} parent=103 // pred_check
          %p742 = pneg %p353
        $region138: #{autoencoder_forward.1} parent=103 // pred_check_branch
          %744 = sbr.rel (%p742) target = $region140
        $region139: #{autoencoder_forward.1} parent=103 // pred_region
          %746 = dma.done [#allocation14], 16
        $region140: #{autoencoder_forward.1} parent=103 // pred_fallthru
          _
        // Predicated region
        $region141: #{autoencoder_forward.1} parent=103 // pred_check
          %p747 = pneg %p374
        $region142: #{autoencoder_forward.1} parent=103 // pred_check_branch
          %749 = sbr.rel (%p747) target = $region144
        $region143: #{autoencoder_forward.1} parent=103 // pred_region
          %751 = dma.done [#allocation17], 16
        $region144: #{autoencoder_forward.1} parent=103 // pred_fallthru
          _
        %s752 = smul.u32 32, %s38
        %p753 = scmp.lt.s32.totalorder %s752, 63
        %s754 = scalar_select %p753, %s752, 63
        %s755 = smul.addr %s754, 4
        %s756 = scalar_lea.vmem %s0, %s755
        %p757 = pneg %p59
        %p758 = pneg %p56
        %p759 = pneg %p80
        %p760 = pneg %p77
        %p761 = pneg %p101
        %p762 = pneg %p98
        %p763 = pneg %p122
        %p764 = pneg %p119
        %p765 = pneg %p143
        %p766 = pneg %p140
        %p767 = pneg %p164
        %p768 = pneg %p161
        %p769 = pneg %p185
        %p770 = pneg %p182
        %p771 = pneg %p206
        %p772 = pneg %p203
        %p773 = pneg %p227
        %p774 = pneg %p224
        %p775 = pneg %p248
        %p776 = pneg %p245
        %p777 = pneg %p269
        %p778 = pneg %p266
        %p779 = pneg %p290
        %p780 = pneg %p287
        %p781 = pneg %p311
        %p782 = pneg %p308
        %p783 = pneg %p332
        %p784 = pneg %p329
        %p785 = pneg %p353
        %p786 = pneg %p350
        %p787 = pneg %p374
        %p788 = pneg %p371
        %p789 = pneg %p395
        %p790 = pneg %p392
        %p791 = pneg %p416
        %p792 = pneg %p413
        %p793 = pneg %p437
        %p794 = pneg %p434
        %p795 = pneg %p458
        %p796 = pneg %p455
        %p797 = pneg %p479
        %p798 = pneg %p476
        %p799 = pneg %p505
        %p800 = pneg %p502
        %s801 = smul.u32 32, %s38
        %p802 = scmp.lt.s32.totalorder %s801, 63
        %s803 = scalar_select %p802, %s801, 63
        %s804 = smul.addr %s803, 8
        %s805 = scalar_lea.vmem %s21, %s804
        %s806 = smul.u32 32, %s38
        %p807 = scmp.lt.s32.totalorder %s806, 63
        %s808 = scalar_select %p807, %s806, 63
        %s809 = smul.addr %s808, 4
        %s810 = scalar_lea.vmem %s0, %s809
        %s811 = smul.u32 32, %s38
        %s812 = smul.u32 32, %s38
        %p813 = scmp.lt.s32.totalorder %s812, 63
        %s814 = scalar_select %p813, %s812, 63
        %s815 = smul.addr %s814, 8
        %s816 = scalar_lea.vmem %s21, %s815
        %s817 = smul.u32 32, %s38
        %v818 = vld [vmem:[%s810] sm:$0xf]
        %v819 = vld [vmem:[%s810 + $0x4] sm:$0xf]
        %v820 = vld [vmem:[%s810 + $0x8] sm:$0xf]
        %v821 = vld [vmem:[%s810 + $0xc] sm:$0xf]
        %v822 = vld [vmem:[%s810 + $0x10] sm:$0xf]
        %v823 = vld [vmem:[%s810 + $0x14] sm:$0xf]
        %v824 = vld [vmem:[%s810 + $0x18] sm:$0xf]
        %v825 = vld [vmem:[%s810 + $0x1c] sm:$0xf]
        %v826 = vld [vmem:[%s810 + $0x20] sm:$0xf]
        %v827 = vld [vmem:[%s810 + $0x24] sm:$0xf]
        %v828 = vld [vmem:[%s810 + $0x28] sm:$0xf]
        %v829 = vld [vmem:[%s810 + $0x2c] sm:$0xf]
        %v830 = vld [vmem:[%s810 + $0x30] sm:$0xf]
        %v831 = vld [vmem:[%s810 + $0x34] sm:$0xf]
        %v832 = vld [vmem:[%s810 + $0x38] sm:$0xf]
        %v833 = vld [vmem:[%s810 + $0x3c] sm:$0xf]
        %v834 = vld [vmem:[%s810 + $0x40] sm:$0xf]
        %v835 = vld [vmem:[%s810 + $0x44] sm:$0xf]
        %v836 = vld [vmem:[%s810 + $0x48] sm:$0xf]
        %v837 = vld [vmem:[%s810 + $0x4c] sm:$0xf]
        %v838 = vld [vmem:[%s810 + $0x50] sm:$0xf]
        %v839 = vld [vmem:[%s810 + $0x54] sm:$0xf]
        %v840 = vld [vmem:[%s810 + $0x58] sm:$0xf]
        %v841 = vld [vmem:[%s810 + $0x5c] sm:$0xf]
        %v842 = vld [vmem:[%s810 + $0x60] sm:$0xf]
        %v843 = vld [vmem:[%s810 + $0x64] sm:$0xf]
        %v844 = vld [vmem:[%s810 + $0x68] sm:$0xf]
        %v845 = vld [vmem:[%s810 + $0x6c] sm:$0xf]
        %v846 = vld [vmem:[%s810 + $0x70] sm:$0xf]
        %v847 = vld [vmem:[%s810 + $0x74] sm:$0xf]
        %v848 = vld [vmem:[%s810 + $0x78] sm:$0xf]
        %v849 = vld [vmem:[%s810 + $0x7c] sm:$0xf]
        %v850 = vld [vmem:[%s1] sm:$0xff]
        %v851 = vld [vmem:[%s1 + $0x8] sm:$0xff]
        %v852 = vld [vmem:[%s1 + $0x10] sm:$0xff]
        %v853 = vld [vmem:[%s1 + $0x18] sm:$0xff]
        %v854 = vld [vmem:[%s1 + $0x20] sm:$0xff]
        %v855 = vld [vmem:[%s1 + $0x28] sm:$0xff]
        %v856 = vld [vmem:[%s1 + $0x30] sm:$0xff]
        %v857 = vld [vmem:[%s1 + $0x38] sm:$0xff]
        %v858 = vld [vmem:[%s1 + $0x40] sm:$0xff]
        %v859 = vld [vmem:[%s1 + $0x48] sm:$0xff]
        %v860 = vld [vmem:[%s1 + $0x50] sm:$0xff]
        %v861 = vld [vmem:[%s1 + $0x58] sm:$0xff]
        %v862 = vld [vmem:[%s1 + $0x60] sm:$0xff]
        %v863 = vld [vmem:[%s1 + $0x68] sm:$0xff]
        %v864 = vld [vmem:[%s1 + $0x70] sm:$0xff]
        %v865 = vld [vmem:[%s1 + $0x78] sm:$0xff]
        %v866 = vld [vmem:[%s1 + $0x80] sm:$0xff]
        %v867 = vld [vmem:[%s1 + $0x88] sm:$0xff]
        %v868 = vld [vmem:[%s1 + $0x90] sm:$0xff]
        %v869 = vld [vmem:[%s1 + $0x98] sm:$0xff]
        %v870 = vld [vmem:[%s1 + $0xa0] sm:$0xff]
        %v871 = vld [vmem:[%s1 + $0xa8] sm:$0xff]
        %v872 = vld [vmem:[%s1 + $0xb0] sm:$0xff]
        %v873 = vld [vmem:[%s1 + $0xb8] sm:$0xff]
        %v874 = vld [vmem:[%s1 + $0xc0] sm:$0xff]
        %v875 = vld [vmem:[%s1 + $0xc8] sm:$0xff]
        %v876 = vld [vmem:[%s1 + $0xd0] sm:$0xff]
        %v877 = vld [vmem:[%s1 + $0xd8] sm:$0xff]
        %v878 = vld [vmem:[%s1 + $0xe0] sm:$0xff]
        %v879 = vld [vmem:[%s1 + $0xe8] sm:$0xff]
        %v880 = vld [vmem:[%s1 + $0xf0] sm:$0xff]
        %v881 = vld [vmem:[%s1 + $0xf8] sm:$0xff]
        %v882 = vld [vmem:[#allocation12] sm:$0xf]
        %v884 = vperm.slane %v882, 0
        %v885 = vperm.slane %v882, 1
        %v886 = vperm.slane %v882, 2
        %v887 = vperm.slane %v882, 3
        %v924 = vunpack.c.l.b16 %v818
        %v925 = vunpack.c.l.b16 %v819
        %v926 = vunpack.c.l.b16 %v820
        %v927 = vunpack.c.l.b16 %v821
        %v928 = vunpack.c.l.b16 %v822
        %v929 = vunpack.c.l.b16 %v823
        %v930 = vunpack.c.l.b16 %v824
        %v931 = vunpack.c.l.b16 %v825
        %v932 = vunpack.c.l.b16 %v826
        %v933 = vunpack.c.l.b16 %v827
        %v934 = vunpack.c.l.b16 %v828
        %v935 = vunpack.c.l.b16 %v829
        %v936 = vunpack.c.l.b16 %v830
        %v937 = vunpack.c.l.b16 %v831
        %v938 = vunpack.c.l.b16 %v832
        %v939 = vunpack.c.l.b16 %v833
        %v940 = vunpack.c.l.b16 %v834
        %v941 = vunpack.c.l.b16 %v835
        %v942 = vunpack.c.l.b16 %v836
        %v943 = vunpack.c.l.b16 %v837
        %v944 = vunpack.c.l.b16 %v838
        %v945 = vunpack.c.l.b16 %v839
        %v946 = vunpack.c.l.b16 %v840
        %v947 = vunpack.c.l.b16 %v841
        %v948 = vunpack.c.l.b16 %v842
        %v949 = vunpack.c.l.b16 %v843
        %v950 = vunpack.c.l.b16 %v844
        %v951 = vunpack.c.l.b16 %v845
        %v952 = vunpack.c.l.b16 %v846
        %v953 = vunpack.c.l.b16 %v847
        %v954 = vunpack.c.l.b16 %v848
        %v955 = vunpack.c.l.b16 %v849
        %v956 = vpack.c.b16 %v925, %v924
        %v957 = vpack.c.b16 %v927, %v926
        %v958 = vpack.c.b16 %v929, %v928
        %v959 = vpack.c.b16 %v931, %v930
        %v960 = vpack.c.b16 %v933, %v932
        %v961 = vpack.c.b16 %v935, %v934
        %v962 = vpack.c.b16 %v937, %v936
        %v963 = vpack.c.b16 %v939, %v938
        %v964 = vpack.c.b16 %v941, %v940
        %v965 = vpack.c.b16 %v943, %v942
        %v966 = vpack.c.b16 %v945, %v944
        %v967 = vpack.c.b16 %v947, %v946
        %v968 = vpack.c.b16 %v949, %v948
        %v969 = vpack.c.b16 %v951, %v950
        %v970 = vpack.c.b16 %v953, %v952
        %v971 = vpack.c.b16 %v955, %v954
        %v1020 = vunpack.c.l.b16 %v850
        %v1021 = vunpack.c.h.b16 %v850
        %v1022 = vunpack.c.l.b16 %v851
        %v1023 = vunpack.c.h.b16 %v851
        %v1024 = vunpack.c.l.b16 %v852
        %v1025 = vunpack.c.h.b16 %v852
        %v1026 = vunpack.c.l.b16 %v853
        %v1027 = vunpack.c.h.b16 %v853
        %v1028 = vunpack.c.l.b16 %v854
        %v1029 = vunpack.c.h.b16 %v854
        %v1030 = vunpack.c.l.b16 %v855
        %v1031 = vunpack.c.h.b16 %v855
        %v1032 = vunpack.c.l.b16 %v856
        %v1033 = vunpack.c.h.b16 %v856
        %v1034 = vunpack.c.l.b16 %v857
        %v1035 = vunpack.c.h.b16 %v857
        %v1036 = vunpack.c.l.b16 %v858
        %v1037 = vunpack.c.h.b16 %v858
        %v1038 = vunpack.c.l.b16 %v859
        %v1039 = vunpack.c.h.b16 %v859
        %v1040 = vunpack.c.l.b16 %v860
        %v1041 = vunpack.c.h.b16 %v860
        %v1042 = vunpack.c.l.b16 %v861
        %v1043 = vunpack.c.h.b16 %v861
        %v1044 = vunpack.c.l.b16 %v862
        %v1045 = vunpack.c.h.b16 %v862
        %v1046 = vunpack.c.l.b16 %v863
        %v1047 = vunpack.c.h.b16 %v863
        %v1048 = vunpack.c.l.b16 %v864
        %v1049 = vunpack.c.h.b16 %v864
        %v1050 = vunpack.c.l.b16 %v865
        %v1051 = vunpack.c.h.b16 %v865
        %v1052 = vunpack.c.l.b16 %v866
        %v1053 = vunpack.c.h.b16 %v866
        %v1054 = vunpack.c.l.b16 %v867
        %v1055 = vunpack.c.h.b16 %v867
        %v1056 = vunpack.c.l.b16 %v868
        %v1057 = vunpack.c.h.b16 %v868
        %v1058 = vunpack.c.l.b16 %v869
        %v1059 = vunpack.c.h.b16 %v869
        %v1060 = vunpack.c.l.b16 %v870
        %v1061 = vunpack.c.h.b16 %v870
        %v1062 = vunpack.c.l.b16 %v871
        %v1063 = vunpack.c.h.b16 %v871
        %v1064 = vunpack.c.l.b16 %v872
        %v1065 = vunpack.c.h.b16 %v872
        %v1066 = vunpack.c.l.b16 %v873
        %v1067 = vunpack.c.h.b16 %v873
        %v1068 = vunpack.c.l.b16 %v874
        %v1069 = vunpack.c.h.b16 %v874
        %v1070 = vunpack.c.l.b16 %v875
        %v1071 = vunpack.c.h.b16 %v875
        %v1072 = vunpack.c.l.b16 %v876
        %v1073 = vunpack.c.h.b16 %v876
        %v1074 = vunpack.c.l.b16 %v877
        %v1075 = vunpack.c.h.b16 %v877
        %v1076 = vunpack.c.l.b16 %v878
        %v1077 = vunpack.c.h.b16 %v878
        %v1078 = vunpack.c.l.b16 %v879
        %v1079 = vunpack.c.h.b16 %v879
        %v1080 = vunpack.c.l.b16 %v880
        %v1081 = vunpack.c.h.b16 %v880
        %v1082 = vunpack.c.l.b16 %v881
        %v1083 = vunpack.c.h.b16 %v881
        %v1084 = vpack.c.b16 %v1024, %v1020
        %v1085 = vpack.c.b16 %v1025, %v1021
        %v1086 = vpack.c.b16 %v1026, %v1022
        %v1087 = vpack.c.b16 %v1027, %v1023
        %v1088 = vpack.c.b16 %v1032, %v1028
        %v1089 = vpack.c.b16 %v1033, %v1029
        %v1090 = vpack.c.b16 %v1034, %v1030
        %v1091 = vpack.c.b16 %v1035, %v1031
        %v1092 = vpack.c.b16 %v1040, %v1036
        %v1093 = vpack.c.b16 %v1041, %v1037
        %v1094 = vpack.c.b16 %v1042, %v1038
        %v1095 = vpack.c.b16 %v1043, %v1039
        %v1096 = vpack.c.b16 %v1048, %v1044
        %v1097 = vpack.c.b16 %v1049, %v1045
        %v1098 = vpack.c.b16 %v1050, %v1046
        %v1099 = vpack.c.b16 %v1051, %v1047
        %v1100 = vpack.c.b16 %v1056, %v1052
        %v1101 = vpack.c.b16 %v1057, %v1053
        %v1102 = vpack.c.b16 %v1058, %v1054
        %v1103 = vpack.c.b16 %v1059, %v1055
        %v1104 = vpack.c.b16 %v1064, %v1060
        %v1105 = vpack.c.b16 %v1065, %v1061
        %v1106 = vpack.c.b16 %v1066, %v1062
        %v1107 = vpack.c.b16 %v1067, %v1063
        %v1108 = vpack.c.b16 %v1072, %v1068
        %v1109 = vpack.c.b16 %v1073, %v1069
        %v1110 = vpack.c.b16 %v1074, %v1070
        %v1111 = vpack.c.b16 %v1075, %v1071
        %v1112 = vpack.c.b16 %v1080, %v1076
        %v1113 = vpack.c.b16 %v1081, %v1077
        %v1114 = vpack.c.b16 %v1082, %v1078
        %v1115 = vpack.c.b16 %v1083, %v1079
        %1148 = vmatpush.bf16.msra.mxu0 %v1112
        %1149 = vmatpush.bf16.msra.mxu0 %v1108
        %1150 = vmatpush.bf16.msra.mxu0 %v1104
        %1151 = vmatpush.bf16.msra.mxu0 %v1100
        %1152 = vmatpush.bf16.msra.mxu0 %v1096
        %1153 = vmatpush.bf16.msra.mxu0 %v1092
        %1154 = vmatpush.bf16.msra.mxu0 %v1088
        %1155 = vmatpush.bf16.msra.mxu0 %v1084
        %1156 = vmatmul.bf16.gmra.mxu0 %v956
        %v1157 = vpop.f32.mrf.mxu0
        %v1158 = vadd.f32 %v884, %v1157
        %v1159 = vpop.f32.mrf.mxu0
        %v1160 = vadd.f32 %v884, %v1159
        %1161 = vmatmul.bf16.gmra.mxu0 %v957
        %v1162 = vpop.f32.mrf.mxu0
        %v1163 = vadd.f32 %v884, %v1162
        %v1164 = vpop.f32.mrf.mxu0
        %v1165 = vadd.f32 %v884, %v1164
        %1166 = vmatmul.bf16.gmra.mxu0 %v958
        %v1167 = vpop.f32.mrf.mxu0
        %v1168 = vadd.f32 %v884, %v1167
        %v1169 = vpop.f32.mrf.mxu0
        %v1170 = vadd.f32 %v884, %v1169
        %1171 = vmatmul.bf16.gmra.mxu0 %v959
        %v1172 = vpop.f32.mrf.mxu0
        %v1173 = vadd.f32 %v884, %v1172
        %v1174 = vpop.f32.mrf.mxu0
        %v1175 = vadd.f32 %v884, %v1174
        %1176 = vmatmul.bf16.gmra.mxu0 %v960
        %v1177 = vpop.f32.mrf.mxu0
        %v1178 = vadd.f32 %v884, %v1177
        %v1179 = vpop.f32.mrf.mxu0
        %v1180 = vadd.f32 %v884, %v1179
        %1181 = vmatmul.bf16.gmra.mxu0 %v961
        %v1182 = vpop.f32.mrf.mxu0
        %v1183 = vadd.f32 %v884, %v1182
        %v1184 = vpop.f32.mrf.mxu0
        %v1185 = vadd.f32 %v884, %v1184
        %1186 = vmatmul.bf16.gmra.mxu0 %v962
        %v1187 = vpop.f32.mrf.mxu0
        %v1188 = vadd.f32 %v884, %v1187
        %v1189 = vpop.f32.mrf.mxu0
        %v1190 = vadd.f32 %v884, %v1189
        %1191 = vmatmul.bf16.gmra.mxu0 %v963
        %v1192 = vpop.f32.mrf.mxu0
        %v1193 = vadd.f32 %v884, %v1192
        %v1194 = vpop.f32.mrf.mxu0
        %v1195 = vadd.f32 %v884, %v1194
        %1196 = vmatmul.bf16.gmra.mxu0 %v964
        %v1197 = vpop.f32.mrf.mxu0
        %v1198 = vadd.f32 %v884, %v1197
        %v1199 = vpop.f32.mrf.mxu0
        %v1200 = vadd.f32 %v884, %v1199
        %1201 = vmatmul.bf16.gmra.mxu0 %v965
        %v1202 = vpop.f32.mrf.mxu0
        %v1203 = vadd.f32 %v884, %v1202
        %v1204 = vpop.f32.mrf.mxu0
        %v1205 = vadd.f32 %v884, %v1204
        %1206 = vmatmul.bf16.gmra.mxu0 %v966
        %v1207 = vpop.f32.mrf.mxu0
        %v1208 = vadd.f32 %v884, %v1207
        %v1209 = vpop.f32.mrf.mxu0
        %v1210 = vadd.f32 %v884, %v1209
        %1211 = vmatmul.bf16.gmra.mxu0 %v967
        %v1212 = vpop.f32.mrf.mxu0
        %v1213 = vadd.f32 %v884, %v1212
        %v1214 = vpop.f32.mrf.mxu0
        %v1215 = vadd.f32 %v884, %v1214
        %1216 = vmatmul.bf16.gmra.mxu0 %v968
        %v1217 = vpop.f32.mrf.mxu0
        %v1218 = vadd.f32 %v884, %v1217
        %v1219 = vpop.f32.mrf.mxu0
        %v1220 = vadd.f32 %v884, %v1219
        %1221 = vmatmul.bf16.gmra.mxu0 %v969
        %v1222 = vpop.f32.mrf.mxu0
        %v1223 = vadd.f32 %v884, %v1222
        %v1224 = vpop.f32.mrf.mxu0
        %v1225 = vadd.f32 %v884, %v1224
        %1226 = vmatmul.bf16.gmra.mxu0 %v970
        %v1227 = vpop.f32.mrf.mxu0
        %v1228 = vadd.f32 %v884, %v1227
        %v1229 = vpop.f32.mrf.mxu0
        %v1230 = vadd.f32 %v884, %v1229
        %1231 = vmatmul.bf16.gmra.mxu0 %v971
        %v1232 = vpop.f32.mrf.mxu0
        %v1233 = vadd.f32 %v884, %v1232
        %v1234 = vpop.f32.mrf.mxu0
        %v1235 = vadd.f32 %v884, %v1234
        %1236 = vdwg.mxu0
        %1237 = vmatpush.bf16.msra.mxu0 %v1113
        %1238 = vmatpush.bf16.msra.mxu0 %v1109
        %1239 = vmatpush.bf16.msra.mxu0 %v1105
        %1240 = vmatpush.bf16.msra.mxu0 %v1101
        %1241 = vmatpush.bf16.msra.mxu0 %v1097
        %1242 = vmatpush.bf16.msra.mxu0 %v1093
        %1243 = vmatpush.bf16.msra.mxu0 %v1089
        %1244 = vmatpush.bf16.msra.mxu0 %v1085
        %1245 = vmatmul.bf16.gmra.mxu0 %v956
        %v1246 = vpop.f32.mrf.mxu0
        %v1247 = vadd.f32 %v885, %v1246
        %v1248 = vpop.f32.mrf.mxu0
        %v1249 = vadd.f32 %v885, %v1248
        %1250 = vmatmul.bf16.gmra.mxu0 %v957
        %v1251 = vpop.f32.mrf.mxu0
        %v1252 = vadd.f32 %v885, %v1251
        %v1253 = vpop.f32.mrf.mxu0
        %v1254 = vadd.f32 %v885, %v1253
        %1255 = vmatmul.bf16.gmra.mxu0 %v958
        %v1256 = vpop.f32.mrf.mxu0
        %v1257 = vadd.f32 %v885, %v1256
        %v1258 = vpop.f32.mrf.mxu0
        %v1259 = vadd.f32 %v885, %v1258
        %1260 = vmatmul.bf16.gmra.mxu0 %v959
        %v1261 = vpop.f32.mrf.mxu0
        %v1262 = vadd.f32 %v885, %v1261
        %v1263 = vpop.f32.mrf.mxu0
        %v1264 = vadd.f32 %v885, %v1263
        %1265 = vmatmul.bf16.gmra.mxu0 %v960
        %v1266 = vpop.f32.mrf.mxu0
        %v1267 = vadd.f32 %v885, %v1266
        %v1268 = vpop.f32.mrf.mxu0
        %v1269 = vadd.f32 %v885, %v1268
        %1270 = vmatmul.bf16.gmra.mxu0 %v961
        %v1271 = vpop.f32.mrf.mxu0
        %v1272 = vadd.f32 %v885, %v1271
        %v1273 = vpop.f32.mrf.mxu0
        %v1274 = vadd.f32 %v885, %v1273
        %1275 = vmatmul.bf16.gmra.mxu0 %v962
        %v1276 = vpop.f32.mrf.mxu0
        %v1277 = vadd.f32 %v885, %v1276
        %v1278 = vpop.f32.mrf.mxu0
        %v1279 = vadd.f32 %v885, %v1278
        %1280 = vmatmul.bf16.gmra.mxu0 %v963
        %v1281 = vpop.f32.mrf.mxu0
        %v1282 = vadd.f32 %v885, %v1281
        %v1283 = vpop.f32.mrf.mxu0
        %v1284 = vadd.f32 %v885, %v1283
        %1285 = vmatmul.bf16.gmra.mxu0 %v964
        %v1286 = vpop.f32.mrf.mxu0
        %v1287 = vadd.f32 %v885, %v1286
        %v1288 = vpop.f32.mrf.mxu0
        %v1289 = vadd.f32 %v885, %v1288
        %1290 = vmatmul.bf16.gmra.mxu0 %v965
        %v1291 = vpop.f32.mrf.mxu0
        %v1292 = vadd.f32 %v885, %v1291
        %v1293 = vpop.f32.mrf.mxu0
        %v1294 = vadd.f32 %v885, %v1293
        %1295 = vmatmul.bf16.gmra.mxu0 %v966
        %v1296 = vpop.f32.mrf.mxu0
        %v1297 = vadd.f32 %v885, %v1296
        %v1298 = vpop.f32.mrf.mxu0
        %v1299 = vadd.f32 %v885, %v1298
        %1300 = vmatmul.bf16.gmra.mxu0 %v967
        %v1301 = vpop.f32.mrf.mxu0
        %v1302 = vadd.f32 %v885, %v1301
        %v1303 = vpop.f32.mrf.mxu0
        %v1304 = vadd.f32 %v885, %v1303
        %1305 = vmatmul.bf16.gmra.mxu0 %v968
        %v1306 = vpop.f32.mrf.mxu0
        %v1307 = vadd.f32 %v885, %v1306
        %v1308 = vpop.f32.mrf.mxu0
        %v1309 = vadd.f32 %v885, %v1308
        %1310 = vmatmul.bf16.gmra.mxu0 %v969
        %v1311 = vpop.f32.mrf.mxu0
        %v1312 = vadd.f32 %v885, %v1311
        %v1313 = vpop.f32.mrf.mxu0
        %v1314 = vadd.f32 %v885, %v1313
        %1315 = vmatmul.bf16.gmra.mxu0 %v970
        %v1316 = vpop.f32.mrf.mxu0
        %v1317 = vadd.f32 %v885, %v1316
        %v1318 = vpop.f32.mrf.mxu0
        %v1319 = vadd.f32 %v885, %v1318
        %1320 = vmatmul.bf16.gmra.mxu0 %v971
        %v1321 = vpop.f32.mrf.mxu0
        %v1322 = vadd.f32 %v885, %v1321
        %v1323 = vpop.f32.mrf.mxu0
        %v1324 = vadd.f32 %v885, %v1323
        %1325 = vdwg.mxu0
        %1326 = vmatpush.bf16.msra.mxu0 %v1114
        %1327 = vmatpush.bf16.msra.mxu0 %v1110
        %1328 = vmatpush.bf16.msra.mxu0 %v1106
        %1329 = vmatpush.bf16.msra.mxu0 %v1102
        %1330 = vmatpush.bf16.msra.mxu0 %v1098
        %1331 = vmatpush.bf16.msra.mxu0 %v1094
        %1332 = vmatpush.bf16.msra.mxu0 %v1090
        %1333 = vmatpush.bf16.msra.mxu0 %v1086
        %1334 = vmatmul.bf16.gmra.mxu0 %v956
        %v1335 = vpop.f32.mrf.mxu0
        %v1336 = vadd.f32 %v886, %v1335
        %v1337 = vpop.f32.mrf.mxu0
        %v1338 = vadd.f32 %v886, %v1337
        %1339 = vmatmul.bf16.gmra.mxu0 %v957
        %v1340 = vpop.f32.mrf.mxu0
        %v1341 = vadd.f32 %v886, %v1340
        %v1342 = vpop.f32.mrf.mxu0
        %v1343 = vadd.f32 %v886, %v1342
        %1344 = vmatmul.bf16.gmra.mxu0 %v958
        %v1345 = vpop.f32.mrf.mxu0
        %v1346 = vadd.f32 %v886, %v1345
        %v1347 = vpop.f32.mrf.mxu0
        %v1348 = vadd.f32 %v886, %v1347
        %1349 = vmatmul.bf16.gmra.mxu0 %v959
        %v1350 = vpop.f32.mrf.mxu0
        %v1351 = vadd.f32 %v886, %v1350
        %v1352 = vpop.f32.mrf.mxu0
        %v1353 = vadd.f32 %v886, %v1352
        %1354 = vmatmul.bf16.gmra.mxu0 %v960
        %v1355 = vpop.f32.mrf.mxu0
        %v1356 = vadd.f32 %v886, %v1355
        %v1357 = vpop.f32.mrf.mxu0
        %v1358 = vadd.f32 %v886, %v1357
        %1359 = vmatmul.bf16.gmra.mxu0 %v961
        %v1360 = vpop.f32.mrf.mxu0
        %v1361 = vadd.f32 %v886, %v1360
        %v1362 = vpop.f32.mrf.mxu0
        %v1363 = vadd.f32 %v886, %v1362
        %1364 = vmatmul.bf16.gmra.mxu0 %v962
        %v1365 = vpop.f32.mrf.mxu0
        %v1366 = vadd.f32 %v886, %v1365
        %v1367 = vpop.f32.mrf.mxu0
        %v1368 = vadd.f32 %v886, %v1367
        %1369 = vmatmul.bf16.gmra.mxu0 %v963
        %v1370 = vpop.f32.mrf.mxu0
        %v1371 = vadd.f32 %v886, %v1370
        %v1372 = vpop.f32.mrf.mxu0
        %v1373 = vadd.f32 %v886, %v1372
        %1374 = vmatmul.bf16.gmra.mxu0 %v964
        %v1375 = vpop.f32.mrf.mxu0
        %v1376 = vadd.f32 %v886, %v1375
        %v1377 = vpop.f32.mrf.mxu0
        %v1378 = vadd.f32 %v886, %v1377
        %1379 = vmatmul.bf16.gmra.mxu0 %v965
        %v1380 = vpop.f32.mrf.mxu0
        %v1381 = vadd.f32 %v886, %v1380
        %v1382 = vpop.f32.mrf.mxu0
        %v1383 = vadd.f32 %v886, %v1382
        %1384 = vmatmul.bf16.gmra.mxu0 %v966
        %v1385 = vpop.f32.mrf.mxu0
        %v1386 = vadd.f32 %v886, %v1385
        %v1387 = vpop.f32.mrf.mxu0
        %v1388 = vadd.f32 %v886, %v1387
        %1389 = vmatmul.bf16.gmra.mxu0 %v967
        %v1390 = vpop.f32.mrf.mxu0
        %v1391 = vadd.f32 %v886, %v1390
        %v1392 = vpop.f32.mrf.mxu0
        %v1393 = vadd.f32 %v886, %v1392
        %1394 = vmatmul.bf16.gmra.mxu0 %v968
        %v1395 = vpop.f32.mrf.mxu0
        %v1396 = vadd.f32 %v886, %v1395
        %v1397 = vpop.f32.mrf.mxu0
        %v1398 = vadd.f32 %v886, %v1397
        %1399 = vmatmul.bf16.gmra.mxu0 %v969
        %v1400 = vpop.f32.mrf.mxu0
        %v1401 = vadd.f32 %v886, %v1400
        %v1402 = vpop.f32.mrf.mxu0
        %v1403 = vadd.f32 %v886, %v1402
        %1404 = vmatmul.bf16.gmra.mxu0 %v970
        %v1405 = vpop.f32.mrf.mxu0
        %v1406 = vadd.f32 %v886, %v1405
        %v1407 = vpop.f32.mrf.mxu0
        %v1408 = vadd.f32 %v886, %v1407
        %1409 = vmatmul.bf16.gmra.mxu0 %v971
        %v1410 = vpop.f32.mrf.mxu0
        %v1411 = vadd.f32 %v886, %v1410
        %v1412 = vpop.f32.mrf.mxu0
        %v1413 = vadd.f32 %v886, %v1412
        %1414 = vdwg.mxu0
        %1415 = vmatpush.bf16.msra.mxu0 %v1115
        %1416 = vmatpush.bf16.msra.mxu0 %v1111
        %1417 = vmatpush.bf16.msra.mxu0 %v1107
        %1418 = vmatpush.bf16.msra.mxu0 %v1103
        %1419 = vmatpush.bf16.msra.mxu0 %v1099
        %1420 = vmatpush.bf16.msra.mxu0 %v1095
        %1421 = vmatpush.bf16.msra.mxu0 %v1091
        %1422 = vmatpush.bf16.msra.mxu0 %v1087
        %1423 = vmatmul.bf16.gmra.mxu0 %v956
        %v1424 = vpop.f32.mrf.mxu0
        %v1425 = vadd.f32 %v887, %v1424
        %v1426 = vpop.f32.mrf.mxu0
        %v1427 = vadd.f32 %v887, %v1426
        %1428 = vmatmul.bf16.gmra.mxu0 %v957
        %v1429 = vpop.f32.mrf.mxu0
        %v1430 = vadd.f32 %v887, %v1429
        %v1431 = vpop.f32.mrf.mxu0
        %v1432 = vadd.f32 %v887, %v1431
        %1433 = vmatmul.bf16.gmra.mxu0 %v958
        %v1434 = vpop.f32.mrf.mxu0
        %v1435 = vadd.f32 %v887, %v1434
        %v1436 = vpop.f32.mrf.mxu0
        %v1437 = vadd.f32 %v887, %v1436
        %1438 = vmatmul.bf16.gmra.mxu0 %v959
        %v1439 = vpop.f32.mrf.mxu0
        %v1440 = vadd.f32 %v887, %v1439
        %v1441 = vpop.f32.mrf.mxu0
        %v1442 = vadd.f32 %v887, %v1441
        %1443 = vmatmul.bf16.gmra.mxu0 %v960
        %v1444 = vpop.f32.mrf.mxu0
        %v1445 = vadd.f32 %v887, %v1444
        %v1446 = vpop.f32.mrf.mxu0
        %v1447 = vadd.f32 %v887, %v1446
        %1448 = vmatmul.bf16.gmra.mxu0 %v961
        %v1449 = vpop.f32.mrf.mxu0
        %v1450 = vadd.f32 %v887, %v1449
        %v1451 = vpop.f32.mrf.mxu0
        %v1452 = vadd.f32 %v887, %v1451
        %1453 = vmatmul.bf16.gmra.mxu0 %v962
        %v1454 = vpop.f32.mrf.mxu0
        %v1455 = vadd.f32 %v887, %v1454
        %v1456 = vpop.f32.mrf.mxu0
        %v1457 = vadd.f32 %v887, %v1456
        %1458 = vmatmul.bf16.gmra.mxu0 %v963
        %v1459 = vpop.f32.mrf.mxu0
        %v1460 = vadd.f32 %v887, %v1459
        %v1461 = vpop.f32.mrf.mxu0
        %v1462 = vadd.f32 %v887, %v1461
        %1463 = vmatmul.bf16.gmra.mxu0 %v964
        %v1464 = vpop.f32.mrf.mxu0
        %v1465 = vadd.f32 %v887, %v1464
        %v1466 = vpop.f32.mrf.mxu0
        %v1467 = vadd.f32 %v887, %v1466
        %1468 = vmatmul.bf16.gmra.mxu0 %v965
        %v1469 = vpop.f32.mrf.mxu0
        %v1470 = vadd.f32 %v887, %v1469
        %v1471 = vpop.f32.mrf.mxu0
        %v1472 = vadd.f32 %v887, %v1471
        %1473 = vmatmul.bf16.gmra.mxu0 %v966
        %v1474 = vpop.f32.mrf.mxu0
        %v1475 = vadd.f32 %v887, %v1474
        %v1476 = vpop.f32.mrf.mxu0
        %v1477 = vadd.f32 %v887, %v1476
        %1478 = vmatmul.bf16.gmra.mxu0 %v967
        %v1479 = vpop.f32.mrf.mxu0
        %v1480 = vadd.f32 %v887, %v1479
        %v1481 = vpop.f32.mrf.mxu0
        %v1482 = vadd.f32 %v887, %v1481
        %1483 = vmatmul.bf16.gmra.mxu0 %v968
        %v1484 = vpop.f32.mrf.mxu0
        %v1485 = vadd.f32 %v887, %v1484
        %v1486 = vpop.f32.mrf.mxu0
        %v1487 = vadd.f32 %v887, %v1486
        %1488 = vmatmul.bf16.gmra.mxu0 %v969
        %v1489 = vpop.f32.mrf.mxu0
        %v1490 = vadd.f32 %v887, %v1489
        %v1491 = vpop.f32.mrf.mxu0
        %v1492 = vadd.f32 %v887, %v1491
        %1493 = vmatmul.bf16.gmra.mxu0 %v970
        %v1494 = vpop.f32.mrf.mxu0
        %v1495 = vadd.f32 %v887, %v1494
        %v1496 = vpop.f32.mrf.mxu0
        %v1497 = vadd.f32 %v887, %v1496
        %1498 = vmatmul.bf16.gmra.mxu0 %v971
        %v1499 = vpop.f32.mrf.mxu0
        %v1500 = vadd.f32 %v887, %v1499
        %v1501 = vpop.f32.mrf.mxu0
        %v1502 = vadd.f32 %v887, %v1501
        %1503 = vdwg.mxu0
        %v1504 = vpack.c.bf16 %v1247, %v1158
        %v1505 = vpack.c.bf16 %v1425, %v1336
        %v1506 = vpack.c.bf16 %v1249, %v1160
        %v1507 = vpack.c.bf16 %v1427, %v1338
        %v1508 = vpack.c.bf16 %v1252, %v1163
        %v1509 = vpack.c.bf16 %v1430, %v1341
        %v1510 = vpack.c.bf16 %v1254, %v1165
        %v1511 = vpack.c.bf16 %v1432, %v1343
        %v1512 = vpack.c.bf16 %v1257, %v1168
        %v1513 = vpack.c.bf16 %v1435, %v1346
        %v1514 = vpack.c.bf16 %v1259, %v1170
        %v1515 = vpack.c.bf16 %v1437, %v1348
        %v1516 = vpack.c.bf16 %v1262, %v1173
        %v1517 = vpack.c.bf16 %v1440, %v1351
        %v1518 = vpack.c.bf16 %v1264, %v1175
        %v1519 = vpack.c.bf16 %v1442, %v1353
        %v1520 = vpack.c.bf16 %v1267, %v1178
        %v1521 = vpack.c.bf16 %v1445, %v1356
        %v1522 = vpack.c.bf16 %v1269, %v1180
        %v1523 = vpack.c.bf16 %v1447, %v1358
        %v1524 = vpack.c.bf16 %v1272, %v1183
        %v1525 = vpack.c.bf16 %v1450, %v1361
        %v1526 = vpack.c.bf16 %v1274, %v1185
        %v1527 = vpack.c.bf16 %v1452, %v1363
        %v1528 = vpack.c.bf16 %v1277, %v1188
        %v1529 = vpack.c.bf16 %v1455, %v1366
        %v1530 = vpack.c.bf16 %v1279, %v1190
        %v1531 = vpack.c.bf16 %v1457, %v1368
        %v1532 = vpack.c.bf16 %v1282, %v1193
        %v1533 = vpack.c.bf16 %v1460, %v1371
        %v1534 = vpack.c.bf16 %v1284, %v1195
        %v1535 = vpack.c.bf16 %v1462, %v1373
        %v1536 = vpack.c.bf16 %v1287, %v1198
        %v1537 = vpack.c.bf16 %v1465, %v1376
        %v1538 = vpack.c.bf16 %v1289, %v1200
        %v1539 = vpack.c.bf16 %v1467, %v1378
        %v1540 = vpack.c.bf16 %v1292, %v1203
        %v1541 = vpack.c.bf16 %v1470, %v1381
        %v1542 = vpack.c.bf16 %v1294, %v1205
        %v1543 = vpack.c.bf16 %v1472, %v1383
        %v1544 = vpack.c.bf16 %v1297, %v1208
        %v1545 = vpack.c.bf16 %v1475, %v1386
        %v1546 = vpack.c.bf16 %v1299, %v1210
        %v1547 = vpack.c.bf16 %v1477, %v1388
        %v1548 = vpack.c.bf16 %v1302, %v1213
        %v1549 = vpack.c.bf16 %v1480, %v1391
        %v1550 = vpack.c.bf16 %v1304, %v1215
        %v1551 = vpack.c.bf16 %v1482, %v1393
        %v1552 = vpack.c.bf16 %v1307, %v1218
        %v1553 = vpack.c.bf16 %v1485, %v1396
        %v1554 = vpack.c.bf16 %v1309, %v1220
        %v1555 = vpack.c.bf16 %v1487, %v1398
        %v1556 = vpack.c.bf16 %v1312, %v1223
        %v1557 = vpack.c.bf16 %v1490, %v1401
        %v1558 = vpack.c.bf16 %v1314, %v1225
        %v1559 = vpack.c.bf16 %v1492, %v1403
        %v1560 = vpack.c.bf16 %v1317, %v1228
        %v1561 = vpack.c.bf16 %v1495, %v1406
        %v1562 = vpack.c.bf16 %v1319, %v1230
        %v1563 = vpack.c.bf16 %v1497, %v1408
        %v1564 = vpack.c.bf16 %v1322, %v1233
        %v1565 = vpack.c.bf16 %v1500, %v1411
        %v1566 = vpack.c.bf16 %v1324, %v1235
        %v1567 = vpack.c.bf16 %v1502, %v1413
        %v1568 = vunpack.c.l.bf16 %v1504
        %v1569 = vunpack.c.h.bf16 %v1504
        %v1570 = vunpack.c.l.bf16 %v1505
        %v1571 = vunpack.c.h.bf16 %v1505
        %v1572 = vunpack.c.l.bf16 %v1506
        %v1573 = vunpack.c.h.bf16 %v1506
        %v1574 = vunpack.c.l.bf16 %v1507
        %v1575 = vunpack.c.h.bf16 %v1507
        %v1576 = vunpack.c.l.bf16 %v1508
        %v1577 = vunpack.c.h.bf16 %v1508
        %v1578 = vunpack.c.l.bf16 %v1509
        %v1579 = vunpack.c.h.bf16 %v1509
        %v1580 = vunpack.c.l.bf16 %v1510
        %v1581 = vunpack.c.h.bf16 %v1510
        %v1582 = vunpack.c.l.bf16 %v1511
        %v1583 = vunpack.c.h.bf16 %v1511
        %v1584 = vunpack.c.l.bf16 %v1512
        %v1585 = vunpack.c.h.bf16 %v1512
        %v1586 = vunpack.c.l.bf16 %v1513
        %v1587 = vunpack.c.h.bf16 %v1513
        %v1588 = vunpack.c.l.bf16 %v1514
        %v1589 = vunpack.c.h.bf16 %v1514
        %v1590 = vunpack.c.l.bf16 %v1515
        %v1591 = vunpack.c.h.bf16 %v1515
        %v1592 = vunpack.c.l.bf16 %v1516
        %v1593 = vunpack.c.h.bf16 %v1516
        %v1594 = vunpack.c.l.bf16 %v1517
        %v1595 = vunpack.c.h.bf16 %v1517
        %v1596 = vunpack.c.l.bf16 %v1518
        %v1597 = vunpack.c.h.bf16 %v1518
        %v1598 = vunpack.c.l.bf16 %v1519
        %v1599 = vunpack.c.h.bf16 %v1519
        %v1600 = vunpack.c.l.bf16 %v1520
        %v1601 = vunpack.c.h.bf16 %v1520
        %v1602 = vunpack.c.l.bf16 %v1521
        %v1603 = vunpack.c.h.bf16 %v1521
        %v1604 = vunpack.c.l.bf16 %v1522
        %v1605 = vunpack.c.h.bf16 %v1522
        %v1606 = vunpack.c.l.bf16 %v1523
        %v1607 = vunpack.c.h.bf16 %v1523
        %v1608 = vunpack.c.l.bf16 %v1524
        %v1609 = vunpack.c.h.bf16 %v1524
        %v1610 = vunpack.c.l.bf16 %v1525
        %v1611 = vunpack.c.h.bf16 %v1525
        %v1612 = vunpack.c.l.bf16 %v1526
        %v1613 = vunpack.c.h.bf16 %v1526
        %v1614 = vunpack.c.l.bf16 %v1527
        %v1615 = vunpack.c.h.bf16 %v1527
        %v1616 = vunpack.c.l.bf16 %v1528
        %v1617 = vunpack.c.h.bf16 %v1528
        %v1618 = vunpack.c.l.bf16 %v1529
        %v1619 = vunpack.c.h.bf16 %v1529
        %v1620 = vunpack.c.l.bf16 %v1530
        %v1621 = vunpack.c.h.bf16 %v1530
        %v1622 = vunpack.c.l.bf16 %v1531
        %v1623 = vunpack.c.h.bf16 %v1531
        %v1624 = vunpack.c.l.bf16 %v1532
        %v1625 = vunpack.c.h.bf16 %v1532
        %v1626 = vunpack.c.l.bf16 %v1533
        %v1627 = vunpack.c.h.bf16 %v1533
        %v1628 = vunpack.c.l.bf16 %v1534
        %v1629 = vunpack.c.h.bf16 %v1534
        %v1630 = vunpack.c.l.bf16 %v1535
        %v1631 = vunpack.c.h.bf16 %v1535
        %v1632 = vunpack.c.l.bf16 %v1536
        %v1633 = vunpack.c.h.bf16 %v1536
        %v1634 = vunpack.c.l.bf16 %v1537
        %v1635 = vunpack.c.h.bf16 %v1537
        %v1636 = vunpack.c.l.bf16 %v1538
        %v1637 = vunpack.c.h.bf16 %v1538
        %v1638 = vunpack.c.l.bf16 %v1539
        %v1639 = vunpack.c.h.bf16 %v1539
        %v1640 = vunpack.c.l.bf16 %v1540
        %v1641 = vunpack.c.h.bf16 %v1540
        %v1642 = vunpack.c.l.bf16 %v1541
        %v1643 = vunpack.c.h.bf16 %v1541
        %v1644 = vunpack.c.l.bf16 %v1542
        %v1645 = vunpack.c.h.bf16 %v1542
        %v1646 = vunpack.c.l.bf16 %v1543
        %v1647 = vunpack.c.h.bf16 %v1543
        %v1648 = vunpack.c.l.bf16 %v1544
        %v1649 = vunpack.c.h.bf16 %v1544
        %v1650 = vunpack.c.l.bf16 %v1545
        %v1651 = vunpack.c.h.bf16 %v1545
        %v1652 = vunpack.c.l.bf16 %v1546
        %v1653 = vunpack.c.h.bf16 %v1546
        %v1654 = vunpack.c.l.bf16 %v1547
        %v1655 = vunpack.c.h.bf16 %v1547
        %v1656 = vunpack.c.l.bf16 %v1548
        %v1657 = vunpack.c.h.bf16 %v1548
        %v1658 = vunpack.c.l.bf16 %v1549
        %v1659 = vunpack.c.h.bf16 %v1549
        %v1660 = vunpack.c.l.bf16 %v1550
        %v1661 = vunpack.c.h.bf16 %v1550
        %v1662 = vunpack.c.l.bf16 %v1551
        %v1663 = vunpack.c.h.bf16 %v1551
        %v1664 = vunpack.c.l.bf16 %v1552
        %v1665 = vunpack.c.h.bf16 %v1552
        %v1666 = vunpack.c.l.bf16 %v1553
        %v1667 = vunpack.c.h.bf16 %v1553
        %v1668 = vunpack.c.l.bf16 %v1554
        %v1669 = vunpack.c.h.bf16 %v1554
        %v1670 = vunpack.c.l.bf16 %v1555
        %v1671 = vunpack.c.h.bf16 %v1555
        %v1672 = vunpack.c.l.bf16 %v1556
        %v1673 = vunpack.c.h.bf16 %v1556
        %v1674 = vunpack.c.l.bf16 %v1557
        %v1675 = vunpack.c.h.bf16 %v1557
        %v1676 = vunpack.c.l.bf16 %v1558
        %v1677 = vunpack.c.h.bf16 %v1558
        %v1678 = vunpack.c.l.bf16 %v1559
        %v1679 = vunpack.c.h.bf16 %v1559
        %v1680 = vunpack.c.l.bf16 %v1560
        %v1681 = vunpack.c.h.bf16 %v1560
        %v1682 = vunpack.c.l.bf16 %v1561
        %v1683 = vunpack.c.h.bf16 %v1561
        %v1684 = vunpack.c.l.bf16 %v1562
        %v1685 = vunpack.c.h.bf16 %v1562
        %v1686 = vunpack.c.l.bf16 %v1563
        %v1687 = vunpack.c.h.bf16 %v1563
        %v1688 = vunpack.c.l.bf16 %v1564
        %v1689 = vunpack.c.h.bf16 %v1564
        %v1690 = vunpack.c.l.bf16 %v1565
        %v1691 = vunpack.c.h.bf16 %v1565
        %v1692 = vunpack.c.l.bf16 %v1566
        %v1693 = vunpack.c.h.bf16 %v1566
        %v1694 = vunpack.c.l.bf16 %v1567
        %v1695 = vunpack.c.h.bf16 %v1567
        %vm1696 = vcmp.gt.f32.partialorder %v1568, 0.0
        %vm1697 = vcmp.gt.f32.partialorder %v1569, 0.0
        %vm1698 = vcmp.gt.f32.partialorder %v1570, 0.0
        %vm1699 = vcmp.gt.f32.partialorder %v1571, 0.0
        %vm1700 = vcmp.gt.f32.partialorder %v1572, 0.0
        %vm1701 = vcmp.gt.f32.partialorder %v1573, 0.0
        %vm1702 = vcmp.gt.f32.partialorder %v1574, 0.0
        %vm1703 = vcmp.gt.f32.partialorder %v1575, 0.0
        %vm1704 = vcmp.gt.f32.partialorder %v1576, 0.0
        %vm1705 = vcmp.gt.f32.partialorder %v1577, 0.0
        %vm1706 = vcmp.gt.f32.partialorder %v1578, 0.0
        %vm1707 = vcmp.gt.f32.partialorder %v1579, 0.0
        %vm1708 = vcmp.gt.f32.partialorder %v1580, 0.0
        %vm1709 = vcmp.gt.f32.partialorder %v1581, 0.0
        %vm1710 = vcmp.gt.f32.partialorder %v1582, 0.0
        %vm1711 = vcmp.gt.f32.partialorder %v1583, 0.0
        %vm1712 = vcmp.gt.f32.partialorder %v1584, 0.0
        %vm1713 = vcmp.gt.f32.partialorder %v1585, 0.0
        %vm1714 = vcmp.gt.f32.partialorder %v1586, 0.0
        %vm1715 = vcmp.gt.f32.partialorder %v1587, 0.0
        %vm1716 = vcmp.gt.f32.partialorder %v1588, 0.0
        %vm1717 = vcmp.gt.f32.partialorder %v1589, 0.0
        %vm1718 = vcmp.gt.f32.partialorder %v1590, 0.0
        %vm1719 = vcmp.gt.f32.partialorder %v1591, 0.0
        %vm1720 = vcmp.gt.f32.partialorder %v1592, 0.0
        %vm1721 = vcmp.gt.f32.partialorder %v1593, 0.0
        %vm1722 = vcmp.gt.f32.partialorder %v1594, 0.0
        %vm1723 = vcmp.gt.f32.partialorder %v1595, 0.0
        %vm1724 = vcmp.gt.f32.partialorder %v1596, 0.0
        %vm1725 = vcmp.gt.f32.partialorder %v1597, 0.0
        %vm1726 = vcmp.gt.f32.partialorder %v1598, 0.0
        %vm1727 = vcmp.gt.f32.partialorder %v1599, 0.0
        %vm1728 = vcmp.gt.f32.partialorder %v1600, 0.0
        %vm1729 = vcmp.gt.f32.partialorder %v1601, 0.0
        %vm1730 = vcmp.gt.f32.partialorder %v1602, 0.0
        %vm1731 = vcmp.gt.f32.partialorder %v1603, 0.0
        %vm1732 = vcmp.gt.f32.partialorder %v1604, 0.0
        %vm1733 = vcmp.gt.f32.partialorder %v1605, 0.0
        %vm1734 = vcmp.gt.f32.partialorder %v1606, 0.0
        %vm1735 = vcmp.gt.f32.partialorder %v1607, 0.0
        %vm1736 = vcmp.gt.f32.partialorder %v1608, 0.0
        %vm1737 = vcmp.gt.f32.partialorder %v1609, 0.0
        %vm1738 = vcmp.gt.f32.partialorder %v1610, 0.0
        %vm1739 = vcmp.gt.f32.partialorder %v1611, 0.0
        %vm1740 = vcmp.gt.f32.partialorder %v1612, 0.0
        %vm1741 = vcmp.gt.f32.partialorder %v1613, 0.0
        %vm1742 = vcmp.gt.f32.partialorder %v1614, 0.0
        %vm1743 = vcmp.gt.f32.partialorder %v1615, 0.0
        %vm1744 = vcmp.gt.f32.partialorder %v1616, 0.0
        %vm1745 = vcmp.gt.f32.partialorder %v1617, 0.0
        %vm1746 = vcmp.gt.f32.partialorder %v1618, 0.0
        %vm1747 = vcmp.gt.f32.partialorder %v1619, 0.0
        %vm1748 = vcmp.gt.f32.partialorder %v1620, 0.0
        %vm1749 = vcmp.gt.f32.partialorder %v1621, 0.0
        %vm1750 = vcmp.gt.f32.partialorder %v1622, 0.0
        %vm1751 = vcmp.gt.f32.partialorder %v1623, 0.0
        %vm1752 = vcmp.gt.f32.partialorder %v1624, 0.0
        %vm1753 = vcmp.gt.f32.partialorder %v1625, 0.0
        %vm1754 = vcmp.gt.f32.partialorder %v1626, 0.0
        %vm1755 = vcmp.gt.f32.partialorder %v1627, 0.0
        %vm1756 = vcmp.gt.f32.partialorder %v1628, 0.0
        %vm1757 = vcmp.gt.f32.partialorder %v1629, 0.0
        %vm1758 = vcmp.gt.f32.partialorder %v1630, 0.0
        %vm1759 = vcmp.gt.f32.partialorder %v1631, 0.0
        %vm1760 = vcmp.gt.f32.partialorder %v1632, 0.0
        %vm1761 = vcmp.gt.f32.partialorder %v1633, 0.0
        %vm1762 = vcmp.gt.f32.partialorder %v1634, 0.0
        %vm1763 = vcmp.gt.f32.partialorder %v1635, 0.0
        %vm1764 = vcmp.gt.f32.partialorder %v1636, 0.0
        %vm1765 = vcmp.gt.f32.partialorder %v1637, 0.0
        %vm1766 = vcmp.gt.f32.partialorder %v1638, 0.0
        %vm1767 = vcmp.gt.f32.partialorder %v1639, 0.0
        %vm1768 = vcmp.gt.f32.partialorder %v1640, 0.0
        %vm1769 = vcmp.gt.f32.partialorder %v1641, 0.0
        %vm1770 = vcmp.gt.f32.partialorder %v1642, 0.0
        %vm1771 = vcmp.gt.f32.partialorder %v1643, 0.0
        %vm1772 = vcmp.gt.f32.partialorder %v1644, 0.0
        %vm1773 = vcmp.gt.f32.partialorder %v1645, 0.0
        %vm1774 = vcmp.gt.f32.partialorder %v1646, 0.0
        %vm1775 = vcmp.gt.f32.partialorder %v1647, 0.0
        %vm1776 = vcmp.gt.f32.partialorder %v1648, 0.0
        %vm1777 = vcmp.gt.f32.partialorder %v1649, 0.0
        %vm1778 = vcmp.gt.f32.partialorder %v1650, 0.0
        %vm1779 = vcmp.gt.f32.partialorder %v1651, 0.0
        %vm1780 = vcmp.gt.f32.partialorder %v1652, 0.0
        %vm1781 = vcmp.gt.f32.partialorder %v1653, 0.0
        %vm1782 = vcmp.gt.f32.partialorder %v1654, 0.0
        %vm1783 = vcmp.gt.f32.partialorder %v1655, 0.0
        %vm1784 = vcmp.gt.f32.partialorder %v1656, 0.0
        %vm1785 = vcmp.gt.f32.partialorder %v1657, 0.0
        %vm1786 = vcmp.gt.f32.partialorder %v1658, 0.0
        %vm1787 = vcmp.gt.f32.partialorder %v1659, 0.0
        %vm1788 = vcmp.gt.f32.partialorder %v1660, 0.0
        %vm1789 = vcmp.gt.f32.partialorder %v1661, 0.0
        %vm1790 = vcmp.gt.f32.partialorder %v1662, 0.0
        %vm1791 = vcmp.gt.f32.partialorder %v1663, 0.0
        %vm1792 = vcmp.gt.f32.partialorder %v1664, 0.0
        %vm1793 = vcmp.gt.f32.partialorder %v1665, 0.0
        %vm1794 = vcmp.gt.f32.partialorder %v1666, 0.0
        %vm1795 = vcmp.gt.f32.partialorder %v1667, 0.0
        %vm1796 = vcmp.gt.f32.partialorder %v1668, 0.0
        %vm1797 = vcmp.gt.f32.partialorder %v1669, 0.0
        %vm1798 = vcmp.gt.f32.partialorder %v1670, 0.0
        %vm1799 = vcmp.gt.f32.partialorder %v1671, 0.0
        %vm1800 = vcmp.gt.f32.partialorder %v1672, 0.0
        %vm1801 = vcmp.gt.f32.partialorder %v1673, 0.0
        %vm1802 = vcmp.gt.f32.partialorder %v1674, 0.0
        %vm1803 = vcmp.gt.f32.partialorder %v1675, 0.0
        %vm1804 = vcmp.gt.f32.partialorder %v1676, 0.0
        %vm1805 = vcmp.gt.f32.partialorder %v1677, 0.0
        %vm1806 = vcmp.gt.f32.partialorder %v1678, 0.0
        %vm1807 = vcmp.gt.f32.partialorder %v1679, 0.0
        %vm1808 = vcmp.gt.f32.partialorder %v1680, 0.0
        %vm1809 = vcmp.gt.f32.partialorder %v1681, 0.0
        %vm1810 = vcmp.gt.f32.partialorder %v1682, 0.0
        %vm1811 = vcmp.gt.f32.partialorder %v1683, 0.0
        %vm1812 = vcmp.gt.f32.partialorder %v1684, 0.0
        %vm1813 = vcmp.gt.f32.partialorder %v1685, 0.0
        %vm1814 = vcmp.gt.f32.partialorder %v1686, 0.0
        %vm1815 = vcmp.gt.f32.partialorder %v1687, 0.0
        %vm1816 = vcmp.gt.f32.partialorder %v1688, 0.0
        %vm1817 = vcmp.gt.f32.partialorder %v1689, 0.0
        %vm1818 = vcmp.gt.f32.partialorder %v1690, 0.0
        %vm1819 = vcmp.gt.f32.partialorder %v1691, 0.0
        %vm1820 = vcmp.gt.f32.partialorder %v1692, 0.0
        %vm1821 = vcmp.gt.f32.partialorder %v1693, 0.0
        %vm1822 = vcmp.gt.f32.partialorder %v1694, 0.0
        %vm1823 = vcmp.gt.f32.partialorder %v1695, 0.0
        %v1824 = vmul.f32 %v1568, 0.010009766
        %v1825 = vmul.f32 %v1569, 0.010009766
        %v1826 = vmul.f32 %v1570, 0.010009766
        %v1827 = vmul.f32 %v1571, 0.010009766
        %v1828 = vmul.f32 %v1572, 0.010009766
        %v1829 = vmul.f32 %v1573, 0.010009766
        %v1830 = vmul.f32 %v1574, 0.010009766
        %v1831 = vmul.f32 %v1575, 0.010009766
        %v1832 = vmul.f32 %v1576, 0.010009766
        %v1833 = vmul.f32 %v1577, 0.010009766
        %v1834 = vmul.f32 %v1578, 0.010009766
        %v1835 = vmul.f32 %v1579, 0.010009766
        %v1836 = vmul.f32 %v1580, 0.010009766
        %v1837 = vmul.f32 %v1581, 0.010009766
        %v1838 = vmul.f32 %v1582, 0.010009766
        %v1839 = vmul.f32 %v1583, 0.010009766
        %v1840 = vmul.f32 %v1584, 0.010009766
        %v1841 = vmul.f32 %v1585, 0.010009766
        %v1842 = vmul.f32 %v1586, 0.010009766
        %v1843 = vmul.f32 %v1587, 0.010009766
        %v1844 = vmul.f32 %v1588, 0.010009766
        %v1845 = vmul.f32 %v1589, 0.010009766
        %v1846 = vmul.f32 %v1590, 0.010009766
        %v1847 = vmul.f32 %v1591, 0.010009766
        %v1848 = vmul.f32 %v1592, 0.010009766
        %v1849 = vmul.f32 %v1593, 0.010009766
        %v1850 = vmul.f32 %v1594, 0.010009766
        %v1851 = vmul.f32 %v1595, 0.010009766
        %v1852 = vmul.f32 %v1596, 0.010009766
        %v1853 = vmul.f32 %v1597, 0.010009766
        %v1854 = vmul.f32 %v1598, 0.010009766
        %v1855 = vmul.f32 %v1599, 0.010009766
        %v1856 = vmul.f32 %v1600, 0.010009766
        %v1857 = vmul.f32 %v1601, 0.010009766
        %v1858 = vmul.f32 %v1602, 0.010009766
        %v1859 = vmul.f32 %v1603, 0.010009766
        %v1860 = vmul.f32 %v1604, 0.010009766
        %v1861 = vmul.f32 %v1605, 0.010009766
        %v1862 = vmul.f32 %v1606, 0.010009766
        %v1863 = vmul.f32 %v1607, 0.010009766
        %v1864 = vmul.f32 %v1608, 0.010009766
        %v1865 = vmul.f32 %v1609, 0.010009766
        %v1866 = vmul.f32 %v1610, 0.010009766
        %v1867 = vmul.f32 %v1611, 0.010009766
        %v1868 = vmul.f32 %v1612, 0.010009766
        %v1869 = vmul.f32 %v1613, 0.010009766
        %v1870 = vmul.f32 %v1614, 0.010009766
        %v1871 = vmul.f32 %v1615, 0.010009766
        %v1872 = vmul.f32 %v1616, 0.010009766
        %v1873 = vmul.f32 %v1617, 0.010009766
        %v1874 = vmul.f32 %v1618, 0.010009766
        %v1875 = vmul.f32 %v1619, 0.010009766
        %v1876 = vmul.f32 %v1620, 0.010009766
        %v1877 = vmul.f32 %v1621, 0.010009766
        %v1878 = vmul.f32 %v1622, 0.010009766
        %v1879 = vmul.f32 %v1623, 0.010009766
        %v1880 = vmul.f32 %v1624, 0.010009766
        %v1881 = vmul.f32 %v1625, 0.010009766
        %v1882 = vmul.f32 %v1626, 0.010009766
        %v1883 = vmul.f32 %v1627, 0.010009766
        %v1884 = vmul.f32 %v1628, 0.010009766
        %v1885 = vmul.f32 %v1629, 0.010009766
        %v1886 = vmul.f32 %v1630, 0.010009766
        %v1887 = vmul.f32 %v1631, 0.010009766
        %v1888 = vmul.f32 %v1632, 0.010009766
        %v1889 = vmul.f32 %v1633, 0.010009766
        %v1890 = vmul.f32 %v1634, 0.010009766
        %v1891 = vmul.f32 %v1635, 0.010009766
        %v1892 = vmul.f32 %v1636, 0.010009766
        %v1893 = vmul.f32 %v1637, 0.010009766
        %v1894 = vmul.f32 %v1638, 0.010009766
        %v1895 = vmul.f32 %v1639, 0.010009766
        %v1896 = vmul.f32 %v1640, 0.010009766
        %v1897 = vmul.f32 %v1641, 0.010009766
        %v1898 = vmul.f32 %v1642, 0.010009766
        %v1899 = vmul.f32 %v1643, 0.010009766
        %v1900 = vmul.f32 %v1644, 0.010009766
        %v1901 = vmul.f32 %v1645, 0.010009766
        %v1902 = vmul.f32 %v1646, 0.010009766
        %v1903 = vmul.f32 %v1647, 0.010009766
        %v1904 = vmul.f32 %v1648, 0.010009766
        %v1905 = vmul.f32 %v1649, 0.010009766
        %v1906 = vmul.f32 %v1650, 0.010009766
        %v1907 = vmul.f32 %v1651, 0.010009766
        %v1908 = vmul.f32 %v1652, 0.010009766
        %v1909 = vmul.f32 %v1653, 0.010009766
        %v1910 = vmul.f32 %v1654, 0.010009766
        %v1911 = vmul.f32 %v1655, 0.010009766
        %v1912 = vmul.f32 %v1656, 0.010009766
        %v1913 = vmul.f32 %v1657, 0.010009766
        %v1914 = vmul.f32 %v1658, 0.010009766
        %v1915 = vmul.f32 %v1659, 0.010009766
        %v1916 = vmul.f32 %v1660, 0.010009766
        %v1917 = vmul.f32 %v1661, 0.010009766
        %v1918 = vmul.f32 %v1662, 0.010009766
        %v1919 = vmul.f32 %v1663, 0.010009766
        %v1920 = vmul.f32 %v1664, 0.010009766
        %v1921 = vmul.f32 %v1665, 0.010009766
        %v1922 = vmul.f32 %v1666, 0.010009766
        %v1923 = vmul.f32 %v1667, 0.010009766
        %v1924 = vmul.f32 %v1668, 0.010009766
        %v1925 = vmul.f32 %v1669, 0.010009766
        %v1926 = vmul.f32 %v1670, 0.010009766
        %v1927 = vmul.f32 %v1671, 0.010009766
        %v1928 = vmul.f32 %v1672, 0.010009766
        %v1929 = vmul.f32 %v1673, 0.010009766
        %v1930 = vmul.f32 %v1674, 0.010009766
        %v1931 = vmul.f32 %v1675, 0.010009766
        %v1932 = vmul.f32 %v1676, 0.010009766
        %v1933 = vmul.f32 %v1677, 0.010009766
        %v1934 = vmul.f32 %v1678, 0.010009766
        %v1935 = vmul.f32 %v1679, 0.010009766
        %v1936 = vmul.f32 %v1680, 0.010009766
        %v1937 = vmul.f32 %v1681, 0.010009766
        %v1938 = vmul.f32 %v1682, 0.010009766
        %v1939 = vmul.f32 %v1683, 0.010009766
        %v1940 = vmul.f32 %v1684, 0.010009766
        %v1941 = vmul.f32 %v1685, 0.010009766
        %v1942 = vmul.f32 %v1686, 0.010009766
        %v1943 = vmul.f32 %v1687, 0.010009766
        %v1944 = vmul.f32 %v1688, 0.010009766
        %v1945 = vmul.f32 %v1689, 0.010009766
        %v1946 = vmul.f32 %v1690, 0.010009766
        %v1947 = vmul.f32 %v1691, 0.010009766
        %v1948 = vmul.f32 %v1692, 0.010009766
        %v1949 = vmul.f32 %v1693, 0.010009766
        %v1950 = vmul.f32 %v1694, 0.010009766
        %v1951 = vmul.f32 %v1695, 0.010009766
        %v1952 = vpack.c.bf16 %v1825, %v1824
        %v1953 = vpack.c.bf16 %v1827, %v1826
        %v1954 = vpack.c.bf16 %v1829, %v1828
        %v1955 = vpack.c.bf16 %v1831, %v1830
        %v1956 = vpack.c.bf16 %v1833, %v1832
        %v1957 = vpack.c.bf16 %v1835, %v1834
        %v1958 = vpack.c.bf16 %v1837, %v1836
        %v1959 = vpack.c.bf16 %v1839, %v1838
        %v1960 = vpack.c.bf16 %v1841, %v1840
        %v1961 = vpack.c.bf16 %v1843, %v1842
        %v1962 = vpack.c.bf16 %v1845, %v1844
        %v1963 = vpack.c.bf16 %v1847, %v1846
        %v1964 = vpack.c.bf16 %v1849, %v1848
        %v1965 = vpack.c.bf16 %v1851, %v1850
        %v1966 = vpack.c.bf16 %v1853, %v1852
        %v1967 = vpack.c.bf16 %v1855, %v1854
        %v1968 = vpack.c.bf16 %v1857, %v1856
        %v1969 = vpack.c.bf16 %v1859, %v1858
        %v1970 = vpack.c.bf16 %v1861, %v1860
        %v1971 = vpack.c.bf16 %v1863, %v1862
        %v1972 = vpack.c.bf16 %v1865, %v1864
        %v1973 = vpack.c.bf16 %v1867, %v1866
        %v1974 = vpack.c.bf16 %v1869, %v1868
        %v1975 = vpack.c.bf16 %v1871, %v1870
        %v1976 = vpack.c.bf16 %v1873, %v1872
        %v1977 = vpack.c.bf16 %v1875, %v1874
        %v1978 = vpack.c.bf16 %v1877, %v1876
        %v1979 = vpack.c.bf16 %v1879, %v1878
        %v1980 = vpack.c.bf16 %v1881, %v1880
        %v1981 = vpack.c.bf16 %v1883, %v1882
        %v1982 = vpack.c.bf16 %v1885, %v1884
        %v1983 = vpack.c.bf16 %v1887, %v1886
        %v1984 = vpack.c.bf16 %v1889, %v1888
        %v1985 = vpack.c.bf16 %v1891, %v1890
        %v1986 = vpack.c.bf16 %v1893, %v1892
        %v1987 = vpack.c.bf16 %v1895, %v1894
        %v1988 = vpack.c.bf16 %v1897, %v1896
        %v1989 = vpack.c.bf16 %v1899, %v1898
        %v1990 = vpack.c.bf16 %v1901, %v1900
        %v1991 = vpack.c.bf16 %v1903, %v1902
        %v1992 = vpack.c.bf16 %v1905, %v1904
        %v1993 = vpack.c.bf16 %v1907, %v1906
        %v1994 = vpack.c.bf16 %v1909, %v1908
        %v1995 = vpack.c.bf16 %v1911, %v1910
        %v1996 = vpack.c.bf16 %v1913, %v1912
        %v1997 = vpack.c.bf16 %v1915, %v1914
        %v1998 = vpack.c.bf16 %v1917, %v1916
        %v1999 = vpack.c.bf16 %v1919, %v1918
        %v2000 = vpack.c.bf16 %v1921, %v1920
        %v2001 = vpack.c.bf16 %v1923, %v1922
        %v2002 = vpack.c.bf16 %v1925, %v1924
        %v2003 = vpack.c.bf16 %v1927, %v1926
        %v2004 = vpack.c.bf16 %v1929, %v1928
        %v2005 = vpack.c.bf16 %v1931, %v1930
        %v2006 = vpack.c.bf16 %v1933, %v1932
        %v2007 = vpack.c.bf16 %v1935, %v1934
        %v2008 = vpack.c.bf16 %v1937, %v1936
        %v2009 = vpack.c.bf16 %v1939, %v1938
        %v2010 = vpack.c.bf16 %v1941, %v1940
        %v2011 = vpack.c.bf16 %v1943, %v1942
        %v2012 = vpack.c.bf16 %v1945, %v1944
        %v2013 = vpack.c.bf16 %v1947, %v1946
        %v2014 = vpack.c.bf16 %v1949, %v1948
        %v2015 = vpack.c.bf16 %v1951, %v1950
        %vm2016 = vmpackc.low %vm1697, %vm1696
        %vm2017 = vmpackc.low %vm1699, %vm1698
        %vm2018 = vmpackc.low %vm1701, %vm1700
        %vm2019 = vmpackc.low %vm1703, %vm1702
        %vm2020 = vmpackc.low %vm1705, %vm1704
        %vm2021 = vmpackc.low %vm1707, %vm1706
        %vm2022 = vmpackc.low %vm1709, %vm1708
        %vm2023 = vmpackc.low %vm1711, %vm1710
        %vm2024 = vmpackc.low %vm1713, %vm1712
        %vm2025 = vmpackc.low %vm1715, %vm1714
        %vm2026 = vmpackc.low %vm1717, %vm1716
        %vm2027 = vmpackc.low %vm1719, %vm1718
        %vm2028 = vmpackc.low %vm1721, %vm1720
        %vm2029 = vmpackc.low %vm1723, %vm1722
        %vm2030 = vmpackc.low %vm1725, %vm1724
        %vm2031 = vmpackc.low %vm1727, %vm1726
        %vm2032 = vmpackc.low %vm1729, %vm1728
        %vm2033 = vmpackc.low %vm1731, %vm1730
        %vm2034 = vmpackc.low %vm1733, %vm1732
        %vm2035 = vmpackc.low %vm1735, %vm1734
        %vm2036 = vmpackc.low %vm1737, %vm1736
        %vm2037 = vmpackc.low %vm1739, %vm1738
        %vm2038 = vmpackc.low %vm1741, %vm1740
        %vm2039 = vmpackc.low %vm1743, %vm1742
        %vm2040 = vmpackc.low %vm1745, %vm1744
        %vm2041 = vmpackc.low %vm1747, %vm1746
        %vm2042 = vmpackc.low %vm1749, %vm1748
        %vm2043 = vmpackc.low %vm1751, %vm1750
        %vm2044 = vmpackc.low %vm1753, %vm1752
        %vm2045 = vmpackc.low %vm1755, %vm1754
        %vm2046 = vmpackc.low %vm1757, %vm1756
        %vm2047 = vmpackc.low %vm1759, %vm1758
        %vm2048 = vmpackc.low %vm1761, %vm1760
        %vm2049 = vmpackc.low %vm1763, %vm1762
        %vm2050 = vmpackc.low %vm1765, %vm1764
        %vm2051 = vmpackc.low %vm1767, %vm1766
        %vm2052 = vmpackc.low %vm1769, %vm1768
        %vm2053 = vmpackc.low %vm1771, %vm1770
        %vm2054 = vmpackc.low %vm1773, %vm1772
        %vm2055 = vmpackc.low %vm1775, %vm1774
        %vm2056 = vmpackc.low %vm1777, %vm1776
        %vm2057 = vmpackc.low %vm1779, %vm1778
        %vm2058 = vmpackc.low %vm1781, %vm1780
        %vm2059 = vmpackc.low %vm1783, %vm1782
        %vm2060 = vmpackc.low %vm1785, %vm1784
        %vm2061 = vmpackc.low %vm1787, %vm1786
        %vm2062 = vmpackc.low %vm1789, %vm1788
        %vm2063 = vmpackc.low %vm1791, %vm1790
        %vm2064 = vmpackc.low %vm1793, %vm1792
        %vm2065 = vmpackc.low %vm1795, %vm1794
        %vm2066 = vmpackc.low %vm1797, %vm1796
        %vm2067 = vmpackc.low %vm1799, %vm1798
        %vm2068 = vmpackc.low %vm1801, %vm1800
        %vm2069 = vmpackc.low %vm1803, %vm1802
        %vm2070 = vmpackc.low %vm1805, %vm1804
        %vm2071 = vmpackc.low %vm1807, %vm1806
        %vm2072 = vmpackc.low %vm1809, %vm1808
        %vm2073 = vmpackc.low %vm1811, %vm1810
        %vm2074 = vmpackc.low %vm1813, %vm1812
        %vm2075 = vmpackc.low %vm1815, %vm1814
        %vm2076 = vmpackc.low %vm1817, %vm1816
        %vm2077 = vmpackc.low %vm1819, %vm1818
        %vm2078 = vmpackc.low %vm1821, %vm1820
        %vm2079 = vmpackc.low %vm1823, %vm1822
        %v2080 = vsel %vm2016, %v1504, %v1952
        %v2081 = vsel %vm2017, %v1505, %v1953
        %v2082 = vsel %vm2018, %v1506, %v1954
        %v2083 = vsel %vm2019, %v1507, %v1955
        %v2084 = vsel %vm2020, %v1508, %v1956
        %v2085 = vsel %vm2021, %v1509, %v1957
        %v2086 = vsel %vm2022, %v1510, %v1958
        %v2087 = vsel %vm2023, %v1511, %v1959
        %v2088 = vsel %vm2024, %v1512, %v1960
        %v2089 = vsel %vm2025, %v1513, %v1961
        %v2090 = vsel %vm2026, %v1514, %v1962
        %v2091 = vsel %vm2027, %v1515, %v1963
        %v2092 = vsel %vm2028, %v1516, %v1964
        %v2093 = vsel %vm2029, %v1517, %v1965
        %v2094 = vsel %vm2030, %v1518, %v1966
        %v2095 = vsel %vm2031, %v1519, %v1967
        %v2096 = vsel %vm2032, %v1520, %v1968
        %v2097 = vsel %vm2033, %v1521, %v1969
        %v2098 = vsel %vm2034, %v1522, %v1970
        %v2099 = vsel %vm2035, %v1523, %v1971
        %v2100 = vsel %vm2036, %v1524, %v1972
        %v2101 = vsel %vm2037, %v1525, %v1973
        %v2102 = vsel %vm2038, %v1526, %v1974
        %v2103 = vsel %vm2039, %v1527, %v1975
        %v2104 = vsel %vm2040, %v1528, %v1976
        %v2105 = vsel %vm2041, %v1529, %v1977
        %v2106 = vsel %vm2042, %v1530, %v1978
        %v2107 = vsel %vm2043, %v1531, %v1979
        %v2108 = vsel %vm2044, %v1532, %v1980
        %v2109 = vsel %vm2045, %v1533, %v1981
        %v2110 = vsel %vm2046, %v1534, %v1982
        %v2111 = vsel %vm2047, %v1535, %v1983
        %v2112 = vsel %vm2048, %v1536, %v1984
        %v2113 = vsel %vm2049, %v1537, %v1985
        %v2114 = vsel %vm2050, %v1538, %v1986
        %v2115 = vsel %vm2051, %v1539, %v1987
        %v2116 = vsel %vm2052, %v1540, %v1988
        %v2117 = vsel %vm2053, %v1541, %v1989
        %v2118 = vsel %vm2054, %v1542, %v1990
        %v2119 = vsel %vm2055, %v1543, %v1991
        %v2120 = vsel %vm2056, %v1544, %v1992
        %v2121 = vsel %vm2057, %v1545, %v1993
        %v2122 = vsel %vm2058, %v1546, %v1994
        %v2123 = vsel %vm2059, %v1547, %v1995
        %v2124 = vsel %vm2060, %v1548, %v1996
        %v2125 = vsel %vm2061, %v1549, %v1997
        %v2126 = vsel %vm2062, %v1550, %v1998
        %v2127 = vsel %vm2063, %v1551, %v1999
        %v2128 = vsel %vm2064, %v1552, %v2000
        %v2129 = vsel %vm2065, %v1553, %v2001
        %v2130 = vsel %vm2066, %v1554, %v2002
        %v2131 = vsel %vm2067, %v1555, %v2003
        %v2132 = vsel %vm2068, %v1556, %v2004
        %v2133 = vsel %vm2069, %v1557, %v2005
        %v2134 = vsel %vm2070, %v1558, %v2006
        %v2135 = vsel %vm2071, %v1559, %v2007
        %v2136 = vsel %vm2072, %v1560, %v2008
        %v2137 = vsel %vm2073, %v1561, %v2009
        %v2138 = vsel %vm2074, %v1562, %v2010
        %v2139 = vsel %vm2075, %v1563, %v2011
        %v2140 = vsel %vm2076, %v1564, %v2012
        %v2141 = vsel %vm2077, %v1565, %v2013
        %v2142 = vsel %vm2078, %v1566, %v2014
        %v2143 = vsel %vm2079, %v1567, %v2015
        %v2144 = vld [vmem:[%s2] sm:$0xff]
        %v2145 = vld [vmem:[%s2 + $0x8] sm:$0xff]
        %v2146 = vld [vmem:[%s2 + $0x10] sm:$0xff]
        %v2147 = vld [vmem:[%s2 + $0x18] sm:$0xff]
        %v2148 = vld [vmem:[%s2 + $0x20] sm:$0xff]
        %v2149 = vld [vmem:[%s2 + $0x28] sm:$0xff]
        %v2150 = vld [vmem:[%s2 + $0x30] sm:$0xff]
        %v2151 = vld [vmem:[%s2 + $0x38] sm:$0xff]
        %v2152 = vld [vmem:[%s2 + $0x40] sm:$0xff]
        %v2153 = vld [vmem:[%s2 + $0x48] sm:$0xff]
        %v2154 = vld [vmem:[%s2 + $0x50] sm:$0xff]
        %v2155 = vld [vmem:[%s2 + $0x58] sm:$0xff]
        %v2156 = vld [vmem:[%s2 + $0x60] sm:$0xff]
        %v2157 = vld [vmem:[%s2 + $0x68] sm:$0xff]
        %v2158 = vld [vmem:[%s2 + $0x70] sm:$0xff]
        %v2159 = vld [vmem:[%s2 + $0x78] sm:$0xff]
        %v2160 = vld [vmem:[%s2 + $0x80] sm:$0xff]
        %v2161 = vld [vmem:[%s2 + $0x88] sm:$0xff]
        %v2162 = vld [vmem:[%s2 + $0x90] sm:$0xff]
        %v2163 = vld [vmem:[%s2 + $0x98] sm:$0xff]
        %v2164 = vld [vmem:[%s2 + $0xa0] sm:$0xff]
        %v2165 = vld [vmem:[%s2 + $0xa8] sm:$0xff]
        %v2166 = vld [vmem:[%s2 + $0xb0] sm:$0xff]
        %v2167 = vld [vmem:[%s2 + $0xb8] sm:$0xff]
        %v2168 = vld [vmem:[%s2 + $0xc0] sm:$0xff]
        %v2169 = vld [vmem:[%s2 + $0xc8] sm:$0xff]
        %v2170 = vld [vmem:[%s2 + $0xd0] sm:$0xff]
        %v2171 = vld [vmem:[%s2 + $0xd8] sm:$0xff]
        %v2172 = vld [vmem:[%s2 + $0xe0] sm:$0xff]
        %v2173 = vld [vmem:[%s2 + $0xe8] sm:$0xff]
        %v2174 = vld [vmem:[%s2 + $0xf0] sm:$0xff]
        %v2175 = vld [vmem:[%s2 + $0xf8] sm:$0xff]
        %v2176 = vld [vmem:[%s2 + $0x100] sm:$0xff]
        %v2177 = vld [vmem:[%s2 + $0x108] sm:$0xff]
        %v2178 = vld [vmem:[%s2 + $0x110] sm:$0xff]
        %v2179 = vld [vmem:[%s2 + $0x118] sm:$0xff]
        %v2180 = vld [vmem:[%s2 + $0x120] sm:$0xff]
        %v2181 = vld [vmem:[%s2 + $0x128] sm:$0xff]
        %v2182 = vld [vmem:[%s2 + $0x130] sm:$0xff]
        %v2183 = vld [vmem:[%s2 + $0x138] sm:$0xff]
        %v2184 = vld [vmem:[%s2 + $0x140] sm:$0xff]
        %v2185 = vld [vmem:[%s2 + $0x148] sm:$0xff]
        %v2186 = vld [vmem:[%s2 + $0x150] sm:$0xff]
        %v2187 = vld [vmem:[%s2 + $0x158] sm:$0xff]
        %v2188 = vld [vmem:[%s2 + $0x160] sm:$0xff]
        %v2189 = vld [vmem:[%s2 + $0x168] sm:$0xff]
        %v2190 = vld [vmem:[%s2 + $0x170] sm:$0xff]
        %v2191 = vld [vmem:[%s2 + $0x178] sm:$0xff]
        %v2192 = vld [vmem:[%s2 + $0x180] sm:$0xff]
        %v2193 = vld [vmem:[%s2 + $0x188] sm:$0xff]
        %v2194 = vld [vmem:[%s2 + $0x190] sm:$0xff]
        %v2195 = vld [vmem:[%s2 + $0x198] sm:$0xff]
        %v2196 = vld [vmem:[%s2 + $0x1a0] sm:$0xff]
        %v2197 = vld [vmem:[%s2 + $0x1a8] sm:$0xff]
        %v2198 = vld [vmem:[%s2 + $0x1b0] sm:$0xff]
        %v2199 = vld [vmem:[%s2 + $0x1b8] sm:$0xff]
        %v2200 = vld [vmem:[%s2 + $0x1c0] sm:$0xff]
        %v2201 = vld [vmem:[%s2 + $0x1c8] sm:$0xff]
        %v2202 = vld [vmem:[%s2 + $0x1d0] sm:$0xff]
        %v2203 = vld [vmem:[%s2 + $0x1d8] sm:$0xff]
        %v2204 = vld [vmem:[%s2 + $0x1e0] sm:$0xff]
        %v2205 = vld [vmem:[%s2 + $0x1e8] sm:$0xff]
        %v2206 = vld [vmem:[%s2 + $0x1f0] sm:$0xff]
        %v2207 = vld [vmem:[%s2 + $0x1f8] sm:$0xff]
        %v2208 = vld [vmem:[%s12] sm:$0x3]
        %v2210 = vperm.slane %v2208, 0
        %v2211 = vperm.slane %v2208, 1
        %v2278 = vunpack.c.l.b16 %v2080
        %v2279 = vunpack.c.h.b16 %v2080
        %v2280 = vunpack.c.l.b16 %v2081
        %v2281 = vunpack.c.h.b16 %v2081
        %v2282 = vunpack.c.l.b16 %v2082
        %v2283 = vunpack.c.h.b16 %v2082
        %v2284 = vunpack.c.l.b16 %v2083
        %v2285 = vunpack.c.h.b16 %v2083
        %v2286 = vunpack.c.l.b16 %v2084
        %v2287 = vunpack.c.h.b16 %v2084
        %v2288 = vunpack.c.l.b16 %v2085
        %v2289 = vunpack.c.h.b16 %v2085
        %v2290 = vunpack.c.l.b16 %v2086
        %v2291 = vunpack.c.h.b16 %v2086
        %v2292 = vunpack.c.l.b16 %v2087
        %v2293 = vunpack.c.h.b16 %v2087
        %v2294 = vunpack.c.l.b16 %v2088
        %v2295 = vunpack.c.h.b16 %v2088
        %v2296 = vunpack.c.l.b16 %v2089
        %v2297 = vunpack.c.h.b16 %v2089
        %v2298 = vunpack.c.l.b16 %v2090
        %v2299 = vunpack.c.h.b16 %v2090
        %v2300 = vunpack.c.l.b16 %v2091
        %v2301 = vunpack.c.h.b16 %v2091
        %v2302 = vunpack.c.l.b16 %v2092
        %v2303 = vunpack.c.h.b16 %v2092
        %v2304 = vunpack.c.l.b16 %v2093
        %v2305 = vunpack.c.h.b16 %v2093
        %v2306 = vunpack.c.l.b16 %v2094
        %v2307 = vunpack.c.h.b16 %v2094
        %v2308 = vunpack.c.l.b16 %v2095
        %v2309 = vunpack.c.h.b16 %v2095
        %v2310 = vunpack.c.l.b16 %v2096
        %v2311 = vunpack.c.h.b16 %v2096
        %v2312 = vunpack.c.l.b16 %v2097
        %v2313 = vunpack.c.h.b16 %v2097
        %v2314 = vunpack.c.l.b16 %v2098
        %v2315 = vunpack.c.h.b16 %v2098
        %v2316 = vunpack.c.l.b16 %v2099
        %v2317 = vunpack.c.h.b16 %v2099
        %v2318 = vunpack.c.l.b16 %v2100
        %v2319 = vunpack.c.h.b16 %v2100
        %v2320 = vunpack.c.l.b16 %v2101
        %v2321 = vunpack.c.h.b16 %v2101
        %v2322 = vunpack.c.l.b16 %v2102
        %v2323 = vunpack.c.h.b16 %v2102
        %v2324 = vunpack.c.l.b16 %v2103
        %v2325 = vunpack.c.h.b16 %v2103
        %v2326 = vunpack.c.l.b16 %v2104
        %v2327 = vunpack.c.h.b16 %v2104
        %v2328 = vunpack.c.l.b16 %v2105
        %v2329 = vunpack.c.h.b16 %v2105
        %v2330 = vunpack.c.l.b16 %v2106
        %v2331 = vunpack.c.h.b16 %v2106
        %v2332 = vunpack.c.l.b16 %v2107
        %v2333 = vunpack.c.h.b16 %v2107
        %v2334 = vunpack.c.l.b16 %v2108
        %v2335 = vunpack.c.h.b16 %v2108
        %v2336 = vunpack.c.l.b16 %v2109
        %v2337 = vunpack.c.h.b16 %v2109
        %v2338 = vunpack.c.l.b16 %v2110
        %v2339 = vunpack.c.h.b16 %v2110
        %v2340 = vunpack.c.l.b16 %v2111
        %v2341 = vunpack.c.h.b16 %v2111
        %v2342 = vunpack.c.l.b16 %v2112
        %v2343 = vunpack.c.h.b16 %v2112
        %v2344 = vunpack.c.l.b16 %v2113
        %v2345 = vunpack.c.h.b16 %v2113
        %v2346 = vunpack.c.l.b16 %v2114
        %v2347 = vunpack.c.h.b16 %v2114
        %v2348 = vunpack.c.l.b16 %v2115
        %v2349 = vunpack.c.h.b16 %v2115
        %v2350 = vunpack.c.l.b16 %v2116
        %v2351 = vunpack.c.h.b16 %v2116
        %v2352 = vunpack.c.l.b16 %v2117
        %v2353 = vunpack.c.h.b16 %v2117
        %v2354 = vunpack.c.l.b16 %v2118
        %v2355 = vunpack.c.h.b16 %v2118
        %v2356 = vunpack.c.l.b16 %v2119
        %v2357 = vunpack.c.h.b16 %v2119
        %v2358 = vunpack.c.l.b16 %v2120
        %v2359 = vunpack.c.h.b16 %v2120
        %v2360 = vunpack.c.l.b16 %v2121
        %v2361 = vunpack.c.h.b16 %v2121
        %v2362 = vunpack.c.l.b16 %v2122
        %v2363 = vunpack.c.h.b16 %v2122
        %v2364 = vunpack.c.l.b16 %v2123
        %v2365 = vunpack.c.h.b16 %v2123
        %v2366 = vunpack.c.l.b16 %v2124
        %v2367 = vunpack.c.h.b16 %v2124
        %v2368 = vunpack.c.l.b16 %v2125
        %v2369 = vunpack.c.h.b16 %v2125
        %v2370 = vunpack.c.l.b16 %v2126
        %v2371 = vunpack.c.h.b16 %v2126
        %v2372 = vunpack.c.l.b16 %v2127
        %v2373 = vunpack.c.h.b16 %v2127
        %v2374 = vunpack.c.l.b16 %v2128
        %v2375 = vunpack.c.h.b16 %v2128
        %v2376 = vunpack.c.l.b16 %v2129
        %v2377 = vunpack.c.h.b16 %v2129
        %v2378 = vunpack.c.l.b16 %v2130
        %v2379 = vunpack.c.h.b16 %v2130
        %v2380 = vunpack.c.l.b16 %v2131
        %v2381 = vunpack.c.h.b16 %v2131
        %v2382 = vunpack.c.l.b16 %v2132
        %v2383 = vunpack.c.h.b16 %v2132
        %v2384 = vunpack.c.l.b16 %v2133
        %v2385 = vunpack.c.h.b16 %v2133
        %v2386 = vunpack.c.l.b16 %v2134
        %v2387 = vunpack.c.h.b16 %v2134
        %v2388 = vunpack.c.l.b16 %v2135
        %v2389 = vunpack.c.h.b16 %v2135
        %v2390 = vunpack.c.l.b16 %v2136
        %v2391 = vunpack.c.h.b16 %v2136
        %v2392 = vunpack.c.l.b16 %v2137
        %v2393 = vunpack.c.h.b16 %v2137
        %v2394 = vunpack.c.l.b16 %v2138
        %v2395 = vunpack.c.h.b16 %v2138
        %v2396 = vunpack.c.l.b16 %v2139
        %v2397 = vunpack.c.h.b16 %v2139
        %v2398 = vunpack.c.l.b16 %v2140
        %v2399 = vunpack.c.h.b16 %v2140
        %v2400 = vunpack.c.l.b16 %v2141
        %v2401 = vunpack.c.h.b16 %v2141
        %v2402 = vunpack.c.l.b16 %v2142
        %v2403 = vunpack.c.h.b16 %v2142
        %v2404 = vunpack.c.l.b16 %v2143
        %v2405 = vunpack.c.h.b16 %v2143
        %v2406 = vpack.c.b16 %v2282, %v2278
        %v2407 = vpack.c.b16 %v2283, %v2279
        %v2408 = vpack.c.b16 %v2284, %v2280
        %v2409 = vpack.c.b16 %v2285, %v2281
        %v2410 = vpack.c.b16 %v2290, %v2286
        %v2411 = vpack.c.b16 %v2291, %v2287
        %v2412 = vpack.c.b16 %v2292, %v2288
        %v2413 = vpack.c.b16 %v2293, %v2289
        %v2414 = vpack.c.b16 %v2298, %v2294
        %v2415 = vpack.c.b16 %v2299, %v2295
        %v2416 = vpack.c.b16 %v2300, %v2296
        %v2417 = vpack.c.b16 %v2301, %v2297
        %v2418 = vpack.c.b16 %v2306, %v2302
        %v2419 = vpack.c.b16 %v2307, %v2303
        %v2420 = vpack.c.b16 %v2308, %v2304
        %v2421 = vpack.c.b16 %v2309, %v2305
        %v2422 = vpack.c.b16 %v2314, %v2310
        %v2423 = vpack.c.b16 %v2315, %v2311
        %v2424 = vpack.c.b16 %v2316, %v2312
        %v2425 = vpack.c.b16 %v2317, %v2313
        %v2426 = vpack.c.b16 %v2322, %v2318
        %v2427 = vpack.c.b16 %v2323, %v2319
        %v2428 = vpack.c.b16 %v2324, %v2320
        %v2429 = vpack.c.b16 %v2325, %v2321
        %v2430 = vpack.c.b16 %v2330, %v2326
        %v2431 = vpack.c.b16 %v2331, %v2327
        %v2432 = vpack.c.b16 %v2332, %v2328
        %v2433 = vpack.c.b16 %v2333, %v2329
        %v2434 = vpack.c.b16 %v2338, %v2334
        %v2435 = vpack.c.b16 %v2339, %v2335
        %v2436 = vpack.c.b16 %v2340, %v2336
        %v2437 = vpack.c.b16 %v2341, %v2337
        %v2438 = vpack.c.b16 %v2346, %v2342
        %v2439 = vpack.c.b16 %v2347, %v2343
        %v2440 = vpack.c.b16 %v2348, %v2344
        %v2441 = vpack.c.b16 %v2349, %v2345
        %v2442 = vpack.c.b16 %v2354, %v2350
        %v2443 = vpack.c.b16 %v2355, %v2351
        %v2444 = vpack.c.b16 %v2356, %v2352
        %v2445 = vpack.c.b16 %v2357, %v2353
        %v2446 = vpack.c.b16 %v2362, %v2358
        %v2447 = vpack.c.b16 %v2363, %v2359
        %v2448 = vpack.c.b16 %v2364, %v2360
        %v2449 = vpack.c.b16 %v2365, %v2361
        %v2450 = vpack.c.b16 %v2370, %v2366
        %v2451 = vpack.c.b16 %v2371, %v2367
        %v2452 = vpack.c.b16 %v2372, %v2368
        %v2453 = vpack.c.b16 %v2373, %v2369
        %v2454 = vpack.c.b16 %v2378, %v2374
        %v2455 = vpack.c.b16 %v2379, %v2375
        %v2456 = vpack.c.b16 %v2380, %v2376
        %v2457 = vpack.c.b16 %v2381, %v2377
        %v2458 = vpack.c.b16 %v2386, %v2382
        %v2459 = vpack.c.b16 %v2387, %v2383
        %v2460 = vpack.c.b16 %v2388, %v2384
        %v2461 = vpack.c.b16 %v2389, %v2385
        %v2462 = vpack.c.b16 %v2394, %v2390
        %v2463 = vpack.c.b16 %v2395, %v2391
        %v2464 = vpack.c.b16 %v2396, %v2392
        %v2465 = vpack.c.b16 %v2397, %v2393
        %v2466 = vpack.c.b16 %v2402, %v2398
        %v2467 = vpack.c.b16 %v2403, %v2399
        %v2468 = vpack.c.b16 %v2404, %v2400
        %v2469 = vpack.c.b16 %v2405, %v2401
        %v2598 = vunpack.c.l.b16 %v2144
        %v2599 = vunpack.c.h.b16 %v2144
        %v2600 = vunpack.c.l.b16 %v2145
        %v2601 = vunpack.c.h.b16 %v2145
        %v2602 = vunpack.c.l.b16 %v2146
        %v2603 = vunpack.c.h.b16 %v2146
        %v2604 = vunpack.c.l.b16 %v2147
        %v2605 = vunpack.c.h.b16 %v2147
        %v2606 = vunpack.c.l.b16 %v2148
        %v2607 = vunpack.c.h.b16 %v2148
        %v2608 = vunpack.c.l.b16 %v2149
        %v2609 = vunpack.c.h.b16 %v2149
        %v2610 = vunpack.c.l.b16 %v2150
        %v2611 = vunpack.c.h.b16 %v2150
        %v2612 = vunpack.c.l.b16 %v2151
        %v2613 = vunpack.c.h.b16 %v2151
        %v2614 = vunpack.c.l.b16 %v2152
        %v2615 = vunpack.c.h.b16 %v2152
        %v2616 = vunpack.c.l.b16 %v2153
        %v2617 = vunpack.c.h.b16 %v2153
        %v2618 = vunpack.c.l.b16 %v2154
        %v2619 = vunpack.c.h.b16 %v2154
        %v2620 = vunpack.c.l.b16 %v2155
        %v2621 = vunpack.c.h.b16 %v2155
        %v2622 = vunpack.c.l.b16 %v2156
        %v2623 = vunpack.c.h.b16 %v2156
        %v2624 = vunpack.c.l.b16 %v2157
        %v2625 = vunpack.c.h.b16 %v2157
        %v2626 = vunpack.c.l.b16 %v2158
        %v2627 = vunpack.c.h.b16 %v2158
        %v2628 = vunpack.c.l.b16 %v2159
        %v2629 = vunpack.c.h.b16 %v2159
        %v2630 = vunpack.c.l.b16 %v2160
        %v2631 = vunpack.c.h.b16 %v2160
        %v2632 = vunpack.c.l.b16 %v2161
        %v2633 = vunpack.c.h.b16 %v2161
        %v2634 = vunpack.c.l.b16 %v2162
        %v2635 = vunpack.c.h.b16 %v2162
        %v2636 = vunpack.c.l.b16 %v2163
        %v2637 = vunpack.c.h.b16 %v2163
        %v2638 = vunpack.c.l.b16 %v2164
        %v2639 = vunpack.c.h.b16 %v2164
        %v2640 = vunpack.c.l.b16 %v2165
        %v2641 = vunpack.c.h.b16 %v2165
        %v2642 = vunpack.c.l.b16 %v2166
        %v2643 = vunpack.c.h.b16 %v2166
        %v2644 = vunpack.c.l.b16 %v2167
        %v2645 = vunpack.c.h.b16 %v2167
        %v2646 = vunpack.c.l.b16 %v2168
        %v2647 = vunpack.c.h.b16 %v2168
        %v2648 = vunpack.c.l.b16 %v2169
        %v2649 = vunpack.c.h.b16 %v2169
        %v2650 = vunpack.c.l.b16 %v2170
        %v2651 = vunpack.c.h.b16 %v2170
        %v2652 = vunpack.c.l.b16 %v2171
        %v2653 = vunpack.c.h.b16 %v2171
        %v2654 = vunpack.c.l.b16 %v2172
        %v2655 = vunpack.c.h.b16 %v2172
        %v2656 = vunpack.c.l.b16 %v2173
        %v2657 = vunpack.c.h.b16 %v2173
        %v2658 = vunpack.c.l.b16 %v2174
        %v2659 = vunpack.c.h.b16 %v2174
        %v2660 = vunpack.c.l.b16 %v2175
        %v2661 = vunpack.c.h.b16 %v2175
        %v2662 = vunpack.c.l.b16 %v2176
        %v2663 = vunpack.c.h.b16 %v2176
        %v2664 = vunpack.c.l.b16 %v2177
        %v2665 = vunpack.c.h.b16 %v2177
        %v2666 = vunpack.c.l.b16 %v2178
        %v2667 = vunpack.c.h.b16 %v2178
        %v2668 = vunpack.c.l.b16 %v2179
        %v2669 = vunpack.c.h.b16 %v2179
        %v2670 = vunpack.c.l.b16 %v2180
        %v2671 = vunpack.c.h.b16 %v2180
        %v2672 = vunpack.c.l.b16 %v2181
        %v2673 = vunpack.c.h.b16 %v2181
        %v2674 = vunpack.c.l.b16 %v2182
        %v2675 = vunpack.c.h.b16 %v2182
        %v2676 = vunpack.c.l.b16 %v2183
        %v2677 = vunpack.c.h.b16 %v2183
        %v2678 = vunpack.c.l.b16 %v2184
        %v2679 = vunpack.c.h.b16 %v2184
        %v2680 = vunpack.c.l.b16 %v2185
        %v2681 = vunpack.c.h.b16 %v2185
        %v2682 = vunpack.c.l.b16 %v2186
        %v2683 = vunpack.c.h.b16 %v2186
        %v2684 = vunpack.c.l.b16 %v2187
        %v2685 = vunpack.c.h.b16 %v2187
        %v2686 = vunpack.c.l.b16 %v2188
        %v2687 = vunpack.c.h.b16 %v2188
        %v2688 = vunpack.c.l.b16 %v2189
        %v2689 = vunpack.c.h.b16 %v2189
        %v2690 = vunpack.c.l.b16 %v2190
        %v2691 = vunpack.c.h.b16 %v2190
        %v2692 = vunpack.c.l.b16 %v2191
        %v2693 = vunpack.c.h.b16 %v2191
        %v2694 = vunpack.c.l.b16 %v2192
        %v2695 = vunpack.c.h.b16 %v2192
        %v2696 = vunpack.c.l.b16 %v2193
        %v2697 = vunpack.c.h.b16 %v2193
        %v2698 = vunpack.c.l.b16 %v2194
        %v2699 = vunpack.c.h.b16 %v2194
        %v2700 = vunpack.c.l.b16 %v2195
        %v2701 = vunpack.c.h.b16 %v2195
        %v2702 = vunpack.c.l.b16 %v2196
        %v2703 = vunpack.c.h.b16 %v2196
        %v2704 = vunpack.c.l.b16 %v2197
        %v2705 = vunpack.c.h.b16 %v2197
        %v2706 = vunpack.c.l.b16 %v2198
        %v2707 = vunpack.c.h.b16 %v2198
        %v2708 = vunpack.c.l.b16 %v2199
        %v2709 = vunpack.c.h.b16 %v2199
        %v2710 = vunpack.c.l.b16 %v2200
        %v2711 = vunpack.c.h.b16 %v2200
        %v2712 = vunpack.c.l.b16 %v2201
        %v2713 = vunpack.c.h.b16 %v2201
        %v2714 = vunpack.c.l.b16 %v2202
        %v2715 = vunpack.c.h.b16 %v2202
        %v2716 = vunpack.c.l.b16 %v2203
        %v2717 = vunpack.c.h.b16 %v2203
        %v2718 = vunpack.c.l.b16 %v2204
        %v2719 = vunpack.c.h.b16 %v2204
        %v2720 = vunpack.c.l.b16 %v2205
        %v2721 = vunpack.c.h.b16 %v2205
        %v2722 = vunpack.c.l.b16 %v2206
        %v2723 = vunpack.c.h.b16 %v2206
        %v2724 = vunpack.c.l.b16 %v2207
        %v2725 = vunpack.c.h.b16 %v2207
        %v2726 = vpack.c.b16 %v2600, %v2598
        %v2727 = vpack.c.b16 %v2601, %v2599
        %v2728 = vpack.c.b16 %v2604, %v2602
        %v2729 = vpack.c.b16 %v2605, %v2603
        %v2730 = vpack.c.b16 %v2608, %v2606
        %v2731 = vpack.c.b16 %v2609, %v2607
        %v2732 = vpack.c.b16 %v2612, %v2610
        %v2733 = vpack.c.b16 %v2613, %v2611
        %v2734 = vpack.c.b16 %v2616, %v2614
        %v2735 = vpack.c.b16 %v2617, %v2615
        %v2736 = vpack.c.b16 %v2620, %v2618
        %v2737 = vpack.c.b16 %v2621, %v2619
        %v2738 = vpack.c.b16 %v2624, %v2622
        %v2739 = vpack.c.b16 %v2625, %v2623
        %v2740 = vpack.c.b16 %v2628, %v2626
        %v2741 = vpack.c.b16 %v2629, %v2627
        %v2742 = vpack.c.b16 %v2632, %v2630
        %v2743 = vpack.c.b16 %v2633, %v2631
        %v2744 = vpack.c.b16 %v2636, %v2634
        %v2745 = vpack.c.b16 %v2637, %v2635
        %v2746 = vpack.c.b16 %v2640, %v2638
        %v2747 = vpack.c.b16 %v2641, %v2639
        %v2748 = vpack.c.b16 %v2644, %v2642
        %v2749 = vpack.c.b16 %v2645, %v2643
        %v2750 = vpack.c.b16 %v2648, %v2646
        %v2751 = vpack.c.b16 %v2649, %v2647
        %v2752 = vpack.c.b16 %v2652, %v2650
        %v2753 = vpack.c.b16 %v2653, %v2651
        %v2754 = vpack.c.b16 %v2656, %v2654
        %v2755 = vpack.c.b16 %v2657, %v2655
        %v2756 = vpack.c.b16 %v2660, %v2658
        %v2757 = vpack.c.b16 %v2661, %v2659
        %v2758 = vpack.c.b16 %v2664, %v2662
        %v2759 = vpack.c.b16 %v2665, %v2663
        %v2760 = vpack.c.b16 %v2668, %v2666
        %v2761 = vpack.c.b16 %v2669, %v2667
        %v2762 = vpack.c.b16 %v2672, %v2670
        %v2763 = vpack.c.b16 %v2673, %v2671
        %v2764 = vpack.c.b16 %v2676, %v2674
        %v2765 = vpack.c.b16 %v2677, %v2675
        %v2766 = vpack.c.b16 %v2680, %v2678
        %v2767 = vpack.c.b16 %v2681, %v2679
        %v2768 = vpack.c.b16 %v2684, %v2682
        %v2769 = vpack.c.b16 %v2685, %v2683
        %v2770 = vpack.c.b16 %v2688, %v2686
        %v2771 = vpack.c.b16 %v2689, %v2687
        %v2772 = vpack.c.b16 %v2692, %v2690
        %v2773 = vpack.c.b16 %v2693, %v2691
        %v2774 = vpack.c.b16 %v2696, %v2694
        %v2775 = vpack.c.b16 %v2697, %v2695
        %v2776 = vpack.c.b16 %v2700, %v2698
        %v2777 = vpack.c.b16 %v2701, %v2699
        %v2778 = vpack.c.b16 %v2704, %v2702
        %v2779 = vpack.c.b16 %v2705, %v2703
        %v2780 = vpack.c.b16 %v2708, %v2706
        %v2781 = vpack.c.b16 %v2709, %v2707
        %v2782 = vpack.c.b16 %v2712, %v2710
        %v2783 = vpack.c.b16 %v2713, %v2711
        %v2784 = vpack.c.b16 %v2716, %v2714
        %v2785 = vpack.c.b16 %v2717, %v2715
        %v2786 = vpack.c.b16 %v2720, %v2718
        %v2787 = vpack.c.b16 %v2721, %v2719
        %v2788 = vpack.c.b16 %v2724, %v2722
        %v2789 = vpack.c.b16 %v2725, %v2723
        %2854 = vmatpush.bf16.msra.mxu0 %v2740
        %2855 = vmatpush.bf16.msra.mxu0 %v2738
        %2856 = vmatpush.bf16.msra.mxu0 %v2736
        %2857 = vmatpush.bf16.msra.mxu0 %v2734
        %2858 = vmatpush.bf16.msra.mxu0 %v2732
        %2859 = vmatpush.bf16.msra.mxu0 %v2730
        %2860 = vmatpush.bf16.msra.mxu0 %v2728
        %2861 = vmatpush.bf16.msra.mxu0 %v2726
        %2862 = vmatmul.bf16.gmra.mxu0 %v2406
        %v2863 = vpop.f32.mrf.mxu0
        %v2864 = vadd.f32 %v2210, %v2863
        %v2865 = vpop.f32.mrf.mxu0
        %v2866 = vadd.f32 %v2210, %v2865
        %2867 = vmatmul.bf16.gmra.mxu0 %v2410
        %v2868 = vpop.f32.mrf.mxu0
        %v2869 = vadd.f32 %v2210, %v2868
        %v2870 = vpop.f32.mrf.mxu0
        %v2871 = vadd.f32 %v2210, %v2870
        %2872 = vmatmul.bf16.gmra.mxu0 %v2414
        %v2873 = vpop.f32.mrf.mxu0
        %v2874 = vadd.f32 %v2210, %v2873
        %v2875 = vpop.f32.mrf.mxu0
        %v2876 = vadd.f32 %v2210, %v2875
        %2877 = vmatmul.bf16.gmra.mxu0 %v2418
        %v2878 = vpop.f32.mrf.mxu0
        %v2879 = vadd.f32 %v2210, %v2878
        %v2880 = vpop.f32.mrf.mxu0
        %v2881 = vadd.f32 %v2210, %v2880
        %2882 = vmatmul.bf16.gmra.mxu0 %v2422
        %v2883 = vpop.f32.mrf.mxu0
        %v2884 = vadd.f32 %v2210, %v2883
        %v2885 = vpop.f32.mrf.mxu0
        %v2886 = vadd.f32 %v2210, %v2885
        %2887 = vmatmul.bf16.gmra.mxu0 %v2426
        %v2888 = vpop.f32.mrf.mxu0
        %v2889 = vadd.f32 %v2210, %v2888
        %v2890 = vpop.f32.mrf.mxu0
        %v2891 = vadd.f32 %v2210, %v2890
        %2892 = vmatmul.bf16.gmra.mxu0 %v2430
        %v2893 = vpop.f32.mrf.mxu0
        %v2894 = vadd.f32 %v2210, %v2893
        %v2895 = vpop.f32.mrf.mxu0
        %v2896 = vadd.f32 %v2210, %v2895
        %2897 = vmatmul.bf16.gmra.mxu0 %v2434
        %v2898 = vpop.f32.mrf.mxu0
        %v2899 = vadd.f32 %v2210, %v2898
        %v2900 = vpop.f32.mrf.mxu0
        %v2901 = vadd.f32 %v2210, %v2900
        %2902 = vmatmul.bf16.gmra.mxu0 %v2438
        %v2903 = vpop.f32.mrf.mxu0
        %v2904 = vadd.f32 %v2210, %v2903
        %v2905 = vpop.f32.mrf.mxu0
        %v2906 = vadd.f32 %v2210, %v2905
        %2907 = vmatmul.bf16.gmra.mxu0 %v2442
        %v2908 = vpop.f32.mrf.mxu0
        %v2909 = vadd.f32 %v2210, %v2908
        %v2910 = vpop.f32.mrf.mxu0
        %v2911 = vadd.f32 %v2210, %v2910
        %2912 = vmatmul.bf16.gmra.mxu0 %v2446
        %v2913 = vpop.f32.mrf.mxu0
        %v2914 = vadd.f32 %v2210, %v2913
        %v2915 = vpop.f32.mrf.mxu0
        %v2916 = vadd.f32 %v2210, %v2915
        %2917 = vmatmul.bf16.gmra.mxu0 %v2450
        %v2918 = vpop.f32.mrf.mxu0
        %v2919 = vadd.f32 %v2210, %v2918
        %v2920 = vpop.f32.mrf.mxu0
        %v2921 = vadd.f32 %v2210, %v2920
        %2922 = vmatmul.bf16.gmra.mxu0 %v2454
        %v2923 = vpop.f32.mrf.mxu0
        %v2924 = vadd.f32 %v2210, %v2923
        %v2925 = vpop.f32.mrf.mxu0
        %v2926 = vadd.f32 %v2210, %v2925
        %2927 = vmatmul.bf16.gmra.mxu0 %v2458
        %v2928 = vpop.f32.mrf.mxu0
        %v2929 = vadd.f32 %v2210, %v2928
        %v2930 = vpop.f32.mrf.mxu0
        %v2931 = vadd.f32 %v2210, %v2930
        %2932 = vmatmul.bf16.gmra.mxu0 %v2462
        %v2933 = vpop.f32.mrf.mxu0
        %v2934 = vadd.f32 %v2210, %v2933
        %v2935 = vpop.f32.mrf.mxu0
        %v2936 = vadd.f32 %v2210, %v2935
        %2937 = vmatmul.bf16.gmra.mxu0 %v2466
        %v2938 = vpop.f32.mrf.mxu0
        %v2939 = vadd.f32 %v2210, %v2938
        %v2940 = vpop.f32.mrf.mxu0
        %v2941 = vadd.f32 %v2210, %v2940
        %2942 = vdwg.mxu0
        %2943 = vmatpush.bf16.msra.mxu0 %v2756
        %2944 = vmatpush.bf16.msra.mxu0 %v2754
        %2945 = vmatpush.bf16.msra.mxu0 %v2752
        %2946 = vmatpush.bf16.msra.mxu0 %v2750
        %2947 = vmatpush.bf16.msra.mxu0 %v2748
        %2948 = vmatpush.bf16.msra.mxu0 %v2746
        %2949 = vmatpush.bf16.msra.mxu0 %v2744
        %2950 = vmatpush.bf16.msra.mxu0 %v2742
        %2951 = vmatmul.bf16.gmra.mxu0 %v2407
        %v2952 = vpop.f32.mrf.mxu0
        %v2953 = vadd.f32 %v2864, %v2952
        %v2954 = vpop.f32.mrf.mxu0
        %v2955 = vadd.f32 %v2866, %v2954
        %2956 = vmatmul.bf16.gmra.mxu0 %v2411
        %v2957 = vpop.f32.mrf.mxu0
        %v2958 = vadd.f32 %v2869, %v2957
        %v2959 = vpop.f32.mrf.mxu0
        %v2960 = vadd.f32 %v2871, %v2959
        %2961 = vmatmul.bf16.gmra.mxu0 %v2415
        %v2962 = vpop.f32.mrf.mxu0
        %v2963 = vadd.f32 %v2874, %v2962
        %v2964 = vpop.f32.mrf.mxu0
        %v2965 = vadd.f32 %v2876, %v2964
        %2966 = vmatmul.bf16.gmra.mxu0 %v2419
        %v2967 = vpop.f32.mrf.mxu0
        %v2968 = vadd.f32 %v2879, %v2967
        %v2969 = vpop.f32.mrf.mxu0
        %v2970 = vadd.f32 %v2881, %v2969
        %2971 = vmatmul.bf16.gmra.mxu0 %v2423
        %v2972 = vpop.f32.mrf.mxu0
        %v2973 = vadd.f32 %v2884, %v2972
        %v2974 = vpop.f32.mrf.mxu0
        %v2975 = vadd.f32 %v2886, %v2974
        %2976 = vmatmul.bf16.gmra.mxu0 %v2427
        %v2977 = vpop.f32.mrf.mxu0
        %v2978 = vadd.f32 %v2889, %v2977
        %v2979 = vpop.f32.mrf.mxu0
        %v2980 = vadd.f32 %v2891, %v2979
        %2981 = vmatmul.bf16.gmra.mxu0 %v2431
        %v2982 = vpop.f32.mrf.mxu0
        %v2983 = vadd.f32 %v2894, %v2982
        %v2984 = vpop.f32.mrf.mxu0
        %v2985 = vadd.f32 %v2896, %v2984
        %2986 = vmatmul.bf16.gmra.mxu0 %v2435
        %v2987 = vpop.f32.mrf.mxu0
        %v2988 = vadd.f32 %v2899, %v2987
        %v2989 = vpop.f32.mrf.mxu0
        %v2990 = vadd.f32 %v2901, %v2989
        %2991 = vmatmul.bf16.gmra.mxu0 %v2439
        %v2992 = vpop.f32.mrf.mxu0
        %v2993 = vadd.f32 %v2904, %v2992
        %v2994 = vpop.f32.mrf.mxu0
        %v2995 = vadd.f32 %v2906, %v2994
        %2996 = vmatmul.bf16.gmra.mxu0 %v2443
        %v2997 = vpop.f32.mrf.mxu0
        %v2998 = vadd.f32 %v2909, %v2997
        %v2999 = vpop.f32.mrf.mxu0
        %v3000 = vadd.f32 %v2911, %v2999
        %3001 = vmatmul.bf16.gmra.mxu0 %v2447
        %v3002 = vpop.f32.mrf.mxu0
        %v3003 = vadd.f32 %v2914, %v3002
        %v3004 = vpop.f32.mrf.mxu0
        %v3005 = vadd.f32 %v2916, %v3004
        %3006 = vmatmul.bf16.gmra.mxu0 %v2451
        %v3007 = vpop.f32.mrf.mxu0
        %v3008 = vadd.f32 %v2919, %v3007
        %v3009 = vpop.f32.mrf.mxu0
        %v3010 = vadd.f32 %v2921, %v3009
        %3011 = vmatmul.bf16.gmra.mxu0 %v2455
        %v3012 = vpop.f32.mrf.mxu0
        %v3013 = vadd.f32 %v2924, %v3012
        %v3014 = vpop.f32.mrf.mxu0
        %v3015 = vadd.f32 %v2926, %v3014
        %3016 = vmatmul.bf16.gmra.mxu0 %v2459
        %v3017 = vpop.f32.mrf.mxu0
        %v3018 = vadd.f32 %v2929, %v3017
        %v3019 = vpop.f32.mrf.mxu0
        %v3020 = vadd.f32 %v2931, %v3019
        %3021 = vmatmul.bf16.gmra.mxu0 %v2463
        %v3022 = vpop.f32.mrf.mxu0
        %v3023 = vadd.f32 %v2934, %v3022
        %v3024 = vpop.f32.mrf.mxu0
        %v3025 = vadd.f32 %v2936, %v3024
        %3026 = vmatmul.bf16.gmra.mxu0 %v2467
        %v3027 = vpop.f32.mrf.mxu0
        %v3028 = vadd.f32 %v2939, %v3027
        %v3029 = vpop.f32.mrf.mxu0
        %v3030 = vadd.f32 %v2941, %v3029
        %3031 = vdwg.mxu0
        %3032 = vmatpush.bf16.msra.mxu0 %v2772
        %3033 = vmatpush.bf16.msra.mxu0 %v2770
        %3034 = vmatpush.bf16.msra.mxu0 %v2768
        %3035 = vmatpush.bf16.msra.mxu0 %v2766
        %3036 = vmatpush.bf16.msra.mxu0 %v2764
        %3037 = vmatpush.bf16.msra.mxu0 %v2762
        %3038 = vmatpush.bf16.msra.mxu0 %v2760
        %3039 = vmatpush.bf16.msra.mxu0 %v2758
        %3040 = vmatmul.bf16.gmra.mxu0 %v2408
        %v3041 = vpop.f32.mrf.mxu0
        %v3042 = vadd.f32 %v2953, %v3041
        %v3043 = vpop.f32.mrf.mxu0
        %v3044 = vadd.f32 %v2955, %v3043
        %3045 = vmatmul.bf16.gmra.mxu0 %v2412
        %v3046 = vpop.f32.mrf.mxu0
        %v3047 = vadd.f32 %v2958, %v3046
        %v3048 = vpop.f32.mrf.mxu0
        %v3049 = vadd.f32 %v2960, %v3048
        %3050 = vmatmul.bf16.gmra.mxu0 %v2416
        %v3051 = vpop.f32.mrf.mxu0
        %v3052 = vadd.f32 %v2963, %v3051
        %v3053 = vpop.f32.mrf.mxu0
        %v3054 = vadd.f32 %v2965, %v3053
        %3055 = vmatmul.bf16.gmra.mxu0 %v2420
        %v3056 = vpop.f32.mrf.mxu0
        %v3057 = vadd.f32 %v2968, %v3056
        %v3058 = vpop.f32.mrf.mxu0
        %v3059 = vadd.f32 %v2970, %v3058
        %3060 = vmatmul.bf16.gmra.mxu0 %v2424
        %v3061 = vpop.f32.mrf.mxu0
        %v3062 = vadd.f32 %v2973, %v3061
        %v3063 = vpop.f32.mrf.mxu0
        %v3064 = vadd.f32 %v2975, %v3063
        %3065 = vmatmul.bf16.gmra.mxu0 %v2428
        %v3066 = vpop.f32.mrf.mxu0
        %v3067 = vadd.f32 %v2978, %v3066
        %v3068 = vpop.f32.mrf.mxu0
        %v3069 = vadd.f32 %v2980, %v3068
        %3070 = vmatmul.bf16.gmra.mxu0 %v2432
        %v3071 = vpop.f32.mrf.mxu0
        %v3072 = vadd.f32 %v2983, %v3071
        %v3073 = vpop.f32.mrf.mxu0
        %v3074 = vadd.f32 %v2985, %v3073
        %3075 = vmatmul.bf16.gmra.mxu0 %v2436
        %v3076 = vpop.f32.mrf.mxu0
        %v3077 = vadd.f32 %v2988, %v3076
        %v3078 = vpop.f32.mrf.mxu0
        %v3079 = vadd.f32 %v2990, %v3078
        %3080 = vmatmul.bf16.gmra.mxu0 %v2440
        %v3081 = vpop.f32.mrf.mxu0
        %v3082 = vadd.f32 %v2993, %v3081
        %v3083 = vpop.f32.mrf.mxu0
        %v3084 = vadd.f32 %v2995, %v3083
        %3085 = vmatmul.bf16.gmra.mxu0 %v2444
        %v3086 = vpop.f32.mrf.mxu0
        %v3087 = vadd.f32 %v2998, %v3086
        %v3088 = vpop.f32.mrf.mxu0
        %v3089 = vadd.f32 %v3000, %v3088
        %3090 = vmatmul.bf16.gmra.mxu0 %v2448
        %v3091 = vpop.f32.mrf.mxu0
        %v3092 = vadd.f32 %v3003, %v3091
        %v3093 = vpop.f32.mrf.mxu0
        %v3094 = vadd.f32 %v3005, %v3093
        %3095 = vmatmul.bf16.gmra.mxu0 %v2452
        %v3096 = vpop.f32.mrf.mxu0
        %v3097 = vadd.f32 %v3008, %v3096
        %v3098 = vpop.f32.mrf.mxu0
        %v3099 = vadd.f32 %v3010, %v3098
        %3100 = vmatmul.bf16.gmra.mxu0 %v2456
        %v3101 = vpop.f32.mrf.mxu0
        %v3102 = vadd.f32 %v3013, %v3101
        %v3103 = vpop.f32.mrf.mxu0
        %v3104 = vadd.f32 %v3015, %v3103
        %3105 = vmatmul.bf16.gmra.mxu0 %v2460
        %v3106 = vpop.f32.mrf.mxu0
        %v3107 = vadd.f32 %v3018, %v3106
        %v3108 = vpop.f32.mrf.mxu0
        %v3109 = vadd.f32 %v3020, %v3108
        %3110 = vmatmul.bf16.gmra.mxu0 %v2464
        %v3111 = vpop.f32.mrf.mxu0
        %v3112 = vadd.f32 %v3023, %v3111
        %v3113 = vpop.f32.mrf.mxu0
        %v3114 = vadd.f32 %v3025, %v3113
        %3115 = vmatmul.bf16.gmra.mxu0 %v2468
        %v3116 = vpop.f32.mrf.mxu0
        %v3117 = vadd.f32 %v3028, %v3116
        %v3118 = vpop.f32.mrf.mxu0
        %v3119 = vadd.f32 %v3030, %v3118
        %3120 = vdwg.mxu0
        %3121 = vmatpush.bf16.msra.mxu0 %v2788
        %3122 = vmatpush.bf16.msra.mxu0 %v2786
        %3123 = vmatpush.bf16.msra.mxu0 %v2784
        %3124 = vmatpush.bf16.msra.mxu0 %v2782
        %3125 = vmatpush.bf16.msra.mxu0 %v2780
        %3126 = vmatpush.bf16.msra.mxu0 %v2778
        %3127 = vmatpush.bf16.msra.mxu0 %v2776
        %3128 = vmatpush.bf16.msra.mxu0 %v2774
        %3129 = vmatmul.bf16.gmra.mxu0 %v2409
        %v3130 = vpop.f32.mrf.mxu0
        %v3131 = vadd.f32 %v3042, %v3130
        %v3132 = vpop.f32.mrf.mxu0
        %v3133 = vadd.f32 %v3044, %v3132
        %3134 = vmatmul.bf16.gmra.mxu0 %v2413
        %v3135 = vpop.f32.mrf.mxu0
        %v3136 = vadd.f32 %v3047, %v3135
        %v3137 = vpop.f32.mrf.mxu0
        %v3138 = vadd.f32 %v3049, %v3137
        %3139 = vmatmul.bf16.gmra.mxu0 %v2417
        %v3140 = vpop.f32.mrf.mxu0
        %v3141 = vadd.f32 %v3052, %v3140
        %v3142 = vpop.f32.mrf.mxu0
        %v3143 = vadd.f32 %v3054, %v3142
        %3144 = vmatmul.bf16.gmra.mxu0 %v2421
        %v3145 = vpop.f32.mrf.mxu0
        %v3146 = vadd.f32 %v3057, %v3145
        %v3147 = vpop.f32.mrf.mxu0
        %v3148 = vadd.f32 %v3059, %v3147
        %3149 = vmatmul.bf16.gmra.mxu0 %v2425
        %v3150 = vpop.f32.mrf.mxu0
        %v3151 = vadd.f32 %v3062, %v3150
        %v3152 = vpop.f32.mrf.mxu0
        %v3153 = vadd.f32 %v3064, %v3152
        %3154 = vmatmul.bf16.gmra.mxu0 %v2429
        %v3155 = vpop.f32.mrf.mxu0
        %v3156 = vadd.f32 %v3067, %v3155
        %v3157 = vpop.f32.mrf.mxu0
        %v3158 = vadd.f32 %v3069, %v3157
        %3159 = vmatmul.bf16.gmra.mxu0 %v2433
        %v3160 = vpop.f32.mrf.mxu0
        %v3161 = vadd.f32 %v3072, %v3160
        %v3162 = vpop.f32.mrf.mxu0
        %v3163 = vadd.f32 %v3074, %v3162
        %3164 = vmatmul.bf16.gmra.mxu0 %v2437
        %v3165 = vpop.f32.mrf.mxu0
        %v3166 = vadd.f32 %v3077, %v3165
        %v3167 = vpop.f32.mrf.mxu0
        %v3168 = vadd.f32 %v3079, %v3167
        %3169 = vmatmul.bf16.gmra.mxu0 %v2441
        %v3170 = vpop.f32.mrf.mxu0
        %v3171 = vadd.f32 %v3082, %v3170
        %v3172 = vpop.f32.mrf.mxu0
        %v3173 = vadd.f32 %v3084, %v3172
        %3174 = vmatmul.bf16.gmra.mxu0 %v2445
        %v3175 = vpop.f32.mrf.mxu0
        %v3176 = vadd.f32 %v3087, %v3175
        %v3177 = vpop.f32.mrf.mxu0
        %v3178 = vadd.f32 %v3089, %v3177
        %3179 = vmatmul.bf16.gmra.mxu0 %v2449
        %v3180 = vpop.f32.mrf.mxu0
        %v3181 = vadd.f32 %v3092, %v3180
        %v3182 = vpop.f32.mrf.mxu0
        %v3183 = vadd.f32 %v3094, %v3182
        %3184 = vmatmul.bf16.gmra.mxu0 %v2453
        %v3185 = vpop.f32.mrf.mxu0
        %v3186 = vadd.f32 %v3097, %v3185
        %v3187 = vpop.f32.mrf.mxu0
        %v3188 = vadd.f32 %v3099, %v3187
        %3189 = vmatmul.bf16.gmra.mxu0 %v2457
        %v3190 = vpop.f32.mrf.mxu0
        %v3191 = vadd.f32 %v3102, %v3190
        %v3192 = vpop.f32.mrf.mxu0
        %v3193 = vadd.f32 %v3104, %v3192
        %3194 = vmatmul.bf16.gmra.mxu0 %v2461
        %v3195 = vpop.f32.mrf.mxu0
        %v3196 = vadd.f32 %v3107, %v3195
        %v3197 = vpop.f32.mrf.mxu0
        %v3198 = vadd.f32 %v3109, %v3197
        %3199 = vmatmul.bf16.gmra.mxu0 %v2465
        %v3200 = vpop.f32.mrf.mxu0
        %v3201 = vadd.f32 %v3112, %v3200
        %v3202 = vpop.f32.mrf.mxu0
        %v3203 = vadd.f32 %v3114, %v3202
        %3204 = vmatmul.bf16.gmra.mxu0 %v2469
        %v3205 = vpop.f32.mrf.mxu0
        %v3206 = vadd.f32 %v3117, %v3205
        %v3207 = vpop.f32.mrf.mxu0
        %v3208 = vadd.f32 %v3119, %v3207
        %3209 = vdwg.mxu0
        %3210 = vmatpush.bf16.msra.mxu0 %v2741
        %3211 = vmatpush.bf16.msra.mxu0 %v2739
        %3212 = vmatpush.bf16.msra.mxu0 %v2737
        %3213 = vmatpush.bf16.msra.mxu0 %v2735
        %3214 = vmatpush.bf16.msra.mxu0 %v2733
        %3215 = vmatpush.bf16.msra.mxu0 %v2731
        %3216 = vmatpush.bf16.msra.mxu0 %v2729
        %3217 = vmatpush.bf16.msra.mxu0 %v2727
        %3218 = vmatmul.bf16.gmra.mxu0 %v2406
        %v3219 = vpop.f32.mrf.mxu0
        %v3220 = vadd.f32 %v2211, %v3219
        %v3221 = vpop.f32.mrf.mxu0
        %v3222 = vadd.f32 %v2211, %v3221
        %3223 = vmatmul.bf16.gmra.mxu0 %v2410
        %v3224 = vpop.f32.mrf.mxu0
        %v3225 = vadd.f32 %v2211, %v3224
        %v3226 = vpop.f32.mrf.mxu0
        %v3227 = vadd.f32 %v2211, %v3226
        %3228 = vmatmul.bf16.gmra.mxu0 %v2414
        %v3229 = vpop.f32.mrf.mxu0
        %v3230 = vadd.f32 %v2211, %v3229
        %v3231 = vpop.f32.mrf.mxu0
        %v3232 = vadd.f32 %v2211, %v3231
        %3233 = vmatmul.bf16.gmra.mxu0 %v2418
        %v3234 = vpop.f32.mrf.mxu0
        %v3235 = vadd.f32 %v2211, %v3234
        %v3236 = vpop.f32.mrf.mxu0
        %v3237 = vadd.f32 %v2211, %v3236
        %3238 = vmatmul.bf16.gmra.mxu0 %v2422
        %v3239 = vpop.f32.mrf.mxu0
        %v3240 = vadd.f32 %v2211, %v3239
        %v3241 = vpop.f32.mrf.mxu0
        %v3242 = vadd.f32 %v2211, %v3241
        %3243 = vmatmul.bf16.gmra.mxu0 %v2426
        %v3244 = vpop.f32.mrf.mxu0
        %v3245 = vadd.f32 %v2211, %v3244
        %v3246 = vpop.f32.mrf.mxu0
        %v3247 = vadd.f32 %v2211, %v3246
        %3248 = vmatmul.bf16.gmra.mxu0 %v2430
        %v3249 = vpop.f32.mrf.mxu0
        %v3250 = vadd.f32 %v2211, %v3249
        %v3251 = vpop.f32.mrf.mxu0
        %v3252 = vadd.f32 %v2211, %v3251
        %3253 = vmatmul.bf16.gmra.mxu0 %v2434
        %v3254 = vpop.f32.mrf.mxu0
        %v3255 = vadd.f32 %v2211, %v3254
        %v3256 = vpop.f32.mrf.mxu0
        %v3257 = vadd.f32 %v2211, %v3256
        %3258 = vmatmul.bf16.gmra.mxu0 %v2438
        %v3259 = vpop.f32.mrf.mxu0
        %v3260 = vadd.f32 %v2211, %v3259
        %v3261 = vpop.f32.mrf.mxu0
        %v3262 = vadd.f32 %v2211, %v3261
        %3263 = vmatmul.bf16.gmra.mxu0 %v2442
        %v3264 = vpop.f32.mrf.mxu0
        %v3265 = vadd.f32 %v2211, %v3264
        %v3266 = vpop.f32.mrf.mxu0
        %v3267 = vadd.f32 %v2211, %v3266
        %3268 = vmatmul.bf16.gmra.mxu0 %v2446
        %v3269 = vpop.f32.mrf.mxu0
        %v3270 = vadd.f32 %v2211, %v3269
        %v3271 = vpop.f32.mrf.mxu0
        %v3272 = vadd.f32 %v2211, %v3271
        %3273 = vmatmul.bf16.gmra.mxu0 %v2450
        %v3274 = vpop.f32.mrf.mxu0
        %v3275 = vadd.f32 %v2211, %v3274
        %v3276 = vpop.f32.mrf.mxu0
        %v3277 = vadd.f32 %v2211, %v3276
        %3278 = vmatmul.bf16.gmra.mxu0 %v2454
        %v3279 = vpop.f32.mrf.mxu0
        %v3280 = vadd.f32 %v2211, %v3279
        %v3281 = vpop.f32.mrf.mxu0
        %v3282 = vadd.f32 %v2211, %v3281
        %3283 = vmatmul.bf16.gmra.mxu0 %v2458
        %v3284 = vpop.f32.mrf.mxu0
        %v3285 = vadd.f32 %v2211, %v3284
        %v3286 = vpop.f32.mrf.mxu0
        %v3287 = vadd.f32 %v2211, %v3286
        %3288 = vmatmul.bf16.gmra.mxu0 %v2462
        %v3289 = vpop.f32.mrf.mxu0
        %v3290 = vadd.f32 %v2211, %v3289
        %v3291 = vpop.f32.mrf.mxu0
        %v3292 = vadd.f32 %v2211, %v3291
        %3293 = vmatmul.bf16.gmra.mxu0 %v2466
        %v3294 = vpop.f32.mrf.mxu0
        %v3295 = vadd.f32 %v2211, %v3294
        %v3296 = vpop.f32.mrf.mxu0
        %v3297 = vadd.f32 %v2211, %v3296
        %3298 = vdwg.mxu0
        %3299 = vmatpush.bf16.msra.mxu0 %v2757
        %3300 = vmatpush.bf16.msra.mxu0 %v2755
        %3301 = vmatpush.bf16.msra.mxu0 %v2753
        %3302 = vmatpush.bf16.msra.mxu0 %v2751
        %3303 = vmatpush.bf16.msra.mxu0 %v2749
        %3304 = vmatpush.bf16.msra.mxu0 %v2747
        %3305 = vmatpush.bf16.msra.mxu0 %v2745
        %3306 = vmatpush.bf16.msra.mxu0 %v2743
        %3307 = vmatmul.bf16.gmra.mxu0 %v2407
        %v3308 = vpop.f32.mrf.mxu0
        %v3309 = vadd.f32 %v3220, %v3308
        %v3310 = vpop.f32.mrf.mxu0
        %v3311 = vadd.f32 %v3222, %v3310
        %3312 = vmatmul.bf16.gmra.mxu0 %v2411
        %v3313 = vpop.f32.mrf.mxu0
        %v3314 = vadd.f32 %v3225, %v3313
        %v3315 = vpop.f32.mrf.mxu0
        %v3316 = vadd.f32 %v3227, %v3315
        %3317 = vmatmul.bf16.gmra.mxu0 %v2415
        %v3318 = vpop.f32.mrf.mxu0
        %v3319 = vadd.f32 %v3230, %v3318
        %v3320 = vpop.f32.mrf.mxu0
        %v3321 = vadd.f32 %v3232, %v3320
        %3322 = vmatmul.bf16.gmra.mxu0 %v2419
        %v3323 = vpop.f32.mrf.mxu0
        %v3324 = vadd.f32 %v3235, %v3323
        %v3325 = vpop.f32.mrf.mxu0
        %v3326 = vadd.f32 %v3237, %v3325
        %3327 = vmatmul.bf16.gmra.mxu0 %v2423
        %v3328 = vpop.f32.mrf.mxu0
        %v3329 = vadd.f32 %v3240, %v3328
        %v3330 = vpop.f32.mrf.mxu0
        %v3331 = vadd.f32 %v3242, %v3330
        %3332 = vmatmul.bf16.gmra.mxu0 %v2427
        %v3333 = vpop.f32.mrf.mxu0
        %v3334 = vadd.f32 %v3245, %v3333
        %v3335 = vpop.f32.mrf.mxu0
        %v3336 = vadd.f32 %v3247, %v3335
        %3337 = vmatmul.bf16.gmra.mxu0 %v2431
        %v3338 = vpop.f32.mrf.mxu0
        %v3339 = vadd.f32 %v3250, %v3338
        %v3340 = vpop.f32.mrf.mxu0
        %v3341 = vadd.f32 %v3252, %v3340
        %3342 = vmatmul.bf16.gmra.mxu0 %v2435
        %v3343 = vpop.f32.mrf.mxu0
        %v3344 = vadd.f32 %v3255, %v3343
        %v3345 = vpop.f32.mrf.mxu0
        %v3346 = vadd.f32 %v3257, %v3345
        %3347 = vmatmul.bf16.gmra.mxu0 %v2439
        %v3348 = vpop.f32.mrf.mxu0
        %v3349 = vadd.f32 %v3260, %v3348
        %v3350 = vpop.f32.mrf.mxu0
        %v3351 = vadd.f32 %v3262, %v3350
        %3352 = vmatmul.bf16.gmra.mxu0 %v2443
        %v3353 = vpop.f32.mrf.mxu0
        %v3354 = vadd.f32 %v3265, %v3353
        %v3355 = vpop.f32.mrf.mxu0
        %v3356 = vadd.f32 %v3267, %v3355
        %3357 = vmatmul.bf16.gmra.mxu0 %v2447
        %v3358 = vpop.f32.mrf.mxu0
        %v3359 = vadd.f32 %v3270, %v3358
        %v3360 = vpop.f32.mrf.mxu0
        %v3361 = vadd.f32 %v3272, %v3360
        %3362 = vmatmul.bf16.gmra.mxu0 %v2451
        %v3363 = vpop.f32.mrf.mxu0
        %v3364 = vadd.f32 %v3275, %v3363
        %v3365 = vpop.f32.mrf.mxu0
        %v3366 = vadd.f32 %v3277, %v3365
        %3367 = vmatmul.bf16.gmra.mxu0 %v2455
        %v3368 = vpop.f32.mrf.mxu0
        %v3369 = vadd.f32 %v3280, %v3368
        %v3370 = vpop.f32.mrf.mxu0
        %v3371 = vadd.f32 %v3282, %v3370
        %3372 = vmatmul.bf16.gmra.mxu0 %v2459
        %v3373 = vpop.f32.mrf.mxu0
        %v3374 = vadd.f32 %v3285, %v3373
        %v3375 = vpop.f32.mrf.mxu0
        %v3376 = vadd.f32 %v3287, %v3375
        %3377 = vmatmul.bf16.gmra.mxu0 %v2463
        %v3378 = vpop.f32.mrf.mxu0
        %v3379 = vadd.f32 %v3290, %v3378
        %v3380 = vpop.f32.mrf.mxu0
        %v3381 = vadd.f32 %v3292, %v3380
        %3382 = vmatmul.bf16.gmra.mxu0 %v2467
        %v3383 = vpop.f32.mrf.mxu0
        %v3384 = vadd.f32 %v3295, %v3383
        %v3385 = vpop.f32.mrf.mxu0
        %v3386 = vadd.f32 %v3297, %v3385
        %3387 = vdwg.mxu0
        %3388 = vmatpush.bf16.msra.mxu0 %v2773
        %3389 = vmatpush.bf16.msra.mxu0 %v2771
        %3390 = vmatpush.bf16.msra.mxu0 %v2769
        %3391 = vmatpush.bf16.msra.mxu0 %v2767
        %3392 = vmatpush.bf16.msra.mxu0 %v2765
        %3393 = vmatpush.bf16.msra.mxu0 %v2763
        %3394 = vmatpush.bf16.msra.mxu0 %v2761
        %3395 = vmatpush.bf16.msra.mxu0 %v2759
        %3396 = vmatmul.bf16.gmra.mxu0 %v2408
        %v3397 = vpop.f32.mrf.mxu0
        %v3398 = vadd.f32 %v3309, %v3397
        %v3399 = vpop.f32.mrf.mxu0
        %v3400 = vadd.f32 %v3311, %v3399
        %3401 = vmatmul.bf16.gmra.mxu0 %v2412
        %v3402 = vpop.f32.mrf.mxu0
        %v3403 = vadd.f32 %v3314, %v3402
        %v3404 = vpop.f32.mrf.mxu0
        %v3405 = vadd.f32 %v3316, %v3404
        %3406 = vmatmul.bf16.gmra.mxu0 %v2416
        %v3407 = vpop.f32.mrf.mxu0
        %v3408 = vadd.f32 %v3319, %v3407
        %v3409 = vpop.f32.mrf.mxu0
        %v3410 = vadd.f32 %v3321, %v3409
        %3411 = vmatmul.bf16.gmra.mxu0 %v2420
        %v3412 = vpop.f32.mrf.mxu0
        %v3413 = vadd.f32 %v3324, %v3412
        %v3414 = vpop.f32.mrf.mxu0
        %v3415 = vadd.f32 %v3326, %v3414
        %3416 = vmatmul.bf16.gmra.mxu0 %v2424
        %v3417 = vpop.f32.mrf.mxu0
        %v3418 = vadd.f32 %v3329, %v3417
        %v3419 = vpop.f32.mrf.mxu0
        %v3420 = vadd.f32 %v3331, %v3419
        %3421 = vmatmul.bf16.gmra.mxu0 %v2428
        %v3422 = vpop.f32.mrf.mxu0
        %v3423 = vadd.f32 %v3334, %v3422
        %v3424 = vpop.f32.mrf.mxu0
        %v3425 = vadd.f32 %v3336, %v3424
        %3426 = vmatmul.bf16.gmra.mxu0 %v2432
        %v3427 = vpop.f32.mrf.mxu0
        %v3428 = vadd.f32 %v3339, %v3427
        %v3429 = vpop.f32.mrf.mxu0
        %v3430 = vadd.f32 %v3341, %v3429
        %3431 = vmatmul.bf16.gmra.mxu0 %v2436
        %v3432 = vpop.f32.mrf.mxu0
        %v3433 = vadd.f32 %v3344, %v3432
        %v3434 = vpop.f32.mrf.mxu0
        %v3435 = vadd.f32 %v3346, %v3434
        %3436 = vmatmul.bf16.gmra.mxu0 %v2440
        %v3437 = vpop.f32.mrf.mxu0
        %v3438 = vadd.f32 %v3349, %v3437
        %v3439 = vpop.f32.mrf.mxu0
        %v3440 = vadd.f32 %v3351, %v3439
        %3441 = vmatmul.bf16.gmra.mxu0 %v2444
        %v3442 = vpop.f32.mrf.mxu0
        %v3443 = vadd.f32 %v3354, %v3442
        %v3444 = vpop.f32.mrf.mxu0
        %v3445 = vadd.f32 %v3356, %v3444
        %3446 = vmatmul.bf16.gmra.mxu0 %v2448
        %v3447 = vpop.f32.mrf.mxu0
        %v3448 = vadd.f32 %v3359, %v3447
        %v3449 = vpop.f32.mrf.mxu0
        %v3450 = vadd.f32 %v3361, %v3449
        %3451 = vmatmul.bf16.gmra.mxu0 %v2452
        %v3452 = vpop.f32.mrf.mxu0
        %v3453 = vadd.f32 %v3364, %v3452
        %v3454 = vpop.f32.mrf.mxu0
        %v3455 = vadd.f32 %v3366, %v3454
        %3456 = vmatmul.bf16.gmra.mxu0 %v2456
        %v3457 = vpop.f32.mrf.mxu0
        %v3458 = vadd.f32 %v3369, %v3457
        %v3459 = vpop.f32.mrf.mxu0
        %v3460 = vadd.f32 %v3371, %v3459
        %3461 = vmatmul.bf16.gmra.mxu0 %v2460
        %v3462 = vpop.f32.mrf.mxu0
        %v3463 = vadd.f32 %v3374, %v3462
        %v3464 = vpop.f32.mrf.mxu0
        %v3465 = vadd.f32 %v3376, %v3464
        %3466 = vmatmul.bf16.gmra.mxu0 %v2464
        %v3467 = vpop.f32.mrf.mxu0
        %v3468 = vadd.f32 %v3379, %v3467
        %v3469 = vpop.f32.mrf.mxu0
        %v3470 = vadd.f32 %v3381, %v3469
        %3471 = vmatmul.bf16.gmra.mxu0 %v2468
        %v3472 = vpop.f32.mrf.mxu0
        %v3473 = vadd.f32 %v3384, %v3472
        %v3474 = vpop.f32.mrf.mxu0
        %v3475 = vadd.f32 %v3386, %v3474
        %3476 = vdwg.mxu0
        %3477 = vmatpush.bf16.msra.mxu0 %v2789
        %3478 = vmatpush.bf16.msra.mxu0 %v2787
        %3479 = vmatpush.bf16.msra.mxu0 %v2785
        %3480 = vmatpush.bf16.msra.mxu0 %v2783
        %3481 = vmatpush.bf16.msra.mxu0 %v2781
        %3482 = vmatpush.bf16.msra.mxu0 %v2779
        %3483 = vmatpush.bf16.msra.mxu0 %v2777
        %3484 = vmatpush.bf16.msra.mxu0 %v2775
        %3485 = vmatmul.bf16.gmra.mxu0 %v2409
        %v3486 = vpop.f32.mrf.mxu0
        %v3487 = vadd.f32 %v3398, %v3486
        %v3488 = vpop.f32.mrf.mxu0
        %v3489 = vadd.f32 %v3400, %v3488
        %3490 = vmatmul.bf16.gmra.mxu0 %v2413
        %v3491 = vpop.f32.mrf.mxu0
        %v3492 = vadd.f32 %v3403, %v3491
        %v3493 = vpop.f32.mrf.mxu0
        %v3494 = vadd.f32 %v3405, %v3493
        %3495 = vmatmul.bf16.gmra.mxu0 %v2417
        %v3496 = vpop.f32.mrf.mxu0
        %v3497 = vadd.f32 %v3408, %v3496
        %v3498 = vpop.f32.mrf.mxu0
        %v3499 = vadd.f32 %v3410, %v3498
        %3500 = vmatmul.bf16.gmra.mxu0 %v2421
        %v3501 = vpop.f32.mrf.mxu0
        %v3502 = vadd.f32 %v3413, %v3501
        %v3503 = vpop.f32.mrf.mxu0
        %v3504 = vadd.f32 %v3415, %v3503
        %3505 = vmatmul.bf16.gmra.mxu0 %v2425
        %v3506 = vpop.f32.mrf.mxu0
        %v3507 = vadd.f32 %v3418, %v3506
        %v3508 = vpop.f32.mrf.mxu0
        %v3509 = vadd.f32 %v3420, %v3508
        %3510 = vmatmul.bf16.gmra.mxu0 %v2429
        %v3511 = vpop.f32.mrf.mxu0
        %v3512 = vadd.f32 %v3423, %v3511
        %v3513 = vpop.f32.mrf.mxu0
        %v3514 = vadd.f32 %v3425, %v3513
        %3515 = vmatmul.bf16.gmra.mxu0 %v2433
        %v3516 = vpop.f32.mrf.mxu0
        %v3517 = vadd.f32 %v3428, %v3516
        %v3518 = vpop.f32.mrf.mxu0
        %v3519 = vadd.f32 %v3430, %v3518
        %3520 = vmatmul.bf16.gmra.mxu0 %v2437
        %v3521 = vpop.f32.mrf.mxu0
        %v3522 = vadd.f32 %v3433, %v3521
        %v3523 = vpop.f32.mrf.mxu0
        %v3524 = vadd.f32 %v3435, %v3523
        %3525 = vmatmul.bf16.gmra.mxu0 %v2441
        %v3526 = vpop.f32.mrf.mxu0
        %v3527 = vadd.f32 %v3438, %v3526
        %v3528 = vpop.f32.mrf.mxu0
        %v3529 = vadd.f32 %v3440, %v3528
        %3530 = vmatmul.bf16.gmra.mxu0 %v2445
        %v3531 = vpop.f32.mrf.mxu0
        %v3532 = vadd.f32 %v3443, %v3531
        %v3533 = vpop.f32.mrf.mxu0
        %v3534 = vadd.f32 %v3445, %v3533
        %3535 = vmatmul.bf16.gmra.mxu0 %v2449
        %v3536 = vpop.f32.mrf.mxu0
        %v3537 = vadd.f32 %v3448, %v3536
        %v3538 = vpop.f32.mrf.mxu0
        %v3539 = vadd.f32 %v3450, %v3538
        %3540 = vmatmul.bf16.gmra.mxu0 %v2453
        %v3541 = vpop.f32.mrf.mxu0
        %v3542 = vadd.f32 %v3453, %v3541
        %v3543 = vpop.f32.mrf.mxu0
        %v3544 = vadd.f32 %v3455, %v3543
        %3545 = vmatmul.bf16.gmra.mxu0 %v2457
        %v3546 = vpop.f32.mrf.mxu0
        %v3547 = vadd.f32 %v3458, %v3546
        %v3548 = vpop.f32.mrf.mxu0
        %v3549 = vadd.f32 %v3460, %v3548
        %3550 = vmatmul.bf16.gmra.mxu0 %v2461
        %v3551 = vpop.f32.mrf.mxu0
        %v3552 = vadd.f32 %v3463, %v3551
        %v3553 = vpop.f32.mrf.mxu0
        %v3554 = vadd.f32 %v3465, %v3553
        %3555 = vmatmul.bf16.gmra.mxu0 %v2465
        %v3556 = vpop.f32.mrf.mxu0
        %v3557 = vadd.f32 %v3468, %v3556
        %v3558 = vpop.f32.mrf.mxu0
        %v3559 = vadd.f32 %v3470, %v3558
        %3560 = vmatmul.bf16.gmra.mxu0 %v2469
        %v3561 = vpop.f32.mrf.mxu0
        %v3562 = vadd.f32 %v3473, %v3561
        %v3563 = vpop.f32.mrf.mxu0
        %v3564 = vadd.f32 %v3475, %v3563
        %3565 = vdwg.mxu0
        %v3566 = vpack.c.bf16 %v3487, %v3131
        %v3567 = vpack.c.bf16 %v3489, %v3133
        %v3568 = vpack.c.bf16 %v3492, %v3136
        %v3569 = vpack.c.bf16 %v3494, %v3138
        %v3570 = vpack.c.bf16 %v3497, %v3141
        %v3571 = vpack.c.bf16 %v3499, %v3143
        %v3572 = vpack.c.bf16 %v3502, %v3146
        %v3573 = vpack.c.bf16 %v3504, %v3148
        %v3574 = vpack.c.bf16 %v3507, %v3151
        %v3575 = vpack.c.bf16 %v3509, %v3153
        %v3576 = vpack.c.bf16 %v3512, %v3156
        %v3577 = vpack.c.bf16 %v3514, %v3158
        %v3578 = vpack.c.bf16 %v3517, %v3161
        %v3579 = vpack.c.bf16 %v3519, %v3163
        %v3580 = vpack.c.bf16 %v3522, %v3166
        %v3581 = vpack.c.bf16 %v3524, %v3168
        %v3582 = vpack.c.bf16 %v3527, %v3171
        %v3583 = vpack.c.bf16 %v3529, %v3173
        %v3584 = vpack.c.bf16 %v3532, %v3176
        %v3585 = vpack.c.bf16 %v3534, %v3178
        %v3586 = vpack.c.bf16 %v3537, %v3181
        %v3587 = vpack.c.bf16 %v3539, %v3183
        %v3588 = vpack.c.bf16 %v3542, %v3186
        %v3589 = vpack.c.bf16 %v3544, %v3188
        %v3590 = vpack.c.bf16 %v3547, %v3191
        %v3591 = vpack.c.bf16 %v3549, %v3193
        %v3592 = vpack.c.bf16 %v3552, %v3196
        %v3593 = vpack.c.bf16 %v3554, %v3198
        %v3594 = vpack.c.bf16 %v3557, %v3201
        %v3595 = vpack.c.bf16 %v3559, %v3203
        %v3596 = vpack.c.bf16 %v3562, %v3206
        %v3597 = vpack.c.bf16 %v3564, %v3208
        %v3598 = vunpack.c.l.bf16 %v3566
        %v3599 = vunpack.c.h.bf16 %v3566
        %v3600 = vunpack.c.l.bf16 %v3567
        %v3601 = vunpack.c.h.bf16 %v3567
        %v3602 = vunpack.c.l.bf16 %v3568
        %v3603 = vunpack.c.h.bf16 %v3568
        %v3604 = vunpack.c.l.bf16 %v3569
        %v3605 = vunpack.c.h.bf16 %v3569
        %v3606 = vunpack.c.l.bf16 %v3570
        %v3607 = vunpack.c.h.bf16 %v3570
        %v3608 = vunpack.c.l.bf16 %v3571
        %v3609 = vunpack.c.h.bf16 %v3571
        %v3610 = vunpack.c.l.bf16 %v3572
        %v3611 = vunpack.c.h.bf16 %v3572
        %v3612 = vunpack.c.l.bf16 %v3573
        %v3613 = vunpack.c.h.bf16 %v3573
        %v3614 = vunpack.c.l.bf16 %v3574
        %v3615 = vunpack.c.h.bf16 %v3574
        %v3616 = vunpack.c.l.bf16 %v3575
        %v3617 = vunpack.c.h.bf16 %v3575
        %v3618 = vunpack.c.l.bf16 %v3576
        %v3619 = vunpack.c.h.bf16 %v3576
        %v3620 = vunpack.c.l.bf16 %v3577
        %v3621 = vunpack.c.h.bf16 %v3577
        %v3622 = vunpack.c.l.bf16 %v3578
        %v3623 = vunpack.c.h.bf16 %v3578
        %v3624 = vunpack.c.l.bf16 %v3579
        %v3625 = vunpack.c.h.bf16 %v3579
        %v3626 = vunpack.c.l.bf16 %v3580
        %v3627 = vunpack.c.h.bf16 %v3580
        %v3628 = vunpack.c.l.bf16 %v3581
        %v3629 = vunpack.c.h.bf16 %v3581
        %v3630 = vunpack.c.l.bf16 %v3582
        %v3631 = vunpack.c.h.bf16 %v3582
        %v3632 = vunpack.c.l.bf16 %v3583
        %v3633 = vunpack.c.h.bf16 %v3583
        %v3634 = vunpack.c.l.bf16 %v3584
        %v3635 = vunpack.c.h.bf16 %v3584
        %v3636 = vunpack.c.l.bf16 %v3585
        %v3637 = vunpack.c.h.bf16 %v3585
        %v3638 = vunpack.c.l.bf16 %v3586
        %v3639 = vunpack.c.h.bf16 %v3586
        %v3640 = vunpack.c.l.bf16 %v3587
        %v3641 = vunpack.c.h.bf16 %v3587
        %v3642 = vunpack.c.l.bf16 %v3588
        %v3643 = vunpack.c.h.bf16 %v3588
        %v3644 = vunpack.c.l.bf16 %v3589
        %v3645 = vunpack.c.h.bf16 %v3589
        %v3646 = vunpack.c.l.bf16 %v3590
        %v3647 = vunpack.c.h.bf16 %v3590
        %v3648 = vunpack.c.l.bf16 %v3591
        %v3649 = vunpack.c.h.bf16 %v3591
        %v3650 = vunpack.c.l.bf16 %v3592
        %v3651 = vunpack.c.h.bf16 %v3592
        %v3652 = vunpack.c.l.bf16 %v3593
        %v3653 = vunpack.c.h.bf16 %v3593
        %v3654 = vunpack.c.l.bf16 %v3594
        %v3655 = vunpack.c.h.bf16 %v3594
        %v3656 = vunpack.c.l.bf16 %v3595
        %v3657 = vunpack.c.h.bf16 %v3595
        %v3658 = vunpack.c.l.bf16 %v3596
        %v3659 = vunpack.c.h.bf16 %v3596
        %v3660 = vunpack.c.l.bf16 %v3597
        %v3661 = vunpack.c.h.bf16 %v3597
        %vm3662 = vcmp.gt.f32.partialorder %v3598, 0.0
        %vm3663 = vcmp.gt.f32.partialorder %v3599, 0.0
        %vm3664 = vcmp.gt.f32.partialorder %v3600, 0.0
        %vm3665 = vcmp.gt.f32.partialorder %v3601, 0.0
        %vm3666 = vcmp.gt.f32.partialorder %v3602, 0.0
        %vm3667 = vcmp.gt.f32.partialorder %v3603, 0.0
        %vm3668 = vcmp.gt.f32.partialorder %v3604, 0.0
        %vm3669 = vcmp.gt.f32.partialorder %v3605, 0.0
        %vm3670 = vcmp.gt.f32.partialorder %v3606, 0.0
        %vm3671 = vcmp.gt.f32.partialorder %v3607, 0.0
        %vm3672 = vcmp.gt.f32.partialorder %v3608, 0.0
        %vm3673 = vcmp.gt.f32.partialorder %v3609, 0.0
        %vm3674 = vcmp.gt.f32.partialorder %v3610, 0.0
        %vm3675 = vcmp.gt.f32.partialorder %v3611, 0.0
        %vm3676 = vcmp.gt.f32.partialorder %v3612, 0.0
        %vm3677 = vcmp.gt.f32.partialorder %v3613, 0.0
        %vm3678 = vcmp.gt.f32.partialorder %v3614, 0.0
        %vm3679 = vcmp.gt.f32.partialorder %v3615, 0.0
        %vm3680 = vcmp.gt.f32.partialorder %v3616, 0.0
        %vm3681 = vcmp.gt.f32.partialorder %v3617, 0.0
        %vm3682 = vcmp.gt.f32.partialorder %v3618, 0.0
        %vm3683 = vcmp.gt.f32.partialorder %v3619, 0.0
        %vm3684 = vcmp.gt.f32.partialorder %v3620, 0.0
        %vm3685 = vcmp.gt.f32.partialorder %v3621, 0.0
        %vm3686 = vcmp.gt.f32.partialorder %v3622, 0.0
        %vm3687 = vcmp.gt.f32.partialorder %v3623, 0.0
        %vm3688 = vcmp.gt.f32.partialorder %v3624, 0.0
        %vm3689 = vcmp.gt.f32.partialorder %v3625, 0.0
        %vm3690 = vcmp.gt.f32.partialorder %v3626, 0.0
        %vm3691 = vcmp.gt.f32.partialorder %v3627, 0.0
        %vm3692 = vcmp.gt.f32.partialorder %v3628, 0.0
        %vm3693 = vcmp.gt.f32.partialorder %v3629, 0.0
        %vm3694 = vcmp.gt.f32.partialorder %v3630, 0.0
        %vm3695 = vcmp.gt.f32.partialorder %v3631, 0.0
        %vm3696 = vcmp.gt.f32.partialorder %v3632, 0.0
        %vm3697 = vcmp.gt.f32.partialorder %v3633, 0.0
        %vm3698 = vcmp.gt.f32.partialorder %v3634, 0.0
        %vm3699 = vcmp.gt.f32.partialorder %v3635, 0.0
        %vm3700 = vcmp.gt.f32.partialorder %v3636, 0.0
        %vm3701 = vcmp.gt.f32.partialorder %v3637, 0.0
        %vm3702 = vcmp.gt.f32.partialorder %v3638, 0.0
        %vm3703 = vcmp.gt.f32.partialorder %v3639, 0.0
        %vm3704 = vcmp.gt.f32.partialorder %v3640, 0.0
        %vm3705 = vcmp.gt.f32.partialorder %v3641, 0.0
        %vm3706 = vcmp.gt.f32.partialorder %v3642, 0.0
        %vm3707 = vcmp.gt.f32.partialorder %v3643, 0.0
        %vm3708 = vcmp.gt.f32.partialorder %v3644, 0.0
        %vm3709 = vcmp.gt.f32.partialorder %v3645, 0.0
        %vm3710 = vcmp.gt.f32.partialorder %v3646, 0.0
        %vm3711 = vcmp.gt.f32.partialorder %v3647, 0.0
        %vm3712 = vcmp.gt.f32.partialorder %v3648, 0.0
        %vm3713 = vcmp.gt.f32.partialorder %v3649, 0.0
        %vm3714 = vcmp.gt.f32.partialorder %v3650, 0.0
        %vm3715 = vcmp.gt.f32.partialorder %v3651, 0.0
        %vm3716 = vcmp.gt.f32.partialorder %v3652, 0.0
        %vm3717 = vcmp.gt.f32.partialorder %v3653, 0.0
        %vm3718 = vcmp.gt.f32.partialorder %v3654, 0.0
        %vm3719 = vcmp.gt.f32.partialorder %v3655, 0.0
        %vm3720 = vcmp.gt.f32.partialorder %v3656, 0.0
        %vm3721 = vcmp.gt.f32.partialorder %v3657, 0.0
        %vm3722 = vcmp.gt.f32.partialorder %v3658, 0.0
        %vm3723 = vcmp.gt.f32.partialorder %v3659, 0.0
        %vm3724 = vcmp.gt.f32.partialorder %v3660, 0.0
        %vm3725 = vcmp.gt.f32.partialorder %v3661, 0.0
        %v3726 = vmul.f32 %v3598, 0.010009766
        %v3727 = vmul.f32 %v3599, 0.010009766
        %v3728 = vmul.f32 %v3600, 0.010009766
        %v3729 = vmul.f32 %v3601, 0.010009766
        %v3730 = vmul.f32 %v3602, 0.010009766
        %v3731 = vmul.f32 %v3603, 0.010009766
        %v3732 = vmul.f32 %v3604, 0.010009766
        %v3733 = vmul.f32 %v3605, 0.010009766
        %v3734 = vmul.f32 %v3606, 0.010009766
        %v3735 = vmul.f32 %v3607, 0.010009766
        %v3736 = vmul.f32 %v3608, 0.010009766
        %v3737 = vmul.f32 %v3609, 0.010009766
        %v3738 = vmul.f32 %v3610, 0.010009766
        %v3739 = vmul.f32 %v3611, 0.010009766
        %v3740 = vmul.f32 %v3612, 0.010009766
        %v3741 = vmul.f32 %v3613, 0.010009766
        %v3742 = vmul.f32 %v3614, 0.010009766
        %v3743 = vmul.f32 %v3615, 0.010009766
        %v3744 = vmul.f32 %v3616, 0.010009766
        %v3745 = vmul.f32 %v3617, 0.010009766
        %v3746 = vmul.f32 %v3618, 0.010009766
        %v3747 = vmul.f32 %v3619, 0.010009766
        %v3748 = vmul.f32 %v3620, 0.010009766
        %v3749 = vmul.f32 %v3621, 0.010009766
        %v3750 = vmul.f32 %v3622, 0.010009766
        %v3751 = vmul.f32 %v3623, 0.010009766
        %v3752 = vmul.f32 %v3624, 0.010009766
        %v3753 = vmul.f32 %v3625, 0.010009766
        %v3754 = vmul.f32 %v3626, 0.010009766
        %v3755 = vmul.f32 %v3627, 0.010009766
        %v3756 = vmul.f32 %v3628, 0.010009766
        %v3757 = vmul.f32 %v3629, 0.010009766
        %v3758 = vmul.f32 %v3630, 0.010009766
        %v3759 = vmul.f32 %v3631, 0.010009766
        %v3760 = vmul.f32 %v3632, 0.010009766
        %v3761 = vmul.f32 %v3633, 0.010009766
        %v3762 = vmul.f32 %v3634, 0.010009766
        %v3763 = vmul.f32 %v3635, 0.010009766
        %v3764 = vmul.f32 %v3636, 0.010009766
        %v3765 = vmul.f32 %v3637, 0.010009766
        %v3766 = vmul.f32 %v3638, 0.010009766
        %v3767 = vmul.f32 %v3639, 0.010009766
        %v3768 = vmul.f32 %v3640, 0.010009766
        %v3769 = vmul.f32 %v3641, 0.010009766
        %v3770 = vmul.f32 %v3642, 0.010009766
        %v3771 = vmul.f32 %v3643, 0.010009766
        %v3772 = vmul.f32 %v3644, 0.010009766
        %v3773 = vmul.f32 %v3645, 0.010009766
        %v3774 = vmul.f32 %v3646, 0.010009766
        %v3775 = vmul.f32 %v3647, 0.010009766
        %v3776 = vmul.f32 %v3648, 0.010009766
        %v3777 = vmul.f32 %v3649, 0.010009766
        %v3778 = vmul.f32 %v3650, 0.010009766
        %v3779 = vmul.f32 %v3651, 0.010009766
        %v3780 = vmul.f32 %v3652, 0.010009766
        %v3781 = vmul.f32 %v3653, 0.010009766
        %v3782 = vmul.f32 %v3654, 0.010009766
        %v3783 = vmul.f32 %v3655, 0.010009766
        %v3784 = vmul.f32 %v3656, 0.010009766
        %v3785 = vmul.f32 %v3657, 0.010009766
        %v3786 = vmul.f32 %v3658, 0.010009766
        %v3787 = vmul.f32 %v3659, 0.010009766
        %v3788 = vmul.f32 %v3660, 0.010009766
        %v3789 = vmul.f32 %v3661, 0.010009766
        %v3790 = vpack.c.bf16 %v3727, %v3726
        %v3791 = vpack.c.bf16 %v3729, %v3728
        %v3792 = vpack.c.bf16 %v3731, %v3730
        %v3793 = vpack.c.bf16 %v3733, %v3732
        %v3794 = vpack.c.bf16 %v3735, %v3734
        %v3795 = vpack.c.bf16 %v3737, %v3736
        %v3796 = vpack.c.bf16 %v3739, %v3738
        %v3797 = vpack.c.bf16 %v3741, %v3740
        %v3798 = vpack.c.bf16 %v3743, %v3742
        %v3799 = vpack.c.bf16 %v3745, %v3744
        %v3800 = vpack.c.bf16 %v3747, %v3746
        %v3801 = vpack.c.bf16 %v3749, %v3748
        %v3802 = vpack.c.bf16 %v3751, %v3750
        %v3803 = vpack.c.bf16 %v3753, %v3752
        %v3804 = vpack.c.bf16 %v3755, %v3754
        %v3805 = vpack.c.bf16 %v3757, %v3756
        %v3806 = vpack.c.bf16 %v3759, %v3758
        %v3807 = vpack.c.bf16 %v3761, %v3760
        %v3808 = vpack.c.bf16 %v3763, %v3762
        %v3809 = vpack.c.bf16 %v3765, %v3764
        %v3810 = vpack.c.bf16 %v3767, %v3766
        %v3811 = vpack.c.bf16 %v3769, %v3768
        %v3812 = vpack.c.bf16 %v3771, %v3770
        %v3813 = vpack.c.bf16 %v3773, %v3772
        %v3814 = vpack.c.bf16 %v3775, %v3774
        %v3815 = vpack.c.bf16 %v3777, %v3776
        %v3816 = vpack.c.bf16 %v3779, %v3778
        %v3817 = vpack.c.bf16 %v3781, %v3780
        %v3818 = vpack.c.bf16 %v3783, %v3782
        %v3819 = vpack.c.bf16 %v3785, %v3784
        %v3820 = vpack.c.bf16 %v3787, %v3786
        %v3821 = vpack.c.bf16 %v3789, %v3788
        %vm3822 = vmpackc.low %vm3663, %vm3662
        %vm3823 = vmpackc.low %vm3665, %vm3664
        %vm3824 = vmpackc.low %vm3667, %vm3666
        %vm3825 = vmpackc.low %vm3669, %vm3668
        %vm3826 = vmpackc.low %vm3671, %vm3670
        %vm3827 = vmpackc.low %vm3673, %vm3672
        %vm3828 = vmpackc.low %vm3675, %vm3674
        %vm3829 = vmpackc.low %vm3677, %vm3676
        %vm3830 = vmpackc.low %vm3679, %vm3678
        %vm3831 = vmpackc.low %vm3681, %vm3680
        %vm3832 = vmpackc.low %vm3683, %vm3682
        %vm3833 = vmpackc.low %vm3685, %vm3684
        %vm3834 = vmpackc.low %vm3687, %vm3686
        %vm3835 = vmpackc.low %vm3689, %vm3688
        %vm3836 = vmpackc.low %vm3691, %vm3690
        %vm3837 = vmpackc.low %vm3693, %vm3692
        %vm3838 = vmpackc.low %vm3695, %vm3694
        %vm3839 = vmpackc.low %vm3697, %vm3696
        %vm3840 = vmpackc.low %vm3699, %vm3698
        %vm3841 = vmpackc.low %vm3701, %vm3700
        %vm3842 = vmpackc.low %vm3703, %vm3702
        %vm3843 = vmpackc.low %vm3705, %vm3704
        %vm3844 = vmpackc.low %vm3707, %vm3706
        %vm3845 = vmpackc.low %vm3709, %vm3708
        %vm3846 = vmpackc.low %vm3711, %vm3710
        %vm3847 = vmpackc.low %vm3713, %vm3712
        %vm3848 = vmpackc.low %vm3715, %vm3714
        %vm3849 = vmpackc.low %vm3717, %vm3716
        %vm3850 = vmpackc.low %vm3719, %vm3718
        %vm3851 = vmpackc.low %vm3721, %vm3720
        %vm3852 = vmpackc.low %vm3723, %vm3722
        %vm3853 = vmpackc.low %vm3725, %vm3724
        %v3854 = vsel %vm3822, %v3566, %v3790
        %v3855 = vsel %vm3823, %v3567, %v3791
        %v3856 = vsel %vm3824, %v3568, %v3792
        %v3857 = vsel %vm3825, %v3569, %v3793
        %v3858 = vsel %vm3826, %v3570, %v3794
        %v3859 = vsel %vm3827, %v3571, %v3795
        %v3860 = vsel %vm3828, %v3572, %v3796
        %v3861 = vsel %vm3829, %v3573, %v3797
        %v3862 = vsel %vm3830, %v3574, %v3798
        %v3863 = vsel %vm3831, %v3575, %v3799
        %v3864 = vsel %vm3832, %v3576, %v3800
        %v3865 = vsel %vm3833, %v3577, %v3801
        %v3866 = vsel %vm3834, %v3578, %v3802
        %v3867 = vsel %vm3835, %v3579, %v3803
        %v3868 = vsel %vm3836, %v3580, %v3804
        %v3869 = vsel %vm3837, %v3581, %v3805
        %v3870 = vsel %vm3838, %v3582, %v3806
        %v3871 = vsel %vm3839, %v3583, %v3807
        %v3872 = vsel %vm3840, %v3584, %v3808
        %v3873 = vsel %vm3841, %v3585, %v3809
        %v3874 = vsel %vm3842, %v3586, %v3810
        %v3875 = vsel %vm3843, %v3587, %v3811
        %v3876 = vsel %vm3844, %v3588, %v3812
        %v3877 = vsel %vm3845, %v3589, %v3813
        %v3878 = vsel %vm3846, %v3590, %v3814
        %v3879 = vsel %vm3847, %v3591, %v3815
        %v3880 = vsel %vm3848, %v3592, %v3816
        %v3881 = vsel %vm3849, %v3593, %v3817
        %v3882 = vsel %vm3850, %v3594, %v3818
        %v3883 = vsel %vm3851, %v3595, %v3819
        %v3884 = vsel %vm3852, %v3596, %v3820
        %v3885 = vsel %vm3853, %v3597, %v3821
        %v3886 = vld [vmem:[#allocation2] sm:$0xf]
        %v3887 = vld [vmem:[#allocation2 + $0x4] sm:$0xf]
        %v3888 = vld [vmem:[#allocation2 + $0x8] sm:$0xf]
        %v3889 = vld [vmem:[#allocation2 + $0xc] sm:$0xf]
        %v3890 = vld [vmem:[#allocation2 + $0x10] sm:$0xf]
        %v3891 = vld [vmem:[#allocation2 + $0x14] sm:$0xf]
        %v3892 = vld [vmem:[#allocation2 + $0x18] sm:$0xf]
        %v3893 = vld [vmem:[#allocation2 + $0x1c] sm:$0xf]
        %v3894 = vld [vmem:[#allocation2 + $0x20] sm:$0xf]
        %v3895 = vld [vmem:[#allocation2 + $0x24] sm:$0xf]
        %v3896 = vld [vmem:[#allocation2 + $0x28] sm:$0xf]
        %v3897 = vld [vmem:[#allocation2 + $0x2c] sm:$0xf]
        %v3898 = vld [vmem:[#allocation2 + $0x30] sm:$0xf]
        %v3899 = vld [vmem:[#allocation2 + $0x34] sm:$0xf]
        %v3900 = vld [vmem:[#allocation2 + $0x38] sm:$0xf]
        %v3901 = vld [vmem:[#allocation2 + $0x3c] sm:$0xf]
        %v3902 = vld [vmem:[#allocation2 + $0x40] sm:$0xf]
        %v3903 = vld [vmem:[#allocation2 + $0x44] sm:$0xf]
        %v3904 = vld [vmem:[#allocation2 + $0x48] sm:$0xf]
        %v3905 = vld [vmem:[#allocation2 + $0x4c] sm:$0xf]
        %v3906 = vld [vmem:[#allocation2 + $0x50] sm:$0xf]
        %v3907 = vld [vmem:[#allocation2 + $0x54] sm:$0xf]
        %v3908 = vld [vmem:[#allocation2 + $0x58] sm:$0xf]
        %v3909 = vld [vmem:[#allocation2 + $0x5c] sm:$0xf]
        %v3910 = vld [vmem:[#allocation2 + $0x60] sm:$0xf]
        %v3911 = vld [vmem:[#allocation2 + $0x64] sm:$0xf]
        %v3912 = vld [vmem:[#allocation2 + $0x68] sm:$0xf]
        %v3913 = vld [vmem:[#allocation2 + $0x6c] sm:$0xf]
        %v3914 = vld [vmem:[#allocation2 + $0x70] sm:$0xf]
        %v3915 = vld [vmem:[#allocation2 + $0x74] sm:$0xf]
        %v3916 = vld [vmem:[#allocation2 + $0x78] sm:$0xf]
        %v3917 = vld [vmem:[#allocation2 + $0x7c] sm:$0xf]
        %v3918 = vld [vmem:[#allocation13] sm:$0x1]
        %v3920 = vperm.slane %v3918, 0
        %v3954 = vunpack.c.l.b16 %v3854
        %v3955 = vunpack.c.h.b16 %v3854
        %v3956 = vunpack.c.l.b16 %v3855
        %v3957 = vunpack.c.h.b16 %v3855
        %v3958 = vunpack.c.l.b16 %v3856
        %v3959 = vunpack.c.h.b16 %v3856
        %v3960 = vunpack.c.l.b16 %v3857
        %v3961 = vunpack.c.h.b16 %v3857
        %v3962 = vunpack.c.l.b16 %v3858
        %v3963 = vunpack.c.h.b16 %v3858
        %v3964 = vunpack.c.l.b16 %v3859
        %v3965 = vunpack.c.h.b16 %v3859
        %v3966 = vunpack.c.l.b16 %v3860
        %v3967 = vunpack.c.h.b16 %v3860
        %v3968 = vunpack.c.l.b16 %v3861
        %v3969 = vunpack.c.h.b16 %v3861
        %v3970 = vunpack.c.l.b16 %v3862
        %v3971 = vunpack.c.h.b16 %v3862
        %v3972 = vunpack.c.l.b16 %v3863
        %v3973 = vunpack.c.h.b16 %v3863
        %v3974 = vunpack.c.l.b16 %v3864
        %v3975 = vunpack.c.h.b16 %v3864
        %v3976 = vunpack.c.l.b16 %v3865
        %v3977 = vunpack.c.h.b16 %v3865
        %v3978 = vunpack.c.l.b16 %v3866
        %v3979 = vunpack.c.h.b16 %v3866
        %v3980 = vunpack.c.l.b16 %v3867
        %v3981 = vunpack.c.h.b16 %v3867
        %v3982 = vunpack.c.l.b16 %v3868
        %v3983 = vunpack.c.h.b16 %v3868
        %v3984 = vunpack.c.l.b16 %v3869
        %v3985 = vunpack.c.h.b16 %v3869
        %v3986 = vunpack.c.l.b16 %v3870
        %v3987 = vunpack.c.h.b16 %v3870
        %v3988 = vunpack.c.l.b16 %v3871
        %v3989 = vunpack.c.h.b16 %v3871
        %v3990 = vunpack.c.l.b16 %v3872
        %v3991 = vunpack.c.h.b16 %v3872
        %v3992 = vunpack.c.l.b16 %v3873
        %v3993 = vunpack.c.h.b16 %v3873
        %v3994 = vunpack.c.l.b16 %v3874
        %v3995 = vunpack.c.h.b16 %v3874
        %v3996 = vunpack.c.l.b16 %v3875
        %v3997 = vunpack.c.h.b16 %v3875
        %v3998 = vunpack.c.l.b16 %v3876
        %v3999 = vunpack.c.h.b16 %v3876
        %v4000 = vunpack.c.l.b16 %v3877
        %v4001 = vunpack.c.h.b16 %v3877
        %v4002 = vunpack.c.l.b16 %v3878
        %v4003 = vunpack.c.h.b16 %v3878
        %v4004 = vunpack.c.l.b16 %v3879
        %v4005 = vunpack.c.h.b16 %v3879
        %v4006 = vunpack.c.l.b16 %v3880
        %v4007 = vunpack.c.h.b16 %v3880
        %v4008 = vunpack.c.l.b16 %v3881
        %v4009 = vunpack.c.h.b16 %v3881
        %v4010 = vunpack.c.l.b16 %v3882
        %v4011 = vunpack.c.h.b16 %v3882
        %v4012 = vunpack.c.l.b16 %v3883
        %v4013 = vunpack.c.h.b16 %v3883
        %v4014 = vunpack.c.l.b16 %v3884
        %v4015 = vunpack.c.h.b16 %v3884
        %v4016 = vunpack.c.l.b16 %v3885
        %v4017 = vunpack.c.h.b16 %v3885
        %v4018 = vpack.c.b16 %v3956, %v3954
        %v4019 = vpack.c.b16 %v3957, %v3955
        %v4020 = vpack.c.b16 %v3960, %v3958
        %v4021 = vpack.c.b16 %v3961, %v3959
        %v4022 = vpack.c.b16 %v3964, %v3962
        %v4023 = vpack.c.b16 %v3965, %v3963
        %v4024 = vpack.c.b16 %v3968, %v3966
        %v4025 = vpack.c.b16 %v3969, %v3967
        %v4026 = vpack.c.b16 %v3972, %v3970
        %v4027 = vpack.c.b16 %v3973, %v3971
        %v4028 = vpack.c.b16 %v3976, %v3974
        %v4029 = vpack.c.b16 %v3977, %v3975
        %v4030 = vpack.c.b16 %v3980, %v3978
        %v4031 = vpack.c.b16 %v3981, %v3979
        %v4032 = vpack.c.b16 %v3984, %v3982
        %v4033 = vpack.c.b16 %v3985, %v3983
        %v4034 = vpack.c.b16 %v3988, %v3986
        %v4035 = vpack.c.b16 %v3989, %v3987
        %v4036 = vpack.c.b16 %v3992, %v3990
        %v4037 = vpack.c.b16 %v3993, %v3991
        %v4038 = vpack.c.b16 %v3996, %v3994
        %v4039 = vpack.c.b16 %v3997, %v3995
        %v4040 = vpack.c.b16 %v4000, %v3998
        %v4041 = vpack.c.b16 %v4001, %v3999
        %v4042 = vpack.c.b16 %v4004, %v4002
        %v4043 = vpack.c.b16 %v4005, %v4003
        %v4044 = vpack.c.b16 %v4008, %v4006
        %v4045 = vpack.c.b16 %v4009, %v4007
        %v4046 = vpack.c.b16 %v4012, %v4010
        %v4047 = vpack.c.b16 %v4013, %v4011
        %v4048 = vpack.c.b16 %v4016, %v4014
        %v4049 = vpack.c.b16 %v4017, %v4015
        %v4114 = vunpack.c.l.b16 %v3886
        %v4115 = vunpack.c.l.b16 %v3887
        %v4116 = vunpack.c.l.b16 %v3888
        %v4117 = vunpack.c.l.b16 %v3889
        %v4118 = vunpack.c.l.b16 %v3890
        %v4119 = vunpack.c.l.b16 %v3891
        %v4120 = vunpack.c.l.b16 %v3892
        %v4121 = vunpack.c.l.b16 %v3893
        %v4122 = vunpack.c.l.b16 %v3894
        %v4123 = vunpack.c.l.b16 %v3895
        %v4124 = vunpack.c.l.b16 %v3896
        %v4125 = vunpack.c.l.b16 %v3897
        %v4126 = vunpack.c.l.b16 %v3898
        %v4127 = vunpack.c.l.b16 %v3899
        %v4128 = vunpack.c.l.b16 %v3900
        %v4129 = vunpack.c.l.b16 %v3901
        %v4130 = vunpack.c.l.b16 %v3902
        %v4131 = vunpack.c.l.b16 %v3903
        %v4132 = vunpack.c.l.b16 %v3904
        %v4133 = vunpack.c.l.b16 %v3905
        %v4134 = vunpack.c.l.b16 %v3906
        %v4135 = vunpack.c.l.b16 %v3907
        %v4136 = vunpack.c.l.b16 %v3908
        %v4137 = vunpack.c.l.b16 %v3909
        %v4138 = vunpack.c.l.b16 %v3910
        %v4139 = vunpack.c.l.b16 %v3911
        %v4140 = vunpack.c.l.b16 %v3912
        %v4141 = vunpack.c.l.b16 %v3913
        %v4142 = vunpack.c.l.b16 %v3914
        %v4143 = vunpack.c.l.b16 %v3915
        %v4144 = vunpack.c.l.b16 %v3916
        %v4145 = vunpack.c.l.b16 %v3917
        %v4146 = vpack.c.b16 %v4115, %v4114
        %v4147 = vpack.c.b16 %v4117, %v4116
        %v4148 = vpack.c.b16 %v4119, %v4118
        %v4149 = vpack.c.b16 %v4121, %v4120
        %v4150 = vpack.c.b16 %v4123, %v4122
        %v4151 = vpack.c.b16 %v4125, %v4124
        %v4152 = vpack.c.b16 %v4127, %v4126
        %v4153 = vpack.c.b16 %v4129, %v4128
        %v4154 = vpack.c.b16 %v4131, %v4130
        %v4155 = vpack.c.b16 %v4133, %v4132
        %v4156 = vpack.c.b16 %v4135, %v4134
        %v4157 = vpack.c.b16 %v4137, %v4136
        %v4158 = vpack.c.b16 %v4139, %v4138
        %v4159 = vpack.c.b16 %v4141, %v4140
        %v4160 = vpack.c.b16 %v4143, %v4142
        %v4161 = vpack.c.b16 %v4145, %v4144
        %4178 = vmatpush.bf16.msra.mxu0 %v4153
        %4179 = vmatpush.bf16.msra.mxu0 %v4152
        %4180 = vmatpush.bf16.msra.mxu0 %v4151
        %4181 = vmatpush.bf16.msra.mxu0 %v4150
        %4182 = vmatpush.bf16.msra.mxu0 %v4149
        %4183 = vmatpush.bf16.msra.mxu0 %v4148
        %4184 = vmatpush.bf16.msra.mxu0 %v4147
        %4185 = vmatpush.bf16.msra.mxu0 %v4146
        %4186 = vmatmul.bf16.gmra.mxu0 %v4018
        %v4187 = vpop.f32.mrf.mxu0
        %v4188 = vadd.f32 %v3920, %v4187
        %v4189 = vpop.f32.mrf.mxu0
        %v4190 = vadd.f32 %v3920, %v4189
        %4191 = vmatmul.bf16.gmra.mxu0 %v4020
        %v4192 = vpop.f32.mrf.mxu0
        %v4193 = vadd.f32 %v3920, %v4192
        %v4194 = vpop.f32.mrf.mxu0
        %v4195 = vadd.f32 %v3920, %v4194
        %4196 = vmatmul.bf16.gmra.mxu0 %v4022
        %v4197 = vpop.f32.mrf.mxu0
        %v4198 = vadd.f32 %v3920, %v4197
        %v4199 = vpop.f32.mrf.mxu0
        %v4200 = vadd.f32 %v3920, %v4199
        %4201 = vmatmul.bf16.gmra.mxu0 %v4024
        %v4202 = vpop.f32.mrf.mxu0
        %v4203 = vadd.f32 %v3920, %v4202
        %v4204 = vpop.f32.mrf.mxu0
        %v4205 = vadd.f32 %v3920, %v4204
        %4206 = vmatmul.bf16.gmra.mxu0 %v4026
        %v4207 = vpop.f32.mrf.mxu0
        %v4208 = vadd.f32 %v3920, %v4207
        %v4209 = vpop.f32.mrf.mxu0
        %v4210 = vadd.f32 %v3920, %v4209
        %4211 = vmatmul.bf16.gmra.mxu0 %v4028
        %v4212 = vpop.f32.mrf.mxu0
        %v4213 = vadd.f32 %v3920, %v4212
        %v4214 = vpop.f32.mrf.mxu0
        %v4215 = vadd.f32 %v3920, %v4214
        %4216 = vmatmul.bf16.gmra.mxu0 %v4030
        %v4217 = vpop.f32.mrf.mxu0
        %v4218 = vadd.f32 %v3920, %v4217
        %v4219 = vpop.f32.mrf.mxu0
        %v4220 = vadd.f32 %v3920, %v4219
        %4221 = vmatmul.bf16.gmra.mxu0 %v4032
        %v4222 = vpop.f32.mrf.mxu0
        %v4223 = vadd.f32 %v3920, %v4222
        %v4224 = vpop.f32.mrf.mxu0
        %v4225 = vadd.f32 %v3920, %v4224
        %4226 = vmatmul.bf16.gmra.mxu0 %v4034
        %v4227 = vpop.f32.mrf.mxu0
        %v4228 = vadd.f32 %v3920, %v4227
        %v4229 = vpop.f32.mrf.mxu0
        %v4230 = vadd.f32 %v3920, %v4229
        %4231 = vmatmul.bf16.gmra.mxu0 %v4036
        %v4232 = vpop.f32.mrf.mxu0
        %v4233 = vadd.f32 %v3920, %v4232
        %v4234 = vpop.f32.mrf.mxu0
        %v4235 = vadd.f32 %v3920, %v4234
        %4236 = vmatmul.bf16.gmra.mxu0 %v4038
        %v4237 = vpop.f32.mrf.mxu0
        %v4238 = vadd.f32 %v3920, %v4237
        %v4239 = vpop.f32.mrf.mxu0
        %v4240 = vadd.f32 %v3920, %v4239
        %4241 = vmatmul.bf16.gmra.mxu0 %v4040
        %v4242 = vpop.f32.mrf.mxu0
        %v4243 = vadd.f32 %v3920, %v4242
        %v4244 = vpop.f32.mrf.mxu0
        %v4245 = vadd.f32 %v3920, %v4244
        %4246 = vmatmul.bf16.gmra.mxu0 %v4042
        %v4247 = vpop.f32.mrf.mxu0
        %v4248 = vadd.f32 %v3920, %v4247
        %v4249 = vpop.f32.mrf.mxu0
        %v4250 = vadd.f32 %v3920, %v4249
        %4251 = vmatmul.bf16.gmra.mxu0 %v4044
        %v4252 = vpop.f32.mrf.mxu0
        %v4253 = vadd.f32 %v3920, %v4252
        %v4254 = vpop.f32.mrf.mxu0
        %v4255 = vadd.f32 %v3920, %v4254
        %4256 = vmatmul.bf16.gmra.mxu0 %v4046
        %v4257 = vpop.f32.mrf.mxu0
        %v4258 = vadd.f32 %v3920, %v4257
        %v4259 = vpop.f32.mrf.mxu0
        %v4260 = vadd.f32 %v3920, %v4259
        %4261 = vmatmul.bf16.gmra.mxu0 %v4048
        %v4262 = vpop.f32.mrf.mxu0
        %v4263 = vadd.f32 %v3920, %v4262
        %v4264 = vpop.f32.mrf.mxu0
        %v4265 = vadd.f32 %v3920, %v4264
        %4266 = vdwg.mxu0
        %4267 = vmatpush.bf16.msra.mxu0 %v4161
        %4268 = vmatpush.bf16.msra.mxu0 %v4160
        %4269 = vmatpush.bf16.msra.mxu0 %v4159
        %4270 = vmatpush.bf16.msra.mxu0 %v4158
        %4271 = vmatpush.bf16.msra.mxu0 %v4157
        %4272 = vmatpush.bf16.msra.mxu0 %v4156
        %4273 = vmatpush.bf16.msra.mxu0 %v4155
        %4274 = vmatpush.bf16.msra.mxu0 %v4154
        %4275 = vmatmul.bf16.gmra.mxu0 %v4019
        %v4276 = vpop.f32.mrf.mxu0
        %v4277 = vadd.f32 %v4188, %v4276
        %v4278 = vpop.f32.mrf.mxu0
        %v4279 = vadd.f32 %v4190, %v4278
        %4280 = vmatmul.bf16.gmra.mxu0 %v4021
        %v4281 = vpop.f32.mrf.mxu0
        %v4282 = vadd.f32 %v4193, %v4281
        %v4283 = vpop.f32.mrf.mxu0
        %v4284 = vadd.f32 %v4195, %v4283
        %4285 = vmatmul.bf16.gmra.mxu0 %v4023
        %v4286 = vpop.f32.mrf.mxu0
        %v4287 = vadd.f32 %v4198, %v4286
        %v4288 = vpop.f32.mrf.mxu0
        %v4289 = vadd.f32 %v4200, %v4288
        %4290 = vmatmul.bf16.gmra.mxu0 %v4025
        %v4291 = vpop.f32.mrf.mxu0
        %v4292 = vadd.f32 %v4203, %v4291
        %v4293 = vpop.f32.mrf.mxu0
        %v4294 = vadd.f32 %v4205, %v4293
        %4295 = vmatmul.bf16.gmra.mxu0 %v4027
        %v4296 = vpop.f32.mrf.mxu0
        %v4297 = vadd.f32 %v4208, %v4296
        %v4298 = vpop.f32.mrf.mxu0
        %v4299 = vadd.f32 %v4210, %v4298
        %4300 = vmatmul.bf16.gmra.mxu0 %v4029
        %v4301 = vpop.f32.mrf.mxu0
        %v4302 = vadd.f32 %v4213, %v4301
        %v4303 = vpop.f32.mrf.mxu0
        %v4304 = vadd.f32 %v4215, %v4303
        %4305 = vmatmul.bf16.gmra.mxu0 %v4031
        %v4306 = vpop.f32.mrf.mxu0
        %v4307 = vadd.f32 %v4218, %v4306
        %v4308 = vpop.f32.mrf.mxu0
        %v4309 = vadd.f32 %v4220, %v4308
        %4310 = vmatmul.bf16.gmra.mxu0 %v4033
        %v4311 = vpop.f32.mrf.mxu0
        %v4312 = vadd.f32 %v4223, %v4311
        %v4313 = vpop.f32.mrf.mxu0
        %v4314 = vadd.f32 %v4225, %v4313
        %4315 = vmatmul.bf16.gmra.mxu0 %v4035
        %v4316 = vpop.f32.mrf.mxu0
        %v4317 = vadd.f32 %v4228, %v4316
        %v4318 = vpop.f32.mrf.mxu0
        %v4319 = vadd.f32 %v4230, %v4318
        %4320 = vmatmul.bf16.gmra.mxu0 %v4037
        %v4321 = vpop.f32.mrf.mxu0
        %v4322 = vadd.f32 %v4233, %v4321
        %v4323 = vpop.f32.mrf.mxu0
        %v4324 = vadd.f32 %v4235, %v4323
        %4325 = vmatmul.bf16.gmra.mxu0 %v4039
        %v4326 = vpop.f32.mrf.mxu0
        %v4327 = vadd.f32 %v4238, %v4326
        %v4328 = vpop.f32.mrf.mxu0
        %v4329 = vadd.f32 %v4240, %v4328
        %4330 = vmatmul.bf16.gmra.mxu0 %v4041
        %v4331 = vpop.f32.mrf.mxu0
        %v4332 = vadd.f32 %v4243, %v4331
        %v4333 = vpop.f32.mrf.mxu0
        %v4334 = vadd.f32 %v4245, %v4333
        %4335 = vmatmul.bf16.gmra.mxu0 %v4043
        %v4336 = vpop.f32.mrf.mxu0
        %v4337 = vadd.f32 %v4248, %v4336
        %v4338 = vpop.f32.mrf.mxu0
        %v4339 = vadd.f32 %v4250, %v4338
        %4340 = vmatmul.bf16.gmra.mxu0 %v4045
        %v4341 = vpop.f32.mrf.mxu0
        %v4342 = vadd.f32 %v4253, %v4341
        %v4343 = vpop.f32.mrf.mxu0
        %v4344 = vadd.f32 %v4255, %v4343
        %4345 = vmatmul.bf16.gmra.mxu0 %v4047
        %v4346 = vpop.f32.mrf.mxu0
        %v4347 = vadd.f32 %v4258, %v4346
        %v4348 = vpop.f32.mrf.mxu0
        %v4349 = vadd.f32 %v4260, %v4348
        %4350 = vmatmul.bf16.gmra.mxu0 %v4049
        %v4351 = vpop.f32.mrf.mxu0
        %v4352 = vadd.f32 %v4263, %v4351
        %v4353 = vpop.f32.mrf.mxu0
        %v4354 = vadd.f32 %v4265, %v4353
        %4355 = vdwg.mxu0
        %v4356 = vpack.c.bf16 %v4277, %v4277
        %v4357 = vpack.c.bf16 %v4279, %v4279
        %v4358 = vpack.c.bf16 %v4282, %v4282
        %v4359 = vpack.c.bf16 %v4284, %v4284
        %v4360 = vpack.c.bf16 %v4287, %v4287
        %v4361 = vpack.c.bf16 %v4289, %v4289
        %v4362 = vpack.c.bf16 %v4292, %v4292
        %v4363 = vpack.c.bf16 %v4294, %v4294
        %v4364 = vpack.c.bf16 %v4297, %v4297
        %v4365 = vpack.c.bf16 %v4299, %v4299
        %v4366 = vpack.c.bf16 %v4302, %v4302
        %v4367 = vpack.c.bf16 %v4304, %v4304
        %v4368 = vpack.c.bf16 %v4307, %v4307
        %v4369 = vpack.c.bf16 %v4309, %v4309
        %v4370 = vpack.c.bf16 %v4312, %v4312
        %v4371 = vpack.c.bf16 %v4314, %v4314
        %v4372 = vpack.c.bf16 %v4317, %v4317
        %v4373 = vpack.c.bf16 %v4319, %v4319
        %v4374 = vpack.c.bf16 %v4322, %v4322
        %v4375 = vpack.c.bf16 %v4324, %v4324
        %v4376 = vpack.c.bf16 %v4327, %v4327
        %v4377 = vpack.c.bf16 %v4329, %v4329
        %v4378 = vpack.c.bf16 %v4332, %v4332
        %v4379 = vpack.c.bf16 %v4334, %v4334
        %v4380 = vpack.c.bf16 %v4337, %v4337
        %v4381 = vpack.c.bf16 %v4339, %v4339
        %v4382 = vpack.c.bf16 %v4342, %v4342
        %v4383 = vpack.c.bf16 %v4344, %v4344
        %v4384 = vpack.c.bf16 %v4347, %v4347
        %v4385 = vpack.c.bf16 %v4349, %v4349
        %v4386 = vpack.c.bf16 %v4352, %v4352
        %v4387 = vpack.c.bf16 %v4354, %v4354
        %v4388 = vunpack.c.l.bf16 %v4356
        %v4389 = vunpack.c.l.bf16 %v4357
        %v4390 = vunpack.c.l.bf16 %v4358
        %v4391 = vunpack.c.l.bf16 %v4359
        %v4392 = vunpack.c.l.bf16 %v4360
        %v4393 = vunpack.c.l.bf16 %v4361
        %v4394 = vunpack.c.l.bf16 %v4362
        %v4395 = vunpack.c.l.bf16 %v4363
        %v4396 = vunpack.c.l.bf16 %v4364
        %v4397 = vunpack.c.l.bf16 %v4365
        %v4398 = vunpack.c.l.bf16 %v4366
        %v4399 = vunpack.c.l.bf16 %v4367
        %v4400 = vunpack.c.l.bf16 %v4368
        %v4401 = vunpack.c.l.bf16 %v4369
        %v4402 = vunpack.c.l.bf16 %v4370
        %v4403 = vunpack.c.l.bf16 %v4371
        %v4404 = vunpack.c.l.bf16 %v4372
        %v4405 = vunpack.c.l.bf16 %v4373
        %v4406 = vunpack.c.l.bf16 %v4374
        %v4407 = vunpack.c.l.bf16 %v4375
        %v4408 = vunpack.c.l.bf16 %v4376
        %v4409 = vunpack.c.l.bf16 %v4377
        %v4410 = vunpack.c.l.bf16 %v4378
        %v4411 = vunpack.c.l.bf16 %v4379
        %v4412 = vunpack.c.l.bf16 %v4380
        %v4413 = vunpack.c.l.bf16 %v4381
        %v4414 = vunpack.c.l.bf16 %v4382
        %v4415 = vunpack.c.l.bf16 %v4383
        %v4416 = vunpack.c.l.bf16 %v4384
        %v4417 = vunpack.c.l.bf16 %v4385
        %v4418 = vunpack.c.l.bf16 %v4386
        %v4419 = vunpack.c.l.bf16 %v4387
        %vm4420 = vcmp.gt.f32.partialorder %v4388, 0.0
        %vm4421 = vcmp.gt.f32.partialorder %v4389, 0.0
        %vm4422 = vcmp.gt.f32.partialorder %v4390, 0.0
        %vm4423 = vcmp.gt.f32.partialorder %v4391, 0.0
        %vm4424 = vcmp.gt.f32.partialorder %v4392, 0.0
        %vm4425 = vcmp.gt.f32.partialorder %v4393, 0.0
        %vm4426 = vcmp.gt.f32.partialorder %v4394, 0.0
        %vm4427 = vcmp.gt.f32.partialorder %v4395, 0.0
        %vm4428 = vcmp.gt.f32.partialorder %v4396, 0.0
        %vm4429 = vcmp.gt.f32.partialorder %v4397, 0.0
        %vm4430 = vcmp.gt.f32.partialorder %v4398, 0.0
        %vm4431 = vcmp.gt.f32.partialorder %v4399, 0.0
        %vm4432 = vcmp.gt.f32.partialorder %v4400, 0.0
        %vm4433 = vcmp.gt.f32.partialorder %v4401, 0.0
        %vm4434 = vcmp.gt.f32.partialorder %v4402, 0.0
        %vm4435 = vcmp.gt.f32.partialorder %v4403, 0.0
        %vm4436 = vcmp.gt.f32.partialorder %v4404, 0.0
        %vm4437 = vcmp.gt.f32.partialorder %v4405, 0.0
        %vm4438 = vcmp.gt.f32.partialorder %v4406, 0.0
        %vm4439 = vcmp.gt.f32.partialorder %v4407, 0.0
        %vm4440 = vcmp.gt.f32.partialorder %v4408, 0.0
        %vm4441 = vcmp.gt.f32.partialorder %v4409, 0.0
        %vm4442 = vcmp.gt.f32.partialorder %v4410, 0.0
        %vm4443 = vcmp.gt.f32.partialorder %v4411, 0.0
        %vm4444 = vcmp.gt.f32.partialorder %v4412, 0.0
        %vm4445 = vcmp.gt.f32.partialorder %v4413, 0.0
        %vm4446 = vcmp.gt.f32.partialorder %v4414, 0.0
        %vm4447 = vcmp.gt.f32.partialorder %v4415, 0.0
        %vm4448 = vcmp.gt.f32.partialorder %v4416, 0.0
        %vm4449 = vcmp.gt.f32.partialorder %v4417, 0.0
        %vm4450 = vcmp.gt.f32.partialorder %v4418, 0.0
        %vm4451 = vcmp.gt.f32.partialorder %v4419, 0.0
        %v4452 = vmul.f32 %v4388, 0.010009766
        %v4453 = vmul.f32 %v4389, 0.010009766
        %v4454 = vmul.f32 %v4390, 0.010009766
        %v4455 = vmul.f32 %v4391, 0.010009766
        %v4456 = vmul.f32 %v4392, 0.010009766
        %v4457 = vmul.f32 %v4393, 0.010009766
        %v4458 = vmul.f32 %v4394, 0.010009766
        %v4459 = vmul.f32 %v4395, 0.010009766
        %v4460 = vmul.f32 %v4396, 0.010009766
        %v4461 = vmul.f32 %v4397, 0.010009766
        %v4462 = vmul.f32 %v4398, 0.010009766
        %v4463 = vmul.f32 %v4399, 0.010009766
        %v4464 = vmul.f32 %v4400, 0.010009766
        %v4465 = vmul.f32 %v4401, 0.010009766
        %v4466 = vmul.f32 %v4402, 0.010009766
        %v4467 = vmul.f32 %v4403, 0.010009766
        %v4468 = vmul.f32 %v4404, 0.010009766
        %v4469 = vmul.f32 %v4405, 0.010009766
        %v4470 = vmul.f32 %v4406, 0.010009766
        %v4471 = vmul.f32 %v4407, 0.010009766
        %v4472 = vmul.f32 %v4408, 0.010009766
        %v4473 = vmul.f32 %v4409, 0.010009766
        %v4474 = vmul.f32 %v4410, 0.010009766
        %v4475 = vmul.f32 %v4411, 0.010009766
        %v4476 = vmul.f32 %v4412, 0.010009766
        %v4477 = vmul.f32 %v4413, 0.010009766
        %v4478 = vmul.f32 %v4414, 0.010009766
        %v4479 = vmul.f32 %v4415, 0.010009766
        %v4480 = vmul.f32 %v4416, 0.010009766
        %v4481 = vmul.f32 %v4417, 0.010009766
        %v4482 = vmul.f32 %v4418, 0.010009766
        %v4483 = vmul.f32 %v4419, 0.010009766
        %v4484 = vpack.c.bf16 %v4452, %v4452
        %v4485 = vpack.c.bf16 %v4453, %v4453
        %v4486 = vpack.c.bf16 %v4454, %v4454
        %v4487 = vpack.c.bf16 %v4455, %v4455
        %v4488 = vpack.c.bf16 %v4456, %v4456
        %v4489 = vpack.c.bf16 %v4457, %v4457
        %v4490 = vpack.c.bf16 %v4458, %v4458
        %v4491 = vpack.c.bf16 %v4459, %v4459
        %v4492 = vpack.c.bf16 %v4460, %v4460
        %v4493 = vpack.c.bf16 %v4461, %v4461
        %v4494 = vpack.c.bf16 %v4462, %v4462
        %v4495 = vpack.c.bf16 %v4463, %v4463
        %v4496 = vpack.c.bf16 %v4464, %v4464
        %v4497 = vpack.c.bf16 %v4465, %v4465
        %v4498 = vpack.c.bf16 %v4466, %v4466
        %v4499 = vpack.c.bf16 %v4467, %v4467
        %v4500 = vpack.c.bf16 %v4468, %v4468
        %v4501 = vpack.c.bf16 %v4469, %v4469
        %v4502 = vpack.c.bf16 %v4470, %v4470
        %v4503 = vpack.c.bf16 %v4471, %v4471
        %v4504 = vpack.c.bf16 %v4472, %v4472
        %v4505 = vpack.c.bf16 %v4473, %v4473
        %v4506 = vpack.c.bf16 %v4474, %v4474
        %v4507 = vpack.c.bf16 %v4475, %v4475
        %v4508 = vpack.c.bf16 %v4476, %v4476
        %v4509 = vpack.c.bf16 %v4477, %v4477
        %v4510 = vpack.c.bf16 %v4478, %v4478
        %v4511 = vpack.c.bf16 %v4479, %v4479
        %v4512 = vpack.c.bf16 %v4480, %v4480
        %v4513 = vpack.c.bf16 %v4481, %v4481
        %v4514 = vpack.c.bf16 %v4482, %v4482
        %v4515 = vpack.c.bf16 %v4483, %v4483
        %vm4516 = vmpackc.low %vm4420, %vm4420
        %vm4517 = vmpackc.low %vm4421, %vm4421
        %vm4518 = vmpackc.low %vm4422, %vm4422
        %vm4519 = vmpackc.low %vm4423, %vm4423
        %vm4520 = vmpackc.low %vm4424, %vm4424
        %vm4521 = vmpackc.low %vm4425, %vm4425
        %vm4522 = vmpackc.low %vm4426, %vm4426
        %vm4523 = vmpackc.low %vm4427, %vm4427
        %vm4524 = vmpackc.low %vm4428, %vm4428
        %vm4525 = vmpackc.low %vm4429, %vm4429
        %vm4526 = vmpackc.low %vm4430, %vm4430
        %vm4527 = vmpackc.low %vm4431, %vm4431
        %vm4528 = vmpackc.low %vm4432, %vm4432
        %vm4529 = vmpackc.low %vm4433, %vm4433
        %vm4530 = vmpackc.low %vm4434, %vm4434
        %vm4531 = vmpackc.low %vm4435, %vm4435
        %vm4532 = vmpackc.low %vm4436, %vm4436
        %vm4533 = vmpackc.low %vm4437, %vm4437
        %vm4534 = vmpackc.low %vm4438, %vm4438
        %vm4535 = vmpackc.low %vm4439, %vm4439
        %vm4536 = vmpackc.low %vm4440, %vm4440
        %vm4537 = vmpackc.low %vm4441, %vm4441
        %vm4538 = vmpackc.low %vm4442, %vm4442
        %vm4539 = vmpackc.low %vm4443, %vm4443
        %vm4540 = vmpackc.low %vm4444, %vm4444
        %vm4541 = vmpackc.low %vm4445, %vm4445
        %vm4542 = vmpackc.low %vm4446, %vm4446
        %vm4543 = vmpackc.low %vm4447, %vm4447
        %vm4544 = vmpackc.low %vm4448, %vm4448
        %vm4545 = vmpackc.low %vm4449, %vm4449
        %vm4546 = vmpackc.low %vm4450, %vm4450
        %vm4547 = vmpackc.low %vm4451, %vm4451
        %v4548 = vsel %vm4516, %v4356, %v4484
        %v4549 = vsel %vm4517, %v4357, %v4485
        %v4550 = vsel %vm4518, %v4358, %v4486
        %v4551 = vsel %vm4519, %v4359, %v4487
        %v4552 = vsel %vm4520, %v4360, %v4488
        %v4553 = vsel %vm4521, %v4361, %v4489
        %v4554 = vsel %vm4522, %v4362, %v4490
        %v4555 = vsel %vm4523, %v4363, %v4491
        %v4556 = vsel %vm4524, %v4364, %v4492
        %v4557 = vsel %vm4525, %v4365, %v4493
        %v4558 = vsel %vm4526, %v4366, %v4494
        %v4559 = vsel %vm4527, %v4367, %v4495
        %v4560 = vsel %vm4528, %v4368, %v4496
        %v4561 = vsel %vm4529, %v4369, %v4497
        %v4562 = vsel %vm4530, %v4370, %v4498
        %v4563 = vsel %vm4531, %v4371, %v4499
        %v4564 = vsel %vm4532, %v4372, %v4500
        %v4565 = vsel %vm4533, %v4373, %v4501
        %v4566 = vsel %vm4534, %v4374, %v4502
        %v4567 = vsel %vm4535, %v4375, %v4503
        %v4568 = vsel %vm4536, %v4376, %v4504
        %v4569 = vsel %vm4537, %v4377, %v4505
        %v4570 = vsel %vm4538, %v4378, %v4506
        %v4571 = vsel %vm4539, %v4379, %v4507
        %v4572 = vsel %vm4540, %v4380, %v4508
        %v4573 = vsel %vm4541, %v4381, %v4509
        %v4574 = vsel %vm4542, %v4382, %v4510
        %v4575 = vsel %vm4543, %v4383, %v4511
        %v4576 = vsel %vm4544, %v4384, %v4512
        %v4577 = vsel %vm4545, %v4385, %v4513
        %v4578 = vsel %vm4546, %v4386, %v4514
        %v4579 = vsel %vm4547, %v4387, %v4515
        %v4580 = vld [vmem:[#allocation4] sm:$0xf]
        %v4581 = vld [vmem:[#allocation4 + $0x4] sm:$0xf]
        %v4582 = vld [vmem:[#allocation4 + $0x8] sm:$0xf]
        %v4583 = vld [vmem:[#allocation4 + $0xc] sm:$0xf]
        %v4584 = vld [vmem:[#allocation4 + $0x10] sm:$0xf]
        %v4585 = vld [vmem:[#allocation4 + $0x14] sm:$0xf]
        %v4586 = vld [vmem:[#allocation4 + $0x18] sm:$0xf]
        %v4587 = vld [vmem:[#allocation4 + $0x1c] sm:$0xf]
        %v4588 = vld [vmem:[#allocation4 + $0x20] sm:$0xf]
        %v4589 = vld [vmem:[#allocation4 + $0x24] sm:$0xf]
        %v4590 = vld [vmem:[#allocation4 + $0x28] sm:$0xf]
        %v4591 = vld [vmem:[#allocation4 + $0x2c] sm:$0xf]
        %v4592 = vld [vmem:[#allocation4 + $0x30] sm:$0xf]
        %v4593 = vld [vmem:[#allocation4 + $0x34] sm:$0xf]
        %v4594 = vld [vmem:[#allocation4 + $0x38] sm:$0xf]
        %v4595 = vld [vmem:[#allocation4 + $0x3c] sm:$0xf]
        %v4596 = vld [vmem:[#allocation15] sm:$0x1]
        %v4598 = vperm.slane %v4596, 0
        %v4632 = vunpack.c.l.b16 %v4548
        %v4633 = vunpack.c.l.b16 %v4549
        %v4634 = vunpack.c.l.b16 %v4550
        %v4635 = vunpack.c.l.b16 %v4551
        %v4636 = vunpack.c.l.b16 %v4552
        %v4637 = vunpack.c.l.b16 %v4553
        %v4638 = vunpack.c.l.b16 %v4554
        %v4639 = vunpack.c.l.b16 %v4555
        %v4640 = vunpack.c.l.b16 %v4556
        %v4641 = vunpack.c.l.b16 %v4557
        %v4642 = vunpack.c.l.b16 %v4558
        %v4643 = vunpack.c.l.b16 %v4559
        %v4644 = vunpack.c.l.b16 %v4560
        %v4645 = vunpack.c.l.b16 %v4561
        %v4646 = vunpack.c.l.b16 %v4562
        %v4647 = vunpack.c.l.b16 %v4563
        %v4648 = vunpack.c.l.b16 %v4564
        %v4649 = vunpack.c.l.b16 %v4565
        %v4650 = vunpack.c.l.b16 %v4566
        %v4651 = vunpack.c.l.b16 %v4567
        %v4652 = vunpack.c.l.b16 %v4568
        %v4653 = vunpack.c.l.b16 %v4569
        %v4654 = vunpack.c.l.b16 %v4570
        %v4655 = vunpack.c.l.b16 %v4571
        %v4656 = vunpack.c.l.b16 %v4572
        %v4657 = vunpack.c.l.b16 %v4573
        %v4658 = vunpack.c.l.b16 %v4574
        %v4659 = vunpack.c.l.b16 %v4575
        %v4660 = vunpack.c.l.b16 %v4576
        %v4661 = vunpack.c.l.b16 %v4577
        %v4662 = vunpack.c.l.b16 %v4578
        %v4663 = vunpack.c.l.b16 %v4579
        %v4664 = vpack.c.b16 %v4633, %v4632
        %v4665 = vpack.c.b16 %v4635, %v4634
        %v4666 = vpack.c.b16 %v4637, %v4636
        %v4667 = vpack.c.b16 %v4639, %v4638
        %v4668 = vpack.c.b16 %v4641, %v4640
        %v4669 = vpack.c.b16 %v4643, %v4642
        %v4670 = vpack.c.b16 %v4645, %v4644
        %v4671 = vpack.c.b16 %v4647, %v4646
        %v4672 = vpack.c.b16 %v4649, %v4648
        %v4673 = vpack.c.b16 %v4651, %v4650
        %v4674 = vpack.c.b16 %v4653, %v4652
        %v4675 = vpack.c.b16 %v4655, %v4654
        %v4676 = vpack.c.b16 %v4657, %v4656
        %v4677 = vpack.c.b16 %v4659, %v4658
        %v4678 = vpack.c.b16 %v4661, %v4660
        %v4679 = vpack.c.b16 %v4663, %v4662
        %v4712 = vunpack.c.l.b16 %v4580
        %v4713 = vunpack.c.l.b16 %v4581
        %v4714 = vunpack.c.l.b16 %v4582
        %v4715 = vunpack.c.l.b16 %v4583
        %v4716 = vunpack.c.l.b16 %v4584
        %v4717 = vunpack.c.l.b16 %v4585
        %v4718 = vunpack.c.l.b16 %v4586
        %v4719 = vunpack.c.l.b16 %v4587
        %v4720 = vunpack.c.l.b16 %v4588
        %v4721 = vunpack.c.l.b16 %v4589
        %v4722 = vunpack.c.l.b16 %v4590
        %v4723 = vunpack.c.l.b16 %v4591
        %v4724 = vunpack.c.l.b16 %v4592
        %v4725 = vunpack.c.l.b16 %v4593
        %v4726 = vunpack.c.l.b16 %v4594
        %v4727 = vunpack.c.l.b16 %v4595
        %v4728 = vpack.c.b16 %v4713, %v4712
        %v4729 = vpack.c.b16 %v4715, %v4714
        %v4730 = vpack.c.b16 %v4717, %v4716
        %v4731 = vpack.c.b16 %v4719, %v4718
        %v4732 = vpack.c.b16 %v4721, %v4720
        %v4733 = vpack.c.b16 %v4723, %v4722
        %v4734 = vpack.c.b16 %v4725, %v4724
        %v4735 = vpack.c.b16 %v4727, %v4726
        %4744 = vmatpush.bf16.msra.mxu0 %v4735
        %4745 = vmatpush.bf16.msra.mxu0 %v4734
        %4746 = vmatpush.bf16.msra.mxu0 %v4733
        %4747 = vmatpush.bf16.msra.mxu0 %v4732
        %4748 = vmatpush.bf16.msra.mxu0 %v4731
        %4749 = vmatpush.bf16.msra.mxu0 %v4730
        %4750 = vmatpush.bf16.msra.mxu0 %v4729
        %4751 = vmatpush.bf16.msra.mxu0 %v4728
        %4752 = vmatmul.bf16.gmra.mxu0 %v4664
        %v4753 = vpop.f32.mrf.mxu0
        %v4754 = vadd.f32 %v4598, %v4753
        %v4755 = vpop.f32.mrf.mxu0
        %v4756 = vadd.f32 %v4598, %v4755
        %4757 = vmatmul.bf16.gmra.mxu0 %v4665
        %v4758 = vpop.f32.mrf.mxu0
        %v4759 = vadd.f32 %v4598, %v4758
        %v4760 = vpop.f32.mrf.mxu0
        %v4761 = vadd.f32 %v4598, %v4760
        %4762 = vmatmul.bf16.gmra.mxu0 %v4666
        %v4763 = vpop.f32.mrf.mxu0
        %v4764 = vadd.f32 %v4598, %v4763
        %v4765 = vpop.f32.mrf.mxu0
        %v4766 = vadd.f32 %v4598, %v4765
        %4767 = vmatmul.bf16.gmra.mxu0 %v4667
        %v4768 = vpop.f32.mrf.mxu0
        %v4769 = vadd.f32 %v4598, %v4768
        %v4770 = vpop.f32.mrf.mxu0
        %v4771 = vadd.f32 %v4598, %v4770
        %4772 = vmatmul.bf16.gmra.mxu0 %v4668
        %v4773 = vpop.f32.mrf.mxu0
        %v4774 = vadd.f32 %v4598, %v4773
        %v4775 = vpop.f32.mrf.mxu0
        %v4776 = vadd.f32 %v4598, %v4775
        %4777 = vmatmul.bf16.gmra.mxu0 %v4669
        %v4778 = vpop.f32.mrf.mxu0
        %v4779 = vadd.f32 %v4598, %v4778
        %v4780 = vpop.f32.mrf.mxu0
        %v4781 = vadd.f32 %v4598, %v4780
        %4782 = vmatmul.bf16.gmra.mxu0 %v4670
        %v4783 = vpop.f32.mrf.mxu0
        %v4784 = vadd.f32 %v4598, %v4783
        %v4785 = vpop.f32.mrf.mxu0
        %v4786 = vadd.f32 %v4598, %v4785
        %4787 = vmatmul.bf16.gmra.mxu0 %v4671
        %v4788 = vpop.f32.mrf.mxu0
        %v4789 = vadd.f32 %v4598, %v4788
        %v4790 = vpop.f32.mrf.mxu0
        %v4791 = vadd.f32 %v4598, %v4790
        %4792 = vmatmul.bf16.gmra.mxu0 %v4672
        %v4793 = vpop.f32.mrf.mxu0
        %v4794 = vadd.f32 %v4598, %v4793
        %v4795 = vpop.f32.mrf.mxu0
        %v4796 = vadd.f32 %v4598, %v4795
        %4797 = vmatmul.bf16.gmra.mxu0 %v4673
        %v4798 = vpop.f32.mrf.mxu0
        %v4799 = vadd.f32 %v4598, %v4798
        %v4800 = vpop.f32.mrf.mxu0
        %v4801 = vadd.f32 %v4598, %v4800
        %4802 = vmatmul.bf16.gmra.mxu0 %v4674
        %v4803 = vpop.f32.mrf.mxu0
        %v4804 = vadd.f32 %v4598, %v4803
        %v4805 = vpop.f32.mrf.mxu0
        %v4806 = vadd.f32 %v4598, %v4805
        %4807 = vmatmul.bf16.gmra.mxu0 %v4675
        %v4808 = vpop.f32.mrf.mxu0
        %v4809 = vadd.f32 %v4598, %v4808
        %v4810 = vpop.f32.mrf.mxu0
        %v4811 = vadd.f32 %v4598, %v4810
        %4812 = vmatmul.bf16.gmra.mxu0 %v4676
        %v4813 = vpop.f32.mrf.mxu0
        %v4814 = vadd.f32 %v4598, %v4813
        %v4815 = vpop.f32.mrf.mxu0
        %v4816 = vadd.f32 %v4598, %v4815
        %4817 = vmatmul.bf16.gmra.mxu0 %v4677
        %v4818 = vpop.f32.mrf.mxu0
        %v4819 = vadd.f32 %v4598, %v4818
        %v4820 = vpop.f32.mrf.mxu0
        %v4821 = vadd.f32 %v4598, %v4820
        %4822 = vmatmul.bf16.gmra.mxu0 %v4678
        %v4823 = vpop.f32.mrf.mxu0
        %v4824 = vadd.f32 %v4598, %v4823
        %v4825 = vpop.f32.mrf.mxu0
        %v4826 = vadd.f32 %v4598, %v4825
        %4827 = vmatmul.bf16.gmra.mxu0 %v4679
        %v4828 = vpop.f32.mrf.mxu0
        %v4829 = vadd.f32 %v4598, %v4828
        %v4830 = vpop.f32.mrf.mxu0
        %v4831 = vadd.f32 %v4598, %v4830
        %4832 = vdwg.mxu0
        %v4833 = vpack.c.bf16 %v4754, %v4754
        %v4834 = vpack.c.bf16 %v4756, %v4756
        %v4835 = vpack.c.bf16 %v4759, %v4759
        %v4836 = vpack.c.bf16 %v4761, %v4761
        %v4837 = vpack.c.bf16 %v4764, %v4764
        %v4838 = vpack.c.bf16 %v4766, %v4766
        %v4839 = vpack.c.bf16 %v4769, %v4769
        %v4840 = vpack.c.bf16 %v4771, %v4771
        %v4841 = vpack.c.bf16 %v4774, %v4774
        %v4842 = vpack.c.bf16 %v4776, %v4776
        %v4843 = vpack.c.bf16 %v4779, %v4779
        %v4844 = vpack.c.bf16 %v4781, %v4781
        %v4845 = vpack.c.bf16 %v4784, %v4784
        %v4846 = vpack.c.bf16 %v4786, %v4786
        %v4847 = vpack.c.bf16 %v4789, %v4789
        %v4848 = vpack.c.bf16 %v4791, %v4791
        %v4849 = vpack.c.bf16 %v4794, %v4794
        %v4850 = vpack.c.bf16 %v4796, %v4796
        %v4851 = vpack.c.bf16 %v4799, %v4799
        %v4852 = vpack.c.bf16 %v4801, %v4801
        %v4853 = vpack.c.bf16 %v4804, %v4804
        %v4854 = vpack.c.bf16 %v4806, %v4806
        %v4855 = vpack.c.bf16 %v4809, %v4809
        %v4856 = vpack.c.bf16 %v4811, %v4811
        %v4857 = vpack.c.bf16 %v4814, %v4814
        %v4858 = vpack.c.bf16 %v4816, %v4816
        %v4859 = vpack.c.bf16 %v4819, %v4819
        %v4860 = vpack.c.bf16 %v4821, %v4821
        %v4861 = vpack.c.bf16 %v4824, %v4824
        %v4862 = vpack.c.bf16 %v4826, %v4826
        %v4863 = vpack.c.bf16 %v4829, %v4829
        %v4864 = vpack.c.bf16 %v4831, %v4831
        %v4865 = vunpack.c.l.bf16 %v4833
        %v4866 = vunpack.c.l.bf16 %v4834
        %v4867 = vunpack.c.l.bf16 %v4835
        %v4868 = vunpack.c.l.bf16 %v4836
        %v4869 = vunpack.c.l.bf16 %v4837
        %v4870 = vunpack.c.l.bf16 %v4838
        %v4871 = vunpack.c.l.bf16 %v4839
        %v4872 = vunpack.c.l.bf16 %v4840
        %v4873 = vunpack.c.l.bf16 %v4841
        %v4874 = vunpack.c.l.bf16 %v4842
        %v4875 = vunpack.c.l.bf16 %v4843
        %v4876 = vunpack.c.l.bf16 %v4844
        %v4877 = vunpack.c.l.bf16 %v4845
        %v4878 = vunpack.c.l.bf16 %v4846
        %v4879 = vunpack.c.l.bf16 %v4847
        %v4880 = vunpack.c.l.bf16 %v4848
        %v4881 = vunpack.c.l.bf16 %v4849
        %v4882 = vunpack.c.l.bf16 %v4850
        %v4883 = vunpack.c.l.bf16 %v4851
        %v4884 = vunpack.c.l.bf16 %v4852
        %v4885 = vunpack.c.l.bf16 %v4853
        %v4886 = vunpack.c.l.bf16 %v4854
        %v4887 = vunpack.c.l.bf16 %v4855
        %v4888 = vunpack.c.l.bf16 %v4856
        %v4889 = vunpack.c.l.bf16 %v4857
        %v4890 = vunpack.c.l.bf16 %v4858
        %v4891 = vunpack.c.l.bf16 %v4859
        %v4892 = vunpack.c.l.bf16 %v4860
        %v4893 = vunpack.c.l.bf16 %v4861
        %v4894 = vunpack.c.l.bf16 %v4862
        %v4895 = vunpack.c.l.bf16 %v4863
        %v4896 = vunpack.c.l.bf16 %v4864
        %vm4897 = vcmp.gt.f32.partialorder %v4865, 0.0
        %vm4898 = vcmp.gt.f32.partialorder %v4866, 0.0
        %vm4899 = vcmp.gt.f32.partialorder %v4867, 0.0
        %vm4900 = vcmp.gt.f32.partialorder %v4868, 0.0
        %vm4901 = vcmp.gt.f32.partialorder %v4869, 0.0
        %vm4902 = vcmp.gt.f32.partialorder %v4870, 0.0
        %vm4903 = vcmp.gt.f32.partialorder %v4871, 0.0
        %vm4904 = vcmp.gt.f32.partialorder %v4872, 0.0
        %vm4905 = vcmp.gt.f32.partialorder %v4873, 0.0
        %vm4906 = vcmp.gt.f32.partialorder %v4874, 0.0
        %vm4907 = vcmp.gt.f32.partialorder %v4875, 0.0
        %vm4908 = vcmp.gt.f32.partialorder %v4876, 0.0
        %vm4909 = vcmp.gt.f32.partialorder %v4877, 0.0
        %vm4910 = vcmp.gt.f32.partialorder %v4878, 0.0
        %vm4911 = vcmp.gt.f32.partialorder %v4879, 0.0
        %vm4912 = vcmp.gt.f32.partialorder %v4880, 0.0
        %vm4913 = vcmp.gt.f32.partialorder %v4881, 0.0
        %vm4914 = vcmp.gt.f32.partialorder %v4882, 0.0
        %vm4915 = vcmp.gt.f32.partialorder %v4883, 0.0
        %vm4916 = vcmp.gt.f32.partialorder %v4884, 0.0
        %vm4917 = vcmp.gt.f32.partialorder %v4885, 0.0
        %vm4918 = vcmp.gt.f32.partialorder %v4886, 0.0
        %vm4919 = vcmp.gt.f32.partialorder %v4887, 0.0
        %vm4920 = vcmp.gt.f32.partialorder %v4888, 0.0
        %vm4921 = vcmp.gt.f32.partialorder %v4889, 0.0
        %vm4922 = vcmp.gt.f32.partialorder %v4890, 0.0
        %vm4923 = vcmp.gt.f32.partialorder %v4891, 0.0
        %vm4924 = vcmp.gt.f32.partialorder %v4892, 0.0
        %vm4925 = vcmp.gt.f32.partialorder %v4893, 0.0
        %vm4926 = vcmp.gt.f32.partialorder %v4894, 0.0
        %vm4927 = vcmp.gt.f32.partialorder %v4895, 0.0
        %vm4928 = vcmp.gt.f32.partialorder %v4896, 0.0
        %v4929 = vmul.f32 %v4865, 0.010009766
        %v4930 = vmul.f32 %v4866, 0.010009766
        %v4931 = vmul.f32 %v4867, 0.010009766
        %v4932 = vmul.f32 %v4868, 0.010009766
        %v4933 = vmul.f32 %v4869, 0.010009766
        %v4934 = vmul.f32 %v4870, 0.010009766
        %v4935 = vmul.f32 %v4871, 0.010009766
        %v4936 = vmul.f32 %v4872, 0.010009766
        %v4937 = vmul.f32 %v4873, 0.010009766
        %v4938 = vmul.f32 %v4874, 0.010009766
        %v4939 = vmul.f32 %v4875, 0.010009766
        %v4940 = vmul.f32 %v4876, 0.010009766
        %v4941 = vmul.f32 %v4877, 0.010009766
        %v4942 = vmul.f32 %v4878, 0.010009766
        %v4943 = vmul.f32 %v4879, 0.010009766
        %v4944 = vmul.f32 %v4880, 0.010009766
        %v4945 = vmul.f32 %v4881, 0.010009766
        %v4946 = vmul.f32 %v4882, 0.010009766
        %v4947 = vmul.f32 %v4883, 0.010009766
        %v4948 = vmul.f32 %v4884, 0.010009766
        %v4949 = vmul.f32 %v4885, 0.010009766
        %v4950 = vmul.f32 %v4886, 0.010009766
        %v4951 = vmul.f32 %v4887, 0.010009766
        %v4952 = vmul.f32 %v4888, 0.010009766
        %v4953 = vmul.f32 %v4889, 0.010009766
        %v4954 = vmul.f32 %v4890, 0.010009766
        %v4955 = vmul.f32 %v4891, 0.010009766
        %v4956 = vmul.f32 %v4892, 0.010009766
        %v4957 = vmul.f32 %v4893, 0.010009766
        %v4958 = vmul.f32 %v4894, 0.010009766
        %v4959 = vmul.f32 %v4895, 0.010009766
        %v4960 = vmul.f32 %v4896, 0.010009766
        %v4961 = vpack.c.bf16 %v4929, %v4929
        %v4962 = vpack.c.bf16 %v4930, %v4930
        %v4963 = vpack.c.bf16 %v4931, %v4931
        %v4964 = vpack.c.bf16 %v4932, %v4932
        %v4965 = vpack.c.bf16 %v4933, %v4933
        %v4966 = vpack.c.bf16 %v4934, %v4934
        %v4967 = vpack.c.bf16 %v4935, %v4935
        %v4968 = vpack.c.bf16 %v4936, %v4936
        %v4969 = vpack.c.bf16 %v4937, %v4937
        %v4970 = vpack.c.bf16 %v4938, %v4938
        %v4971 = vpack.c.bf16 %v4939, %v4939
        %v4972 = vpack.c.bf16 %v4940, %v4940
        %v4973 = vpack.c.bf16 %v4941, %v4941
        %v4974 = vpack.c.bf16 %v4942, %v4942
        %v4975 = vpack.c.bf16 %v4943, %v4943
        %v4976 = vpack.c.bf16 %v4944, %v4944
        %v4977 = vpack.c.bf16 %v4945, %v4945
        %v4978 = vpack.c.bf16 %v4946, %v4946
        %v4979 = vpack.c.bf16 %v4947, %v4947
        %v4980 = vpack.c.bf16 %v4948, %v4948
        %v4981 = vpack.c.bf16 %v4949, %v4949
        %v4982 = vpack.c.bf16 %v4950, %v4950
        %v4983 = vpack.c.bf16 %v4951, %v4951
        %v4984 = vpack.c.bf16 %v4952, %v4952
        %v4985 = vpack.c.bf16 %v4953, %v4953
        %v4986 = vpack.c.bf16 %v4954, %v4954
        %v4987 = vpack.c.bf16 %v4955, %v4955
        %v4988 = vpack.c.bf16 %v4956, %v4956
        %v4989 = vpack.c.bf16 %v4957, %v4957
        %v4990 = vpack.c.bf16 %v4958, %v4958
        %v4991 = vpack.c.bf16 %v4959, %v4959
        %v4992 = vpack.c.bf16 %v4960, %v4960
        %vm4993 = vmpackc.low %vm4897, %vm4897
        %vm4994 = vmpackc.low %vm4898, %vm4898
        %vm4995 = vmpackc.low %vm4899, %vm4899
        %vm4996 = vmpackc.low %vm4900, %vm4900
        %vm4997 = vmpackc.low %vm4901, %vm4901
        %vm4998 = vmpackc.low %vm4902, %vm4902
        %vm4999 = vmpackc.low %vm4903, %vm4903
        %vm5000 = vmpackc.low %vm4904, %vm4904
        %vm5001 = vmpackc.low %vm4905, %vm4905
        %vm5002 = vmpackc.low %vm4906, %vm4906
        %vm5003 = vmpackc.low %vm4907, %vm4907
        %vm5004 = vmpackc.low %vm4908, %vm4908
        %vm5005 = vmpackc.low %vm4909, %vm4909
        %vm5006 = vmpackc.low %vm4910, %vm4910
        %vm5007 = vmpackc.low %vm4911, %vm4911
        %vm5008 = vmpackc.low %vm4912, %vm4912
        %vm5009 = vmpackc.low %vm4913, %vm4913
        %vm5010 = vmpackc.low %vm4914, %vm4914
        %vm5011 = vmpackc.low %vm4915, %vm4915
        %vm5012 = vmpackc.low %vm4916, %vm4916
        %vm5013 = vmpackc.low %vm4917, %vm4917
        %vm5014 = vmpackc.low %vm4918, %vm4918
        %vm5015 = vmpackc.low %vm4919, %vm4919
        %vm5016 = vmpackc.low %vm4920, %vm4920
        %vm5017 = vmpackc.low %vm4921, %vm4921
        %vm5018 = vmpackc.low %vm4922, %vm4922
        %vm5019 = vmpackc.low %vm4923, %vm4923
        %vm5020 = vmpackc.low %vm4924, %vm4924
        %vm5021 = vmpackc.low %vm4925, %vm4925
        %vm5022 = vmpackc.low %vm4926, %vm4926
        %vm5023 = vmpackc.low %vm4927, %vm4927
        %vm5024 = vmpackc.low %vm4928, %vm4928
        %v5025 = vsel %vm4993, %v4833, %v4961
        %v5026 = vsel %vm4994, %v4834, %v4962
        %v5027 = vsel %vm4995, %v4835, %v4963
        %v5028 = vsel %vm4996, %v4836, %v4964
        %v5029 = vsel %vm4997, %v4837, %v4965
        %v5030 = vsel %vm4998, %v4838, %v4966
        %v5031 = vsel %vm4999, %v4839, %v4967
        %v5032 = vsel %vm5000, %v4840, %v4968
        %v5033 = vsel %vm5001, %v4841, %v4969
        %v5034 = vsel %vm5002, %v4842, %v4970
        %v5035 = vsel %vm5003, %v4843, %v4971
        %v5036 = vsel %vm5004, %v4844, %v4972
        %v5037 = vsel %vm5005, %v4845, %v4973
        %v5038 = vsel %vm5006, %v4846, %v4974
        %v5039 = vsel %vm5007, %v4847, %v4975
        %v5040 = vsel %vm5008, %v4848, %v4976
        %v5041 = vsel %vm5009, %v4849, %v4977
        %v5042 = vsel %vm5010, %v4850, %v4978
        %v5043 = vsel %vm5011, %v4851, %v4979
        %v5044 = vsel %vm5012, %v4852, %v4980
        %v5045 = vsel %vm5013, %v4853, %v4981
        %v5046 = vsel %vm5014, %v4854, %v4982
        %v5047 = vsel %vm5015, %v4855, %v4983
        %v5048 = vsel %vm5016, %v4856, %v4984
        %v5049 = vsel %vm5017, %v4857, %v4985
        %v5050 = vsel %vm5018, %v4858, %v4986
        %v5051 = vsel %vm5019, %v4859, %v4987
        %v5052 = vsel %vm5020, %v4860, %v4988
        %v5053 = vsel %vm5021, %v4861, %v4989
        %v5054 = vsel %vm5022, %v4862, %v4990
        %v5055 = vsel %vm5023, %v4863, %v4991
        %v5056 = vsel %vm5024, %v4864, %v4992
        %v5057 = vld [vmem:[#allocation6] sm:$0xf]
        %v5058 = vld [vmem:[#allocation6 + $0x4] sm:$0xf]
        %v5059 = vld [vmem:[#allocation6 + $0x8] sm:$0xf]
        %v5060 = vld [vmem:[#allocation6 + $0xc] sm:$0xf]
        %v5061 = vld [vmem:[#allocation6 + $0x10] sm:$0xf]
        %v5062 = vld [vmem:[#allocation6 + $0x14] sm:$0xf]
        %v5063 = vld [vmem:[#allocation6 + $0x18] sm:$0xf]
        %v5064 = vld [vmem:[#allocation6 + $0x1c] sm:$0xf]
        %v5065 = vld [vmem:[#allocation6 + $0x20] sm:$0xf]
        %v5066 = vld [vmem:[#allocation6 + $0x24] sm:$0xf]
        %v5067 = vld [vmem:[#allocation6 + $0x28] sm:$0xf]
        %v5068 = vld [vmem:[#allocation6 + $0x2c] sm:$0xf]
        %v5069 = vld [vmem:[#allocation6 + $0x30] sm:$0xf]
        %v5070 = vld [vmem:[#allocation6 + $0x34] sm:$0xf]
        %v5071 = vld [vmem:[#allocation6 + $0x38] sm:$0xf]
        %v5072 = vld [vmem:[#allocation6 + $0x3c] sm:$0xf]
        %v5073 = vld [vmem:[#allocation16] sm:$0x1]
        %v5075 = vperm.slane %v5073, 0
        %v5109 = vunpack.c.l.b16 %v5025
        %v5110 = vunpack.c.l.b16 %v5026
        %v5111 = vunpack.c.l.b16 %v5027
        %v5112 = vunpack.c.l.b16 %v5028
        %v5113 = vunpack.c.l.b16 %v5029
        %v5114 = vunpack.c.l.b16 %v5030
        %v5115 = vunpack.c.l.b16 %v5031
        %v5116 = vunpack.c.l.b16 %v5032
        %v5117 = vunpack.c.l.b16 %v5033
        %v5118 = vunpack.c.l.b16 %v5034
        %v5119 = vunpack.c.l.b16 %v5035
        %v5120 = vunpack.c.l.b16 %v5036
        %v5121 = vunpack.c.l.b16 %v5037
        %v5122 = vunpack.c.l.b16 %v5038
        %v5123 = vunpack.c.l.b16 %v5039
        %v5124 = vunpack.c.l.b16 %v5040
        %v5125 = vunpack.c.l.b16 %v5041
        %v5126 = vunpack.c.l.b16 %v5042
        %v5127 = vunpack.c.l.b16 %v5043
        %v5128 = vunpack.c.l.b16 %v5044
        %v5129 = vunpack.c.l.b16 %v5045
        %v5130 = vunpack.c.l.b16 %v5046
        %v5131 = vunpack.c.l.b16 %v5047
        %v5132 = vunpack.c.l.b16 %v5048
        %v5133 = vunpack.c.l.b16 %v5049
        %v5134 = vunpack.c.l.b16 %v5050
        %v5135 = vunpack.c.l.b16 %v5051
        %v5136 = vunpack.c.l.b16 %v5052
        %v5137 = vunpack.c.l.b16 %v5053
        %v5138 = vunpack.c.l.b16 %v5054
        %v5139 = vunpack.c.l.b16 %v5055
        %v5140 = vunpack.c.l.b16 %v5056
        %v5141 = vpack.c.b16 %v5110, %v5109
        %v5142 = vpack.c.b16 %v5112, %v5111
        %v5143 = vpack.c.b16 %v5114, %v5113
        %v5144 = vpack.c.b16 %v5116, %v5115
        %v5145 = vpack.c.b16 %v5118, %v5117
        %v5146 = vpack.c.b16 %v5120, %v5119
        %v5147 = vpack.c.b16 %v5122, %v5121
        %v5148 = vpack.c.b16 %v5124, %v5123
        %v5149 = vpack.c.b16 %v5126, %v5125
        %v5150 = vpack.c.b16 %v5128, %v5127
        %v5151 = vpack.c.b16 %v5130, %v5129
        %v5152 = vpack.c.b16 %v5132, %v5131
        %v5153 = vpack.c.b16 %v5134, %v5133
        %v5154 = vpack.c.b16 %v5136, %v5135
        %v5155 = vpack.c.b16 %v5138, %v5137
        %v5156 = vpack.c.b16 %v5140, %v5139
        %v5189 = vunpack.c.l.b16 %v5057
        %v5190 = vunpack.c.l.b16 %v5058
        %v5191 = vunpack.c.l.b16 %v5059
        %v5192 = vunpack.c.l.b16 %v5060
        %v5193 = vunpack.c.l.b16 %v5061
        %v5194 = vunpack.c.l.b16 %v5062
        %v5195 = vunpack.c.l.b16 %v5063
        %v5196 = vunpack.c.l.b16 %v5064
        %v5197 = vunpack.c.l.b16 %v5065
        %v5198 = vunpack.c.l.b16 %v5066
        %v5199 = vunpack.c.l.b16 %v5067
        %v5200 = vunpack.c.l.b16 %v5068
        %v5201 = vunpack.c.l.b16 %v5069
        %v5202 = vunpack.c.l.b16 %v5070
        %v5203 = vunpack.c.l.b16 %v5071
        %v5204 = vunpack.c.l.b16 %v5072
        %v5205 = vpack.c.b16 %v5190, %v5189
        %v5206 = vpack.c.b16 %v5192, %v5191
        %v5207 = vpack.c.b16 %v5194, %v5193
        %v5208 = vpack.c.b16 %v5196, %v5195
        %v5209 = vpack.c.b16 %v5198, %v5197
        %v5210 = vpack.c.b16 %v5200, %v5199
        %v5211 = vpack.c.b16 %v5202, %v5201
        %v5212 = vpack.c.b16 %v5204, %v5203
        %5221 = vmatpush.bf16.msra.mxu0 %v5212
        %5222 = vmatpush.bf16.msra.mxu0 %v5211
        %5223 = vmatpush.bf16.msra.mxu0 %v5210
        %5224 = vmatpush.bf16.msra.mxu0 %v5209
        %5225 = vmatpush.bf16.msra.mxu0 %v5208
        %5226 = vmatpush.bf16.msra.mxu0 %v5207
        %5227 = vmatpush.bf16.msra.mxu0 %v5206
        %5228 = vmatpush.bf16.msra.mxu0 %v5205
        %5229 = vmatmul.bf16.gmra.mxu0 %v5141
        %v5230 = vpop.f32.mrf.mxu0
        %v5231 = vadd.f32 %v5075, %v5230
        %v5232 = vpop.f32.mrf.mxu0
        %v5233 = vadd.f32 %v5075, %v5232
        %5234 = vmatmul.bf16.gmra.mxu0 %v5142
        %v5235 = vpop.f32.mrf.mxu0
        %v5236 = vadd.f32 %v5075, %v5235
        %v5237 = vpop.f32.mrf.mxu0
        %v5238 = vadd.f32 %v5075, %v5237
        %5239 = vmatmul.bf16.gmra.mxu0 %v5143
        %v5240 = vpop.f32.mrf.mxu0
        %v5241 = vadd.f32 %v5075, %v5240
        %v5242 = vpop.f32.mrf.mxu0
        %v5243 = vadd.f32 %v5075, %v5242
        %5244 = vmatmul.bf16.gmra.mxu0 %v5144
        %v5245 = vpop.f32.mrf.mxu0
        %v5246 = vadd.f32 %v5075, %v5245
        %v5247 = vpop.f32.mrf.mxu0
        %v5248 = vadd.f32 %v5075, %v5247
        %5249 = vmatmul.bf16.gmra.mxu0 %v5145
        %v5250 = vpop.f32.mrf.mxu0
        %v5251 = vadd.f32 %v5075, %v5250
        %v5252 = vpop.f32.mrf.mxu0
        %v5253 = vadd.f32 %v5075, %v5252
        %5254 = vmatmul.bf16.gmra.mxu0 %v5146
        %v5255 = vpop.f32.mrf.mxu0
        %v5256 = vadd.f32 %v5075, %v5255
        %v5257 = vpop.f32.mrf.mxu0
        %v5258 = vadd.f32 %v5075, %v5257
        %5259 = vmatmul.bf16.gmra.mxu0 %v5147
        %v5260 = vpop.f32.mrf.mxu0
        %v5261 = vadd.f32 %v5075, %v5260
        %v5262 = vpop.f32.mrf.mxu0
        %v5263 = vadd.f32 %v5075, %v5262
        %5264 = vmatmul.bf16.gmra.mxu0 %v5148
        %v5265 = vpop.f32.mrf.mxu0
        %v5266 = vadd.f32 %v5075, %v5265
        %v5267 = vpop.f32.mrf.mxu0
        %v5268 = vadd.f32 %v5075, %v5267
        %5269 = vmatmul.bf16.gmra.mxu0 %v5149
        %v5270 = vpop.f32.mrf.mxu0
        %v5271 = vadd.f32 %v5075, %v5270
        %v5272 = vpop.f32.mrf.mxu0
        %v5273 = vadd.f32 %v5075, %v5272
        %5274 = vmatmul.bf16.gmra.mxu0 %v5150
        %v5275 = vpop.f32.mrf.mxu0
        %v5276 = vadd.f32 %v5075, %v5275
        %v5277 = vpop.f32.mrf.mxu0
        %v5278 = vadd.f32 %v5075, %v5277
        %5279 = vmatmul.bf16.gmra.mxu0 %v5151
        %v5280 = vpop.f32.mrf.mxu0
        %v5281 = vadd.f32 %v5075, %v5280
        %v5282 = vpop.f32.mrf.mxu0
        %v5283 = vadd.f32 %v5075, %v5282
        %5284 = vmatmul.bf16.gmra.mxu0 %v5152
        %v5285 = vpop.f32.mrf.mxu0
        %v5286 = vadd.f32 %v5075, %v5285
        %v5287 = vpop.f32.mrf.mxu0
        %v5288 = vadd.f32 %v5075, %v5287
        %5289 = vmatmul.bf16.gmra.mxu0 %v5153
        %v5290 = vpop.f32.mrf.mxu0
        %v5291 = vadd.f32 %v5075, %v5290
        %v5292 = vpop.f32.mrf.mxu0
        %v5293 = vadd.f32 %v5075, %v5292
        %5294 = vmatmul.bf16.gmra.mxu0 %v5154
        %v5295 = vpop.f32.mrf.mxu0
        %v5296 = vadd.f32 %v5075, %v5295
        %v5297 = vpop.f32.mrf.mxu0
        %v5298 = vadd.f32 %v5075, %v5297
        %5299 = vmatmul.bf16.gmra.mxu0 %v5155
        %v5300 = vpop.f32.mrf.mxu0
        %v5301 = vadd.f32 %v5075, %v5300
        %v5302 = vpop.f32.mrf.mxu0
        %v5303 = vadd.f32 %v5075, %v5302
        %5304 = vmatmul.bf16.gmra.mxu0 %v5156
        %v5305 = vpop.f32.mrf.mxu0
        %v5306 = vadd.f32 %v5075, %v5305
        %v5307 = vpop.f32.mrf.mxu0
        %v5308 = vadd.f32 %v5075, %v5307
        %5309 = vdwg.mxu0
        %v5310 = vpack.c.bf16 %v5231, %v5231
        %v5311 = vpack.c.bf16 %v5233, %v5233
        %v5312 = vpack.c.bf16 %v5236, %v5236
        %v5313 = vpack.c.bf16 %v5238, %v5238
        %v5314 = vpack.c.bf16 %v5241, %v5241
        %v5315 = vpack.c.bf16 %v5243, %v5243
        %v5316 = vpack.c.bf16 %v5246, %v5246
        %v5317 = vpack.c.bf16 %v5248, %v5248
        %v5318 = vpack.c.bf16 %v5251, %v5251
        %v5319 = vpack.c.bf16 %v5253, %v5253
        %v5320 = vpack.c.bf16 %v5256, %v5256
        %v5321 = vpack.c.bf16 %v5258, %v5258
        %v5322 = vpack.c.bf16 %v5261, %v5261
        %v5323 = vpack.c.bf16 %v5263, %v5263
        %v5324 = vpack.c.bf16 %v5266, %v5266
        %v5325 = vpack.c.bf16 %v5268, %v5268
        %v5326 = vpack.c.bf16 %v5271, %v5271
        %v5327 = vpack.c.bf16 %v5273, %v5273
        %v5328 = vpack.c.bf16 %v5276, %v5276
        %v5329 = vpack.c.bf16 %v5278, %v5278
        %v5330 = vpack.c.bf16 %v5281, %v5281
        %v5331 = vpack.c.bf16 %v5283, %v5283
        %v5332 = vpack.c.bf16 %v5286, %v5286
        %v5333 = vpack.c.bf16 %v5288, %v5288
        %v5334 = vpack.c.bf16 %v5291, %v5291
        %v5335 = vpack.c.bf16 %v5293, %v5293
        %v5336 = vpack.c.bf16 %v5296, %v5296
        %v5337 = vpack.c.bf16 %v5298, %v5298
        %v5338 = vpack.c.bf16 %v5301, %v5301
        %v5339 = vpack.c.bf16 %v5303, %v5303
        %v5340 = vpack.c.bf16 %v5306, %v5306
        %v5341 = vpack.c.bf16 %v5308, %v5308
        %v5342 = vunpack.c.l.bf16 %v5310
        %v5343 = vunpack.c.l.bf16 %v5311
        %v5344 = vunpack.c.l.bf16 %v5312
        %v5345 = vunpack.c.l.bf16 %v5313
        %v5346 = vunpack.c.l.bf16 %v5314
        %v5347 = vunpack.c.l.bf16 %v5315
        %v5348 = vunpack.c.l.bf16 %v5316
        %v5349 = vunpack.c.l.bf16 %v5317
        %v5350 = vunpack.c.l.bf16 %v5318
        %v5351 = vunpack.c.l.bf16 %v5319
        %v5352 = vunpack.c.l.bf16 %v5320
        %v5353 = vunpack.c.l.bf16 %v5321
        %v5354 = vunpack.c.l.bf16 %v5322
        %v5355 = vunpack.c.l.bf16 %v5323
        %v5356 = vunpack.c.l.bf16 %v5324
        %v5357 = vunpack.c.l.bf16 %v5325
        %v5358 = vunpack.c.l.bf16 %v5326
        %v5359 = vunpack.c.l.bf16 %v5327
        %v5360 = vunpack.c.l.bf16 %v5328
        %v5361 = vunpack.c.l.bf16 %v5329
        %v5362 = vunpack.c.l.bf16 %v5330
        %v5363 = vunpack.c.l.bf16 %v5331
        %v5364 = vunpack.c.l.bf16 %v5332
        %v5365 = vunpack.c.l.bf16 %v5333
        %v5366 = vunpack.c.l.bf16 %v5334
        %v5367 = vunpack.c.l.bf16 %v5335
        %v5368 = vunpack.c.l.bf16 %v5336
        %v5369 = vunpack.c.l.bf16 %v5337
        %v5370 = vunpack.c.l.bf16 %v5338
        %v5371 = vunpack.c.l.bf16 %v5339
        %v5372 = vunpack.c.l.bf16 %v5340
        %v5373 = vunpack.c.l.bf16 %v5341
        %vm5374 = vcmp.gt.f32.partialorder %v5342, 0.0
        %vm5375 = vcmp.gt.f32.partialorder %v5343, 0.0
        %vm5376 = vcmp.gt.f32.partialorder %v5344, 0.0
        %vm5377 = vcmp.gt.f32.partialorder %v5345, 0.0
        %vm5378 = vcmp.gt.f32.partialorder %v5346, 0.0
        %vm5379 = vcmp.gt.f32.partialorder %v5347, 0.0
        %vm5380 = vcmp.gt.f32.partialorder %v5348, 0.0
        %vm5381 = vcmp.gt.f32.partialorder %v5349, 0.0
        %vm5382 = vcmp.gt.f32.partialorder %v5350, 0.0
        %vm5383 = vcmp.gt.f32.partialorder %v5351, 0.0
        %vm5384 = vcmp.gt.f32.partialorder %v5352, 0.0
        %vm5385 = vcmp.gt.f32.partialorder %v5353, 0.0
        %vm5386 = vcmp.gt.f32.partialorder %v5354, 0.0
        %vm5387 = vcmp.gt.f32.partialorder %v5355, 0.0
        %vm5388 = vcmp.gt.f32.partialorder %v5356, 0.0
        %vm5389 = vcmp.gt.f32.partialorder %v5357, 0.0
        %vm5390 = vcmp.gt.f32.partialorder %v5358, 0.0
        %vm5391 = vcmp.gt.f32.partialorder %v5359, 0.0
        %vm5392 = vcmp.gt.f32.partialorder %v5360, 0.0
        %vm5393 = vcmp.gt.f32.partialorder %v5361, 0.0
        %vm5394 = vcmp.gt.f32.partialorder %v5362, 0.0
        %vm5395 = vcmp.gt.f32.partialorder %v5363, 0.0
        %vm5396 = vcmp.gt.f32.partialorder %v5364, 0.0
        %vm5397 = vcmp.gt.f32.partialorder %v5365, 0.0
        %vm5398 = vcmp.gt.f32.partialorder %v5366, 0.0
        %vm5399 = vcmp.gt.f32.partialorder %v5367, 0.0
        %vm5400 = vcmp.gt.f32.partialorder %v5368, 0.0
        %vm5401 = vcmp.gt.f32.partialorder %v5369, 0.0
        %vm5402 = vcmp.gt.f32.partialorder %v5370, 0.0
        %vm5403 = vcmp.gt.f32.partialorder %v5371, 0.0
        %vm5404 = vcmp.gt.f32.partialorder %v5372, 0.0
        %vm5405 = vcmp.gt.f32.partialorder %v5373, 0.0
        %v5406 = vmul.f32 %v5342, 0.010009766
        %v5407 = vmul.f32 %v5343, 0.010009766
        %v5408 = vmul.f32 %v5344, 0.010009766
        %v5409 = vmul.f32 %v5345, 0.010009766
        %v5410 = vmul.f32 %v5346, 0.010009766
        %v5411 = vmul.f32 %v5347, 0.010009766
        %v5412 = vmul.f32 %v5348, 0.010009766
        %v5413 = vmul.f32 %v5349, 0.010009766
        %v5414 = vmul.f32 %v5350, 0.010009766
        %v5415 = vmul.f32 %v5351, 0.010009766
        %v5416 = vmul.f32 %v5352, 0.010009766
        %v5417 = vmul.f32 %v5353, 0.010009766
        %v5418 = vmul.f32 %v5354, 0.010009766
        %v5419 = vmul.f32 %v5355, 0.010009766
        %v5420 = vmul.f32 %v5356, 0.010009766
        %v5421 = vmul.f32 %v5357, 0.010009766
        %v5422 = vmul.f32 %v5358, 0.010009766
        %v5423 = vmul.f32 %v5359, 0.010009766
        %v5424 = vmul.f32 %v5360, 0.010009766
        %v5425 = vmul.f32 %v5361, 0.010009766
        %v5426 = vmul.f32 %v5362, 0.010009766
        %v5427 = vmul.f32 %v5363, 0.010009766
        %v5428 = vmul.f32 %v5364, 0.010009766
        %v5429 = vmul.f32 %v5365, 0.010009766
        %v5430 = vmul.f32 %v5366, 0.010009766
        %v5431 = vmul.f32 %v5367, 0.010009766
        %v5432 = vmul.f32 %v5368, 0.010009766
        %v5433 = vmul.f32 %v5369, 0.010009766
        %v5434 = vmul.f32 %v5370, 0.010009766
        %v5435 = vmul.f32 %v5371, 0.010009766
        %v5436 = vmul.f32 %v5372, 0.010009766
        %v5437 = vmul.f32 %v5373, 0.010009766
        %v5438 = vpack.c.bf16 %v5406, %v5406
        %v5439 = vpack.c.bf16 %v5407, %v5407
        %v5440 = vpack.c.bf16 %v5408, %v5408
        %v5441 = vpack.c.bf16 %v5409, %v5409
        %v5442 = vpack.c.bf16 %v5410, %v5410
        %v5443 = vpack.c.bf16 %v5411, %v5411
        %v5444 = vpack.c.bf16 %v5412, %v5412
        %v5445 = vpack.c.bf16 %v5413, %v5413
        %v5446 = vpack.c.bf16 %v5414, %v5414
        %v5447 = vpack.c.bf16 %v5415, %v5415
        %v5448 = vpack.c.bf16 %v5416, %v5416
        %v5449 = vpack.c.bf16 %v5417, %v5417
        %v5450 = vpack.c.bf16 %v5418, %v5418
        %v5451 = vpack.c.bf16 %v5419, %v5419
        %v5452 = vpack.c.bf16 %v5420, %v5420
        %v5453 = vpack.c.bf16 %v5421, %v5421
        %v5454 = vpack.c.bf16 %v5422, %v5422
        %v5455 = vpack.c.bf16 %v5423, %v5423
        %v5456 = vpack.c.bf16 %v5424, %v5424
        %v5457 = vpack.c.bf16 %v5425, %v5425
        %v5458 = vpack.c.bf16 %v5426, %v5426
        %v5459 = vpack.c.bf16 %v5427, %v5427
        %v5460 = vpack.c.bf16 %v5428, %v5428
        %v5461 = vpack.c.bf16 %v5429, %v5429
        %v5462 = vpack.c.bf16 %v5430, %v5430
        %v5463 = vpack.c.bf16 %v5431, %v5431
        %v5464 = vpack.c.bf16 %v5432, %v5432
        %v5465 = vpack.c.bf16 %v5433, %v5433
        %v5466 = vpack.c.bf16 %v5434, %v5434
        %v5467 = vpack.c.bf16 %v5435, %v5435
        %v5468 = vpack.c.bf16 %v5436, %v5436
        %v5469 = vpack.c.bf16 %v5437, %v5437
        %vm5470 = vmpackc.low %vm5374, %vm5374
        %vm5471 = vmpackc.low %vm5375, %vm5375
        %vm5472 = vmpackc.low %vm5376, %vm5376
        %vm5473 = vmpackc.low %vm5377, %vm5377
        %vm5474 = vmpackc.low %vm5378, %vm5378
        %vm5475 = vmpackc.low %vm5379, %vm5379
        %vm5476 = vmpackc.low %vm5380, %vm5380
        %vm5477 = vmpackc.low %vm5381, %vm5381
        %vm5478 = vmpackc.low %vm5382, %vm5382
        %vm5479 = vmpackc.low %vm5383, %vm5383
        %vm5480 = vmpackc.low %vm5384, %vm5384
        %vm5481 = vmpackc.low %vm5385, %vm5385
        %vm5482 = vmpackc.low %vm5386, %vm5386
        %vm5483 = vmpackc.low %vm5387, %vm5387
        %vm5484 = vmpackc.low %vm5388, %vm5388
        %vm5485 = vmpackc.low %vm5389, %vm5389
        %vm5486 = vmpackc.low %vm5390, %vm5390
        %vm5487 = vmpackc.low %vm5391, %vm5391
        %vm5488 = vmpackc.low %vm5392, %vm5392
        %vm5489 = vmpackc.low %vm5393, %vm5393
        %vm5490 = vmpackc.low %vm5394, %vm5394
        %vm5491 = vmpackc.low %vm5395, %vm5395
        %vm5492 = vmpackc.low %vm5396, %vm5396
        %vm5493 = vmpackc.low %vm5397, %vm5397
        %vm5494 = vmpackc.low %vm5398, %vm5398
        %vm5495 = vmpackc.low %vm5399, %vm5399
        %vm5496 = vmpackc.low %vm5400, %vm5400
        %vm5497 = vmpackc.low %vm5401, %vm5401
        %vm5498 = vmpackc.low %vm5402, %vm5402
        %vm5499 = vmpackc.low %vm5403, %vm5403
        %vm5500 = vmpackc.low %vm5404, %vm5404
        %vm5501 = vmpackc.low %vm5405, %vm5405
        %v5502 = vsel %vm5470, %v5310, %v5438
        %v5503 = vsel %vm5471, %v5311, %v5439
        %v5504 = vsel %vm5472, %v5312, %v5440
        %v5505 = vsel %vm5473, %v5313, %v5441
        %v5506 = vsel %vm5474, %v5314, %v5442
        %v5507 = vsel %vm5475, %v5315, %v5443
        %v5508 = vsel %vm5476, %v5316, %v5444
        %v5509 = vsel %vm5477, %v5317, %v5445
        %v5510 = vsel %vm5478, %v5318, %v5446
        %v5511 = vsel %vm5479, %v5319, %v5447
        %v5512 = vsel %vm5480, %v5320, %v5448
        %v5513 = vsel %vm5481, %v5321, %v5449
        %v5514 = vsel %vm5482, %v5322, %v5450
        %v5515 = vsel %vm5483, %v5323, %v5451
        %v5516 = vsel %vm5484, %v5324, %v5452
        %v5517 = vsel %vm5485, %v5325, %v5453
        %v5518 = vsel %vm5486, %v5326, %v5454
        %v5519 = vsel %vm5487, %v5327, %v5455
        %v5520 = vsel %vm5488, %v5328, %v5456
        %v5521 = vsel %vm5489, %v5329, %v5457
        %v5522 = vsel %vm5490, %v5330, %v5458
        %v5523 = vsel %vm5491, %v5331, %v5459
        %v5524 = vsel %vm5492, %v5332, %v5460
        %v5525 = vsel %vm5493, %v5333, %v5461
        %v5526 = vsel %vm5494, %v5334, %v5462
        %v5527 = vsel %vm5495, %v5335, %v5463
        %v5528 = vsel %vm5496, %v5336, %v5464
        %v5529 = vsel %vm5497, %v5337, %v5465
        %v5530 = vsel %vm5498, %v5338, %v5466
        %v5531 = vsel %vm5499, %v5339, %v5467
        %v5532 = vsel %vm5500, %v5340, %v5468
        %v5533 = vsel %vm5501, %v5341, %v5469
        %v5534 = vld [vmem:[#allocation7] sm:$0xf]
        %v5535 = vld [vmem:[#allocation7 + $0x4] sm:$0xf]
        %v5536 = vld [vmem:[#allocation7 + $0x8] sm:$0xf]
        %v5537 = vld [vmem:[#allocation7 + $0xc] sm:$0xf]
        %v5538 = vld [vmem:[#allocation7 + $0x10] sm:$0xf]
        %v5539 = vld [vmem:[#allocation7 + $0x14] sm:$0xf]
        %v5540 = vld [vmem:[#allocation7 + $0x18] sm:$0xf]
        %v5541 = vld [vmem:[#allocation7 + $0x1c] sm:$0xf]
        %v5542 = vld [vmem:[#allocation7 + $0x20] sm:$0xf]
        %v5543 = vld [vmem:[#allocation7 + $0x24] sm:$0xf]
        %v5544 = vld [vmem:[#allocation7 + $0x28] sm:$0xf]
        %v5545 = vld [vmem:[#allocation7 + $0x2c] sm:$0xf]
        %v5546 = vld [vmem:[#allocation7 + $0x30] sm:$0xf]
        %v5547 = vld [vmem:[#allocation7 + $0x34] sm:$0xf]
        %v5548 = vld [vmem:[#allocation7 + $0x38] sm:$0xf]
        %v5549 = vld [vmem:[#allocation7 + $0x3c] sm:$0xf]
        %v5550 = vld [vmem:[%s16] sm:$0x1]
        %v5552 = vperm.slane %v5550, 0
        %v5586 = vunpack.c.l.b16 %v5502
        %v5587 = vunpack.c.l.b16 %v5503
        %v5588 = vunpack.c.l.b16 %v5504
        %v5589 = vunpack.c.l.b16 %v5505
        %v5590 = vunpack.c.l.b16 %v5506
        %v5591 = vunpack.c.l.b16 %v5507
        %v5592 = vunpack.c.l.b16 %v5508
        %v5593 = vunpack.c.l.b16 %v5509
        %v5594 = vunpack.c.l.b16 %v5510
        %v5595 = vunpack.c.l.b16 %v5511
        %v5596 = vunpack.c.l.b16 %v5512
        %v5597 = vunpack.c.l.b16 %v5513
        %v5598 = vunpack.c.l.b16 %v5514
        %v5599 = vunpack.c.l.b16 %v5515
        %v5600 = vunpack.c.l.b16 %v5516
        %v5601 = vunpack.c.l.b16 %v5517
        %v5602 = vunpack.c.l.b16 %v5518
        %v5603 = vunpack.c.l.b16 %v5519
        %v5604 = vunpack.c.l.b16 %v5520
        %v5605 = vunpack.c.l.b16 %v5521
        %v5606 = vunpack.c.l.b16 %v5522
        %v5607 = vunpack.c.l.b16 %v5523
        %v5608 = vunpack.c.l.b16 %v5524
        %v5609 = vunpack.c.l.b16 %v5525
        %v5610 = vunpack.c.l.b16 %v5526
        %v5611 = vunpack.c.l.b16 %v5527
        %v5612 = vunpack.c.l.b16 %v5528
        %v5613 = vunpack.c.l.b16 %v5529
        %v5614 = vunpack.c.l.b16 %v5530
        %v5615 = vunpack.c.l.b16 %v5531
        %v5616 = vunpack.c.l.b16 %v5532
        %v5617 = vunpack.c.l.b16 %v5533
        %v5618 = vpack.c.b16 %v5587, %v5586
        %v5619 = vpack.c.b16 %v5589, %v5588
        %v5620 = vpack.c.b16 %v5591, %v5590
        %v5621 = vpack.c.b16 %v5593, %v5592
        %v5622 = vpack.c.b16 %v5595, %v5594
        %v5623 = vpack.c.b16 %v5597, %v5596
        %v5624 = vpack.c.b16 %v5599, %v5598
        %v5625 = vpack.c.b16 %v5601, %v5600
        %v5626 = vpack.c.b16 %v5603, %v5602
        %v5627 = vpack.c.b16 %v5605, %v5604
        %v5628 = vpack.c.b16 %v5607, %v5606
        %v5629 = vpack.c.b16 %v5609, %v5608
        %v5630 = vpack.c.b16 %v5611, %v5610
        %v5631 = vpack.c.b16 %v5613, %v5612
        %v5632 = vpack.c.b16 %v5615, %v5614
        %v5633 = vpack.c.b16 %v5617, %v5616
        %v5666 = vunpack.c.l.b16 %v5534
        %v5667 = vunpack.c.l.b16 %v5535
        %v5668 = vunpack.c.l.b16 %v5536
        %v5669 = vunpack.c.l.b16 %v5537
        %v5670 = vunpack.c.l.b16 %v5538
        %v5671 = vunpack.c.l.b16 %v5539
        %v5672 = vunpack.c.l.b16 %v5540
        %v5673 = vunpack.c.l.b16 %v5541
        %v5674 = vunpack.c.l.b16 %v5542
        %v5675 = vunpack.c.l.b16 %v5543
        %v5676 = vunpack.c.l.b16 %v5544
        %v5677 = vunpack.c.l.b16 %v5545
        %v5678 = vunpack.c.l.b16 %v5546
        %v5679 = vunpack.c.l.b16 %v5547
        %v5680 = vunpack.c.l.b16 %v5548
        %v5681 = vunpack.c.l.b16 %v5549
        %v5682 = vpack.c.b16 %v5667, %v5666
        %v5683 = vpack.c.b16 %v5669, %v5668
        %v5684 = vpack.c.b16 %v5671, %v5670
        %v5685 = vpack.c.b16 %v5673, %v5672
        %v5686 = vpack.c.b16 %v5675, %v5674
        %v5687 = vpack.c.b16 %v5677, %v5676
        %v5688 = vpack.c.b16 %v5679, %v5678
        %v5689 = vpack.c.b16 %v5681, %v5680
        %5698 = vmatpush.bf16.msra.mxu0 %v5689
        %5699 = vmatpush.bf16.msra.mxu0 %v5688
        %5700 = vmatpush.bf16.msra.mxu0 %v5687
        %5701 = vmatpush.bf16.msra.mxu0 %v5686
        %5702 = vmatpush.bf16.msra.mxu0 %v5685
        %5703 = vmatpush.bf16.msra.mxu0 %v5684
        %5704 = vmatpush.bf16.msra.mxu0 %v5683
        %5705 = vmatpush.bf16.msra.mxu0 %v5682
        %5706 = vmatmul.bf16.gmra.mxu0 %v5618
        %v5707 = vpop.f32.mrf.mxu0
        %v5708 = vadd.f32 %v5552, %v5707
        %v5709 = vpop.f32.mrf.mxu0
        %v5710 = vadd.f32 %v5552, %v5709
        %5711 = vmatmul.bf16.gmra.mxu0 %v5619
        %v5712 = vpop.f32.mrf.mxu0
        %v5713 = vadd.f32 %v5552, %v5712
        %v5714 = vpop.f32.mrf.mxu0
        %v5715 = vadd.f32 %v5552, %v5714
        %5716 = vmatmul.bf16.gmra.mxu0 %v5620
        %v5717 = vpop.f32.mrf.mxu0
        %v5718 = vadd.f32 %v5552, %v5717
        %v5719 = vpop.f32.mrf.mxu0
        %v5720 = vadd.f32 %v5552, %v5719
        %5721 = vmatmul.bf16.gmra.mxu0 %v5621
        %v5722 = vpop.f32.mrf.mxu0
        %v5723 = vadd.f32 %v5552, %v5722
        %v5724 = vpop.f32.mrf.mxu0
        %v5725 = vadd.f32 %v5552, %v5724
        %5726 = vmatmul.bf16.gmra.mxu0 %v5622
        %v5727 = vpop.f32.mrf.mxu0
        %v5728 = vadd.f32 %v5552, %v5727
        %v5729 = vpop.f32.mrf.mxu0
        %v5730 = vadd.f32 %v5552, %v5729
        %5731 = vmatmul.bf16.gmra.mxu0 %v5623
        %v5732 = vpop.f32.mrf.mxu0
        %v5733 = vadd.f32 %v5552, %v5732
        %v5734 = vpop.f32.mrf.mxu0
        %v5735 = vadd.f32 %v5552, %v5734
        %5736 = vmatmul.bf16.gmra.mxu0 %v5624
        %v5737 = vpop.f32.mrf.mxu0
        %v5738 = vadd.f32 %v5552, %v5737
        %v5739 = vpop.f32.mrf.mxu0
        %v5740 = vadd.f32 %v5552, %v5739
        %5741 = vmatmul.bf16.gmra.mxu0 %v5625
        %v5742 = vpop.f32.mrf.mxu0
        %v5743 = vadd.f32 %v5552, %v5742
        %v5744 = vpop.f32.mrf.mxu0
        %v5745 = vadd.f32 %v5552, %v5744
        %5746 = vmatmul.bf16.gmra.mxu0 %v5626
        %v5747 = vpop.f32.mrf.mxu0
        %v5748 = vadd.f32 %v5552, %v5747
        %v5749 = vpop.f32.mrf.mxu0
        %v5750 = vadd.f32 %v5552, %v5749
        %5751 = vmatmul.bf16.gmra.mxu0 %v5627
        %v5752 = vpop.f32.mrf.mxu0
        %v5753 = vadd.f32 %v5552, %v5752
        %v5754 = vpop.f32.mrf.mxu0
        %v5755 = vadd.f32 %v5552, %v5754
        %5756 = vmatmul.bf16.gmra.mxu0 %v5628
        %v5757 = vpop.f32.mrf.mxu0
        %v5758 = vadd.f32 %v5552, %v5757
        %v5759 = vpop.f32.mrf.mxu0
        %v5760 = vadd.f32 %v5552, %v5759
        %5761 = vmatmul.bf16.gmra.mxu0 %v5629
        %v5762 = vpop.f32.mrf.mxu0
        %v5763 = vadd.f32 %v5552, %v5762
        %v5764 = vpop.f32.mrf.mxu0
        %v5765 = vadd.f32 %v5552, %v5764
        %5766 = vmatmul.bf16.gmra.mxu0 %v5630
        %v5767 = vpop.f32.mrf.mxu0
        %v5768 = vadd.f32 %v5552, %v5767
        %v5769 = vpop.f32.mrf.mxu0
        %v5770 = vadd.f32 %v5552, %v5769
        %5771 = vmatmul.bf16.gmra.mxu0 %v5631
        %v5772 = vpop.f32.mrf.mxu0
        %v5773 = vadd.f32 %v5552, %v5772
        %v5774 = vpop.f32.mrf.mxu0
        %v5775 = vadd.f32 %v5552, %v5774
        %5776 = vmatmul.bf16.gmra.mxu0 %v5632
        %v5777 = vpop.f32.mrf.mxu0
        %v5778 = vadd.f32 %v5552, %v5777
        %v5779 = vpop.f32.mrf.mxu0
        %v5780 = vadd.f32 %v5552, %v5779
        %5781 = vmatmul.bf16.gmra.mxu0 %v5633
        %v5782 = vpop.f32.mrf.mxu0
        %v5783 = vadd.f32 %v5552, %v5782
        %v5784 = vpop.f32.mrf.mxu0
        %v5785 = vadd.f32 %v5552, %v5784
        %5786 = vdwg.mxu0
        %v5787 = vpack.c.bf16 %v5708, %v5708
        %v5788 = vpack.c.bf16 %v5710, %v5710
        %v5789 = vpack.c.bf16 %v5713, %v5713
        %v5790 = vpack.c.bf16 %v5715, %v5715
        %v5791 = vpack.c.bf16 %v5718, %v5718
        %v5792 = vpack.c.bf16 %v5720, %v5720
        %v5793 = vpack.c.bf16 %v5723, %v5723
        %v5794 = vpack.c.bf16 %v5725, %v5725
        %v5795 = vpack.c.bf16 %v5728, %v5728
        %v5796 = vpack.c.bf16 %v5730, %v5730
        %v5797 = vpack.c.bf16 %v5733, %v5733
        %v5798 = vpack.c.bf16 %v5735, %v5735
        %v5799 = vpack.c.bf16 %v5738, %v5738
        %v5800 = vpack.c.bf16 %v5740, %v5740
        %v5801 = vpack.c.bf16 %v5743, %v5743
        %v5802 = vpack.c.bf16 %v5745, %v5745
        %v5803 = vpack.c.bf16 %v5748, %v5748
        %v5804 = vpack.c.bf16 %v5750, %v5750
        %v5805 = vpack.c.bf16 %v5753, %v5753
        %v5806 = vpack.c.bf16 %v5755, %v5755
        %v5807 = vpack.c.bf16 %v5758, %v5758
        %v5808 = vpack.c.bf16 %v5760, %v5760
        %v5809 = vpack.c.bf16 %v5763, %v5763
        %v5810 = vpack.c.bf16 %v5765, %v5765
        %v5811 = vpack.c.bf16 %v5768, %v5768
        %v5812 = vpack.c.bf16 %v5770, %v5770
        %v5813 = vpack.c.bf16 %v5773, %v5773
        %v5814 = vpack.c.bf16 %v5775, %v5775
        %v5815 = vpack.c.bf16 %v5778, %v5778
        %v5816 = vpack.c.bf16 %v5780, %v5780
        %v5817 = vpack.c.bf16 %v5783, %v5783
        %v5818 = vpack.c.bf16 %v5785, %v5785
        %v5819 = vunpack.c.l.bf16 %v5787
        %v5820 = vunpack.c.l.bf16 %v5788
        %v5821 = vunpack.c.l.bf16 %v5789
        %v5822 = vunpack.c.l.bf16 %v5790
        %v5823 = vunpack.c.l.bf16 %v5791
        %v5824 = vunpack.c.l.bf16 %v5792
        %v5825 = vunpack.c.l.bf16 %v5793
        %v5826 = vunpack.c.l.bf16 %v5794
        %v5827 = vunpack.c.l.bf16 %v5795
        %v5828 = vunpack.c.l.bf16 %v5796
        %v5829 = vunpack.c.l.bf16 %v5797
        %v5830 = vunpack.c.l.bf16 %v5798
        %v5831 = vunpack.c.l.bf16 %v5799
        %v5832 = vunpack.c.l.bf16 %v5800
        %v5833 = vunpack.c.l.bf16 %v5801
        %v5834 = vunpack.c.l.bf16 %v5802
        %v5835 = vunpack.c.l.bf16 %v5803
        %v5836 = vunpack.c.l.bf16 %v5804
        %v5837 = vunpack.c.l.bf16 %v5805
        %v5838 = vunpack.c.l.bf16 %v5806
        %v5839 = vunpack.c.l.bf16 %v5807
        %v5840 = vunpack.c.l.bf16 %v5808
        %v5841 = vunpack.c.l.bf16 %v5809
        %v5842 = vunpack.c.l.bf16 %v5810
        %v5843 = vunpack.c.l.bf16 %v5811
        %v5844 = vunpack.c.l.bf16 %v5812
        %v5845 = vunpack.c.l.bf16 %v5813
        %v5846 = vunpack.c.l.bf16 %v5814
        %v5847 = vunpack.c.l.bf16 %v5815
        %v5848 = vunpack.c.l.bf16 %v5816
        %v5849 = vunpack.c.l.bf16 %v5817
        %v5850 = vunpack.c.l.bf16 %v5818
        %vm5851 = vcmp.gt.f32.partialorder %v5819, 0.0
        %vm5852 = vcmp.gt.f32.partialorder %v5820, 0.0
        %vm5853 = vcmp.gt.f32.partialorder %v5821, 0.0
        %vm5854 = vcmp.gt.f32.partialorder %v5822, 0.0
        %vm5855 = vcmp.gt.f32.partialorder %v5823, 0.0
        %vm5856 = vcmp.gt.f32.partialorder %v5824, 0.0
        %vm5857 = vcmp.gt.f32.partialorder %v5825, 0.0
        %vm5858 = vcmp.gt.f32.partialorder %v5826, 0.0
        %vm5859 = vcmp.gt.f32.partialorder %v5827, 0.0
        %vm5860 = vcmp.gt.f32.partialorder %v5828, 0.0
        %vm5861 = vcmp.gt.f32.partialorder %v5829, 0.0
        %vm5862 = vcmp.gt.f32.partialorder %v5830, 0.0
        %vm5863 = vcmp.gt.f32.partialorder %v5831, 0.0
        %vm5864 = vcmp.gt.f32.partialorder %v5832, 0.0
        %vm5865 = vcmp.gt.f32.partialorder %v5833, 0.0
        %vm5866 = vcmp.gt.f32.partialorder %v5834, 0.0
        %vm5867 = vcmp.gt.f32.partialorder %v5835, 0.0
        %vm5868 = vcmp.gt.f32.partialorder %v5836, 0.0
        %vm5869 = vcmp.gt.f32.partialorder %v5837, 0.0
        %vm5870 = vcmp.gt.f32.partialorder %v5838, 0.0
        %vm5871 = vcmp.gt.f32.partialorder %v5839, 0.0
        %vm5872 = vcmp.gt.f32.partialorder %v5840, 0.0
        %vm5873 = vcmp.gt.f32.partialorder %v5841, 0.0
        %vm5874 = vcmp.gt.f32.partialorder %v5842, 0.0
        %vm5875 = vcmp.gt.f32.partialorder %v5843, 0.0
        %vm5876 = vcmp.gt.f32.partialorder %v5844, 0.0
        %vm5877 = vcmp.gt.f32.partialorder %v5845, 0.0
        %vm5878 = vcmp.gt.f32.partialorder %v5846, 0.0
        %vm5879 = vcmp.gt.f32.partialorder %v5847, 0.0
        %vm5880 = vcmp.gt.f32.partialorder %v5848, 0.0
        %vm5881 = vcmp.gt.f32.partialorder %v5849, 0.0
        %vm5882 = vcmp.gt.f32.partialorder %v5850, 0.0
        %v5883 = vmul.f32 %v5819, 0.010009766
        %v5884 = vmul.f32 %v5820, 0.010009766
        %v5885 = vmul.f32 %v5821, 0.010009766
        %v5886 = vmul.f32 %v5822, 0.010009766
        %v5887 = vmul.f32 %v5823, 0.010009766
        %v5888 = vmul.f32 %v5824, 0.010009766
        %v5889 = vmul.f32 %v5825, 0.010009766
        %v5890 = vmul.f32 %v5826, 0.010009766
        %v5891 = vmul.f32 %v5827, 0.010009766
        %v5892 = vmul.f32 %v5828, 0.010009766
        %v5893 = vmul.f32 %v5829, 0.010009766
        %v5894 = vmul.f32 %v5830, 0.010009766
        %v5895 = vmul.f32 %v5831, 0.010009766
        %v5896 = vmul.f32 %v5832, 0.010009766
        %v5897 = vmul.f32 %v5833, 0.010009766
        %v5898 = vmul.f32 %v5834, 0.010009766
        %v5899 = vmul.f32 %v5835, 0.010009766
        %v5900 = vmul.f32 %v5836, 0.010009766
        %v5901 = vmul.f32 %v5837, 0.010009766
        %v5902 = vmul.f32 %v5838, 0.010009766
        %v5903 = vmul.f32 %v5839, 0.010009766
        %v5904 = vmul.f32 %v5840, 0.010009766
        %v5905 = vmul.f32 %v5841, 0.010009766
        %v5906 = vmul.f32 %v5842, 0.010009766
        %v5907 = vmul.f32 %v5843, 0.010009766
        %v5908 = vmul.f32 %v5844, 0.010009766
        %v5909 = vmul.f32 %v5845, 0.010009766
        %v5910 = vmul.f32 %v5846, 0.010009766
        %v5911 = vmul.f32 %v5847, 0.010009766
        %v5912 = vmul.f32 %v5848, 0.010009766
        %v5913 = vmul.f32 %v5849, 0.010009766
        %v5914 = vmul.f32 %v5850, 0.010009766
        %v5915 = vpack.c.bf16 %v5883, %v5883
        %v5916 = vpack.c.bf16 %v5884, %v5884
        %v5917 = vpack.c.bf16 %v5885, %v5885
        %v5918 = vpack.c.bf16 %v5886, %v5886
        %v5919 = vpack.c.bf16 %v5887, %v5887
        %v5920 = vpack.c.bf16 %v5888, %v5888
        %v5921 = vpack.c.bf16 %v5889, %v5889
        %v5922 = vpack.c.bf16 %v5890, %v5890
        %v5923 = vpack.c.bf16 %v5891, %v5891
        %v5924 = vpack.c.bf16 %v5892, %v5892
        %v5925 = vpack.c.bf16 %v5893, %v5893
        %v5926 = vpack.c.bf16 %v5894, %v5894
        %v5927 = vpack.c.bf16 %v5895, %v5895
        %v5928 = vpack.c.bf16 %v5896, %v5896
        %v5929 = vpack.c.bf16 %v5897, %v5897
        %v5930 = vpack.c.bf16 %v5898, %v5898
        %v5931 = vpack.c.bf16 %v5899, %v5899
        %v5932 = vpack.c.bf16 %v5900, %v5900
        %v5933 = vpack.c.bf16 %v5901, %v5901
        %v5934 = vpack.c.bf16 %v5902, %v5902
        %v5935 = vpack.c.bf16 %v5903, %v5903
        %v5936 = vpack.c.bf16 %v5904, %v5904
        %v5937 = vpack.c.bf16 %v5905, %v5905
        %v5938 = vpack.c.bf16 %v5906, %v5906
        %v5939 = vpack.c.bf16 %v5907, %v5907
        %v5940 = vpack.c.bf16 %v5908, %v5908
        %v5941 = vpack.c.bf16 %v5909, %v5909
        %v5942 = vpack.c.bf16 %v5910, %v5910
        %v5943 = vpack.c.bf16 %v5911, %v5911
        %v5944 = vpack.c.bf16 %v5912, %v5912
        %v5945 = vpack.c.bf16 %v5913, %v5913
        %v5946 = vpack.c.bf16 %v5914, %v5914
        %vm5947 = vmpackc.low %vm5851, %vm5851
        %vm5948 = vmpackc.low %vm5852, %vm5852
        %vm5949 = vmpackc.low %vm5853, %vm5853
        %vm5950 = vmpackc.low %vm5854, %vm5854
        %vm5951 = vmpackc.low %vm5855, %vm5855
        %vm5952 = vmpackc.low %vm5856, %vm5856
        %vm5953 = vmpackc.low %vm5857, %vm5857
        %vm5954 = vmpackc.low %vm5858, %vm5858
        %vm5955 = vmpackc.low %vm5859, %vm5859
        %vm5956 = vmpackc.low %vm5860, %vm5860
        %vm5957 = vmpackc.low %vm5861, %vm5861
        %vm5958 = vmpackc.low %vm5862, %vm5862
        %vm5959 = vmpackc.low %vm5863, %vm5863
        %vm5960 = vmpackc.low %vm5864, %vm5864
        %vm5961 = vmpackc.low %vm5865, %vm5865
        %vm5962 = vmpackc.low %vm5866, %vm5866
        %vm5963 = vmpackc.low %vm5867, %vm5867
        %vm5964 = vmpackc.low %vm5868, %vm5868
        %vm5965 = vmpackc.low %vm5869, %vm5869
        %vm5966 = vmpackc.low %vm5870, %vm5870
        %vm5967 = vmpackc.low %vm5871, %vm5871
        %vm5968 = vmpackc.low %vm5872, %vm5872
        %vm5969 = vmpackc.low %vm5873, %vm5873
        %vm5970 = vmpackc.low %vm5874, %vm5874
        %vm5971 = vmpackc.low %vm5875, %vm5875
        %vm5972 = vmpackc.low %vm5876, %vm5876
        %vm5973 = vmpackc.low %vm5877, %vm5877
        %vm5974 = vmpackc.low %vm5878, %vm5878
        %vm5975 = vmpackc.low %vm5879, %vm5879
        %vm5976 = vmpackc.low %vm5880, %vm5880
        %vm5977 = vmpackc.low %vm5881, %vm5881
        %vm5978 = vmpackc.low %vm5882, %vm5882
        %v5979 = vsel %vm5947, %v5787, %v5915
        %v5980 = vsel %vm5948, %v5788, %v5916
        %v5981 = vsel %vm5949, %v5789, %v5917
        %v5982 = vsel %vm5950, %v5790, %v5918
        %v5983 = vsel %vm5951, %v5791, %v5919
        %v5984 = vsel %vm5952, %v5792, %v5920
        %v5985 = vsel %vm5953, %v5793, %v5921
        %v5986 = vsel %vm5954, %v5794, %v5922
        %v5987 = vsel %vm5955, %v5795, %v5923
        %v5988 = vsel %vm5956, %v5796, %v5924
        %v5989 = vsel %vm5957, %v5797, %v5925
        %v5990 = vsel %vm5958, %v5798, %v5926
        %v5991 = vsel %vm5959, %v5799, %v5927
        %v5992 = vsel %vm5960, %v5800, %v5928
        %v5993 = vsel %vm5961, %v5801, %v5929
        %v5994 = vsel %vm5962, %v5802, %v5930
        %v5995 = vsel %vm5963, %v5803, %v5931
        %v5996 = vsel %vm5964, %v5804, %v5932
        %v5997 = vsel %vm5965, %v5805, %v5933
        %v5998 = vsel %vm5966, %v5806, %v5934
        %v5999 = vsel %vm5967, %v5807, %v5935
        %v6000 = vsel %vm5968, %v5808, %v5936
        %v6001 = vsel %vm5969, %v5809, %v5937
        %v6002 = vsel %vm5970, %v5810, %v5938
        %v6003 = vsel %vm5971, %v5811, %v5939
        %v6004 = vsel %vm5972, %v5812, %v5940
        %v6005 = vsel %vm5973, %v5813, %v5941
        %v6006 = vsel %vm5974, %v5814, %v5942
        %v6007 = vsel %vm5975, %v5815, %v5943
        %v6008 = vsel %vm5976, %v5816, %v5944
        %v6009 = vsel %vm5977, %v5817, %v5945
        %v6010 = vsel %vm5978, %v5818, %v5946
        %v6011 = vld [vmem:[#allocation9] sm:$0xf]
        %v6012 = vld [vmem:[#allocation9 + $0x4] sm:$0xf]
        %v6013 = vld [vmem:[#allocation9 + $0x8] sm:$0xf]
        %v6014 = vld [vmem:[#allocation9 + $0xc] sm:$0xf]
        %v6015 = vld [vmem:[#allocation9 + $0x10] sm:$0xf]
        %v6016 = vld [vmem:[#allocation9 + $0x14] sm:$0xf]
        %v6017 = vld [vmem:[#allocation9 + $0x18] sm:$0xf]
        %v6018 = vld [vmem:[#allocation9 + $0x1c] sm:$0xf]
        %v6019 = vld [vmem:[#allocation9 + $0x20] sm:$0xf]
        %v6020 = vld [vmem:[#allocation9 + $0x24] sm:$0xf]
        %v6021 = vld [vmem:[#allocation9 + $0x28] sm:$0xf]
        %v6022 = vld [vmem:[#allocation9 + $0x2c] sm:$0xf]
        %v6023 = vld [vmem:[#allocation9 + $0x30] sm:$0xf]
        %v6024 = vld [vmem:[#allocation9 + $0x34] sm:$0xf]
        %v6025 = vld [vmem:[#allocation9 + $0x38] sm:$0xf]
        %v6026 = vld [vmem:[#allocation9 + $0x3c] sm:$0xf]
        %v6027 = vld [vmem:[%s17] sm:$0x1]
        %v6029 = vperm.slane %v6027, 0
        %v6063 = vunpack.c.l.b16 %v5979
        %v6064 = vunpack.c.l.b16 %v5980
        %v6065 = vunpack.c.l.b16 %v5981
        %v6066 = vunpack.c.l.b16 %v5982
        %v6067 = vunpack.c.l.b16 %v5983
        %v6068 = vunpack.c.l.b16 %v5984
        %v6069 = vunpack.c.l.b16 %v5985
        %v6070 = vunpack.c.l.b16 %v5986
        %v6071 = vunpack.c.l.b16 %v5987
        %v6072 = vunpack.c.l.b16 %v5988
        %v6073 = vunpack.c.l.b16 %v5989
        %v6074 = vunpack.c.l.b16 %v5990
        %v6075 = vunpack.c.l.b16 %v5991
        %v6076 = vunpack.c.l.b16 %v5992
        %v6077 = vunpack.c.l.b16 %v5993
        %v6078 = vunpack.c.l.b16 %v5994
        %v6079 = vunpack.c.l.b16 %v5995
        %v6080 = vunpack.c.l.b16 %v5996
        %v6081 = vunpack.c.l.b16 %v5997
        %v6082 = vunpack.c.l.b16 %v5998
        %v6083 = vunpack.c.l.b16 %v5999
        %v6084 = vunpack.c.l.b16 %v6000
        %v6085 = vunpack.c.l.b16 %v6001
        %v6086 = vunpack.c.l.b16 %v6002
        %v6087 = vunpack.c.l.b16 %v6003
        %v6088 = vunpack.c.l.b16 %v6004
        %v6089 = vunpack.c.l.b16 %v6005
        %v6090 = vunpack.c.l.b16 %v6006
        %v6091 = vunpack.c.l.b16 %v6007
        %v6092 = vunpack.c.l.b16 %v6008
        %v6093 = vunpack.c.l.b16 %v6009
        %v6094 = vunpack.c.l.b16 %v6010
        %v6095 = vpack.c.b16 %v6064, %v6063
        %v6096 = vpack.c.b16 %v6066, %v6065
        %v6097 = vpack.c.b16 %v6068, %v6067
        %v6098 = vpack.c.b16 %v6070, %v6069
        %v6099 = vpack.c.b16 %v6072, %v6071
        %v6100 = vpack.c.b16 %v6074, %v6073
        %v6101 = vpack.c.b16 %v6076, %v6075
        %v6102 = vpack.c.b16 %v6078, %v6077
        %v6103 = vpack.c.b16 %v6080, %v6079
        %v6104 = vpack.c.b16 %v6082, %v6081
        %v6105 = vpack.c.b16 %v6084, %v6083
        %v6106 = vpack.c.b16 %v6086, %v6085
        %v6107 = vpack.c.b16 %v6088, %v6087
        %v6108 = vpack.c.b16 %v6090, %v6089
        %v6109 = vpack.c.b16 %v6092, %v6091
        %v6110 = vpack.c.b16 %v6094, %v6093
        %v6143 = vunpack.c.l.b16 %v6011
        %v6144 = vunpack.c.l.b16 %v6012
        %v6145 = vunpack.c.l.b16 %v6013
        %v6146 = vunpack.c.l.b16 %v6014
        %v6147 = vunpack.c.l.b16 %v6015
        %v6148 = vunpack.c.l.b16 %v6016
        %v6149 = vunpack.c.l.b16 %v6017
        %v6150 = vunpack.c.l.b16 %v6018
        %v6151 = vunpack.c.l.b16 %v6019
        %v6152 = vunpack.c.l.b16 %v6020
        %v6153 = vunpack.c.l.b16 %v6021
        %v6154 = vunpack.c.l.b16 %v6022
        %v6155 = vunpack.c.l.b16 %v6023
        %v6156 = vunpack.c.l.b16 %v6024
        %v6157 = vunpack.c.l.b16 %v6025
        %v6158 = vunpack.c.l.b16 %v6026
        %v6159 = vpack.c.b16 %v6144, %v6143
        %v6160 = vpack.c.b16 %v6146, %v6145
        %v6161 = vpack.c.b16 %v6148, %v6147
        %v6162 = vpack.c.b16 %v6150, %v6149
        %v6163 = vpack.c.b16 %v6152, %v6151
        %v6164 = vpack.c.b16 %v6154, %v6153
        %v6165 = vpack.c.b16 %v6156, %v6155
        %v6166 = vpack.c.b16 %v6158, %v6157
        %6175 = vmatpush.bf16.msra.mxu0 %v6166
        %6176 = vmatpush.bf16.msra.mxu0 %v6165
        %6177 = vmatpush.bf16.msra.mxu0 %v6164
        %6178 = vmatpush.bf16.msra.mxu0 %v6163
        %6179 = vmatpush.bf16.msra.mxu0 %v6162
        %6180 = vmatpush.bf16.msra.mxu0 %v6161
        %6181 = vmatpush.bf16.msra.mxu0 %v6160
        %6182 = vmatpush.bf16.msra.mxu0 %v6159
        %6183 = vmatmul.bf16.gmra.mxu0 %v6095
        %v6184 = vpop.f32.mrf.mxu0
        %v6185 = vadd.f32 %v6029, %v6184
        %v6186 = vpop.f32.mrf.mxu0
        %v6187 = vadd.f32 %v6029, %v6186
        %6188 = vmatmul.bf16.gmra.mxu0 %v6096
        %v6189 = vpop.f32.mrf.mxu0
        %v6190 = vadd.f32 %v6029, %v6189
        %v6191 = vpop.f32.mrf.mxu0
        %v6192 = vadd.f32 %v6029, %v6191
        %6193 = vmatmul.bf16.gmra.mxu0 %v6097
        %v6194 = vpop.f32.mrf.mxu0
        %v6195 = vadd.f32 %v6029, %v6194
        %v6196 = vpop.f32.mrf.mxu0
        %v6197 = vadd.f32 %v6029, %v6196
        %6198 = vmatmul.bf16.gmra.mxu0 %v6098
        %v6199 = vpop.f32.mrf.mxu0
        %v6200 = vadd.f32 %v6029, %v6199
        %v6201 = vpop.f32.mrf.mxu0
        %v6202 = vadd.f32 %v6029, %v6201
        %6203 = vmatmul.bf16.gmra.mxu0 %v6099
        %v6204 = vpop.f32.mrf.mxu0
        %v6205 = vadd.f32 %v6029, %v6204
        %v6206 = vpop.f32.mrf.mxu0
        %v6207 = vadd.f32 %v6029, %v6206
        %6208 = vmatmul.bf16.gmra.mxu0 %v6100
        %v6209 = vpop.f32.mrf.mxu0
        %v6210 = vadd.f32 %v6029, %v6209
        %v6211 = vpop.f32.mrf.mxu0
        %v6212 = vadd.f32 %v6029, %v6211
        %6213 = vmatmul.bf16.gmra.mxu0 %v6101
        %v6214 = vpop.f32.mrf.mxu0
        %v6215 = vadd.f32 %v6029, %v6214
        %v6216 = vpop.f32.mrf.mxu0
        %v6217 = vadd.f32 %v6029, %v6216
        %6218 = vmatmul.bf16.gmra.mxu0 %v6102
        %v6219 = vpop.f32.mrf.mxu0
        %v6220 = vadd.f32 %v6029, %v6219
        %v6221 = vpop.f32.mrf.mxu0
        %v6222 = vadd.f32 %v6029, %v6221
        %6223 = vmatmul.bf16.gmra.mxu0 %v6103
        %v6224 = vpop.f32.mrf.mxu0
        %v6225 = vadd.f32 %v6029, %v6224
        %v6226 = vpop.f32.mrf.mxu0
        %v6227 = vadd.f32 %v6029, %v6226
        %6228 = vmatmul.bf16.gmra.mxu0 %v6104
        %v6229 = vpop.f32.mrf.mxu0
        %v6230 = vadd.f32 %v6029, %v6229
        %v6231 = vpop.f32.mrf.mxu0
        %v6232 = vadd.f32 %v6029, %v6231
        %6233 = vmatmul.bf16.gmra.mxu0 %v6105
        %v6234 = vpop.f32.mrf.mxu0
        %v6235 = vadd.f32 %v6029, %v6234
        %v6236 = vpop.f32.mrf.mxu0
        %v6237 = vadd.f32 %v6029, %v6236
        %6238 = vmatmul.bf16.gmra.mxu0 %v6106
        %v6239 = vpop.f32.mrf.mxu0
        %v6240 = vadd.f32 %v6029, %v6239
        %v6241 = vpop.f32.mrf.mxu0
        %v6242 = vadd.f32 %v6029, %v6241
        %6243 = vmatmul.bf16.gmra.mxu0 %v6107
        %v6244 = vpop.f32.mrf.mxu0
        %v6245 = vadd.f32 %v6029, %v6244
        %v6246 = vpop.f32.mrf.mxu0
        %v6247 = vadd.f32 %v6029, %v6246
        %6248 = vmatmul.bf16.gmra.mxu0 %v6108
        %v6249 = vpop.f32.mrf.mxu0
        %v6250 = vadd.f32 %v6029, %v6249
        %v6251 = vpop.f32.mrf.mxu0
        %v6252 = vadd.f32 %v6029, %v6251
        %6253 = vmatmul.bf16.gmra.mxu0 %v6109
        %v6254 = vpop.f32.mrf.mxu0
        %v6255 = vadd.f32 %v6029, %v6254
        %v6256 = vpop.f32.mrf.mxu0
        %v6257 = vadd.f32 %v6029, %v6256
        %6258 = vmatmul.bf16.gmra.mxu0 %v6110
        %v6259 = vpop.f32.mrf.mxu0
        %v6260 = vadd.f32 %v6029, %v6259
        %v6261 = vpop.f32.mrf.mxu0
        %v6262 = vadd.f32 %v6029, %v6261
        %6263 = vdwg.mxu0
        %v6264 = vpack.c.bf16 %v6185, %v6185
        %v6265 = vpack.c.bf16 %v6187, %v6187
        %v6266 = vpack.c.bf16 %v6190, %v6190
        %v6267 = vpack.c.bf16 %v6192, %v6192
        %v6268 = vpack.c.bf16 %v6195, %v6195
        %v6269 = vpack.c.bf16 %v6197, %v6197
        %v6270 = vpack.c.bf16 %v6200, %v6200
        %v6271 = vpack.c.bf16 %v6202, %v6202
        %v6272 = vpack.c.bf16 %v6205, %v6205
        %v6273 = vpack.c.bf16 %v6207, %v6207
        %v6274 = vpack.c.bf16 %v6210, %v6210
        %v6275 = vpack.c.bf16 %v6212, %v6212
        %v6276 = vpack.c.bf16 %v6215, %v6215
        %v6277 = vpack.c.bf16 %v6217, %v6217
        %v6278 = vpack.c.bf16 %v6220, %v6220
        %v6279 = vpack.c.bf16 %v6222, %v6222
        %v6280 = vpack.c.bf16 %v6225, %v6225
        %v6281 = vpack.c.bf16 %v6227, %v6227
        %v6282 = vpack.c.bf16 %v6230, %v6230
        %v6283 = vpack.c.bf16 %v6232, %v6232
        %v6284 = vpack.c.bf16 %v6235, %v6235
        %v6285 = vpack.c.bf16 %v6237, %v6237
        %v6286 = vpack.c.bf16 %v6240, %v6240
        %v6287 = vpack.c.bf16 %v6242, %v6242
        %v6288 = vpack.c.bf16 %v6245, %v6245
        %v6289 = vpack.c.bf16 %v6247, %v6247
        %v6290 = vpack.c.bf16 %v6250, %v6250
        %v6291 = vpack.c.bf16 %v6252, %v6252
        %v6292 = vpack.c.bf16 %v6255, %v6255
        %v6293 = vpack.c.bf16 %v6257, %v6257
        %v6294 = vpack.c.bf16 %v6260, %v6260
        %v6295 = vpack.c.bf16 %v6262, %v6262
        %v6296 = vunpack.c.l.bf16 %v6264
        %v6297 = vunpack.c.l.bf16 %v6265
        %v6298 = vunpack.c.l.bf16 %v6266
        %v6299 = vunpack.c.l.bf16 %v6267
        %v6300 = vunpack.c.l.bf16 %v6268
        %v6301 = vunpack.c.l.bf16 %v6269
        %v6302 = vunpack.c.l.bf16 %v6270
        %v6303 = vunpack.c.l.bf16 %v6271
        %v6304 = vunpack.c.l.bf16 %v6272
        %v6305 = vunpack.c.l.bf16 %v6273
        %v6306 = vunpack.c.l.bf16 %v6274
        %v6307 = vunpack.c.l.bf16 %v6275
        %v6308 = vunpack.c.l.bf16 %v6276
        %v6309 = vunpack.c.l.bf16 %v6277
        %v6310 = vunpack.c.l.bf16 %v6278
        %v6311 = vunpack.c.l.bf16 %v6279
        %v6312 = vunpack.c.l.bf16 %v6280
        %v6313 = vunpack.c.l.bf16 %v6281
        %v6314 = vunpack.c.l.bf16 %v6282
        %v6315 = vunpack.c.l.bf16 %v6283
        %v6316 = vunpack.c.l.bf16 %v6284
        %v6317 = vunpack.c.l.bf16 %v6285
        %v6318 = vunpack.c.l.bf16 %v6286
        %v6319 = vunpack.c.l.bf16 %v6287
        %v6320 = vunpack.c.l.bf16 %v6288
        %v6321 = vunpack.c.l.bf16 %v6289
        %v6322 = vunpack.c.l.bf16 %v6290
        %v6323 = vunpack.c.l.bf16 %v6291
        %v6324 = vunpack.c.l.bf16 %v6292
        %v6325 = vunpack.c.l.bf16 %v6293
        %v6326 = vunpack.c.l.bf16 %v6294
        %v6327 = vunpack.c.l.bf16 %v6295
        %vm6328 = vcmp.gt.f32.partialorder %v6296, 0.0
        %vm6329 = vcmp.gt.f32.partialorder %v6297, 0.0
        %vm6330 = vcmp.gt.f32.partialorder %v6298, 0.0
        %vm6331 = vcmp.gt.f32.partialorder %v6299, 0.0
        %vm6332 = vcmp.gt.f32.partialorder %v6300, 0.0
        %vm6333 = vcmp.gt.f32.partialorder %v6301, 0.0
        %vm6334 = vcmp.gt.f32.partialorder %v6302, 0.0
        %vm6335 = vcmp.gt.f32.partialorder %v6303, 0.0
        %vm6336 = vcmp.gt.f32.partialorder %v6304, 0.0
        %vm6337 = vcmp.gt.f32.partialorder %v6305, 0.0
        %vm6338 = vcmp.gt.f32.partialorder %v6306, 0.0
        %vm6339 = vcmp.gt.f32.partialorder %v6307, 0.0
        %vm6340 = vcmp.gt.f32.partialorder %v6308, 0.0
        %vm6341 = vcmp.gt.f32.partialorder %v6309, 0.0
        %vm6342 = vcmp.gt.f32.partialorder %v6310, 0.0
        %vm6343 = vcmp.gt.f32.partialorder %v6311, 0.0
        %vm6344 = vcmp.gt.f32.partialorder %v6312, 0.0
        %vm6345 = vcmp.gt.f32.partialorder %v6313, 0.0
        %vm6346 = vcmp.gt.f32.partialorder %v6314, 0.0
        %vm6347 = vcmp.gt.f32.partialorder %v6315, 0.0
        %vm6348 = vcmp.gt.f32.partialorder %v6316, 0.0
        %vm6349 = vcmp.gt.f32.partialorder %v6317, 0.0
        %vm6350 = vcmp.gt.f32.partialorder %v6318, 0.0
        %vm6351 = vcmp.gt.f32.partialorder %v6319, 0.0
        %vm6352 = vcmp.gt.f32.partialorder %v6320, 0.0
        %vm6353 = vcmp.gt.f32.partialorder %v6321, 0.0
        %vm6354 = vcmp.gt.f32.partialorder %v6322, 0.0
        %vm6355 = vcmp.gt.f32.partialorder %v6323, 0.0
        %vm6356 = vcmp.gt.f32.partialorder %v6324, 0.0
        %vm6357 = vcmp.gt.f32.partialorder %v6325, 0.0
        %vm6358 = vcmp.gt.f32.partialorder %v6326, 0.0
        %vm6359 = vcmp.gt.f32.partialorder %v6327, 0.0
        %v6360 = vmul.f32 %v6296, 0.010009766
        %v6361 = vmul.f32 %v6297, 0.010009766
        %v6362 = vmul.f32 %v6298, 0.010009766
        %v6363 = vmul.f32 %v6299, 0.010009766
        %v6364 = vmul.f32 %v6300, 0.010009766
        %v6365 = vmul.f32 %v6301, 0.010009766
        %v6366 = vmul.f32 %v6302, 0.010009766
        %v6367 = vmul.f32 %v6303, 0.010009766
        %v6368 = vmul.f32 %v6304, 0.010009766
        %v6369 = vmul.f32 %v6305, 0.010009766
        %v6370 = vmul.f32 %v6306, 0.010009766
        %v6371 = vmul.f32 %v6307, 0.010009766
        %v6372 = vmul.f32 %v6308, 0.010009766
        %v6373 = vmul.f32 %v6309, 0.010009766
        %v6374 = vmul.f32 %v6310, 0.010009766
        %v6375 = vmul.f32 %v6311, 0.010009766
        %v6376 = vmul.f32 %v6312, 0.010009766
        %v6377 = vmul.f32 %v6313, 0.010009766
        %v6378 = vmul.f32 %v6314, 0.010009766
        %v6379 = vmul.f32 %v6315, 0.010009766
        %v6380 = vmul.f32 %v6316, 0.010009766
        %v6381 = vmul.f32 %v6317, 0.010009766
        %v6382 = vmul.f32 %v6318, 0.010009766
        %v6383 = vmul.f32 %v6319, 0.010009766
        %v6384 = vmul.f32 %v6320, 0.010009766
        %v6385 = vmul.f32 %v6321, 0.010009766
        %v6386 = vmul.f32 %v6322, 0.010009766
        %v6387 = vmul.f32 %v6323, 0.010009766
        %v6388 = vmul.f32 %v6324, 0.010009766
        %v6389 = vmul.f32 %v6325, 0.010009766
        %v6390 = vmul.f32 %v6326, 0.010009766
        %v6391 = vmul.f32 %v6327, 0.010009766
        %v6392 = vpack.c.bf16 %v6360, %v6360
        %v6393 = vpack.c.bf16 %v6361, %v6361
        %v6394 = vpack.c.bf16 %v6362, %v6362
        %v6395 = vpack.c.bf16 %v6363, %v6363
        %v6396 = vpack.c.bf16 %v6364, %v6364
        %v6397 = vpack.c.bf16 %v6365, %v6365
        %v6398 = vpack.c.bf16 %v6366, %v6366
        %v6399 = vpack.c.bf16 %v6367, %v6367
        %v6400 = vpack.c.bf16 %v6368, %v6368
        %v6401 = vpack.c.bf16 %v6369, %v6369
        %v6402 = vpack.c.bf16 %v6370, %v6370
        %v6403 = vpack.c.bf16 %v6371, %v6371
        %v6404 = vpack.c.bf16 %v6372, %v6372
        %v6405 = vpack.c.bf16 %v6373, %v6373
        %v6406 = vpack.c.bf16 %v6374, %v6374
        %v6407 = vpack.c.bf16 %v6375, %v6375
        %v6408 = vpack.c.bf16 %v6376, %v6376
        %v6409 = vpack.c.bf16 %v6377, %v6377
        %v6410 = vpack.c.bf16 %v6378, %v6378
        %v6411 = vpack.c.bf16 %v6379, %v6379
        %v6412 = vpack.c.bf16 %v6380, %v6380
        %v6413 = vpack.c.bf16 %v6381, %v6381
        %v6414 = vpack.c.bf16 %v6382, %v6382
        %v6415 = vpack.c.bf16 %v6383, %v6383
        %v6416 = vpack.c.bf16 %v6384, %v6384
        %v6417 = vpack.c.bf16 %v6385, %v6385
        %v6418 = vpack.c.bf16 %v6386, %v6386
        %v6419 = vpack.c.bf16 %v6387, %v6387
        %v6420 = vpack.c.bf16 %v6388, %v6388
        %v6421 = vpack.c.bf16 %v6389, %v6389
        %v6422 = vpack.c.bf16 %v6390, %v6390
        %v6423 = vpack.c.bf16 %v6391, %v6391
        %vm6424 = vmpackc.low %vm6328, %vm6328
        %vm6425 = vmpackc.low %vm6329, %vm6329
        %vm6426 = vmpackc.low %vm6330, %vm6330
        %vm6427 = vmpackc.low %vm6331, %vm6331
        %vm6428 = vmpackc.low %vm6332, %vm6332
        %vm6429 = vmpackc.low %vm6333, %vm6333
        %vm6430 = vmpackc.low %vm6334, %vm6334
        %vm6431 = vmpackc.low %vm6335, %vm6335
        %vm6432 = vmpackc.low %vm6336, %vm6336
        %vm6433 = vmpackc.low %vm6337, %vm6337
        %vm6434 = vmpackc.low %vm6338, %vm6338
        %vm6435 = vmpackc.low %vm6339, %vm6339
        %vm6436 = vmpackc.low %vm6340, %vm6340
        %vm6437 = vmpackc.low %vm6341, %vm6341
        %vm6438 = vmpackc.low %vm6342, %vm6342
        %vm6439 = vmpackc.low %vm6343, %vm6343
        %vm6440 = vmpackc.low %vm6344, %vm6344
        %vm6441 = vmpackc.low %vm6345, %vm6345
        %vm6442 = vmpackc.low %vm6346, %vm6346
        %vm6443 = vmpackc.low %vm6347, %vm6347
        %vm6444 = vmpackc.low %vm6348, %vm6348
        %vm6445 = vmpackc.low %vm6349, %vm6349
        %vm6446 = vmpackc.low %vm6350, %vm6350
        %vm6447 = vmpackc.low %vm6351, %vm6351
        %vm6448 = vmpackc.low %vm6352, %vm6352
        %vm6449 = vmpackc.low %vm6353, %vm6353
        %vm6450 = vmpackc.low %vm6354, %vm6354
        %vm6451 = vmpackc.low %vm6355, %vm6355
        %vm6452 = vmpackc.low %vm6356, %vm6356
        %vm6453 = vmpackc.low %vm6357, %vm6357
        %vm6454 = vmpackc.low %vm6358, %vm6358
        %vm6455 = vmpackc.low %vm6359, %vm6359
        %v6456 = vsel %vm6424, %v6264, %v6392
        %v6457 = vsel %vm6425, %v6265, %v6393
        %v6458 = vsel %vm6426, %v6266, %v6394
        %v6459 = vsel %vm6427, %v6267, %v6395
        %v6460 = vsel %vm6428, %v6268, %v6396
        %v6461 = vsel %vm6429, %v6269, %v6397
        %v6462 = vsel %vm6430, %v6270, %v6398
        %v6463 = vsel %vm6431, %v6271, %v6399
        %v6464 = vsel %vm6432, %v6272, %v6400
        %v6465 = vsel %vm6433, %v6273, %v6401
        %v6466 = vsel %vm6434, %v6274, %v6402
        %v6467 = vsel %vm6435, %v6275, %v6403
        %v6468 = vsel %vm6436, %v6276, %v6404
        %v6469 = vsel %vm6437, %v6277, %v6405
        %v6470 = vsel %vm6438, %v6278, %v6406
        %v6471 = vsel %vm6439, %v6279, %v6407
        %v6472 = vsel %vm6440, %v6280, %v6408
        %v6473 = vsel %vm6441, %v6281, %v6409
        %v6474 = vsel %vm6442, %v6282, %v6410
        %v6475 = vsel %vm6443, %v6283, %v6411
        %v6476 = vsel %vm6444, %v6284, %v6412
        %v6477 = vsel %vm6445, %v6285, %v6413
        %v6478 = vsel %vm6446, %v6286, %v6414
        %v6479 = vsel %vm6447, %v6287, %v6415
        %v6480 = vsel %vm6448, %v6288, %v6416
        %v6481 = vsel %vm6449, %v6289, %v6417
        %v6482 = vsel %vm6450, %v6290, %v6418
        %v6483 = vsel %vm6451, %v6291, %v6419
        %v6484 = vsel %vm6452, %v6292, %v6420
        %v6485 = vsel %vm6453, %v6293, %v6421
        %v6486 = vsel %vm6454, %v6294, %v6422
        %v6487 = vsel %vm6455, %v6295, %v6423
        %v6488 = vld [vmem:[#allocation10] sm:$0xff]
        %v6489 = vld [vmem:[#allocation10 + $0x8] sm:$0xff]
        %v6490 = vld [vmem:[#allocation10 + $0x10] sm:$0xff]
        %v6491 = vld [vmem:[#allocation10 + $0x18] sm:$0xff]
        %v6492 = vld [vmem:[#allocation10 + $0x20] sm:$0xff]
        %v6493 = vld [vmem:[#allocation10 + $0x28] sm:$0xff]
        %v6494 = vld [vmem:[#allocation10 + $0x30] sm:$0xff]
        %v6495 = vld [vmem:[#allocation10 + $0x38] sm:$0xff]
        %v6496 = vld [vmem:[#allocation10 + $0x40] sm:$0xff]
        %v6497 = vld [vmem:[#allocation10 + $0x48] sm:$0xff]
        %v6498 = vld [vmem:[#allocation10 + $0x50] sm:$0xff]
        %v6499 = vld [vmem:[#allocation10 + $0x58] sm:$0xff]
        %v6500 = vld [vmem:[#allocation10 + $0x60] sm:$0xff]
        %v6501 = vld [vmem:[#allocation10 + $0x68] sm:$0xff]
        %v6502 = vld [vmem:[#allocation10 + $0x70] sm:$0xff]
        %v6503 = vld [vmem:[#allocation10 + $0x78] sm:$0xff]
        %v6504 = vld [vmem:[%s18] sm:$0x3]
        %v6506 = vperm.slane %v6504, 0
        %v6507 = vperm.slane %v6504, 1
        %v6542 = vunpack.c.l.b16 %v6456
        %v6543 = vunpack.c.l.b16 %v6457
        %v6544 = vunpack.c.l.b16 %v6458
        %v6545 = vunpack.c.l.b16 %v6459
        %v6546 = vunpack.c.l.b16 %v6460
        %v6547 = vunpack.c.l.b16 %v6461
        %v6548 = vunpack.c.l.b16 %v6462
        %v6549 = vunpack.c.l.b16 %v6463
        %v6550 = vunpack.c.l.b16 %v6464
        %v6551 = vunpack.c.l.b16 %v6465
        %v6552 = vunpack.c.l.b16 %v6466
        %v6553 = vunpack.c.l.b16 %v6467
        %v6554 = vunpack.c.l.b16 %v6468
        %v6555 = vunpack.c.l.b16 %v6469
        %v6556 = vunpack.c.l.b16 %v6470
        %v6557 = vunpack.c.l.b16 %v6471
        %v6558 = vunpack.c.l.b16 %v6472
        %v6559 = vunpack.c.l.b16 %v6473
        %v6560 = vunpack.c.l.b16 %v6474
        %v6561 = vunpack.c.l.b16 %v6475
        %v6562 = vunpack.c.l.b16 %v6476
        %v6563 = vunpack.c.l.b16 %v6477
        %v6564 = vunpack.c.l.b16 %v6478
        %v6565 = vunpack.c.l.b16 %v6479
        %v6566 = vunpack.c.l.b16 %v6480
        %v6567 = vunpack.c.l.b16 %v6481
        %v6568 = vunpack.c.l.b16 %v6482
        %v6569 = vunpack.c.l.b16 %v6483
        %v6570 = vunpack.c.l.b16 %v6484
        %v6571 = vunpack.c.l.b16 %v6485
        %v6572 = vunpack.c.l.b16 %v6486
        %v6573 = vunpack.c.l.b16 %v6487
        %v6574 = vpack.c.b16 %v6543, %v6542
        %v6575 = vpack.c.b16 %v6545, %v6544
        %v6576 = vpack.c.b16 %v6547, %v6546
        %v6577 = vpack.c.b16 %v6549, %v6548
        %v6578 = vpack.c.b16 %v6551, %v6550
        %v6579 = vpack.c.b16 %v6553, %v6552
        %v6580 = vpack.c.b16 %v6555, %v6554
        %v6581 = vpack.c.b16 %v6557, %v6556
        %v6582 = vpack.c.b16 %v6559, %v6558
        %v6583 = vpack.c.b16 %v6561, %v6560
        %v6584 = vpack.c.b16 %v6563, %v6562
        %v6585 = vpack.c.b16 %v6565, %v6564
        %v6586 = vpack.c.b16 %v6567, %v6566
        %v6587 = vpack.c.b16 %v6569, %v6568
        %v6588 = vpack.c.b16 %v6571, %v6570
        %v6589 = vpack.c.b16 %v6573, %v6572
        %v6622 = vunpack.c.l.b16 %v6488
        %v6623 = vunpack.c.h.b16 %v6488
        %v6624 = vunpack.c.l.b16 %v6489
        %v6625 = vunpack.c.h.b16 %v6489
        %v6626 = vunpack.c.l.b16 %v6490
        %v6627 = vunpack.c.h.b16 %v6490
        %v6628 = vunpack.c.l.b16 %v6491
        %v6629 = vunpack.c.h.b16 %v6491
        %v6630 = vunpack.c.l.b16 %v6492
        %v6631 = vunpack.c.h.b16 %v6492
        %v6632 = vunpack.c.l.b16 %v6493
        %v6633 = vunpack.c.h.b16 %v6493
        %v6634 = vunpack.c.l.b16 %v6494
        %v6635 = vunpack.c.h.b16 %v6494
        %v6636 = vunpack.c.l.b16 %v6495
        %v6637 = vunpack.c.h.b16 %v6495
        %v6638 = vunpack.c.l.b16 %v6496
        %v6639 = vunpack.c.h.b16 %v6496
        %v6640 = vunpack.c.l.b16 %v6497
        %v6641 = vunpack.c.h.b16 %v6497
        %v6642 = vunpack.c.l.b16 %v6498
        %v6643 = vunpack.c.h.b16 %v6498
        %v6644 = vunpack.c.l.b16 %v6499
        %v6645 = vunpack.c.h.b16 %v6499
        %v6646 = vunpack.c.l.b16 %v6500
        %v6647 = vunpack.c.h.b16 %v6500
        %v6648 = vunpack.c.l.b16 %v6501
        %v6649 = vunpack.c.h.b16 %v6501
        %v6650 = vunpack.c.l.b16 %v6502
        %v6651 = vunpack.c.h.b16 %v6502
        %v6652 = vunpack.c.l.b16 %v6503
        %v6653 = vunpack.c.h.b16 %v6503
        %v6654 = vpack.c.b16 %v6624, %v6622
        %v6655 = vpack.c.b16 %v6625, %v6623
        %v6656 = vpack.c.b16 %v6628, %v6626
        %v6657 = vpack.c.b16 %v6629, %v6627
        %v6658 = vpack.c.b16 %v6632, %v6630
        %v6659 = vpack.c.b16 %v6633, %v6631
        %v6660 = vpack.c.b16 %v6636, %v6634
        %v6661 = vpack.c.b16 %v6637, %v6635
        %v6662 = vpack.c.b16 %v6640, %v6638
        %v6663 = vpack.c.b16 %v6641, %v6639
        %v6664 = vpack.c.b16 %v6644, %v6642
        %v6665 = vpack.c.b16 %v6645, %v6643
        %v6666 = vpack.c.b16 %v6648, %v6646
        %v6667 = vpack.c.b16 %v6649, %v6647
        %v6668 = vpack.c.b16 %v6652, %v6650
        %v6669 = vpack.c.b16 %v6653, %v6651
        %6686 = vmatpush.bf16.msra.mxu0 %v6668
        %6687 = vmatpush.bf16.msra.mxu0 %v6666
        %6688 = vmatpush.bf16.msra.mxu0 %v6664
        %6689 = vmatpush.bf16.msra.mxu0 %v6662
        %6690 = vmatpush.bf16.msra.mxu0 %v6660
        %6691 = vmatpush.bf16.msra.mxu0 %v6658
        %6692 = vmatpush.bf16.msra.mxu0 %v6656
        %6693 = vmatpush.bf16.msra.mxu0 %v6654
        %6694 = vmatmul.bf16.gmra.mxu0 %v6574
        %v6695 = vpop.f32.mrf.mxu0
        %v6696 = vadd.f32 %v6506, %v6695
        %v6697 = vpop.f32.mrf.mxu0
        %v6698 = vadd.f32 %v6506, %v6697
        %6699 = vmatmul.bf16.gmra.mxu0 %v6575
        %v6700 = vpop.f32.mrf.mxu0
        %v6701 = vadd.f32 %v6506, %v6700
        %v6702 = vpop.f32.mrf.mxu0
        %v6703 = vadd.f32 %v6506, %v6702
        %6704 = vmatmul.bf16.gmra.mxu0 %v6576
        %v6705 = vpop.f32.mrf.mxu0
        %v6706 = vadd.f32 %v6506, %v6705
        %v6707 = vpop.f32.mrf.mxu0
        %v6708 = vadd.f32 %v6506, %v6707
        %6709 = vmatmul.bf16.gmra.mxu0 %v6577
        %v6710 = vpop.f32.mrf.mxu0
        %v6711 = vadd.f32 %v6506, %v6710
        %v6712 = vpop.f32.mrf.mxu0
        %v6713 = vadd.f32 %v6506, %v6712
        %6714 = vmatmul.bf16.gmra.mxu0 %v6578
        %v6715 = vpop.f32.mrf.mxu0
        %v6716 = vadd.f32 %v6506, %v6715
        %v6717 = vpop.f32.mrf.mxu0
        %v6718 = vadd.f32 %v6506, %v6717
        %6719 = vmatmul.bf16.gmra.mxu0 %v6579
        %v6720 = vpop.f32.mrf.mxu0
        %v6721 = vadd.f32 %v6506, %v6720
        %v6722 = vpop.f32.mrf.mxu0
        %v6723 = vadd.f32 %v6506, %v6722
        %6724 = vmatmul.bf16.gmra.mxu0 %v6580
        %v6725 = vpop.f32.mrf.mxu0
        %v6726 = vadd.f32 %v6506, %v6725
        %v6727 = vpop.f32.mrf.mxu0
        %v6728 = vadd.f32 %v6506, %v6727
        %6729 = vmatmul.bf16.gmra.mxu0 %v6581
        %v6730 = vpop.f32.mrf.mxu0
        %v6731 = vadd.f32 %v6506, %v6730
        %v6732 = vpop.f32.mrf.mxu0
        %v6733 = vadd.f32 %v6506, %v6732
        %6734 = vmatmul.bf16.gmra.mxu0 %v6582
        %v6735 = vpop.f32.mrf.mxu0
        %v6736 = vadd.f32 %v6506, %v6735
        %v6737 = vpop.f32.mrf.mxu0
        %v6738 = vadd.f32 %v6506, %v6737
        %6739 = vmatmul.bf16.gmra.mxu0 %v6583
        %v6740 = vpop.f32.mrf.mxu0
        %v6741 = vadd.f32 %v6506, %v6740
        %v6742 = vpop.f32.mrf.mxu0
        %v6743 = vadd.f32 %v6506, %v6742
        %6744 = vmatmul.bf16.gmra.mxu0 %v6584
        %v6745 = vpop.f32.mrf.mxu0
        %v6746 = vadd.f32 %v6506, %v6745
        %v6747 = vpop.f32.mrf.mxu0
        %v6748 = vadd.f32 %v6506, %v6747
        %6749 = vmatmul.bf16.gmra.mxu0 %v6585
        %v6750 = vpop.f32.mrf.mxu0
        %v6751 = vadd.f32 %v6506, %v6750
        %v6752 = vpop.f32.mrf.mxu0
        %v6753 = vadd.f32 %v6506, %v6752
        %6754 = vmatmul.bf16.gmra.mxu0 %v6586
        %v6755 = vpop.f32.mrf.mxu0
        %v6756 = vadd.f32 %v6506, %v6755
        %v6757 = vpop.f32.mrf.mxu0
        %v6758 = vadd.f32 %v6506, %v6757
        %6759 = vmatmul.bf16.gmra.mxu0 %v6587
        %v6760 = vpop.f32.mrf.mxu0
        %v6761 = vadd.f32 %v6506, %v6760
        %v6762 = vpop.f32.mrf.mxu0
        %v6763 = vadd.f32 %v6506, %v6762
        %6764 = vmatmul.bf16.gmra.mxu0 %v6588
        %v6765 = vpop.f32.mrf.mxu0
        %v6766 = vadd.f32 %v6506, %v6765
        %v6767 = vpop.f32.mrf.mxu0
        %v6768 = vadd.f32 %v6506, %v6767
        %6769 = vmatmul.bf16.gmra.mxu0 %v6589
        %v6770 = vpop.f32.mrf.mxu0
        %v6771 = vadd.f32 %v6506, %v6770
        %v6772 = vpop.f32.mrf.mxu0
        %v6773 = vadd.f32 %v6506, %v6772
        %6774 = vdwg.mxu0
        %6775 = vmatpush.bf16.msra.mxu0 %v6669
        %6776 = vmatpush.bf16.msra.mxu0 %v6667
        %6777 = vmatpush.bf16.msra.mxu0 %v6665
        %6778 = vmatpush.bf16.msra.mxu0 %v6663
        %6779 = vmatpush.bf16.msra.mxu0 %v6661
        %6780 = vmatpush.bf16.msra.mxu0 %v6659
        %6781 = vmatpush.bf16.msra.mxu0 %v6657
        %6782 = vmatpush.bf16.msra.mxu0 %v6655
        %6783 = vmatmul.bf16.gmra.mxu0 %v6574
        %v6784 = vpop.f32.mrf.mxu0
        %v6785 = vadd.f32 %v6507, %v6784
        %v6786 = vpop.f32.mrf.mxu0
        %v6787 = vadd.f32 %v6507, %v6786
        %6788 = vmatmul.bf16.gmra.mxu0 %v6575
        %v6789 = vpop.f32.mrf.mxu0
        %v6790 = vadd.f32 %v6507, %v6789
        %v6791 = vpop.f32.mrf.mxu0
        %v6792 = vadd.f32 %v6507, %v6791
        %6793 = vmatmul.bf16.gmra.mxu0 %v6576
        %v6794 = vpop.f32.mrf.mxu0
        %v6795 = vadd.f32 %v6507, %v6794
        %v6796 = vpop.f32.mrf.mxu0
        %v6797 = vadd.f32 %v6507, %v6796
        %6798 = vmatmul.bf16.gmra.mxu0 %v6577
        %v6799 = vpop.f32.mrf.mxu0
        %v6800 = vadd.f32 %v6507, %v6799
        %v6801 = vpop.f32.mrf.mxu0
        %v6802 = vadd.f32 %v6507, %v6801
        %6803 = vmatmul.bf16.gmra.mxu0 %v6578
        %v6804 = vpop.f32.mrf.mxu0
        %v6805 = vadd.f32 %v6507, %v6804
        %v6806 = vpop.f32.mrf.mxu0
        %v6807 = vadd.f32 %v6507, %v6806
        %6808 = vmatmul.bf16.gmra.mxu0 %v6579
        %v6809 = vpop.f32.mrf.mxu0
        %v6810 = vadd.f32 %v6507, %v6809
        %v6811 = vpop.f32.mrf.mxu0
        %v6812 = vadd.f32 %v6507, %v6811
        %6813 = vmatmul.bf16.gmra.mxu0 %v6580
        %v6814 = vpop.f32.mrf.mxu0
        %v6815 = vadd.f32 %v6507, %v6814
        %v6816 = vpop.f32.mrf.mxu0
        %v6817 = vadd.f32 %v6507, %v6816
        %6818 = vmatmul.bf16.gmra.mxu0 %v6581
        %v6819 = vpop.f32.mrf.mxu0
        %v6820 = vadd.f32 %v6507, %v6819
        %v6821 = vpop.f32.mrf.mxu0
        %v6822 = vadd.f32 %v6507, %v6821
        %6823 = vmatmul.bf16.gmra.mxu0 %v6582
        %v6824 = vpop.f32.mrf.mxu0
        %v6825 = vadd.f32 %v6507, %v6824
        %v6826 = vpop.f32.mrf.mxu0
        %v6827 = vadd.f32 %v6507, %v6826
        %6828 = vmatmul.bf16.gmra.mxu0 %v6583
        %v6829 = vpop.f32.mrf.mxu0
        %v6830 = vadd.f32 %v6507, %v6829
        %v6831 = vpop.f32.mrf.mxu0
        %v6832 = vadd.f32 %v6507, %v6831
        %6833 = vmatmul.bf16.gmra.mxu0 %v6584
        %v6834 = vpop.f32.mrf.mxu0
        %v6835 = vadd.f32 %v6507, %v6834
        %v6836 = vpop.f32.mrf.mxu0
        %v6837 = vadd.f32 %v6507, %v6836
        %6838 = vmatmul.bf16.gmra.mxu0 %v6585
        %v6839 = vpop.f32.mrf.mxu0
        %v6840 = vadd.f32 %v6507, %v6839
        %v6841 = vpop.f32.mrf.mxu0
        %v6842 = vadd.f32 %v6507, %v6841
        %6843 = vmatmul.bf16.gmra.mxu0 %v6586
        %v6844 = vpop.f32.mrf.mxu0
        %v6845 = vadd.f32 %v6507, %v6844
        %v6846 = vpop.f32.mrf.mxu0
        %v6847 = vadd.f32 %v6507, %v6846
        %6848 = vmatmul.bf16.gmra.mxu0 %v6587
        %v6849 = vpop.f32.mrf.mxu0
        %v6850 = vadd.f32 %v6507, %v6849
        %v6851 = vpop.f32.mrf.mxu0
        %v6852 = vadd.f32 %v6507, %v6851
        %6853 = vmatmul.bf16.gmra.mxu0 %v6588
        %v6854 = vpop.f32.mrf.mxu0
        %v6855 = vadd.f32 %v6507, %v6854
        %v6856 = vpop.f32.mrf.mxu0
        %v6857 = vadd.f32 %v6507, %v6856
        %6858 = vmatmul.bf16.gmra.mxu0 %v6589
        %v6859 = vpop.f32.mrf.mxu0
        %v6860 = vadd.f32 %v6507, %v6859
        %v6861 = vpop.f32.mrf.mxu0
        %v6862 = vadd.f32 %v6507, %v6861
        %6863 = vdwg.mxu0
        %v6864 = vpack.c.bf16 %v6785, %v6696
        %v6865 = vpack.c.bf16 %v6787, %v6698
        %v6866 = vpack.c.bf16 %v6790, %v6701
        %v6867 = vpack.c.bf16 %v6792, %v6703
        %v6868 = vpack.c.bf16 %v6795, %v6706
        %v6869 = vpack.c.bf16 %v6797, %v6708
        %v6870 = vpack.c.bf16 %v6800, %v6711
        %v6871 = vpack.c.bf16 %v6802, %v6713
        %v6872 = vpack.c.bf16 %v6805, %v6716
        %v6873 = vpack.c.bf16 %v6807, %v6718
        %v6874 = vpack.c.bf16 %v6810, %v6721
        %v6875 = vpack.c.bf16 %v6812, %v6723
        %v6876 = vpack.c.bf16 %v6815, %v6726
        %v6877 = vpack.c.bf16 %v6817, %v6728
        %v6878 = vpack.c.bf16 %v6820, %v6731
        %v6879 = vpack.c.bf16 %v6822, %v6733
        %v6880 = vpack.c.bf16 %v6825, %v6736
        %v6881 = vpack.c.bf16 %v6827, %v6738
        %v6882 = vpack.c.bf16 %v6830, %v6741
        %v6883 = vpack.c.bf16 %v6832, %v6743
        %v6884 = vpack.c.bf16 %v6835, %v6746
        %v6885 = vpack.c.bf16 %v6837, %v6748
        %v6886 = vpack.c.bf16 %v6840, %v6751
        %v6887 = vpack.c.bf16 %v6842, %v6753
        %v6888 = vpack.c.bf16 %v6845, %v6756
        %v6889 = vpack.c.bf16 %v6847, %v6758
        %v6890 = vpack.c.bf16 %v6850, %v6761
        %v6891 = vpack.c.bf16 %v6852, %v6763
        %v6892 = vpack.c.bf16 %v6855, %v6766
        %v6893 = vpack.c.bf16 %v6857, %v6768
        %v6894 = vpack.c.bf16 %v6860, %v6771
        %v6895 = vpack.c.bf16 %v6862, %v6773
        %v6896 = vunpack.c.l.bf16 %v6864
        %v6897 = vunpack.c.h.bf16 %v6864
        %v6898 = vunpack.c.l.bf16 %v6865
        %v6899 = vunpack.c.h.bf16 %v6865
        %v6900 = vunpack.c.l.bf16 %v6866
        %v6901 = vunpack.c.h.bf16 %v6866
        %v6902 = vunpack.c.l.bf16 %v6867
        %v6903 = vunpack.c.h.bf16 %v6867
        %v6904 = vunpack.c.l.bf16 %v6868
        %v6905 = vunpack.c.h.bf16 %v6868
        %v6906 = vunpack.c.l.bf16 %v6869
        %v6907 = vunpack.c.h.bf16 %v6869
        %v6908 = vunpack.c.l.bf16 %v6870
        %v6909 = vunpack.c.h.bf16 %v6870
        %v6910 = vunpack.c.l.bf16 %v6871
        %v6911 = vunpack.c.h.bf16 %v6871
        %v6912 = vunpack.c.l.bf16 %v6872
        %v6913 = vunpack.c.h.bf16 %v6872
        %v6914 = vunpack.c.l.bf16 %v6873
        %v6915 = vunpack.c.h.bf16 %v6873
        %v6916 = vunpack.c.l.bf16 %v6874
        %v6917 = vunpack.c.h.bf16 %v6874
        %v6918 = vunpack.c.l.bf16 %v6875
        %v6919 = vunpack.c.h.bf16 %v6875
        %v6920 = vunpack.c.l.bf16 %v6876
        %v6921 = vunpack.c.h.bf16 %v6876
        %v6922 = vunpack.c.l.bf16 %v6877
        %v6923 = vunpack.c.h.bf16 %v6877
        %v6924 = vunpack.c.l.bf16 %v6878
        %v6925 = vunpack.c.h.bf16 %v6878
        %v6926 = vunpack.c.l.bf16 %v6879
        %v6927 = vunpack.c.h.bf16 %v6879
        %v6928 = vunpack.c.l.bf16 %v6880
        %v6929 = vunpack.c.h.bf16 %v6880
        %v6930 = vunpack.c.l.bf16 %v6881
        %v6931 = vunpack.c.h.bf16 %v6881
        %v6932 = vunpack.c.l.bf16 %v6882
        %v6933 = vunpack.c.h.bf16 %v6882
        %v6934 = vunpack.c.l.bf16 %v6883
        %v6935 = vunpack.c.h.bf16 %v6883
        %v6936 = vunpack.c.l.bf16 %v6884
        %v6937 = vunpack.c.h.bf16 %v6884
        %v6938 = vunpack.c.l.bf16 %v6885
        %v6939 = vunpack.c.h.bf16 %v6885
        %v6940 = vunpack.c.l.bf16 %v6886
        %v6941 = vunpack.c.h.bf16 %v6886
        %v6942 = vunpack.c.l.bf16 %v6887
        %v6943 = vunpack.c.h.bf16 %v6887
        %v6944 = vunpack.c.l.bf16 %v6888
        %v6945 = vunpack.c.h.bf16 %v6888
        %v6946 = vunpack.c.l.bf16 %v6889
        %v6947 = vunpack.c.h.bf16 %v6889
        %v6948 = vunpack.c.l.bf16 %v6890
        %v6949 = vunpack.c.h.bf16 %v6890
        %v6950 = vunpack.c.l.bf16 %v6891
        %v6951 = vunpack.c.h.bf16 %v6891
        %v6952 = vunpack.c.l.bf16 %v6892
        %v6953 = vunpack.c.h.bf16 %v6892
        %v6954 = vunpack.c.l.bf16 %v6893
        %v6955 = vunpack.c.h.bf16 %v6893
        %v6956 = vunpack.c.l.bf16 %v6894
        %v6957 = vunpack.c.h.bf16 %v6894
        %v6958 = vunpack.c.l.bf16 %v6895
        %v6959 = vunpack.c.h.bf16 %v6895
        %vm6960 = vcmp.gt.f32.partialorder %v6896, 0.0
        %vm6961 = vcmp.gt.f32.partialorder %v6897, 0.0
        %vm6962 = vcmp.gt.f32.partialorder %v6898, 0.0
        %vm6963 = vcmp.gt.f32.partialorder %v6899, 0.0
        %vm6964 = vcmp.gt.f32.partialorder %v6900, 0.0
        %vm6965 = vcmp.gt.f32.partialorder %v6901, 0.0
        %vm6966 = vcmp.gt.f32.partialorder %v6902, 0.0
        %vm6967 = vcmp.gt.f32.partialorder %v6903, 0.0
        %vm6968 = vcmp.gt.f32.partialorder %v6904, 0.0
        %vm6969 = vcmp.gt.f32.partialorder %v6905, 0.0
        %vm6970 = vcmp.gt.f32.partialorder %v6906, 0.0
        %vm6971 = vcmp.gt.f32.partialorder %v6907, 0.0
        %vm6972 = vcmp.gt.f32.partialorder %v6908, 0.0
        %vm6973 = vcmp.gt.f32.partialorder %v6909, 0.0
        %vm6974 = vcmp.gt.f32.partialorder %v6910, 0.0
        %vm6975 = vcmp.gt.f32.partialorder %v6911, 0.0
        %vm6976 = vcmp.gt.f32.partialorder %v6912, 0.0
        %vm6977 = vcmp.gt.f32.partialorder %v6913, 0.0
        %vm6978 = vcmp.gt.f32.partialorder %v6914, 0.0
        %vm6979 = vcmp.gt.f32.partialorder %v6915, 0.0
        %vm6980 = vcmp.gt.f32.partialorder %v6916, 0.0
        %vm6981 = vcmp.gt.f32.partialorder %v6917, 0.0
        %vm6982 = vcmp.gt.f32.partialorder %v6918, 0.0
        %vm6983 = vcmp.gt.f32.partialorder %v6919, 0.0
        %vm6984 = vcmp.gt.f32.partialorder %v6920, 0.0
        %vm6985 = vcmp.gt.f32.partialorder %v6921, 0.0
        %vm6986 = vcmp.gt.f32.partialorder %v6922, 0.0
        %vm6987 = vcmp.gt.f32.partialorder %v6923, 0.0
        %vm6988 = vcmp.gt.f32.partialorder %v6924, 0.0
        %vm6989 = vcmp.gt.f32.partialorder %v6925, 0.0
        %vm6990 = vcmp.gt.f32.partialorder %v6926, 0.0
        %vm6991 = vcmp.gt.f32.partialorder %v6927, 0.0
        %vm6992 = vcmp.gt.f32.partialorder %v6928, 0.0
        %vm6993 = vcmp.gt.f32.partialorder %v6929, 0.0
        %vm6994 = vcmp.gt.f32.partialorder %v6930, 0.0
        %vm6995 = vcmp.gt.f32.partialorder %v6931, 0.0
        %vm6996 = vcmp.gt.f32.partialorder %v6932, 0.0
        %vm6997 = vcmp.gt.f32.partialorder %v6933, 0.0
        %vm6998 = vcmp.gt.f32.partialorder %v6934, 0.0
        %vm6999 = vcmp.gt.f32.partialorder %v6935, 0.0
        %vm7000 = vcmp.gt.f32.partialorder %v6936, 0.0
        %vm7001 = vcmp.gt.f32.partialorder %v6937, 0.0
        %vm7002 = vcmp.gt.f32.partialorder %v6938, 0.0
        %vm7003 = vcmp.gt.f32.partialorder %v6939, 0.0
        %vm7004 = vcmp.gt.f32.partialorder %v6940, 0.0
        %vm7005 = vcmp.gt.f32.partialorder %v6941, 0.0
        %vm7006 = vcmp.gt.f32.partialorder %v6942, 0.0
        %vm7007 = vcmp.gt.f32.partialorder %v6943, 0.0
        %vm7008 = vcmp.gt.f32.partialorder %v6944, 0.0
        %vm7009 = vcmp.gt.f32.partialorder %v6945, 0.0
        %vm7010 = vcmp.gt.f32.partialorder %v6946, 0.0
        %vm7011 = vcmp.gt.f32.partialorder %v6947, 0.0
        %vm7012 = vcmp.gt.f32.partialorder %v6948, 0.0
        %vm7013 = vcmp.gt.f32.partialorder %v6949, 0.0
        %vm7014 = vcmp.gt.f32.partialorder %v6950, 0.0
        %vm7015 = vcmp.gt.f32.partialorder %v6951, 0.0
        %vm7016 = vcmp.gt.f32.partialorder %v6952, 0.0
        %vm7017 = vcmp.gt.f32.partialorder %v6953, 0.0
        %vm7018 = vcmp.gt.f32.partialorder %v6954, 0.0
        %vm7019 = vcmp.gt.f32.partialorder %v6955, 0.0
        %vm7020 = vcmp.gt.f32.partialorder %v6956, 0.0
        %vm7021 = vcmp.gt.f32.partialorder %v6957, 0.0
        %vm7022 = vcmp.gt.f32.partialorder %v6958, 0.0
        %vm7023 = vcmp.gt.f32.partialorder %v6959, 0.0
        %v7024 = vmul.f32 %v6896, 0.010009766
        %v7025 = vmul.f32 %v6897, 0.010009766
        %v7026 = vmul.f32 %v6898, 0.010009766
        %v7027 = vmul.f32 %v6899, 0.010009766
        %v7028 = vmul.f32 %v6900, 0.010009766
        %v7029 = vmul.f32 %v6901, 0.010009766
        %v7030 = vmul.f32 %v6902, 0.010009766
        %v7031 = vmul.f32 %v6903, 0.010009766
        %v7032 = vmul.f32 %v6904, 0.010009766
        %v7033 = vmul.f32 %v6905, 0.010009766
        %v7034 = vmul.f32 %v6906, 0.010009766
        %v7035 = vmul.f32 %v6907, 0.010009766
        %v7036 = vmul.f32 %v6908, 0.010009766
        %v7037 = vmul.f32 %v6909, 0.010009766
        %v7038 = vmul.f32 %v6910, 0.010009766
        %v7039 = vmul.f32 %v6911, 0.010009766
        %v7040 = vmul.f32 %v6912, 0.010009766
        %v7041 = vmul.f32 %v6913, 0.010009766
        %v7042 = vmul.f32 %v6914, 0.010009766
        %v7043 = vmul.f32 %v6915, 0.010009766
        %v7044 = vmul.f32 %v6916, 0.010009766
        %v7045 = vmul.f32 %v6917, 0.010009766
        %v7046 = vmul.f32 %v6918, 0.010009766
        %v7047 = vmul.f32 %v6919, 0.010009766
        %v7048 = vmul.f32 %v6920, 0.010009766
        %v7049 = vmul.f32 %v6921, 0.010009766
        %v7050 = vmul.f32 %v6922, 0.010009766
        %v7051 = vmul.f32 %v6923, 0.010009766
        %v7052 = vmul.f32 %v6924, 0.010009766
        %v7053 = vmul.f32 %v6925, 0.010009766
        %v7054 = vmul.f32 %v6926, 0.010009766
        %v7055 = vmul.f32 %v6927, 0.010009766
        %v7056 = vmul.f32 %v6928, 0.010009766
        %v7057 = vmul.f32 %v6929, 0.010009766
        %v7058 = vmul.f32 %v6930, 0.010009766
        %v7059 = vmul.f32 %v6931, 0.010009766
        %v7060 = vmul.f32 %v6932, 0.010009766
        %v7061 = vmul.f32 %v6933, 0.010009766
        %v7062 = vmul.f32 %v6934, 0.010009766
        %v7063 = vmul.f32 %v6935, 0.010009766
        %v7064 = vmul.f32 %v6936, 0.010009766
        %v7065 = vmul.f32 %v6937, 0.010009766
        %v7066 = vmul.f32 %v6938, 0.010009766
        %v7067 = vmul.f32 %v6939, 0.010009766
        %v7068 = vmul.f32 %v6940, 0.010009766
        %v7069 = vmul.f32 %v6941, 0.010009766
        %v7070 = vmul.f32 %v6942, 0.010009766
        %v7071 = vmul.f32 %v6943, 0.010009766
        %v7072 = vmul.f32 %v6944, 0.010009766
        %v7073 = vmul.f32 %v6945, 0.010009766
        %v7074 = vmul.f32 %v6946, 0.010009766
        %v7075 = vmul.f32 %v6947, 0.010009766
        %v7076 = vmul.f32 %v6948, 0.010009766
        %v7077 = vmul.f32 %v6949, 0.010009766
        %v7078 = vmul.f32 %v6950, 0.010009766
        %v7079 = vmul.f32 %v6951, 0.010009766
        %v7080 = vmul.f32 %v6952, 0.010009766
        %v7081 = vmul.f32 %v6953, 0.010009766
        %v7082 = vmul.f32 %v6954, 0.010009766
        %v7083 = vmul.f32 %v6955, 0.010009766
        %v7084 = vmul.f32 %v6956, 0.010009766
        %v7085 = vmul.f32 %v6957, 0.010009766
        %v7086 = vmul.f32 %v6958, 0.010009766
        %v7087 = vmul.f32 %v6959, 0.010009766
        %v7088 = vpack.c.bf16 %v7025, %v7024
        %v7089 = vpack.c.bf16 %v7027, %v7026
        %v7090 = vpack.c.bf16 %v7029, %v7028
        %v7091 = vpack.c.bf16 %v7031, %v7030
        %v7092 = vpack.c.bf16 %v7033, %v7032
        %v7093 = vpack.c.bf16 %v7035, %v7034
        %v7094 = vpack.c.bf16 %v7037, %v7036
        %v7095 = vpack.c.bf16 %v7039, %v7038
        %v7096 = vpack.c.bf16 %v7041, %v7040
        %v7097 = vpack.c.bf16 %v7043, %v7042
        %v7098 = vpack.c.bf16 %v7045, %v7044
        %v7099 = vpack.c.bf16 %v7047, %v7046
        %v7100 = vpack.c.bf16 %v7049, %v7048
        %v7101 = vpack.c.bf16 %v7051, %v7050
        %v7102 = vpack.c.bf16 %v7053, %v7052
        %v7103 = vpack.c.bf16 %v7055, %v7054
        %v7104 = vpack.c.bf16 %v7057, %v7056
        %v7105 = vpack.c.bf16 %v7059, %v7058
        %v7106 = vpack.c.bf16 %v7061, %v7060
        %v7107 = vpack.c.bf16 %v7063, %v7062
        %v7108 = vpack.c.bf16 %v7065, %v7064
        %v7109 = vpack.c.bf16 %v7067, %v7066
        %v7110 = vpack.c.bf16 %v7069, %v7068
        %v7111 = vpack.c.bf16 %v7071, %v7070
        %v7112 = vpack.c.bf16 %v7073, %v7072
        %v7113 = vpack.c.bf16 %v7075, %v7074
        %v7114 = vpack.c.bf16 %v7077, %v7076
        %v7115 = vpack.c.bf16 %v7079, %v7078
        %v7116 = vpack.c.bf16 %v7081, %v7080
        %v7117 = vpack.c.bf16 %v7083, %v7082
        %v7118 = vpack.c.bf16 %v7085, %v7084
        %v7119 = vpack.c.bf16 %v7087, %v7086
        %vm7120 = vmpackc.low %vm6961, %vm6960
        %vm7121 = vmpackc.low %vm6963, %vm6962
        %vm7122 = vmpackc.low %vm6965, %vm6964
        %vm7123 = vmpackc.low %vm6967, %vm6966
        %vm7124 = vmpackc.low %vm6969, %vm6968
        %vm7125 = vmpackc.low %vm6971, %vm6970
        %vm7126 = vmpackc.low %vm6973, %vm6972
        %vm7127 = vmpackc.low %vm6975, %vm6974
        %vm7128 = vmpackc.low %vm6977, %vm6976
        %vm7129 = vmpackc.low %vm6979, %vm6978
        %vm7130 = vmpackc.low %vm6981, %vm6980
        %vm7131 = vmpackc.low %vm6983, %vm6982
        %vm7132 = vmpackc.low %vm6985, %vm6984
        %vm7133 = vmpackc.low %vm6987, %vm6986
        %vm7134 = vmpackc.low %vm6989, %vm6988
        %vm7135 = vmpackc.low %vm6991, %vm6990
        %vm7136 = vmpackc.low %vm6993, %vm6992
        %vm7137 = vmpackc.low %vm6995, %vm6994
        %vm7138 = vmpackc.low %vm6997, %vm6996
        %vm7139 = vmpackc.low %vm6999, %vm6998
        %vm7140 = vmpackc.low %vm7001, %vm7000
        %vm7141 = vmpackc.low %vm7003, %vm7002
        %vm7142 = vmpackc.low %vm7005, %vm7004
        %vm7143 = vmpackc.low %vm7007, %vm7006
        %vm7144 = vmpackc.low %vm7009, %vm7008
        %vm7145 = vmpackc.low %vm7011, %vm7010
        %vm7146 = vmpackc.low %vm7013, %vm7012
        %vm7147 = vmpackc.low %vm7015, %vm7014
        %vm7148 = vmpackc.low %vm7017, %vm7016
        %vm7149 = vmpackc.low %vm7019, %vm7018
        %vm7150 = vmpackc.low %vm7021, %vm7020
        %vm7151 = vmpackc.low %vm7023, %vm7022
        %v7152 = vsel %vm7120, %v6864, %v7088
        %v7153 = vsel %vm7121, %v6865, %v7089
        %v7154 = vsel %vm7122, %v6866, %v7090
        %v7155 = vsel %vm7123, %v6867, %v7091
        %v7156 = vsel %vm7124, %v6868, %v7092
        %v7157 = vsel %vm7125, %v6869, %v7093
        %v7158 = vsel %vm7126, %v6870, %v7094
        %v7159 = vsel %vm7127, %v6871, %v7095
        %v7160 = vsel %vm7128, %v6872, %v7096
        %v7161 = vsel %vm7129, %v6873, %v7097
        %v7162 = vsel %vm7130, %v6874, %v7098
        %v7163 = vsel %vm7131, %v6875, %v7099
        %v7164 = vsel %vm7132, %v6876, %v7100
        %v7165 = vsel %vm7133, %v6877, %v7101
        %v7166 = vsel %vm7134, %v6878, %v7102
        %v7167 = vsel %vm7135, %v6879, %v7103
        %v7168 = vsel %vm7136, %v6880, %v7104
        %v7169 = vsel %vm7137, %v6881, %v7105
        %v7170 = vsel %vm7138, %v6882, %v7106
        %v7171 = vsel %vm7139, %v6883, %v7107
        %v7172 = vsel %vm7140, %v6884, %v7108
        %v7173 = vsel %vm7141, %v6885, %v7109
        %v7174 = vsel %vm7142, %v6886, %v7110
        %v7175 = vsel %vm7143, %v6887, %v7111
        %v7176 = vsel %vm7144, %v6888, %v7112
        %v7177 = vsel %vm7145, %v6889, %v7113
        %v7178 = vsel %vm7146, %v6890, %v7114
        %v7179 = vsel %vm7147, %v6891, %v7115
        %v7180 = vsel %vm7148, %v6892, %v7116
        %v7181 = vsel %vm7149, %v6893, %v7117
        %v7182 = vsel %vm7150, %v6894, %v7118
        %v7183 = vsel %vm7151, %v6895, %v7119
        %v7184 = vld [vmem:[%s9] sm:$0xff]
        %v7185 = vld [vmem:[%s9 + $0x8] sm:$0xff]
        %v7186 = vld [vmem:[%s9 + $0x10] sm:$0xff]
        %v7187 = vld [vmem:[%s9 + $0x18] sm:$0xff]
        %v7188 = vld [vmem:[%s9 + $0x20] sm:$0xff]
        %v7189 = vld [vmem:[%s9 + $0x28] sm:$0xff]
        %v7190 = vld [vmem:[%s9 + $0x30] sm:$0xff]
        %v7191 = vld [vmem:[%s9 + $0x38] sm:$0xff]
        %v7192 = vld [vmem:[%s9 + $0x40] sm:$0xff]
        %v7193 = vld [vmem:[%s9 + $0x48] sm:$0xff]
        %v7194 = vld [vmem:[%s9 + $0x50] sm:$0xff]
        %v7195 = vld [vmem:[%s9 + $0x58] sm:$0xff]
        %v7196 = vld [vmem:[%s9 + $0x60] sm:$0xff]
        %v7197 = vld [vmem:[%s9 + $0x68] sm:$0xff]
        %v7198 = vld [vmem:[%s9 + $0x70] sm:$0xff]
        %v7199 = vld [vmem:[%s9 + $0x78] sm:$0xff]
        %v7200 = vld [vmem:[%s9 + $0x80] sm:$0xff]
        %v7201 = vld [vmem:[%s9 + $0x88] sm:$0xff]
        %v7202 = vld [vmem:[%s9 + $0x90] sm:$0xff]
        %v7203 = vld [vmem:[%s9 + $0x98] sm:$0xff]
        %v7204 = vld [vmem:[%s9 + $0xa0] sm:$0xff]
        %v7205 = vld [vmem:[%s9 + $0xa8] sm:$0xff]
        %v7206 = vld [vmem:[%s9 + $0xb0] sm:$0xff]
        %v7207 = vld [vmem:[%s9 + $0xb8] sm:$0xff]
        %v7208 = vld [vmem:[%s9 + $0xc0] sm:$0xff]
        %v7209 = vld [vmem:[%s9 + $0xc8] sm:$0xff]
        %v7210 = vld [vmem:[%s9 + $0xd0] sm:$0xff]
        %v7211 = vld [vmem:[%s9 + $0xd8] sm:$0xff]
        %v7212 = vld [vmem:[%s9 + $0xe0] sm:$0xff]
        %v7213 = vld [vmem:[%s9 + $0xe8] sm:$0xff]
        %v7214 = vld [vmem:[%s9 + $0xf0] sm:$0xff]
        %v7215 = vld [vmem:[%s9 + $0xf8] sm:$0xff]
        %v7216 = vld [vmem:[%s9 + $0x100] sm:$0xff]
        %v7217 = vld [vmem:[%s9 + $0x108] sm:$0xff]
        %v7218 = vld [vmem:[%s9 + $0x110] sm:$0xff]
        %v7219 = vld [vmem:[%s9 + $0x118] sm:$0xff]
        %v7220 = vld [vmem:[%s9 + $0x120] sm:$0xff]
        %v7221 = vld [vmem:[%s9 + $0x128] sm:$0xff]
        %v7222 = vld [vmem:[%s9 + $0x130] sm:$0xff]
        %v7223 = vld [vmem:[%s9 + $0x138] sm:$0xff]
        %v7224 = vld [vmem:[%s9 + $0x140] sm:$0xff]
        %v7225 = vld [vmem:[%s9 + $0x148] sm:$0xff]
        %v7226 = vld [vmem:[%s9 + $0x150] sm:$0xff]
        %v7227 = vld [vmem:[%s9 + $0x158] sm:$0xff]
        %v7228 = vld [vmem:[%s9 + $0x160] sm:$0xff]
        %v7229 = vld [vmem:[%s9 + $0x168] sm:$0xff]
        %v7230 = vld [vmem:[%s9 + $0x170] sm:$0xff]
        %v7231 = vld [vmem:[%s9 + $0x178] sm:$0xff]
        %v7232 = vld [vmem:[%s9 + $0x180] sm:$0xff]
        %v7233 = vld [vmem:[%s9 + $0x188] sm:$0xff]
        %v7234 = vld [vmem:[%s9 + $0x190] sm:$0xff]
        %v7235 = vld [vmem:[%s9 + $0x198] sm:$0xff]
        %v7236 = vld [vmem:[%s9 + $0x1a0] sm:$0xff]
        %v7237 = vld [vmem:[%s9 + $0x1a8] sm:$0xff]
        %v7238 = vld [vmem:[%s9 + $0x1b0] sm:$0xff]
        %v7239 = vld [vmem:[%s9 + $0x1b8] sm:$0xff]
        %v7240 = vld [vmem:[%s9 + $0x1c0] sm:$0xff]
        %v7241 = vld [vmem:[%s9 + $0x1c8] sm:$0xff]
        %v7242 = vld [vmem:[%s9 + $0x1d0] sm:$0xff]
        %v7243 = vld [vmem:[%s9 + $0x1d8] sm:$0xff]
        %v7244 = vld [vmem:[%s9 + $0x1e0] sm:$0xff]
        %v7245 = vld [vmem:[%s9 + $0x1e8] sm:$0xff]
        %v7246 = vld [vmem:[%s9 + $0x1f0] sm:$0xff]
        %v7247 = vld [vmem:[%s9 + $0x1f8] sm:$0xff]
        %v7248 = vld [vmem:[%s19] sm:$0xf]
        %v7250 = vperm.slane %v7248, 0
        %v7251 = vperm.slane %v7248, 1
        %v7252 = vperm.slane %v7248, 2
        %v7253 = vperm.slane %v7248, 3
        %v7290 = vunpack.c.l.b16 %v7152
        %v7291 = vunpack.c.h.b16 %v7152
        %v7292 = vunpack.c.l.b16 %v7153
        %v7293 = vunpack.c.h.b16 %v7153
        %v7294 = vunpack.c.l.b16 %v7154
        %v7295 = vunpack.c.h.b16 %v7154
        %v7296 = vunpack.c.l.b16 %v7155
        %v7297 = vunpack.c.h.b16 %v7155
        %v7298 = vunpack.c.l.b16 %v7156
        %v7299 = vunpack.c.h.b16 %v7156
        %v7300 = vunpack.c.l.b16 %v7157
        %v7301 = vunpack.c.h.b16 %v7157
        %v7302 = vunpack.c.l.b16 %v7158
        %v7303 = vunpack.c.h.b16 %v7158
        %v7304 = vunpack.c.l.b16 %v7159
        %v7305 = vunpack.c.h.b16 %v7159
        %v7306 = vunpack.c.l.b16 %v7160
        %v7307 = vunpack.c.h.b16 %v7160
        %v7308 = vunpack.c.l.b16 %v7161
        %v7309 = vunpack.c.h.b16 %v7161
        %v7310 = vunpack.c.l.b16 %v7162
        %v7311 = vunpack.c.h.b16 %v7162
        %v7312 = vunpack.c.l.b16 %v7163
        %v7313 = vunpack.c.h.b16 %v7163
        %v7314 = vunpack.c.l.b16 %v7164
        %v7315 = vunpack.c.h.b16 %v7164
        %v7316 = vunpack.c.l.b16 %v7165
        %v7317 = vunpack.c.h.b16 %v7165
        %v7318 = vunpack.c.l.b16 %v7166
        %v7319 = vunpack.c.h.b16 %v7166
        %v7320 = vunpack.c.l.b16 %v7167
        %v7321 = vunpack.c.h.b16 %v7167
        %v7322 = vunpack.c.l.b16 %v7168
        %v7323 = vunpack.c.h.b16 %v7168
        %v7324 = vunpack.c.l.b16 %v7169
        %v7325 = vunpack.c.h.b16 %v7169
        %v7326 = vunpack.c.l.b16 %v7170
        %v7327 = vunpack.c.h.b16 %v7170
        %v7328 = vunpack.c.l.b16 %v7171
        %v7329 = vunpack.c.h.b16 %v7171
        %v7330 = vunpack.c.l.b16 %v7172
        %v7331 = vunpack.c.h.b16 %v7172
        %v7332 = vunpack.c.l.b16 %v7173
        %v7333 = vunpack.c.h.b16 %v7173
        %v7334 = vunpack.c.l.b16 %v7174
        %v7335 = vunpack.c.h.b16 %v7174
        %v7336 = vunpack.c.l.b16 %v7175
        %v7337 = vunpack.c.h.b16 %v7175
        %v7338 = vunpack.c.l.b16 %v7176
        %v7339 = vunpack.c.h.b16 %v7176
        %v7340 = vunpack.c.l.b16 %v7177
        %v7341 = vunpack.c.h.b16 %v7177
        %v7342 = vunpack.c.l.b16 %v7178
        %v7343 = vunpack.c.h.b16 %v7178
        %v7344 = vunpack.c.l.b16 %v7179
        %v7345 = vunpack.c.h.b16 %v7179
        %v7346 = vunpack.c.l.b16 %v7180
        %v7347 = vunpack.c.h.b16 %v7180
        %v7348 = vunpack.c.l.b16 %v7181
        %v7349 = vunpack.c.h.b16 %v7181
        %v7350 = vunpack.c.l.b16 %v7182
        %v7351 = vunpack.c.h.b16 %v7182
        %v7352 = vunpack.c.l.b16 %v7183
        %v7353 = vunpack.c.h.b16 %v7183
        %v7354 = vpack.c.b16 %v7292, %v7290
        %v7355 = vpack.c.b16 %v7293, %v7291
        %v7356 = vpack.c.b16 %v7296, %v7294
        %v7357 = vpack.c.b16 %v7297, %v7295
        %v7358 = vpack.c.b16 %v7300, %v7298
        %v7359 = vpack.c.b16 %v7301, %v7299
        %v7360 = vpack.c.b16 %v7304, %v7302
        %v7361 = vpack.c.b16 %v7305, %v7303
        %v7362 = vpack.c.b16 %v7308, %v7306
        %v7363 = vpack.c.b16 %v7309, %v7307
        %v7364 = vpack.c.b16 %v7312, %v7310
        %v7365 = vpack.c.b16 %v7313, %v7311
        %v7366 = vpack.c.b16 %v7316, %v7314
        %v7367 = vpack.c.b16 %v7317, %v7315
        %v7368 = vpack.c.b16 %v7320, %v7318
        %v7369 = vpack.c.b16 %v7321, %v7319
        %v7370 = vpack.c.b16 %v7324, %v7322
        %v7371 = vpack.c.b16 %v7325, %v7323
        %v7372 = vpack.c.b16 %v7328, %v7326
        %v7373 = vpack.c.b16 %v7329, %v7327
        %v7374 = vpack.c.b16 %v7332, %v7330
        %v7375 = vpack.c.b16 %v7333, %v7331
        %v7376 = vpack.c.b16 %v7336, %v7334
        %v7377 = vpack.c.b16 %v7337, %v7335
        %v7378 = vpack.c.b16 %v7340, %v7338
        %v7379 = vpack.c.b16 %v7341, %v7339
        %v7380 = vpack.c.b16 %v7344, %v7342
        %v7381 = vpack.c.b16 %v7345, %v7343
        %v7382 = vpack.c.b16 %v7348, %v7346
        %v7383 = vpack.c.b16 %v7349, %v7347
        %v7384 = vpack.c.b16 %v7352, %v7350
        %v7385 = vpack.c.b16 %v7353, %v7351
        %v7482 = vunpack.c.l.b16 %v7184
        %v7483 = vunpack.c.h.b16 %v7184
        %v7484 = vunpack.c.l.b16 %v7185
        %v7485 = vunpack.c.h.b16 %v7185
        %v7486 = vunpack.c.l.b16 %v7186
        %v7487 = vunpack.c.h.b16 %v7186
        %v7488 = vunpack.c.l.b16 %v7187
        %v7489 = vunpack.c.h.b16 %v7187
        %v7490 = vunpack.c.l.b16 %v7188
        %v7491 = vunpack.c.h.b16 %v7188
        %v7492 = vunpack.c.l.b16 %v7189
        %v7493 = vunpack.c.h.b16 %v7189
        %v7494 = vunpack.c.l.b16 %v7190
        %v7495 = vunpack.c.h.b16 %v7190
        %v7496 = vunpack.c.l.b16 %v7191
        %v7497 = vunpack.c.h.b16 %v7191
        %v7498 = vunpack.c.l.b16 %v7192
        %v7499 = vunpack.c.h.b16 %v7192
        %v7500 = vunpack.c.l.b16 %v7193
        %v7501 = vunpack.c.h.b16 %v7193
        %v7502 = vunpack.c.l.b16 %v7194
        %v7503 = vunpack.c.h.b16 %v7194
        %v7504 = vunpack.c.l.b16 %v7195
        %v7505 = vunpack.c.h.b16 %v7195
        %v7506 = vunpack.c.l.b16 %v7196
        %v7507 = vunpack.c.h.b16 %v7196
        %v7508 = vunpack.c.l.b16 %v7197
        %v7509 = vunpack.c.h.b16 %v7197
        %v7510 = vunpack.c.l.b16 %v7198
        %v7511 = vunpack.c.h.b16 %v7198
        %v7512 = vunpack.c.l.b16 %v7199
        %v7513 = vunpack.c.h.b16 %v7199
        %v7514 = vunpack.c.l.b16 %v7200
        %v7515 = vunpack.c.h.b16 %v7200
        %v7516 = vunpack.c.l.b16 %v7201
        %v7517 = vunpack.c.h.b16 %v7201
        %v7518 = vunpack.c.l.b16 %v7202
        %v7519 = vunpack.c.h.b16 %v7202
        %v7520 = vunpack.c.l.b16 %v7203
        %v7521 = vunpack.c.h.b16 %v7203
        %v7522 = vunpack.c.l.b16 %v7204
        %v7523 = vunpack.c.h.b16 %v7204
        %v7524 = vunpack.c.l.b16 %v7205
        %v7525 = vunpack.c.h.b16 %v7205
        %v7526 = vunpack.c.l.b16 %v7206
        %v7527 = vunpack.c.h.b16 %v7206
        %v7528 = vunpack.c.l.b16 %v7207
        %v7529 = vunpack.c.h.b16 %v7207
        %v7530 = vunpack.c.l.b16 %v7208
        %v7531 = vunpack.c.h.b16 %v7208
        %v7532 = vunpack.c.l.b16 %v7209
        %v7533 = vunpack.c.h.b16 %v7209
        %v7534 = vunpack.c.l.b16 %v7210
        %v7535 = vunpack.c.h.b16 %v7210
        %v7536 = vunpack.c.l.b16 %v7211
        %v7537 = vunpack.c.h.b16 %v7211
        %v7538 = vunpack.c.l.b16 %v7212
        %v7539 = vunpack.c.h.b16 %v7212
        %v7540 = vunpack.c.l.b16 %v7213
        %v7541 = vunpack.c.h.b16 %v7213
        %v7542 = vunpack.c.l.b16 %v7214
        %v7543 = vunpack.c.h.b16 %v7214
        %v7544 = vunpack.c.l.b16 %v7215
        %v7545 = vunpack.c.h.b16 %v7215
        %v7546 = vunpack.c.l.b16 %v7216
        %v7547 = vunpack.c.h.b16 %v7216
        %v7548 = vunpack.c.l.b16 %v7217
        %v7549 = vunpack.c.h.b16 %v7217
        %v7550 = vunpack.c.l.b16 %v7218
        %v7551 = vunpack.c.h.b16 %v7218
        %v7552 = vunpack.c.l.b16 %v7219
        %v7553 = vunpack.c.h.b16 %v7219
        %v7554 = vunpack.c.l.b16 %v7220
        %v7555 = vunpack.c.h.b16 %v7220
        %v7556 = vunpack.c.l.b16 %v7221
        %v7557 = vunpack.c.h.b16 %v7221
        %v7558 = vunpack.c.l.b16 %v7222
        %v7559 = vunpack.c.h.b16 %v7222
        %v7560 = vunpack.c.l.b16 %v7223
        %v7561 = vunpack.c.h.b16 %v7223
        %v7562 = vunpack.c.l.b16 %v7224
        %v7563 = vunpack.c.h.b16 %v7224
        %v7564 = vunpack.c.l.b16 %v7225
        %v7565 = vunpack.c.h.b16 %v7225
        %v7566 = vunpack.c.l.b16 %v7226
        %v7567 = vunpack.c.h.b16 %v7226
        %v7568 = vunpack.c.l.b16 %v7227
        %v7569 = vunpack.c.h.b16 %v7227
        %v7570 = vunpack.c.l.b16 %v7228
        %v7571 = vunpack.c.h.b16 %v7228
        %v7572 = vunpack.c.l.b16 %v7229
        %v7573 = vunpack.c.h.b16 %v7229
        %v7574 = vunpack.c.l.b16 %v7230
        %v7575 = vunpack.c.h.b16 %v7230
        %v7576 = vunpack.c.l.b16 %v7231
        %v7577 = vunpack.c.h.b16 %v7231
        %v7578 = vunpack.c.l.b16 %v7232
        %v7579 = vunpack.c.h.b16 %v7232
        %v7580 = vunpack.c.l.b16 %v7233
        %v7581 = vunpack.c.h.b16 %v7233
        %v7582 = vunpack.c.l.b16 %v7234
        %v7583 = vunpack.c.h.b16 %v7234
        %v7584 = vunpack.c.l.b16 %v7235
        %v7585 = vunpack.c.h.b16 %v7235
        %v7586 = vunpack.c.l.b16 %v7236
        %v7587 = vunpack.c.h.b16 %v7236
        %v7588 = vunpack.c.l.b16 %v7237
        %v7589 = vunpack.c.h.b16 %v7237
        %v7590 = vunpack.c.l.b16 %v7238
        %v7591 = vunpack.c.h.b16 %v7238
        %v7592 = vunpack.c.l.b16 %v7239
        %v7593 = vunpack.c.h.b16 %v7239
        %v7594 = vunpack.c.l.b16 %v7240
        %v7595 = vunpack.c.h.b16 %v7240
        %v7596 = vunpack.c.l.b16 %v7241
        %v7597 = vunpack.c.h.b16 %v7241
        %v7598 = vunpack.c.l.b16 %v7242
        %v7599 = vunpack.c.h.b16 %v7242
        %v7600 = vunpack.c.l.b16 %v7243
        %v7601 = vunpack.c.h.b16 %v7243
        %v7602 = vunpack.c.l.b16 %v7244
        %v7603 = vunpack.c.h.b16 %v7244
        %v7604 = vunpack.c.l.b16 %v7245
        %v7605 = vunpack.c.h.b16 %v7245
        %v7606 = vunpack.c.l.b16 %v7246
        %v7607 = vunpack.c.h.b16 %v7246
        %v7608 = vunpack.c.l.b16 %v7247
        %v7609 = vunpack.c.h.b16 %v7247
        %v7610 = vpack.c.b16 %v7486, %v7482
        %v7611 = vpack.c.b16 %v7487, %v7483
        %v7612 = vpack.c.b16 %v7488, %v7484
        %v7613 = vpack.c.b16 %v7489, %v7485
        %v7614 = vpack.c.b16 %v7494, %v7490
        %v7615 = vpack.c.b16 %v7495, %v7491
        %v7616 = vpack.c.b16 %v7496, %v7492
        %v7617 = vpack.c.b16 %v7497, %v7493
        %v7618 = vpack.c.b16 %v7502, %v7498
        %v7619 = vpack.c.b16 %v7503, %v7499
        %v7620 = vpack.c.b16 %v7504, %v7500
        %v7621 = vpack.c.b16 %v7505, %v7501
        %v7622 = vpack.c.b16 %v7510, %v7506
        %v7623 = vpack.c.b16 %v7511, %v7507
        %v7624 = vpack.c.b16 %v7512, %v7508
        %v7625 = vpack.c.b16 %v7513, %v7509
        %v7626 = vpack.c.b16 %v7518, %v7514
        %v7627 = vpack.c.b16 %v7519, %v7515
        %v7628 = vpack.c.b16 %v7520, %v7516
        %v7629 = vpack.c.b16 %v7521, %v7517
        %v7630 = vpack.c.b16 %v7526, %v7522
        %v7631 = vpack.c.b16 %v7527, %v7523
        %v7632 = vpack.c.b16 %v7528, %v7524
        %v7633 = vpack.c.b16 %v7529, %v7525
        %v7634 = vpack.c.b16 %v7534, %v7530
        %v7635 = vpack.c.b16 %v7535, %v7531
        %v7636 = vpack.c.b16 %v7536, %v7532
        %v7637 = vpack.c.b16 %v7537, %v7533
        %v7638 = vpack.c.b16 %v7542, %v7538
        %v7639 = vpack.c.b16 %v7543, %v7539
        %v7640 = vpack.c.b16 %v7544, %v7540
        %v7641 = vpack.c.b16 %v7545, %v7541
        %v7642 = vpack.c.b16 %v7550, %v7546
        %v7643 = vpack.c.b16 %v7551, %v7547
        %v7644 = vpack.c.b16 %v7552, %v7548
        %v7645 = vpack.c.b16 %v7553, %v7549
        %v7646 = vpack.c.b16 %v7558, %v7554
        %v7647 = vpack.c.b16 %v7559, %v7555
        %v7648 = vpack.c.b16 %v7560, %v7556
        %v7649 = vpack.c.b16 %v7561, %v7557
        %v7650 = vpack.c.b16 %v7566, %v7562
        %v7651 = vpack.c.b16 %v7567, %v7563
        %v7652 = vpack.c.b16 %v7568, %v7564
        %v7653 = vpack.c.b16 %v7569, %v7565
        %v7654 = vpack.c.b16 %v7574, %v7570
        %v7655 = vpack.c.b16 %v7575, %v7571
        %v7656 = vpack.c.b16 %v7576, %v7572
        %v7657 = vpack.c.b16 %v7577, %v7573
        %v7658 = vpack.c.b16 %v7582, %v7578
        %v7659 = vpack.c.b16 %v7583, %v7579
        %v7660 = vpack.c.b16 %v7584, %v7580
        %v7661 = vpack.c.b16 %v7585, %v7581
        %v7662 = vpack.c.b16 %v7590, %v7586
        %v7663 = vpack.c.b16 %v7591, %v7587
        %v7664 = vpack.c.b16 %v7592, %v7588
        %v7665 = vpack.c.b16 %v7593, %v7589
        %v7666 = vpack.c.b16 %v7598, %v7594
        %v7667 = vpack.c.b16 %v7599, %v7595
        %v7668 = vpack.c.b16 %v7600, %v7596
        %v7669 = vpack.c.b16 %v7601, %v7597
        %v7670 = vpack.c.b16 %v7606, %v7602
        %v7671 = vpack.c.b16 %v7607, %v7603
        %v7672 = vpack.c.b16 %v7608, %v7604
        %v7673 = vpack.c.b16 %v7609, %v7605
        %7738 = vmatpush.bf16.msra.mxu0 %v7638
        %7739 = vmatpush.bf16.msra.mxu0 %v7634
        %7740 = vmatpush.bf16.msra.mxu0 %v7630
        %7741 = vmatpush.bf16.msra.mxu0 %v7626
        %7742 = vmatpush.bf16.msra.mxu0 %v7622
        %7743 = vmatpush.bf16.msra.mxu0 %v7618
        %7744 = vmatpush.bf16.msra.mxu0 %v7614
        %7745 = vmatpush.bf16.msra.mxu0 %v7610
        %7746 = vmatmul.bf16.gmra.mxu0 %v7354
        %v7747 = vpop.f32.mrf.mxu0
        %v7748 = vadd.f32 %v7250, %v7747
        %v7749 = vpop.f32.mrf.mxu0
        %v7750 = vadd.f32 %v7250, %v7749
        %7751 = vmatmul.bf16.gmra.mxu0 %v7356
        %v7752 = vpop.f32.mrf.mxu0
        %v7753 = vadd.f32 %v7250, %v7752
        %v7754 = vpop.f32.mrf.mxu0
        %v7755 = vadd.f32 %v7250, %v7754
        %7756 = vmatmul.bf16.gmra.mxu0 %v7358
        %v7757 = vpop.f32.mrf.mxu0
        %v7758 = vadd.f32 %v7250, %v7757
        %v7759 = vpop.f32.mrf.mxu0
        %v7760 = vadd.f32 %v7250, %v7759
        %7761 = vmatmul.bf16.gmra.mxu0 %v7360
        %v7762 = vpop.f32.mrf.mxu0
        %v7763 = vadd.f32 %v7250, %v7762
        %v7764 = vpop.f32.mrf.mxu0
        %v7765 = vadd.f32 %v7250, %v7764
        %7766 = vmatmul.bf16.gmra.mxu0 %v7362
        %v7767 = vpop.f32.mrf.mxu0
        %v7768 = vadd.f32 %v7250, %v7767
        %v7769 = vpop.f32.mrf.mxu0
        %v7770 = vadd.f32 %v7250, %v7769
        %7771 = vmatmul.bf16.gmra.mxu0 %v7364
        %v7772 = vpop.f32.mrf.mxu0
        %v7773 = vadd.f32 %v7250, %v7772
        %v7774 = vpop.f32.mrf.mxu0
        %v7775 = vadd.f32 %v7250, %v7774
        %7776 = vmatmul.bf16.gmra.mxu0 %v7366
        %v7777 = vpop.f32.mrf.mxu0
        %v7778 = vadd.f32 %v7250, %v7777
        %v7779 = vpop.f32.mrf.mxu0
        %v7780 = vadd.f32 %v7250, %v7779
        %7781 = vmatmul.bf16.gmra.mxu0 %v7368
        %v7782 = vpop.f32.mrf.mxu0
        %v7783 = vadd.f32 %v7250, %v7782
        %v7784 = vpop.f32.mrf.mxu0
        %v7785 = vadd.f32 %v7250, %v7784
        %7786 = vmatmul.bf16.gmra.mxu0 %v7370
        %v7787 = vpop.f32.mrf.mxu0
        %v7788 = vadd.f32 %v7250, %v7787
        %v7789 = vpop.f32.mrf.mxu0
        %v7790 = vadd.f32 %v7250, %v7789
        %7791 = vmatmul.bf16.gmra.mxu0 %v7372
        %v7792 = vpop.f32.mrf.mxu0
        %v7793 = vadd.f32 %v7250, %v7792
        %v7794 = vpop.f32.mrf.mxu0
        %v7795 = vadd.f32 %v7250, %v7794
        %7796 = vmatmul.bf16.gmra.mxu0 %v7374
        %v7797 = vpop.f32.mrf.mxu0
        %v7798 = vadd.f32 %v7250, %v7797
        %v7799 = vpop.f32.mrf.mxu0
        %v7800 = vadd.f32 %v7250, %v7799
        %7801 = vmatmul.bf16.gmra.mxu0 %v7376
        %v7802 = vpop.f32.mrf.mxu0
        %v7803 = vadd.f32 %v7250, %v7802
        %v7804 = vpop.f32.mrf.mxu0
        %v7805 = vadd.f32 %v7250, %v7804
        %7806 = vmatmul.bf16.gmra.mxu0 %v7378
        %v7807 = vpop.f32.mrf.mxu0
        %v7808 = vadd.f32 %v7250, %v7807
        %v7809 = vpop.f32.mrf.mxu0
        %v7810 = vadd.f32 %v7250, %v7809
        %7811 = vmatmul.bf16.gmra.mxu0 %v7380
        %v7812 = vpop.f32.mrf.mxu0
        %v7813 = vadd.f32 %v7250, %v7812
        %v7814 = vpop.f32.mrf.mxu0
        %v7815 = vadd.f32 %v7250, %v7814
        %7816 = vmatmul.bf16.gmra.mxu0 %v7382
        %v7817 = vpop.f32.mrf.mxu0
        %v7818 = vadd.f32 %v7250, %v7817
        %v7819 = vpop.f32.mrf.mxu0
        %v7820 = vadd.f32 %v7250, %v7819
        %7821 = vmatmul.bf16.gmra.mxu0 %v7384
        %v7822 = vpop.f32.mrf.mxu0
        %v7823 = vadd.f32 %v7250, %v7822
        %v7824 = vpop.f32.mrf.mxu0
        %v7825 = vadd.f32 %v7250, %v7824
        %7826 = vdwg.mxu0
        %7827 = vmatpush.bf16.msra.mxu0 %v7670
        %7828 = vmatpush.bf16.msra.mxu0 %v7666
        %7829 = vmatpush.bf16.msra.mxu0 %v7662
        %7830 = vmatpush.bf16.msra.mxu0 %v7658
        %7831 = vmatpush.bf16.msra.mxu0 %v7654
        %7832 = vmatpush.bf16.msra.mxu0 %v7650
        %7833 = vmatpush.bf16.msra.mxu0 %v7646
        %7834 = vmatpush.bf16.msra.mxu0 %v7642
        %7835 = vmatmul.bf16.gmra.mxu0 %v7355
        %v7836 = vpop.f32.mrf.mxu0
        %v7837 = vadd.f32 %v7748, %v7836
        %v7838 = vpop.f32.mrf.mxu0
        %v7839 = vadd.f32 %v7750, %v7838
        %7840 = vmatmul.bf16.gmra.mxu0 %v7357
        %v7841 = vpop.f32.mrf.mxu0
        %v7842 = vadd.f32 %v7753, %v7841
        %v7843 = vpop.f32.mrf.mxu0
        %v7844 = vadd.f32 %v7755, %v7843
        %7845 = vmatmul.bf16.gmra.mxu0 %v7359
        %v7846 = vpop.f32.mrf.mxu0
        %v7847 = vadd.f32 %v7758, %v7846
        %v7848 = vpop.f32.mrf.mxu0
        %v7849 = vadd.f32 %v7760, %v7848
        %7850 = vmatmul.bf16.gmra.mxu0 %v7361
        %v7851 = vpop.f32.mrf.mxu0
        %v7852 = vadd.f32 %v7763, %v7851
        %v7853 = vpop.f32.mrf.mxu0
        %v7854 = vadd.f32 %v7765, %v7853
        %7855 = vmatmul.bf16.gmra.mxu0 %v7363
        %v7856 = vpop.f32.mrf.mxu0
        %v7857 = vadd.f32 %v7768, %v7856
        %v7858 = vpop.f32.mrf.mxu0
        %v7859 = vadd.f32 %v7770, %v7858
        %7860 = vmatmul.bf16.gmra.mxu0 %v7365
        %v7861 = vpop.f32.mrf.mxu0
        %v7862 = vadd.f32 %v7773, %v7861
        %v7863 = vpop.f32.mrf.mxu0
        %v7864 = vadd.f32 %v7775, %v7863
        %7865 = vmatmul.bf16.gmra.mxu0 %v7367
        %v7866 = vpop.f32.mrf.mxu0
        %v7867 = vadd.f32 %v7778, %v7866
        %v7868 = vpop.f32.mrf.mxu0
        %v7869 = vadd.f32 %v7780, %v7868
        %7870 = vmatmul.bf16.gmra.mxu0 %v7369
        %v7871 = vpop.f32.mrf.mxu0
        %v7872 = vadd.f32 %v7783, %v7871
        %v7873 = vpop.f32.mrf.mxu0
        %v7874 = vadd.f32 %v7785, %v7873
        %7875 = vmatmul.bf16.gmra.mxu0 %v7371
        %v7876 = vpop.f32.mrf.mxu0
        %v7877 = vadd.f32 %v7788, %v7876
        %v7878 = vpop.f32.mrf.mxu0
        %v7879 = vadd.f32 %v7790, %v7878
        %7880 = vmatmul.bf16.gmra.mxu0 %v7373
        %v7881 = vpop.f32.mrf.mxu0
        %v7882 = vadd.f32 %v7793, %v7881
        %v7883 = vpop.f32.mrf.mxu0
        %v7884 = vadd.f32 %v7795, %v7883
        %7885 = vmatmul.bf16.gmra.mxu0 %v7375
        %v7886 = vpop.f32.mrf.mxu0
        %v7887 = vadd.f32 %v7798, %v7886
        %v7888 = vpop.f32.mrf.mxu0
        %v7889 = vadd.f32 %v7800, %v7888
        %7890 = vmatmul.bf16.gmra.mxu0 %v7377
        %v7891 = vpop.f32.mrf.mxu0
        %v7892 = vadd.f32 %v7803, %v7891
        %v7893 = vpop.f32.mrf.mxu0
        %v7894 = vadd.f32 %v7805, %v7893
        %7895 = vmatmul.bf16.gmra.mxu0 %v7379
        %v7896 = vpop.f32.mrf.mxu0
        %v7897 = vadd.f32 %v7808, %v7896
        %v7898 = vpop.f32.mrf.mxu0
        %v7899 = vadd.f32 %v7810, %v7898
        %7900 = vmatmul.bf16.gmra.mxu0 %v7381
        %v7901 = vpop.f32.mrf.mxu0
        %v7902 = vadd.f32 %v7813, %v7901
        %v7903 = vpop.f32.mrf.mxu0
        %v7904 = vadd.f32 %v7815, %v7903
        %7905 = vmatmul.bf16.gmra.mxu0 %v7383
        %v7906 = vpop.f32.mrf.mxu0
        %v7907 = vadd.f32 %v7818, %v7906
        %v7908 = vpop.f32.mrf.mxu0
        %v7909 = vadd.f32 %v7820, %v7908
        %7910 = vmatmul.bf16.gmra.mxu0 %v7385
        %v7911 = vpop.f32.mrf.mxu0
        %v7912 = vadd.f32 %v7823, %v7911
        %v7913 = vpop.f32.mrf.mxu0
        %v7914 = vadd.f32 %v7825, %v7913
        %7915 = vdwg.mxu0
        %7916 = vmatpush.bf16.msra.mxu0 %v7639
        %7917 = vmatpush.bf16.msra.mxu0 %v7635
        %7918 = vmatpush.bf16.msra.mxu0 %v7631
        %7919 = vmatpush.bf16.msra.mxu0 %v7627
        %7920 = vmatpush.bf16.msra.mxu0 %v7623
        %7921 = vmatpush.bf16.msra.mxu0 %v7619
        %7922 = vmatpush.bf16.msra.mxu0 %v7615
        %7923 = vmatpush.bf16.msra.mxu0 %v7611
        %7924 = vmatmul.bf16.gmra.mxu0 %v7354
        %v7925 = vpop.f32.mrf.mxu0
        %v7926 = vadd.f32 %v7251, %v7925
        %v7927 = vpop.f32.mrf.mxu0
        %v7928 = vadd.f32 %v7251, %v7927
        %7929 = vmatmul.bf16.gmra.mxu0 %v7356
        %v7930 = vpop.f32.mrf.mxu0
        %v7931 = vadd.f32 %v7251, %v7930
        %v7932 = vpop.f32.mrf.mxu0
        %v7933 = vadd.f32 %v7251, %v7932
        %7934 = vmatmul.bf16.gmra.mxu0 %v7358
        %v7935 = vpop.f32.mrf.mxu0
        %v7936 = vadd.f32 %v7251, %v7935
        %v7937 = vpop.f32.mrf.mxu0
        %v7938 = vadd.f32 %v7251, %v7937
        %7939 = vmatmul.bf16.gmra.mxu0 %v7360
        %v7940 = vpop.f32.mrf.mxu0
        %v7941 = vadd.f32 %v7251, %v7940
        %v7942 = vpop.f32.mrf.mxu0
        %v7943 = vadd.f32 %v7251, %v7942
        %7944 = vmatmul.bf16.gmra.mxu0 %v7362
        %v7945 = vpop.f32.mrf.mxu0
        %v7946 = vadd.f32 %v7251, %v7945
        %v7947 = vpop.f32.mrf.mxu0
        %v7948 = vadd.f32 %v7251, %v7947
        %7949 = vmatmul.bf16.gmra.mxu0 %v7364
        %v7950 = vpop.f32.mrf.mxu0
        %v7951 = vadd.f32 %v7251, %v7950
        %v7952 = vpop.f32.mrf.mxu0
        %v7953 = vadd.f32 %v7251, %v7952
        %7954 = vmatmul.bf16.gmra.mxu0 %v7366
        %v7955 = vpop.f32.mrf.mxu0
        %v7956 = vadd.f32 %v7251, %v7955
        %v7957 = vpop.f32.mrf.mxu0
        %v7958 = vadd.f32 %v7251, %v7957
        %7959 = vmatmul.bf16.gmra.mxu0 %v7368
        %v7960 = vpop.f32.mrf.mxu0
        %v7961 = vadd.f32 %v7251, %v7960
        %v7962 = vpop.f32.mrf.mxu0
        %v7963 = vadd.f32 %v7251, %v7962
        %7964 = vmatmul.bf16.gmra.mxu0 %v7370
        %v7965 = vpop.f32.mrf.mxu0
        %v7966 = vadd.f32 %v7251, %v7965
        %v7967 = vpop.f32.mrf.mxu0
        %v7968 = vadd.f32 %v7251, %v7967
        %7969 = vmatmul.bf16.gmra.mxu0 %v7372
        %v7970 = vpop.f32.mrf.mxu0
        %v7971 = vadd.f32 %v7251, %v7970
        %v7972 = vpop.f32.mrf.mxu0
        %v7973 = vadd.f32 %v7251, %v7972
        %7974 = vmatmul.bf16.gmra.mxu0 %v7374
        %v7975 = vpop.f32.mrf.mxu0
        %v7976 = vadd.f32 %v7251, %v7975
        %v7977 = vpop.f32.mrf.mxu0
        %v7978 = vadd.f32 %v7251, %v7977
        %7979 = vmatmul.bf16.gmra.mxu0 %v7376
        %v7980 = vpop.f32.mrf.mxu0
        %v7981 = vadd.f32 %v7251, %v7980
        %v7982 = vpop.f32.mrf.mxu0
        %v7983 = vadd.f32 %v7251, %v7982
        %7984 = vmatmul.bf16.gmra.mxu0 %v7378
        %v7985 = vpop.f32.mrf.mxu0
        %v7986 = vadd.f32 %v7251, %v7985
        %v7987 = vpop.f32.mrf.mxu0
        %v7988 = vadd.f32 %v7251, %v7987
        %7989 = vmatmul.bf16.gmra.mxu0 %v7380
        %v7990 = vpop.f32.mrf.mxu0
        %v7991 = vadd.f32 %v7251, %v7990
        %v7992 = vpop.f32.mrf.mxu0
        %v7993 = vadd.f32 %v7251, %v7992
        %7994 = vmatmul.bf16.gmra.mxu0 %v7382
        %v7995 = vpop.f32.mrf.mxu0
        %v7996 = vadd.f32 %v7251, %v7995
        %v7997 = vpop.f32.mrf.mxu0
        %v7998 = vadd.f32 %v7251, %v7997
        %7999 = vmatmul.bf16.gmra.mxu0 %v7384
        %v8000 = vpop.f32.mrf.mxu0
        %v8001 = vadd.f32 %v7251, %v8000
        %v8002 = vpop.f32.mrf.mxu0
        %v8003 = vadd.f32 %v7251, %v8002
        %8004 = vdwg.mxu0
        %8005 = vmatpush.bf16.msra.mxu0 %v7671
        %8006 = vmatpush.bf16.msra.mxu0 %v7667
        %8007 = vmatpush.bf16.msra.mxu0 %v7663
        %8008 = vmatpush.bf16.msra.mxu0 %v7659
        %8009 = vmatpush.bf16.msra.mxu0 %v7655
        %8010 = vmatpush.bf16.msra.mxu0 %v7651
        %8011 = vmatpush.bf16.msra.mxu0 %v7647
        %8012 = vmatpush.bf16.msra.mxu0 %v7643
        %8013 = vmatmul.bf16.gmra.mxu0 %v7355
        %v8014 = vpop.f32.mrf.mxu0
        %v8015 = vadd.f32 %v7926, %v8014
        %v8016 = vpop.f32.mrf.mxu0
        %v8017 = vadd.f32 %v7928, %v8016
        %8018 = vmatmul.bf16.gmra.mxu0 %v7357
        %v8019 = vpop.f32.mrf.mxu0
        %v8020 = vadd.f32 %v7931, %v8019
        %v8021 = vpop.f32.mrf.mxu0
        %v8022 = vadd.f32 %v7933, %v8021
        %8023 = vmatmul.bf16.gmra.mxu0 %v7359
        %v8024 = vpop.f32.mrf.mxu0
        %v8025 = vadd.f32 %v7936, %v8024
        %v8026 = vpop.f32.mrf.mxu0
        %v8027 = vadd.f32 %v7938, %v8026
        %8028 = vmatmul.bf16.gmra.mxu0 %v7361
        %v8029 = vpop.f32.mrf.mxu0
        %v8030 = vadd.f32 %v7941, %v8029
        %v8031 = vpop.f32.mrf.mxu0
        %v8032 = vadd.f32 %v7943, %v8031
        %8033 = vmatmul.bf16.gmra.mxu0 %v7363
        %v8034 = vpop.f32.mrf.mxu0
        %v8035 = vadd.f32 %v7946, %v8034
        %v8036 = vpop.f32.mrf.mxu0
        %v8037 = vadd.f32 %v7948, %v8036
        %8038 = vmatmul.bf16.gmra.mxu0 %v7365
        %v8039 = vpop.f32.mrf.mxu0
        %v8040 = vadd.f32 %v7951, %v8039
        %v8041 = vpop.f32.mrf.mxu0
        %v8042 = vadd.f32 %v7953, %v8041
        %8043 = vmatmul.bf16.gmra.mxu0 %v7367
        %v8044 = vpop.f32.mrf.mxu0
        %v8045 = vadd.f32 %v7956, %v8044
        %v8046 = vpop.f32.mrf.mxu0
        %v8047 = vadd.f32 %v7958, %v8046
        %8048 = vmatmul.bf16.gmra.mxu0 %v7369
        %v8049 = vpop.f32.mrf.mxu0
        %v8050 = vadd.f32 %v7961, %v8049
        %v8051 = vpop.f32.mrf.mxu0
        %v8052 = vadd.f32 %v7963, %v8051
        %8053 = vmatmul.bf16.gmra.mxu0 %v7371
        %v8054 = vpop.f32.mrf.mxu0
        %v8055 = vadd.f32 %v7966, %v8054
        %v8056 = vpop.f32.mrf.mxu0
        %v8057 = vadd.f32 %v7968, %v8056
        %8058 = vmatmul.bf16.gmra.mxu0 %v7373
        %v8059 = vpop.f32.mrf.mxu0
        %v8060 = vadd.f32 %v7971, %v8059
        %v8061 = vpop.f32.mrf.mxu0
        %v8062 = vadd.f32 %v7973, %v8061
        %8063 = vmatmul.bf16.gmra.mxu0 %v7375
        %v8064 = vpop.f32.mrf.mxu0
        %v8065 = vadd.f32 %v7976, %v8064
        %v8066 = vpop.f32.mrf.mxu0
        %v8067 = vadd.f32 %v7978, %v8066
        %8068 = vmatmul.bf16.gmra.mxu0 %v7377
        %v8069 = vpop.f32.mrf.mxu0
        %v8070 = vadd.f32 %v7981, %v8069
        %v8071 = vpop.f32.mrf.mxu0
        %v8072 = vadd.f32 %v7983, %v8071
        %8073 = vmatmul.bf16.gmra.mxu0 %v7379
        %v8074 = vpop.f32.mrf.mxu0
        %v8075 = vadd.f32 %v7986, %v8074
        %v8076 = vpop.f32.mrf.mxu0
        %v8077 = vadd.f32 %v7988, %v8076
        %8078 = vmatmul.bf16.gmra.mxu0 %v7381
        %v8079 = vpop.f32.mrf.mxu0
        %v8080 = vadd.f32 %v7991, %v8079
        %v8081 = vpop.f32.mrf.mxu0
        %v8082 = vadd.f32 %v7993, %v8081
        %8083 = vmatmul.bf16.gmra.mxu0 %v7383
        %v8084 = vpop.f32.mrf.mxu0
        %v8085 = vadd.f32 %v7996, %v8084
        %v8086 = vpop.f32.mrf.mxu0
        %v8087 = vadd.f32 %v7998, %v8086
        %8088 = vmatmul.bf16.gmra.mxu0 %v7385
        %v8089 = vpop.f32.mrf.mxu0
        %v8090 = vadd.f32 %v8001, %v8089
        %v8091 = vpop.f32.mrf.mxu0
        %v8092 = vadd.f32 %v8003, %v8091
        %8093 = vdwg.mxu0
        %8094 = vmatpush.bf16.msra.mxu0 %v7640
        %8095 = vmatpush.bf16.msra.mxu0 %v7636
        %8096 = vmatpush.bf16.msra.mxu0 %v7632
        %8097 = vmatpush.bf16.msra.mxu0 %v7628
        %8098 = vmatpush.bf16.msra.mxu0 %v7624
        %8099 = vmatpush.bf16.msra.mxu0 %v7620
        %8100 = vmatpush.bf16.msra.mxu0 %v7616
        %8101 = vmatpush.bf16.msra.mxu0 %v7612
        %8102 = vmatmul.bf16.gmra.mxu0 %v7354
        %v8103 = vpop.f32.mrf.mxu0
        %v8104 = vadd.f32 %v7252, %v8103
        %v8105 = vpop.f32.mrf.mxu0
        %v8106 = vadd.f32 %v7252, %v8105
        %8107 = vmatmul.bf16.gmra.mxu0 %v7356
        %v8108 = vpop.f32.mrf.mxu0
        %v8109 = vadd.f32 %v7252, %v8108
        %v8110 = vpop.f32.mrf.mxu0
        %v8111 = vadd.f32 %v7252, %v8110
        %8112 = vmatmul.bf16.gmra.mxu0 %v7358
        %v8113 = vpop.f32.mrf.mxu0
        %v8114 = vadd.f32 %v7252, %v8113
        %v8115 = vpop.f32.mrf.mxu0
        %v8116 = vadd.f32 %v7252, %v8115
        %8117 = vmatmul.bf16.gmra.mxu0 %v7360
        %v8118 = vpop.f32.mrf.mxu0
        %v8119 = vadd.f32 %v7252, %v8118
        %v8120 = vpop.f32.mrf.mxu0
        %v8121 = vadd.f32 %v7252, %v8120
        %8122 = vmatmul.bf16.gmra.mxu0 %v7362
        %v8123 = vpop.f32.mrf.mxu0
        %v8124 = vadd.f32 %v7252, %v8123
        %v8125 = vpop.f32.mrf.mxu0
        %v8126 = vadd.f32 %v7252, %v8125
        %8127 = vmatmul.bf16.gmra.mxu0 %v7364
        %v8128 = vpop.f32.mrf.mxu0
        %v8129 = vadd.f32 %v7252, %v8128
        %v8130 = vpop.f32.mrf.mxu0
        %v8131 = vadd.f32 %v7252, %v8130
        %8132 = vmatmul.bf16.gmra.mxu0 %v7366
        %v8133 = vpop.f32.mrf.mxu0
        %v8134 = vadd.f32 %v7252, %v8133
        %v8135 = vpop.f32.mrf.mxu0
        %v8136 = vadd.f32 %v7252, %v8135
        %8137 = vmatmul.bf16.gmra.mxu0 %v7368
        %v8138 = vpop.f32.mrf.mxu0
        %v8139 = vadd.f32 %v7252, %v8138
        %v8140 = vpop.f32.mrf.mxu0
        %v8141 = vadd.f32 %v7252, %v8140
        %8142 = vmatmul.bf16.gmra.mxu0 %v7370
        %v8143 = vpop.f32.mrf.mxu0
        %v8144 = vadd.f32 %v7252, %v8143
        %v8145 = vpop.f32.mrf.mxu0
        %v8146 = vadd.f32 %v7252, %v8145
        %8147 = vmatmul.bf16.gmra.mxu0 %v7372
        %v8148 = vpop.f32.mrf.mxu0
        %v8149 = vadd.f32 %v7252, %v8148
        %v8150 = vpop.f32.mrf.mxu0
        %v8151 = vadd.f32 %v7252, %v8150
        %8152 = vmatmul.bf16.gmra.mxu0 %v7374
        %v8153 = vpop.f32.mrf.mxu0
        %v8154 = vadd.f32 %v7252, %v8153
        %v8155 = vpop.f32.mrf.mxu0
        %v8156 = vadd.f32 %v7252, %v8155
        %8157 = vmatmul.bf16.gmra.mxu0 %v7376
        %v8158 = vpop.f32.mrf.mxu0
        %v8159 = vadd.f32 %v7252, %v8158
        %v8160 = vpop.f32.mrf.mxu0
        %v8161 = vadd.f32 %v7252, %v8160
        %8162 = vmatmul.bf16.gmra.mxu0 %v7378
        %v8163 = vpop.f32.mrf.mxu0
        %v8164 = vadd.f32 %v7252, %v8163
        %v8165 = vpop.f32.mrf.mxu0
        %v8166 = vadd.f32 %v7252, %v8165
        %8167 = vmatmul.bf16.gmra.mxu0 %v7380
        %v8168 = vpop.f32.mrf.mxu0
        %v8169 = vadd.f32 %v7252, %v8168
        %v8170 = vpop.f32.mrf.mxu0
        %v8171 = vadd.f32 %v7252, %v8170
        %8172 = vmatmul.bf16.gmra.mxu0 %v7382
        %v8173 = vpop.f32.mrf.mxu0
        %v8174 = vadd.f32 %v7252, %v8173
        %v8175 = vpop.f32.mrf.mxu0
        %v8176 = vadd.f32 %v7252, %v8175
        %8177 = vmatmul.bf16.gmra.mxu0 %v7384
        %v8178 = vpop.f32.mrf.mxu0
        %v8179 = vadd.f32 %v7252, %v8178
        %v8180 = vpop.f32.mrf.mxu0
        %v8181 = vadd.f32 %v7252, %v8180
        %8182 = vdwg.mxu0
        %8183 = vmatpush.bf16.msra.mxu0 %v7672
        %8184 = vmatpush.bf16.msra.mxu0 %v7668
        %8185 = vmatpush.bf16.msra.mxu0 %v7664
        %8186 = vmatpush.bf16.msra.mxu0 %v7660
        %8187 = vmatpush.bf16.msra.mxu0 %v7656
        %8188 = vmatpush.bf16.msra.mxu0 %v7652
        %8189 = vmatpush.bf16.msra.mxu0 %v7648
        %8190 = vmatpush.bf16.msra.mxu0 %v7644
        %8191 = vmatmul.bf16.gmra.mxu0 %v7355
        %v8192 = vpop.f32.mrf.mxu0
        %v8193 = vadd.f32 %v8104, %v8192
        %v8194 = vpop.f32.mrf.mxu0
        %v8195 = vadd.f32 %v8106, %v8194
        %8196 = vmatmul.bf16.gmra.mxu0 %v7357
        %v8197 = vpop.f32.mrf.mxu0
        %v8198 = vadd.f32 %v8109, %v8197
        %v8199 = vpop.f32.mrf.mxu0
        %v8200 = vadd.f32 %v8111, %v8199
        %8201 = vmatmul.bf16.gmra.mxu0 %v7359
        %v8202 = vpop.f32.mrf.mxu0
        %v8203 = vadd.f32 %v8114, %v8202
        %v8204 = vpop.f32.mrf.mxu0
        %v8205 = vadd.f32 %v8116, %v8204
        %8206 = vmatmul.bf16.gmra.mxu0 %v7361
        %v8207 = vpop.f32.mrf.mxu0
        %v8208 = vadd.f32 %v8119, %v8207
        %v8209 = vpop.f32.mrf.mxu0
        %v8210 = vadd.f32 %v8121, %v8209
        %8211 = vmatmul.bf16.gmra.mxu0 %v7363
        %v8212 = vpop.f32.mrf.mxu0
        %v8213 = vadd.f32 %v8124, %v8212
        %v8214 = vpop.f32.mrf.mxu0
        %v8215 = vadd.f32 %v8126, %v8214
        %8216 = vmatmul.bf16.gmra.mxu0 %v7365
        %v8217 = vpop.f32.mrf.mxu0
        %v8218 = vadd.f32 %v8129, %v8217
        %v8219 = vpop.f32.mrf.mxu0
        %v8220 = vadd.f32 %v8131, %v8219
        %8221 = vmatmul.bf16.gmra.mxu0 %v7367
        %v8222 = vpop.f32.mrf.mxu0
        %v8223 = vadd.f32 %v8134, %v8222
        %v8224 = vpop.f32.mrf.mxu0
        %v8225 = vadd.f32 %v8136, %v8224
        %8226 = vmatmul.bf16.gmra.mxu0 %v7369
        %v8227 = vpop.f32.mrf.mxu0
        %v8228 = vadd.f32 %v8139, %v8227
        %v8229 = vpop.f32.mrf.mxu0
        %v8230 = vadd.f32 %v8141, %v8229
        %8231 = vmatmul.bf16.gmra.mxu0 %v7371
        %v8232 = vpop.f32.mrf.mxu0
        %v8233 = vadd.f32 %v8144, %v8232
        %v8234 = vpop.f32.mrf.mxu0
        %v8235 = vadd.f32 %v8146, %v8234
        %8236 = vmatmul.bf16.gmra.mxu0 %v7373
        %v8237 = vpop.f32.mrf.mxu0
        %v8238 = vadd.f32 %v8149, %v8237
        %v8239 = vpop.f32.mrf.mxu0
        %v8240 = vadd.f32 %v8151, %v8239
        %8241 = vmatmul.bf16.gmra.mxu0 %v7375
        %v8242 = vpop.f32.mrf.mxu0
        %v8243 = vadd.f32 %v8154, %v8242
        %v8244 = vpop.f32.mrf.mxu0
        %v8245 = vadd.f32 %v8156, %v8244
        %8246 = vmatmul.bf16.gmra.mxu0 %v7377
        %v8247 = vpop.f32.mrf.mxu0
        %v8248 = vadd.f32 %v8159, %v8247
        %v8249 = vpop.f32.mrf.mxu0
        %v8250 = vadd.f32 %v8161, %v8249
        %8251 = vmatmul.bf16.gmra.mxu0 %v7379
        %v8252 = vpop.f32.mrf.mxu0
        %v8253 = vadd.f32 %v8164, %v8252
        %v8254 = vpop.f32.mrf.mxu0
        %v8255 = vadd.f32 %v8166, %v8254
        %8256 = vmatmul.bf16.gmra.mxu0 %v7381
        %v8257 = vpop.f32.mrf.mxu0
        %v8258 = vadd.f32 %v8169, %v8257
        %v8259 = vpop.f32.mrf.mxu0
        %v8260 = vadd.f32 %v8171, %v8259
        %8261 = vmatmul.bf16.gmra.mxu0 %v7383
        %v8262 = vpop.f32.mrf.mxu0
        %v8263 = vadd.f32 %v8174, %v8262
        %v8264 = vpop.f32.mrf.mxu0
        %v8265 = vadd.f32 %v8176, %v8264
        %8266 = vmatmul.bf16.gmra.mxu0 %v7385
        %v8267 = vpop.f32.mrf.mxu0
        %v8268 = vadd.f32 %v8179, %v8267
        %v8269 = vpop.f32.mrf.mxu0
        %v8270 = vadd.f32 %v8181, %v8269
        %8271 = vdwg.mxu0
        %8272 = vmatpush.bf16.msra.mxu0 %v7641
        %8273 = vmatpush.bf16.msra.mxu0 %v7637
        %8274 = vmatpush.bf16.msra.mxu0 %v7633
        %8275 = vmatpush.bf16.msra.mxu0 %v7629
        %8276 = vmatpush.bf16.msra.mxu0 %v7625
        %8277 = vmatpush.bf16.msra.mxu0 %v7621
        %8278 = vmatpush.bf16.msra.mxu0 %v7617
        %8279 = vmatpush.bf16.msra.mxu0 %v7613
        %8280 = vmatmul.bf16.gmra.mxu0 %v7354
        %v8281 = vpop.f32.mrf.mxu0
        %v8282 = vadd.f32 %v7253, %v8281
        %v8283 = vpop.f32.mrf.mxu0
        %v8284 = vadd.f32 %v7253, %v8283
        %8285 = vmatmul.bf16.gmra.mxu0 %v7356
        %v8286 = vpop.f32.mrf.mxu0
        %v8287 = vadd.f32 %v7253, %v8286
        %v8288 = vpop.f32.mrf.mxu0
        %v8289 = vadd.f32 %v7253, %v8288
        %8290 = vmatmul.bf16.gmra.mxu0 %v7358
        %v8291 = vpop.f32.mrf.mxu0
        %v8292 = vadd.f32 %v7253, %v8291
        %v8293 = vpop.f32.mrf.mxu0
        %v8294 = vadd.f32 %v7253, %v8293
        %8295 = vmatmul.bf16.gmra.mxu0 %v7360
        %v8296 = vpop.f32.mrf.mxu0
        %v8297 = vadd.f32 %v7253, %v8296
        %v8298 = vpop.f32.mrf.mxu0
        %v8299 = vadd.f32 %v7253, %v8298
        %8300 = vmatmul.bf16.gmra.mxu0 %v7362
        %v8301 = vpop.f32.mrf.mxu0
        %v8302 = vadd.f32 %v7253, %v8301
        %v8303 = vpop.f32.mrf.mxu0
        %v8304 = vadd.f32 %v7253, %v8303
        %8305 = vmatmul.bf16.gmra.mxu0 %v7364
        %v8306 = vpop.f32.mrf.mxu0
        %v8307 = vadd.f32 %v7253, %v8306
        %v8308 = vpop.f32.mrf.mxu0
        %v8309 = vadd.f32 %v7253, %v8308
        %8310 = vmatmul.bf16.gmra.mxu0 %v7366
        %v8311 = vpop.f32.mrf.mxu0
        %v8312 = vadd.f32 %v7253, %v8311
        %v8313 = vpop.f32.mrf.mxu0
        %v8314 = vadd.f32 %v7253, %v8313
        %8315 = vmatmul.bf16.gmra.mxu0 %v7368
        %v8316 = vpop.f32.mrf.mxu0
        %v8317 = vadd.f32 %v7253, %v8316
        %v8318 = vpop.f32.mrf.mxu0
        %v8319 = vadd.f32 %v7253, %v8318
        %8320 = vmatmul.bf16.gmra.mxu0 %v7370
        %v8321 = vpop.f32.mrf.mxu0
        %v8322 = vadd.f32 %v7253, %v8321
        %v8323 = vpop.f32.mrf.mxu0
        %v8324 = vadd.f32 %v7253, %v8323
        %8325 = vmatmul.bf16.gmra.mxu0 %v7372
        %v8326 = vpop.f32.mrf.mxu0
        %v8327 = vadd.f32 %v7253, %v8326
        %v8328 = vpop.f32.mrf.mxu0
        %v8329 = vadd.f32 %v7253, %v8328
        %8330 = vmatmul.bf16.gmra.mxu0 %v7374
        %v8331 = vpop.f32.mrf.mxu0
        %v8332 = vadd.f32 %v7253, %v8331
        %v8333 = vpop.f32.mrf.mxu0
        %v8334 = vadd.f32 %v7253, %v8333
        %8335 = vmatmul.bf16.gmra.mxu0 %v7376
        %v8336 = vpop.f32.mrf.mxu0
        %v8337 = vadd.f32 %v7253, %v8336
        %v8338 = vpop.f32.mrf.mxu0
        %v8339 = vadd.f32 %v7253, %v8338
        %8340 = vmatmul.bf16.gmra.mxu0 %v7378
        %v8341 = vpop.f32.mrf.mxu0
        %v8342 = vadd.f32 %v7253, %v8341
        %v8343 = vpop.f32.mrf.mxu0
        %v8344 = vadd.f32 %v7253, %v8343
        %8345 = vmatmul.bf16.gmra.mxu0 %v7380
        %v8346 = vpop.f32.mrf.mxu0
        %v8347 = vadd.f32 %v7253, %v8346
        %v8348 = vpop.f32.mrf.mxu0
        %v8349 = vadd.f32 %v7253, %v8348
        %8350 = vmatmul.bf16.gmra.mxu0 %v7382
        %v8351 = vpop.f32.mrf.mxu0
        %v8352 = vadd.f32 %v7253, %v8351
        %v8353 = vpop.f32.mrf.mxu0
        %v8354 = vadd.f32 %v7253, %v8353
        %8355 = vmatmul.bf16.gmra.mxu0 %v7384
        %v8356 = vpop.f32.mrf.mxu0
        %v8357 = vadd.f32 %v7253, %v8356
        %v8358 = vpop.f32.mrf.mxu0
        %v8359 = vadd.f32 %v7253, %v8358
        %8360 = vdwg.mxu0
        %8361 = vmatpush.bf16.msra.mxu0 %v7673
        %8362 = vmatpush.bf16.msra.mxu0 %v7669
        %8363 = vmatpush.bf16.msra.mxu0 %v7665
        %8364 = vmatpush.bf16.msra.mxu0 %v7661
        %8365 = vmatpush.bf16.msra.mxu0 %v7657
        %8366 = vmatpush.bf16.msra.mxu0 %v7653
        %8367 = vmatpush.bf16.msra.mxu0 %v7649
        %8368 = vmatpush.bf16.msra.mxu0 %v7645
        %8369 = vmatmul.bf16.gmra.mxu0 %v7355
        %v8370 = vpop.f32.mrf.mxu0
        %v8371 = vadd.f32 %v8282, %v8370
        %v8372 = vpop.f32.mrf.mxu0
        %v8373 = vadd.f32 %v8284, %v8372
        %8374 = vmatmul.bf16.gmra.mxu0 %v7357
        %v8375 = vpop.f32.mrf.mxu0
        %v8376 = vadd.f32 %v8287, %v8375
        %v8377 = vpop.f32.mrf.mxu0
        %v8378 = vadd.f32 %v8289, %v8377
        %8379 = vmatmul.bf16.gmra.mxu0 %v7359
        %v8380 = vpop.f32.mrf.mxu0
        %v8381 = vadd.f32 %v8292, %v8380
        %v8382 = vpop.f32.mrf.mxu0
        %v8383 = vadd.f32 %v8294, %v8382
        %8384 = vmatmul.bf16.gmra.mxu0 %v7361
        %v8385 = vpop.f32.mrf.mxu0
        %v8386 = vadd.f32 %v8297, %v8385
        %v8387 = vpop.f32.mrf.mxu0
        %v8388 = vadd.f32 %v8299, %v8387
        %8389 = vmatmul.bf16.gmra.mxu0 %v7363
        %v8390 = vpop.f32.mrf.mxu0
        %v8391 = vadd.f32 %v8302, %v8390
        %v8392 = vpop.f32.mrf.mxu0
        %v8393 = vadd.f32 %v8304, %v8392
        %8394 = vmatmul.bf16.gmra.mxu0 %v7365
        %v8395 = vpop.f32.mrf.mxu0
        %v8396 = vadd.f32 %v8307, %v8395
        %v8397 = vpop.f32.mrf.mxu0
        %v8398 = vadd.f32 %v8309, %v8397
        %8399 = vmatmul.bf16.gmra.mxu0 %v7367
        %v8400 = vpop.f32.mrf.mxu0
        %v8401 = vadd.f32 %v8312, %v8400
        %v8402 = vpop.f32.mrf.mxu0
        %v8403 = vadd.f32 %v8314, %v8402
        %8404 = vmatmul.bf16.gmra.mxu0 %v7369
        %v8405 = vpop.f32.mrf.mxu0
        %v8406 = vadd.f32 %v8317, %v8405
        %v8407 = vpop.f32.mrf.mxu0
        %v8408 = vadd.f32 %v8319, %v8407
        %8409 = vmatmul.bf16.gmra.mxu0 %v7371
        %v8410 = vpop.f32.mrf.mxu0
        %v8411 = vadd.f32 %v8322, %v8410
        %v8412 = vpop.f32.mrf.mxu0
        %v8413 = vadd.f32 %v8324, %v8412
        %8414 = vmatmul.bf16.gmra.mxu0 %v7373
        %v8415 = vpop.f32.mrf.mxu0
        %v8416 = vadd.f32 %v8327, %v8415
        %v8417 = vpop.f32.mrf.mxu0
        %v8418 = vadd.f32 %v8329, %v8417
        %8419 = vmatmul.bf16.gmra.mxu0 %v7375
        %v8420 = vpop.f32.mrf.mxu0
        %v8421 = vadd.f32 %v8332, %v8420
        %v8422 = vpop.f32.mrf.mxu0
        %v8423 = vadd.f32 %v8334, %v8422
        %8424 = vmatmul.bf16.gmra.mxu0 %v7377
        %v8425 = vpop.f32.mrf.mxu0
        %v8426 = vadd.f32 %v8337, %v8425
        %v8427 = vpop.f32.mrf.mxu0
        %v8428 = vadd.f32 %v8339, %v8427
        %8429 = vmatmul.bf16.gmra.mxu0 %v7379
        %v8430 = vpop.f32.mrf.mxu0
        %v8431 = vadd.f32 %v8342, %v8430
        %v8432 = vpop.f32.mrf.mxu0
        %v8433 = vadd.f32 %v8344, %v8432
        %8434 = vmatmul.bf16.gmra.mxu0 %v7381
        %v8435 = vpop.f32.mrf.mxu0
        %v8436 = vadd.f32 %v8347, %v8435
        %v8437 = vpop.f32.mrf.mxu0
        %v8438 = vadd.f32 %v8349, %v8437
        %8439 = vmatmul.bf16.gmra.mxu0 %v7383
        %v8440 = vpop.f32.mrf.mxu0
        %v8441 = vadd.f32 %v8352, %v8440
        %v8442 = vpop.f32.mrf.mxu0
        %v8443 = vadd.f32 %v8354, %v8442
        %8444 = vmatmul.bf16.gmra.mxu0 %v7385
        %v8445 = vpop.f32.mrf.mxu0
        %v8446 = vadd.f32 %v8357, %v8445
        %v8447 = vpop.f32.mrf.mxu0
        %v8448 = vadd.f32 %v8359, %v8447
        %8449 = vdwg.mxu0
        %v8450 = vpack.c.bf16 %v8015, %v7837
        %v8451 = vpack.c.bf16 %v8371, %v8193
        %v8452 = vpack.c.bf16 %v8017, %v7839
        %v8453 = vpack.c.bf16 %v8373, %v8195
        %v8454 = vpack.c.bf16 %v8020, %v7842
        %v8455 = vpack.c.bf16 %v8376, %v8198
        %v8456 = vpack.c.bf16 %v8022, %v7844
        %v8457 = vpack.c.bf16 %v8378, %v8200
        %v8458 = vpack.c.bf16 %v8025, %v7847
        %v8459 = vpack.c.bf16 %v8381, %v8203
        %v8460 = vpack.c.bf16 %v8027, %v7849
        %v8461 = vpack.c.bf16 %v8383, %v8205
        %v8462 = vpack.c.bf16 %v8030, %v7852
        %v8463 = vpack.c.bf16 %v8386, %v8208
        %v8464 = vpack.c.bf16 %v8032, %v7854
        %v8465 = vpack.c.bf16 %v8388, %v8210
        %v8466 = vpack.c.bf16 %v8035, %v7857
        %v8467 = vpack.c.bf16 %v8391, %v8213
        %v8468 = vpack.c.bf16 %v8037, %v7859
        %v8469 = vpack.c.bf16 %v8393, %v8215
        %v8470 = vpack.c.bf16 %v8040, %v7862
        %v8471 = vpack.c.bf16 %v8396, %v8218
        %v8472 = vpack.c.bf16 %v8042, %v7864
        %v8473 = vpack.c.bf16 %v8398, %v8220
        %v8474 = vpack.c.bf16 %v8045, %v7867
        %v8475 = vpack.c.bf16 %v8401, %v8223
        %v8476 = vpack.c.bf16 %v8047, %v7869
        %v8477 = vpack.c.bf16 %v8403, %v8225
        %v8478 = vpack.c.bf16 %v8050, %v7872
        %v8479 = vpack.c.bf16 %v8406, %v8228
        %v8480 = vpack.c.bf16 %v8052, %v7874
        %v8481 = vpack.c.bf16 %v8408, %v8230
        %v8482 = vpack.c.bf16 %v8055, %v7877
        %v8483 = vpack.c.bf16 %v8411, %v8233
        %v8484 = vpack.c.bf16 %v8057, %v7879
        %v8485 = vpack.c.bf16 %v8413, %v8235
        %v8486 = vpack.c.bf16 %v8060, %v7882
        %v8487 = vpack.c.bf16 %v8416, %v8238
        %v8488 = vpack.c.bf16 %v8062, %v7884
        %v8489 = vpack.c.bf16 %v8418, %v8240
        %v8490 = vpack.c.bf16 %v8065, %v7887
        %v8491 = vpack.c.bf16 %v8421, %v8243
        %v8492 = vpack.c.bf16 %v8067, %v7889
        %v8493 = vpack.c.bf16 %v8423, %v8245
        %v8494 = vpack.c.bf16 %v8070, %v7892
        %v8495 = vpack.c.bf16 %v8426, %v8248
        %v8496 = vpack.c.bf16 %v8072, %v7894
        %v8497 = vpack.c.bf16 %v8428, %v8250
        %v8498 = vpack.c.bf16 %v8075, %v7897
        %v8499 = vpack.c.bf16 %v8431, %v8253
        %v8500 = vpack.c.bf16 %v8077, %v7899
        %v8501 = vpack.c.bf16 %v8433, %v8255
        %v8502 = vpack.c.bf16 %v8080, %v7902
        %v8503 = vpack.c.bf16 %v8436, %v8258
        %v8504 = vpack.c.bf16 %v8082, %v7904
        %v8505 = vpack.c.bf16 %v8438, %v8260
        %v8506 = vpack.c.bf16 %v8085, %v7907
        %v8507 = vpack.c.bf16 %v8441, %v8263
        %v8508 = vpack.c.bf16 %v8087, %v7909
        %v8509 = vpack.c.bf16 %v8443, %v8265
        %v8510 = vpack.c.bf16 %v8090, %v7912
        %v8511 = vpack.c.bf16 %v8446, %v8268
        %v8512 = vpack.c.bf16 %v8092, %v7914
        %v8513 = vpack.c.bf16 %v8448, %v8270
        %v8514 = vunpack.c.l.bf16 %v8450
        %v8515 = vunpack.c.h.bf16 %v8450
        %v8516 = vunpack.c.l.bf16 %v8451
        %v8517 = vunpack.c.h.bf16 %v8451
        %v8518 = vunpack.c.l.bf16 %v8452
        %v8519 = vunpack.c.h.bf16 %v8452
        %v8520 = vunpack.c.l.bf16 %v8453
        %v8521 = vunpack.c.h.bf16 %v8453
        %v8522 = vunpack.c.l.bf16 %v8454
        %v8523 = vunpack.c.h.bf16 %v8454
        %v8524 = vunpack.c.l.bf16 %v8455
        %v8525 = vunpack.c.h.bf16 %v8455
        %v8526 = vunpack.c.l.bf16 %v8456
        %v8527 = vunpack.c.h.bf16 %v8456
        %v8528 = vunpack.c.l.bf16 %v8457
        %v8529 = vunpack.c.h.bf16 %v8457
        %v8530 = vunpack.c.l.bf16 %v8458
        %v8531 = vunpack.c.h.bf16 %v8458
        %v8532 = vunpack.c.l.bf16 %v8459
        %v8533 = vunpack.c.h.bf16 %v8459
        %v8534 = vunpack.c.l.bf16 %v8460
        %v8535 = vunpack.c.h.bf16 %v8460
        %v8536 = vunpack.c.l.bf16 %v8461
        %v8537 = vunpack.c.h.bf16 %v8461
        %v8538 = vunpack.c.l.bf16 %v8462
        %v8539 = vunpack.c.h.bf16 %v8462
        %v8540 = vunpack.c.l.bf16 %v8463
        %v8541 = vunpack.c.h.bf16 %v8463
        %v8542 = vunpack.c.l.bf16 %v8464
        %v8543 = vunpack.c.h.bf16 %v8464
        %v8544 = vunpack.c.l.bf16 %v8465
        %v8545 = vunpack.c.h.bf16 %v8465
        %v8546 = vunpack.c.l.bf16 %v8466
        %v8547 = vunpack.c.h.bf16 %v8466
        %v8548 = vunpack.c.l.bf16 %v8467
        %v8549 = vunpack.c.h.bf16 %v8467
        %v8550 = vunpack.c.l.bf16 %v8468
        %v8551 = vunpack.c.h.bf16 %v8468
        %v8552 = vunpack.c.l.bf16 %v8469
        %v8553 = vunpack.c.h.bf16 %v8469
        %v8554 = vunpack.c.l.bf16 %v8470
        %v8555 = vunpack.c.h.bf16 %v8470
        %v8556 = vunpack.c.l.bf16 %v8471
        %v8557 = vunpack.c.h.bf16 %v8471
        %v8558 = vunpack.c.l.bf16 %v8472
        %v8559 = vunpack.c.h.bf16 %v8472
        %v8560 = vunpack.c.l.bf16 %v8473
        %v8561 = vunpack.c.h.bf16 %v8473
        %v8562 = vunpack.c.l.bf16 %v8474
        %v8563 = vunpack.c.h.bf16 %v8474
        %v8564 = vunpack.c.l.bf16 %v8475
        %v8565 = vunpack.c.h.bf16 %v8475
        %v8566 = vunpack.c.l.bf16 %v8476
        %v8567 = vunpack.c.h.bf16 %v8476
        %v8568 = vunpack.c.l.bf16 %v8477
        %v8569 = vunpack.c.h.bf16 %v8477
        %v8570 = vunpack.c.l.bf16 %v8478
        %v8571 = vunpack.c.h.bf16 %v8478
        %v8572 = vunpack.c.l.bf16 %v8479
        %v8573 = vunpack.c.h.bf16 %v8479
        %v8574 = vunpack.c.l.bf16 %v8480
        %v8575 = vunpack.c.h.bf16 %v8480
        %v8576 = vunpack.c.l.bf16 %v8481
        %v8577 = vunpack.c.h.bf16 %v8481
        %v8578 = vunpack.c.l.bf16 %v8482
        %v8579 = vunpack.c.h.bf16 %v8482
        %v8580 = vunpack.c.l.bf16 %v8483
        %v8581 = vunpack.c.h.bf16 %v8483
        %v8582 = vunpack.c.l.bf16 %v8484
        %v8583 = vunpack.c.h.bf16 %v8484
        %v8584 = vunpack.c.l.bf16 %v8485
        %v8585 = vunpack.c.h.bf16 %v8485
        %v8586 = vunpack.c.l.bf16 %v8486
        %v8587 = vunpack.c.h.bf16 %v8486
        %v8588 = vunpack.c.l.bf16 %v8487
        %v8589 = vunpack.c.h.bf16 %v8487
        %v8590 = vunpack.c.l.bf16 %v8488
        %v8591 = vunpack.c.h.bf16 %v8488
        %v8592 = vunpack.c.l.bf16 %v8489
        %v8593 = vunpack.c.h.bf16 %v8489
        %v8594 = vunpack.c.l.bf16 %v8490
        %v8595 = vunpack.c.h.bf16 %v8490
        %v8596 = vunpack.c.l.bf16 %v8491
        %v8597 = vunpack.c.h.bf16 %v8491
        %v8598 = vunpack.c.l.bf16 %v8492
        %v8599 = vunpack.c.h.bf16 %v8492
        %v8600 = vunpack.c.l.bf16 %v8493
        %v8601 = vunpack.c.h.bf16 %v8493
        %v8602 = vunpack.c.l.bf16 %v8494
        %v8603 = vunpack.c.h.bf16 %v8494
        %v8604 = vunpack.c.l.bf16 %v8495
        %v8605 = vunpack.c.h.bf16 %v8495
        %v8606 = vunpack.c.l.bf16 %v8496
        %v8607 = vunpack.c.h.bf16 %v8496
        %v8608 = vunpack.c.l.bf16 %v8497
        %v8609 = vunpack.c.h.bf16 %v8497
        %v8610 = vunpack.c.l.bf16 %v8498
        %v8611 = vunpack.c.h.bf16 %v8498
        %v8612 = vunpack.c.l.bf16 %v8499
        %v8613 = vunpack.c.h.bf16 %v8499
        %v8614 = vunpack.c.l.bf16 %v8500
        %v8615 = vunpack.c.h.bf16 %v8500
        %v8616 = vunpack.c.l.bf16 %v8501
        %v8617 = vunpack.c.h.bf16 %v8501
        %v8618 = vunpack.c.l.bf16 %v8502
        %v8619 = vunpack.c.h.bf16 %v8502
        %v8620 = vunpack.c.l.bf16 %v8503
        %v8621 = vunpack.c.h.bf16 %v8503
        %v8622 = vunpack.c.l.bf16 %v8504
        %v8623 = vunpack.c.h.bf16 %v8504
        %v8624 = vunpack.c.l.bf16 %v8505
        %v8625 = vunpack.c.h.bf16 %v8505
        %v8626 = vunpack.c.l.bf16 %v8506
        %v8627 = vunpack.c.h.bf16 %v8506
        %v8628 = vunpack.c.l.bf16 %v8507
        %v8629 = vunpack.c.h.bf16 %v8507
        %v8630 = vunpack.c.l.bf16 %v8508
        %v8631 = vunpack.c.h.bf16 %v8508
        %v8632 = vunpack.c.l.bf16 %v8509
        %v8633 = vunpack.c.h.bf16 %v8509
        %v8634 = vunpack.c.l.bf16 %v8510
        %v8635 = vunpack.c.h.bf16 %v8510
        %v8636 = vunpack.c.l.bf16 %v8511
        %v8637 = vunpack.c.h.bf16 %v8511
        %v8638 = vunpack.c.l.bf16 %v8512
        %v8639 = vunpack.c.h.bf16 %v8512
        %v8640 = vunpack.c.l.bf16 %v8513
        %v8641 = vunpack.c.h.bf16 %v8513
        %vm8642 = vcmp.gt.f32.partialorder %v8514, 0.0
        %vm8643 = vcmp.gt.f32.partialorder %v8515, 0.0
        %vm8644 = vcmp.gt.f32.partialorder %v8516, 0.0
        %vm8645 = vcmp.gt.f32.partialorder %v8517, 0.0
        %vm8646 = vcmp.gt.f32.partialorder %v8518, 0.0
        %vm8647 = vcmp.gt.f32.partialorder %v8519, 0.0
        %vm8648 = vcmp.gt.f32.partialorder %v8520, 0.0
        %vm8649 = vcmp.gt.f32.partialorder %v8521, 0.0
        %vm8650 = vcmp.gt.f32.partialorder %v8522, 0.0
        %vm8651 = vcmp.gt.f32.partialorder %v8523, 0.0
        %vm8652 = vcmp.gt.f32.partialorder %v8524, 0.0
        %vm8653 = vcmp.gt.f32.partialorder %v8525, 0.0
        %vm8654 = vcmp.gt.f32.partialorder %v8526, 0.0
        %vm8655 = vcmp.gt.f32.partialorder %v8527, 0.0
        %vm8656 = vcmp.gt.f32.partialorder %v8528, 0.0
        %vm8657 = vcmp.gt.f32.partialorder %v8529, 0.0
        %vm8658 = vcmp.gt.f32.partialorder %v8530, 0.0
        %vm8659 = vcmp.gt.f32.partialorder %v8531, 0.0
        %vm8660 = vcmp.gt.f32.partialorder %v8532, 0.0
        %vm8661 = vcmp.gt.f32.partialorder %v8533, 0.0
        %vm8662 = vcmp.gt.f32.partialorder %v8534, 0.0
        %vm8663 = vcmp.gt.f32.partialorder %v8535, 0.0
        %vm8664 = vcmp.gt.f32.partialorder %v8536, 0.0
        %vm8665 = vcmp.gt.f32.partialorder %v8537, 0.0
        %vm8666 = vcmp.gt.f32.partialorder %v8538, 0.0
        %vm8667 = vcmp.gt.f32.partialorder %v8539, 0.0
        %vm8668 = vcmp.gt.f32.partialorder %v8540, 0.0
        %vm8669 = vcmp.gt.f32.partialorder %v8541, 0.0
        %vm8670 = vcmp.gt.f32.partialorder %v8542, 0.0
        %vm8671 = vcmp.gt.f32.partialorder %v8543, 0.0
        %vm8672 = vcmp.gt.f32.partialorder %v8544, 0.0
        %vm8673 = vcmp.gt.f32.partialorder %v8545, 0.0
        %vm8674 = vcmp.gt.f32.partialorder %v8546, 0.0
        %vm8675 = vcmp.gt.f32.partialorder %v8547, 0.0
        %vm8676 = vcmp.gt.f32.partialorder %v8548, 0.0
        %vm8677 = vcmp.gt.f32.partialorder %v8549, 0.0
        %vm8678 = vcmp.gt.f32.partialorder %v8550, 0.0
        %vm8679 = vcmp.gt.f32.partialorder %v8551, 0.0
        %vm8680 = vcmp.gt.f32.partialorder %v8552, 0.0
        %vm8681 = vcmp.gt.f32.partialorder %v8553, 0.0
        %vm8682 = vcmp.gt.f32.partialorder %v8554, 0.0
        %vm8683 = vcmp.gt.f32.partialorder %v8555, 0.0
        %vm8684 = vcmp.gt.f32.partialorder %v8556, 0.0
        %vm8685 = vcmp.gt.f32.partialorder %v8557, 0.0
        %vm8686 = vcmp.gt.f32.partialorder %v8558, 0.0
        %vm8687 = vcmp.gt.f32.partialorder %v8559, 0.0
        %vm8688 = vcmp.gt.f32.partialorder %v8560, 0.0
        %vm8689 = vcmp.gt.f32.partialorder %v8561, 0.0
        %vm8690 = vcmp.gt.f32.partialorder %v8562, 0.0
        %vm8691 = vcmp.gt.f32.partialorder %v8563, 0.0
        %vm8692 = vcmp.gt.f32.partialorder %v8564, 0.0
        %vm8693 = vcmp.gt.f32.partialorder %v8565, 0.0
        %vm8694 = vcmp.gt.f32.partialorder %v8566, 0.0
        %vm8695 = vcmp.gt.f32.partialorder %v8567, 0.0
        %vm8696 = vcmp.gt.f32.partialorder %v8568, 0.0
        %vm8697 = vcmp.gt.f32.partialorder %v8569, 0.0
        %vm8698 = vcmp.gt.f32.partialorder %v8570, 0.0
        %vm8699 = vcmp.gt.f32.partialorder %v8571, 0.0
        %vm8700 = vcmp.gt.f32.partialorder %v8572, 0.0
        %vm8701 = vcmp.gt.f32.partialorder %v8573, 0.0
        %vm8702 = vcmp.gt.f32.partialorder %v8574, 0.0
        %vm8703 = vcmp.gt.f32.partialorder %v8575, 0.0
        %vm8704 = vcmp.gt.f32.partialorder %v8576, 0.0
        %vm8705 = vcmp.gt.f32.partialorder %v8577, 0.0
        %vm8706 = vcmp.gt.f32.partialorder %v8578, 0.0
        %vm8707 = vcmp.gt.f32.partialorder %v8579, 0.0
        %vm8708 = vcmp.gt.f32.partialorder %v8580, 0.0
        %vm8709 = vcmp.gt.f32.partialorder %v8581, 0.0
        %vm8710 = vcmp.gt.f32.partialorder %v8582, 0.0
        %vm8711 = vcmp.gt.f32.partialorder %v8583, 0.0
        %vm8712 = vcmp.gt.f32.partialorder %v8584, 0.0
        %vm8713 = vcmp.gt.f32.partialorder %v8585, 0.0
        %vm8714 = vcmp.gt.f32.partialorder %v8586, 0.0
        %vm8715 = vcmp.gt.f32.partialorder %v8587, 0.0
        %vm8716 = vcmp.gt.f32.partialorder %v8588, 0.0
        %vm8717 = vcmp.gt.f32.partialorder %v8589, 0.0
        %vm8718 = vcmp.gt.f32.partialorder %v8590, 0.0
        %vm8719 = vcmp.gt.f32.partialorder %v8591, 0.0
        %vm8720 = vcmp.gt.f32.partialorder %v8592, 0.0
        %vm8721 = vcmp.gt.f32.partialorder %v8593, 0.0
        %vm8722 = vcmp.gt.f32.partialorder %v8594, 0.0
        %vm8723 = vcmp.gt.f32.partialorder %v8595, 0.0
        %vm8724 = vcmp.gt.f32.partialorder %v8596, 0.0
        %vm8725 = vcmp.gt.f32.partialorder %v8597, 0.0
        %vm8726 = vcmp.gt.f32.partialorder %v8598, 0.0
        %vm8727 = vcmp.gt.f32.partialorder %v8599, 0.0
        %vm8728 = vcmp.gt.f32.partialorder %v8600, 0.0
        %vm8729 = vcmp.gt.f32.partialorder %v8601, 0.0
        %vm8730 = vcmp.gt.f32.partialorder %v8602, 0.0
        %vm8731 = vcmp.gt.f32.partialorder %v8603, 0.0
        %vm8732 = vcmp.gt.f32.partialorder %v8604, 0.0
        %vm8733 = vcmp.gt.f32.partialorder %v8605, 0.0
        %vm8734 = vcmp.gt.f32.partialorder %v8606, 0.0
        %vm8735 = vcmp.gt.f32.partialorder %v8607, 0.0
        %vm8736 = vcmp.gt.f32.partialorder %v8608, 0.0
        %vm8737 = vcmp.gt.f32.partialorder %v8609, 0.0
        %vm8738 = vcmp.gt.f32.partialorder %v8610, 0.0
        %vm8739 = vcmp.gt.f32.partialorder %v8611, 0.0
        %vm8740 = vcmp.gt.f32.partialorder %v8612, 0.0
        %vm8741 = vcmp.gt.f32.partialorder %v8613, 0.0
        %vm8742 = vcmp.gt.f32.partialorder %v8614, 0.0
        %vm8743 = vcmp.gt.f32.partialorder %v8615, 0.0
        %vm8744 = vcmp.gt.f32.partialorder %v8616, 0.0
        %vm8745 = vcmp.gt.f32.partialorder %v8617, 0.0
        %vm8746 = vcmp.gt.f32.partialorder %v8618, 0.0
        %vm8747 = vcmp.gt.f32.partialorder %v8619, 0.0
        %vm8748 = vcmp.gt.f32.partialorder %v8620, 0.0
        %vm8749 = vcmp.gt.f32.partialorder %v8621, 0.0
        %vm8750 = vcmp.gt.f32.partialorder %v8622, 0.0
        %vm8751 = vcmp.gt.f32.partialorder %v8623, 0.0
        %vm8752 = vcmp.gt.f32.partialorder %v8624, 0.0
        %vm8753 = vcmp.gt.f32.partialorder %v8625, 0.0
        %vm8754 = vcmp.gt.f32.partialorder %v8626, 0.0
        %vm8755 = vcmp.gt.f32.partialorder %v8627, 0.0
        %vm8756 = vcmp.gt.f32.partialorder %v8628, 0.0
        %vm8757 = vcmp.gt.f32.partialorder %v8629, 0.0
        %vm8758 = vcmp.gt.f32.partialorder %v8630, 0.0
        %vm8759 = vcmp.gt.f32.partialorder %v8631, 0.0
        %vm8760 = vcmp.gt.f32.partialorder %v8632, 0.0
        %vm8761 = vcmp.gt.f32.partialorder %v8633, 0.0
        %vm8762 = vcmp.gt.f32.partialorder %v8634, 0.0
        %vm8763 = vcmp.gt.f32.partialorder %v8635, 0.0
        %vm8764 = vcmp.gt.f32.partialorder %v8636, 0.0
        %vm8765 = vcmp.gt.f32.partialorder %v8637, 0.0
        %vm8766 = vcmp.gt.f32.partialorder %v8638, 0.0
        %vm8767 = vcmp.gt.f32.partialorder %v8639, 0.0
        %vm8768 = vcmp.gt.f32.partialorder %v8640, 0.0
        %vm8769 = vcmp.gt.f32.partialorder %v8641, 0.0
        %v8770 = vmul.f32 %v8514, 0.010009766
        %v8771 = vmul.f32 %v8515, 0.010009766
        %v8772 = vmul.f32 %v8516, 0.010009766
        %v8773 = vmul.f32 %v8517, 0.010009766
        %v8774 = vmul.f32 %v8518, 0.010009766
        %v8775 = vmul.f32 %v8519, 0.010009766
        %v8776 = vmul.f32 %v8520, 0.010009766
        %v8777 = vmul.f32 %v8521, 0.010009766
        %v8778 = vmul.f32 %v8522, 0.010009766
        %v8779 = vmul.f32 %v8523, 0.010009766
        %v8780 = vmul.f32 %v8524, 0.010009766
        %v8781 = vmul.f32 %v8525, 0.010009766
        %v8782 = vmul.f32 %v8526, 0.010009766
        %v8783 = vmul.f32 %v8527, 0.010009766
        %v8784 = vmul.f32 %v8528, 0.010009766
        %v8785 = vmul.f32 %v8529, 0.010009766
        %v8786 = vmul.f32 %v8530, 0.010009766
        %v8787 = vmul.f32 %v8531, 0.010009766
        %v8788 = vmul.f32 %v8532, 0.010009766
        %v8789 = vmul.f32 %v8533, 0.010009766
        %v8790 = vmul.f32 %v8534, 0.010009766
        %v8791 = vmul.f32 %v8535, 0.010009766
        %v8792 = vmul.f32 %v8536, 0.010009766
        %v8793 = vmul.f32 %v8537, 0.010009766
        %v8794 = vmul.f32 %v8538, 0.010009766
        %v8795 = vmul.f32 %v8539, 0.010009766
        %v8796 = vmul.f32 %v8540, 0.010009766
        %v8797 = vmul.f32 %v8541, 0.010009766
        %v8798 = vmul.f32 %v8542, 0.010009766
        %v8799 = vmul.f32 %v8543, 0.010009766
        %v8800 = vmul.f32 %v8544, 0.010009766
        %v8801 = vmul.f32 %v8545, 0.010009766
        %v8802 = vmul.f32 %v8546, 0.010009766
        %v8803 = vmul.f32 %v8547, 0.010009766
        %v8804 = vmul.f32 %v8548, 0.010009766
        %v8805 = vmul.f32 %v8549, 0.010009766
        %v8806 = vmul.f32 %v8550, 0.010009766
        %v8807 = vmul.f32 %v8551, 0.010009766
        %v8808 = vmul.f32 %v8552, 0.010009766
        %v8809 = vmul.f32 %v8553, 0.010009766
        %v8810 = vmul.f32 %v8554, 0.010009766
        %v8811 = vmul.f32 %v8555, 0.010009766
        %v8812 = vmul.f32 %v8556, 0.010009766
        %v8813 = vmul.f32 %v8557, 0.010009766
        %v8814 = vmul.f32 %v8558, 0.010009766
        %v8815 = vmul.f32 %v8559, 0.010009766
        %v8816 = vmul.f32 %v8560, 0.010009766
        %v8817 = vmul.f32 %v8561, 0.010009766
        %v8818 = vmul.f32 %v8562, 0.010009766
        %v8819 = vmul.f32 %v8563, 0.010009766
        %v8820 = vmul.f32 %v8564, 0.010009766
        %v8821 = vmul.f32 %v8565, 0.010009766
        %v8822 = vmul.f32 %v8566, 0.010009766
        %v8823 = vmul.f32 %v8567, 0.010009766
        %v8824 = vmul.f32 %v8568, 0.010009766
        %v8825 = vmul.f32 %v8569, 0.010009766
        %v8826 = vmul.f32 %v8570, 0.010009766
        %v8827 = vmul.f32 %v8571, 0.010009766
        %v8828 = vmul.f32 %v8572, 0.010009766
        %v8829 = vmul.f32 %v8573, 0.010009766
        %v8830 = vmul.f32 %v8574, 0.010009766
        %v8831 = vmul.f32 %v8575, 0.010009766
        %v8832 = vmul.f32 %v8576, 0.010009766
        %v8833 = vmul.f32 %v8577, 0.010009766
        %v8834 = vmul.f32 %v8578, 0.010009766
        %v8835 = vmul.f32 %v8579, 0.010009766
        %v8836 = vmul.f32 %v8580, 0.010009766
        %v8837 = vmul.f32 %v8581, 0.010009766
        %v8838 = vmul.f32 %v8582, 0.010009766
        %v8839 = vmul.f32 %v8583, 0.010009766
        %v8840 = vmul.f32 %v8584, 0.010009766
        %v8841 = vmul.f32 %v8585, 0.010009766
        %v8842 = vmul.f32 %v8586, 0.010009766
        %v8843 = vmul.f32 %v8587, 0.010009766
        %v8844 = vmul.f32 %v8588, 0.010009766
        %v8845 = vmul.f32 %v8589, 0.010009766
        %v8846 = vmul.f32 %v8590, 0.010009766
        %v8847 = vmul.f32 %v8591, 0.010009766
        %v8848 = vmul.f32 %v8592, 0.010009766
        %v8849 = vmul.f32 %v8593, 0.010009766
        %v8850 = vmul.f32 %v8594, 0.010009766
        %v8851 = vmul.f32 %v8595, 0.010009766
        %v8852 = vmul.f32 %v8596, 0.010009766
        %v8853 = vmul.f32 %v8597, 0.010009766
        %v8854 = vmul.f32 %v8598, 0.010009766
        %v8855 = vmul.f32 %v8599, 0.010009766
        %v8856 = vmul.f32 %v8600, 0.010009766
        %v8857 = vmul.f32 %v8601, 0.010009766
        %v8858 = vmul.f32 %v8602, 0.010009766
        %v8859 = vmul.f32 %v8603, 0.010009766
        %v8860 = vmul.f32 %v8604, 0.010009766
        %v8861 = vmul.f32 %v8605, 0.010009766
        %v8862 = vmul.f32 %v8606, 0.010009766
        %v8863 = vmul.f32 %v8607, 0.010009766
        %v8864 = vmul.f32 %v8608, 0.010009766
        %v8865 = vmul.f32 %v8609, 0.010009766
        %v8866 = vmul.f32 %v8610, 0.010009766
        %v8867 = vmul.f32 %v8611, 0.010009766
        %v8868 = vmul.f32 %v8612, 0.010009766
        %v8869 = vmul.f32 %v8613, 0.010009766
        %v8870 = vmul.f32 %v8614, 0.010009766
        %v8871 = vmul.f32 %v8615, 0.010009766
        %v8872 = vmul.f32 %v8616, 0.010009766
        %v8873 = vmul.f32 %v8617, 0.010009766
        %v8874 = vmul.f32 %v8618, 0.010009766
        %v8875 = vmul.f32 %v8619, 0.010009766
        %v8876 = vmul.f32 %v8620, 0.010009766
        %v8877 = vmul.f32 %v8621, 0.010009766
        %v8878 = vmul.f32 %v8622, 0.010009766
        %v8879 = vmul.f32 %v8623, 0.010009766
        %v8880 = vmul.f32 %v8624, 0.010009766
        %v8881 = vmul.f32 %v8625, 0.010009766
        %v8882 = vmul.f32 %v8626, 0.010009766
        %v8883 = vmul.f32 %v8627, 0.010009766
        %v8884 = vmul.f32 %v8628, 0.010009766
        %v8885 = vmul.f32 %v8629, 0.010009766
        %v8886 = vmul.f32 %v8630, 0.010009766
        %v8887 = vmul.f32 %v8631, 0.010009766
        %v8888 = vmul.f32 %v8632, 0.010009766
        %v8889 = vmul.f32 %v8633, 0.010009766
        %v8890 = vmul.f32 %v8634, 0.010009766
        %v8891 = vmul.f32 %v8635, 0.010009766
        %v8892 = vmul.f32 %v8636, 0.010009766
        %v8893 = vmul.f32 %v8637, 0.010009766
        %v8894 = vmul.f32 %v8638, 0.010009766
        %v8895 = vmul.f32 %v8639, 0.010009766
        %v8896 = vmul.f32 %v8640, 0.010009766
        %v8897 = vmul.f32 %v8641, 0.010009766
        %v8898 = vpack.c.bf16 %v8771, %v8770
        %v8899 = vpack.c.bf16 %v8773, %v8772
        %v8900 = vpack.c.bf16 %v8775, %v8774
        %v8901 = vpack.c.bf16 %v8777, %v8776
        %v8902 = vpack.c.bf16 %v8779, %v8778
        %v8903 = vpack.c.bf16 %v8781, %v8780
        %v8904 = vpack.c.bf16 %v8783, %v8782
        %v8905 = vpack.c.bf16 %v8785, %v8784
        %v8906 = vpack.c.bf16 %v8787, %v8786
        %v8907 = vpack.c.bf16 %v8789, %v8788
        %v8908 = vpack.c.bf16 %v8791, %v8790
        %v8909 = vpack.c.bf16 %v8793, %v8792
        %v8910 = vpack.c.bf16 %v8795, %v8794
        %v8911 = vpack.c.bf16 %v8797, %v8796
        %v8912 = vpack.c.bf16 %v8799, %v8798
        %v8913 = vpack.c.bf16 %v8801, %v8800
        %v8914 = vpack.c.bf16 %v8803, %v8802
        %v8915 = vpack.c.bf16 %v8805, %v8804
        %v8916 = vpack.c.bf16 %v8807, %v8806
        %v8917 = vpack.c.bf16 %v8809, %v8808
        %v8918 = vpack.c.bf16 %v8811, %v8810
        %v8919 = vpack.c.bf16 %v8813, %v8812
        %v8920 = vpack.c.bf16 %v8815, %v8814
        %v8921 = vpack.c.bf16 %v8817, %v8816
        %v8922 = vpack.c.bf16 %v8819, %v8818
        %v8923 = vpack.c.bf16 %v8821, %v8820
        %v8924 = vpack.c.bf16 %v8823, %v8822
        %v8925 = vpack.c.bf16 %v8825, %v8824
        %v8926 = vpack.c.bf16 %v8827, %v8826
        %v8927 = vpack.c.bf16 %v8829, %v8828
        %v8928 = vpack.c.bf16 %v8831, %v8830
        %v8929 = vpack.c.bf16 %v8833, %v8832
        %v8930 = vpack.c.bf16 %v8835, %v8834
        %v8931 = vpack.c.bf16 %v8837, %v8836
        %v8932 = vpack.c.bf16 %v8839, %v8838
        %v8933 = vpack.c.bf16 %v8841, %v8840
        %v8934 = vpack.c.bf16 %v8843, %v8842
        %v8935 = vpack.c.bf16 %v8845, %v8844
        %v8936 = vpack.c.bf16 %v8847, %v8846
        %v8937 = vpack.c.bf16 %v8849, %v8848
        %v8938 = vpack.c.bf16 %v8851, %v8850
        %v8939 = vpack.c.bf16 %v8853, %v8852
        %v8940 = vpack.c.bf16 %v8855, %v8854
        %v8941 = vpack.c.bf16 %v8857, %v8856
        %v8942 = vpack.c.bf16 %v8859, %v8858
        %v8943 = vpack.c.bf16 %v8861, %v8860
        %v8944 = vpack.c.bf16 %v8863, %v8862
        %v8945 = vpack.c.bf16 %v8865, %v8864
        %v8946 = vpack.c.bf16 %v8867, %v8866
        %v8947 = vpack.c.bf16 %v8869, %v8868
        %v8948 = vpack.c.bf16 %v8871, %v8870
        %v8949 = vpack.c.bf16 %v8873, %v8872
        %v8950 = vpack.c.bf16 %v8875, %v8874
        %v8951 = vpack.c.bf16 %v8877, %v8876
        %v8952 = vpack.c.bf16 %v8879, %v8878
        %v8953 = vpack.c.bf16 %v8881, %v8880
        %v8954 = vpack.c.bf16 %v8883, %v8882
        %v8955 = vpack.c.bf16 %v8885, %v8884
        %v8956 = vpack.c.bf16 %v8887, %v8886
        %v8957 = vpack.c.bf16 %v8889, %v8888
        %v8958 = vpack.c.bf16 %v8891, %v8890
        %v8959 = vpack.c.bf16 %v8893, %v8892
        %v8960 = vpack.c.bf16 %v8895, %v8894
        %v8961 = vpack.c.bf16 %v8897, %v8896
        %vm8962 = vmpackc.low %vm8643, %vm8642
        %vm8963 = vmpackc.low %vm8645, %vm8644
        %vm8964 = vmpackc.low %vm8647, %vm8646
        %vm8965 = vmpackc.low %vm8649, %vm8648
        %vm8966 = vmpackc.low %vm8651, %vm8650
        %vm8967 = vmpackc.low %vm8653, %vm8652
        %vm8968 = vmpackc.low %vm8655, %vm8654
        %vm8969 = vmpackc.low %vm8657, %vm8656
        %vm8970 = vmpackc.low %vm8659, %vm8658
        %vm8971 = vmpackc.low %vm8661, %vm8660
        %vm8972 = vmpackc.low %vm8663, %vm8662
        %vm8973 = vmpackc.low %vm8665, %vm8664
        %vm8974 = vmpackc.low %vm8667, %vm8666
        %vm8975 = vmpackc.low %vm8669, %vm8668
        %vm8976 = vmpackc.low %vm8671, %vm8670
        %vm8977 = vmpackc.low %vm8673, %vm8672
        %vm8978 = vmpackc.low %vm8675, %vm8674
        %vm8979 = vmpackc.low %vm8677, %vm8676
        %vm8980 = vmpackc.low %vm8679, %vm8678
        %vm8981 = vmpackc.low %vm8681, %vm8680
        %vm8982 = vmpackc.low %vm8683, %vm8682
        %vm8983 = vmpackc.low %vm8685, %vm8684
        %vm8984 = vmpackc.low %vm8687, %vm8686
        %vm8985 = vmpackc.low %vm8689, %vm8688
        %vm8986 = vmpackc.low %vm8691, %vm8690
        %vm8987 = vmpackc.low %vm8693, %vm8692
        %vm8988 = vmpackc.low %vm8695, %vm8694
        %vm8989 = vmpackc.low %vm8697, %vm8696
        %vm8990 = vmpackc.low %vm8699, %vm8698
        %vm8991 = vmpackc.low %vm8701, %vm8700
        %vm8992 = vmpackc.low %vm8703, %vm8702
        %vm8993 = vmpackc.low %vm8705, %vm8704
        %vm8994 = vmpackc.low %vm8707, %vm8706
        %vm8995 = vmpackc.low %vm8709, %vm8708
        %vm8996 = vmpackc.low %vm8711, %vm8710
        %vm8997 = vmpackc.low %vm8713, %vm8712
        %vm8998 = vmpackc.low %vm8715, %vm8714
        %vm8999 = vmpackc.low %vm8717, %vm8716
        %vm9000 = vmpackc.low %vm8719, %vm8718
        %vm9001 = vmpackc.low %vm8721, %vm8720
        %vm9002 = vmpackc.low %vm8723, %vm8722
        %vm9003 = vmpackc.low %vm8725, %vm8724
        %vm9004 = vmpackc.low %vm8727, %vm8726
        %vm9005 = vmpackc.low %vm8729, %vm8728
        %vm9006 = vmpackc.low %vm8731, %vm8730
        %vm9007 = vmpackc.low %vm8733, %vm8732
        %vm9008 = vmpackc.low %vm8735, %vm8734
        %vm9009 = vmpackc.low %vm8737, %vm8736
        %vm9010 = vmpackc.low %vm8739, %vm8738
        %vm9011 = vmpackc.low %vm8741, %vm8740
        %vm9012 = vmpackc.low %vm8743, %vm8742
        %vm9013 = vmpackc.low %vm8745, %vm8744
        %vm9014 = vmpackc.low %vm8747, %vm8746
        %vm9015 = vmpackc.low %vm8749, %vm8748
        %vm9016 = vmpackc.low %vm8751, %vm8750
        %vm9017 = vmpackc.low %vm8753, %vm8752
        %vm9018 = vmpackc.low %vm8755, %vm8754
        %vm9019 = vmpackc.low %vm8757, %vm8756
        %vm9020 = vmpackc.low %vm8759, %vm8758
        %vm9021 = vmpackc.low %vm8761, %vm8760
        %vm9022 = vmpackc.low %vm8763, %vm8762
        %vm9023 = vmpackc.low %vm8765, %vm8764
        %vm9024 = vmpackc.low %vm8767, %vm8766
        %vm9025 = vmpackc.low %vm8769, %vm8768
        %v9026 = vsel %vm8962, %v8450, %v8898
        %v9027 = vsel %vm8963, %v8451, %v8899
        %v9028 = vsel %vm8964, %v8452, %v8900
        %v9029 = vsel %vm8965, %v8453, %v8901
        %v9030 = vsel %vm8966, %v8454, %v8902
        %v9031 = vsel %vm8967, %v8455, %v8903
        %v9032 = vsel %vm8968, %v8456, %v8904
        %v9033 = vsel %vm8969, %v8457, %v8905
        %v9034 = vsel %vm8970, %v8458, %v8906
        %v9035 = vsel %vm8971, %v8459, %v8907
        %v9036 = vsel %vm8972, %v8460, %v8908
        %v9037 = vsel %vm8973, %v8461, %v8909
        %v9038 = vsel %vm8974, %v8462, %v8910
        %v9039 = vsel %vm8975, %v8463, %v8911
        %v9040 = vsel %vm8976, %v8464, %v8912
        %v9041 = vsel %vm8977, %v8465, %v8913
        %v9042 = vsel %vm8978, %v8466, %v8914
        %v9043 = vsel %vm8979, %v8467, %v8915
        %v9044 = vsel %vm8980, %v8468, %v8916
        %v9045 = vsel %vm8981, %v8469, %v8917
        %v9046 = vsel %vm8982, %v8470, %v8918
        %v9047 = vsel %vm8983, %v8471, %v8919
        %v9048 = vsel %vm8984, %v8472, %v8920
        %v9049 = vsel %vm8985, %v8473, %v8921
        %v9050 = vsel %vm8986, %v8474, %v8922
        %v9051 = vsel %vm8987, %v8475, %v8923
        %v9052 = vsel %vm8988, %v8476, %v8924
        %v9053 = vsel %vm8989, %v8477, %v8925
        %v9054 = vsel %vm8990, %v8478, %v8926
        %v9055 = vsel %vm8991, %v8479, %v8927
        %v9056 = vsel %vm8992, %v8480, %v8928
        %v9057 = vsel %vm8993, %v8481, %v8929
        %v9058 = vsel %vm8994, %v8482, %v8930
        %v9059 = vsel %vm8995, %v8483, %v8931
        %v9060 = vsel %vm8996, %v8484, %v8932
        %v9061 = vsel %vm8997, %v8485, %v8933
        %v9062 = vsel %vm8998, %v8486, %v8934
        %v9063 = vsel %vm8999, %v8487, %v8935
        %v9064 = vsel %vm9000, %v8488, %v8936
        %v9065 = vsel %vm9001, %v8489, %v8937
        %v9066 = vsel %vm9002, %v8490, %v8938
        %v9067 = vsel %vm9003, %v8491, %v8939
        %v9068 = vsel %vm9004, %v8492, %v8940
        %v9069 = vsel %vm9005, %v8493, %v8941
        %v9070 = vsel %vm9006, %v8494, %v8942
        %v9071 = vsel %vm9007, %v8495, %v8943
        %v9072 = vsel %vm9008, %v8496, %v8944
        %v9073 = vsel %vm9009, %v8497, %v8945
        %v9074 = vsel %vm9010, %v8498, %v8946
        %v9075 = vsel %vm9011, %v8499, %v8947
        %v9076 = vsel %vm9012, %v8500, %v8948
        %v9077 = vsel %vm9013, %v8501, %v8949
        %v9078 = vsel %vm9014, %v8502, %v8950
        %v9079 = vsel %vm9015, %v8503, %v8951
        %v9080 = vsel %vm9016, %v8504, %v8952
        %v9081 = vsel %vm9017, %v8505, %v8953
        %v9082 = vsel %vm9018, %v8506, %v8954
        %v9083 = vsel %vm9019, %v8507, %v8955
        %v9084 = vsel %vm9020, %v8508, %v8956
        %v9085 = vsel %vm9021, %v8509, %v8957
        %v9086 = vsel %vm9022, %v8510, %v8958
        %v9087 = vsel %vm9023, %v8511, %v8959
        %v9088 = vsel %vm9024, %v8512, %v8960
        %v9089 = vsel %vm9025, %v8513, %v8961
        %v9090 = vld [vmem:[%s10] sm:$0xf]
        %v9091 = vld [vmem:[%s10 + $0x4] sm:$0xf]
        %v9092 = vld [vmem:[%s10 + $0x8] sm:$0xf]
        %v9093 = vld [vmem:[%s10 + $0xc] sm:$0xf]
        %v9094 = vld [vmem:[%s10 + $0x10] sm:$0xf]
        %v9095 = vld [vmem:[%s10 + $0x14] sm:$0xf]
        %v9096 = vld [vmem:[%s10 + $0x18] sm:$0xf]
        %v9097 = vld [vmem:[%s10 + $0x1c] sm:$0xf]
        %v9098 = vld [vmem:[%s10 + $0x20] sm:$0xf]
        %v9099 = vld [vmem:[%s10 + $0x24] sm:$0xf]
        %v9100 = vld [vmem:[%s10 + $0x28] sm:$0xf]
        %v9101 = vld [vmem:[%s10 + $0x2c] sm:$0xf]
        %v9102 = vld [vmem:[%s10 + $0x30] sm:$0xf]
        %v9103 = vld [vmem:[%s10 + $0x34] sm:$0xf]
        %v9104 = vld [vmem:[%s10 + $0x38] sm:$0xf]
        %v9105 = vld [vmem:[%s10 + $0x3c] sm:$0xf]
        %v9106 = vld [vmem:[%s10 + $0x40] sm:$0xf]
        %v9107 = vld [vmem:[%s10 + $0x44] sm:$0xf]
        %v9108 = vld [vmem:[%s10 + $0x48] sm:$0xf]
        %v9109 = vld [vmem:[%s10 + $0x4c] sm:$0xf]
        %v9110 = vld [vmem:[%s10 + $0x50] sm:$0xf]
        %v9111 = vld [vmem:[%s10 + $0x54] sm:$0xf]
        %v9112 = vld [vmem:[%s10 + $0x58] sm:$0xf]
        %v9113 = vld [vmem:[%s10 + $0x5c] sm:$0xf]
        %v9114 = vld [vmem:[%s10 + $0x60] sm:$0xf]
        %v9115 = vld [vmem:[%s10 + $0x64] sm:$0xf]
        %v9116 = vld [vmem:[%s10 + $0x68] sm:$0xf]
        %v9117 = vld [vmem:[%s10 + $0x6c] sm:$0xf]
        %v9118 = vld [vmem:[%s10 + $0x70] sm:$0xf]
        %v9119 = vld [vmem:[%s10 + $0x74] sm:$0xf]
        %v9120 = vld [vmem:[%s10 + $0x78] sm:$0xf]
        %v9121 = vld [vmem:[%s10 + $0x7c] sm:$0xf]
        %v9122 = vld [vmem:[%s10 + $0x80] sm:$0xf]
        %v9123 = vld [vmem:[%s10 + $0x84] sm:$0xf]
        %v9124 = vld [vmem:[%s10 + $0x88] sm:$0xf]
        %v9125 = vld [vmem:[%s10 + $0x8c] sm:$0xf]
        %v9126 = vld [vmem:[%s10 + $0x90] sm:$0xf]
        %v9127 = vld [vmem:[%s10 + $0x94] sm:$0xf]
        %v9128 = vld [vmem:[%s10 + $0x98] sm:$0xf]
        %v9129 = vld [vmem:[%s10 + $0x9c] sm:$0xf]
        %v9130 = vld [vmem:[%s10 + $0xa0] sm:$0xf]
        %v9131 = vld [vmem:[%s10 + $0xa4] sm:$0xf]
        %v9132 = vld [vmem:[%s10 + $0xa8] sm:$0xf]
        %v9133 = vld [vmem:[%s10 + $0xac] sm:$0xf]
        %v9134 = vld [vmem:[%s10 + $0xb0] sm:$0xf]
        %v9135 = vld [vmem:[%s10 + $0xb4] sm:$0xf]
        %v9136 = vld [vmem:[%s10 + $0xb8] sm:$0xf]
        %v9137 = vld [vmem:[%s10 + $0xbc] sm:$0xf]
        %v9138 = vld [vmem:[%s10 + $0xc0] sm:$0xf]
        %v9139 = vld [vmem:[%s10 + $0xc4] sm:$0xf]
        %v9140 = vld [vmem:[%s10 + $0xc8] sm:$0xf]
        %v9141 = vld [vmem:[%s10 + $0xcc] sm:$0xf]
        %v9142 = vld [vmem:[%s10 + $0xd0] sm:$0xf]
        %v9143 = vld [vmem:[%s10 + $0xd4] sm:$0xf]
        %v9144 = vld [vmem:[%s10 + $0xd8] sm:$0xf]
        %v9145 = vld [vmem:[%s10 + $0xdc] sm:$0xf]
        %v9146 = vld [vmem:[%s10 + $0xe0] sm:$0xf]
        %v9147 = vld [vmem:[%s10 + $0xe4] sm:$0xf]
        %v9148 = vld [vmem:[%s10 + $0xe8] sm:$0xf]
        %v9149 = vld [vmem:[%s10 + $0xec] sm:$0xf]
        %v9150 = vld [vmem:[%s10 + $0xf0] sm:$0xf]
        %v9151 = vld [vmem:[%s10 + $0xf4] sm:$0xf]
        %v9152 = vld [vmem:[%s10 + $0xf8] sm:$0xf]
        %v9153 = vld [vmem:[%s10 + $0xfc] sm:$0xf]
        %v9154 = vld [vmem:[%s20] sm:$0x1]
        %v9156 = vperm.slane %v9154, 0
        %v9222 = vunpack.c.l.b16 %v9026
        %v9223 = vunpack.c.h.b16 %v9026
        %v9224 = vunpack.c.l.b16 %v9027
        %v9225 = vunpack.c.h.b16 %v9027
        %v9226 = vunpack.c.l.b16 %v9028
        %v9227 = vunpack.c.h.b16 %v9028
        %v9228 = vunpack.c.l.b16 %v9029
        %v9229 = vunpack.c.h.b16 %v9029
        %v9230 = vunpack.c.l.b16 %v9030
        %v9231 = vunpack.c.h.b16 %v9030
        %v9232 = vunpack.c.l.b16 %v9031
        %v9233 = vunpack.c.h.b16 %v9031
        %v9234 = vunpack.c.l.b16 %v9032
        %v9235 = vunpack.c.h.b16 %v9032
        %v9236 = vunpack.c.l.b16 %v9033
        %v9237 = vunpack.c.h.b16 %v9033
        %v9238 = vunpack.c.l.b16 %v9034
        %v9239 = vunpack.c.h.b16 %v9034
        %v9240 = vunpack.c.l.b16 %v9035
        %v9241 = vunpack.c.h.b16 %v9035
        %v9242 = vunpack.c.l.b16 %v9036
        %v9243 = vunpack.c.h.b16 %v9036
        %v9244 = vunpack.c.l.b16 %v9037
        %v9245 = vunpack.c.h.b16 %v9037
        %v9246 = vunpack.c.l.b16 %v9038
        %v9247 = vunpack.c.h.b16 %v9038
        %v9248 = vunpack.c.l.b16 %v9039
        %v9249 = vunpack.c.h.b16 %v9039
        %v9250 = vunpack.c.l.b16 %v9040
        %v9251 = vunpack.c.h.b16 %v9040
        %v9252 = vunpack.c.l.b16 %v9041
        %v9253 = vunpack.c.h.b16 %v9041
        %v9254 = vunpack.c.l.b16 %v9042
        %v9255 = vunpack.c.h.b16 %v9042
        %v9256 = vunpack.c.l.b16 %v9043
        %v9257 = vunpack.c.h.b16 %v9043
        %v9258 = vunpack.c.l.b16 %v9044
        %v9259 = vunpack.c.h.b16 %v9044
        %v9260 = vunpack.c.l.b16 %v9045
        %v9261 = vunpack.c.h.b16 %v9045
        %v9262 = vunpack.c.l.b16 %v9046
        %v9263 = vunpack.c.h.b16 %v9046
        %v9264 = vunpack.c.l.b16 %v9047
        %v9265 = vunpack.c.h.b16 %v9047
        %v9266 = vunpack.c.l.b16 %v9048
        %v9267 = vunpack.c.h.b16 %v9048
        %v9268 = vunpack.c.l.b16 %v9049
        %v9269 = vunpack.c.h.b16 %v9049
        %v9270 = vunpack.c.l.b16 %v9050
        %v9271 = vunpack.c.h.b16 %v9050
        %v9272 = vunpack.c.l.b16 %v9051
        %v9273 = vunpack.c.h.b16 %v9051
        %v9274 = vunpack.c.l.b16 %v9052
        %v9275 = vunpack.c.h.b16 %v9052
        %v9276 = vunpack.c.l.b16 %v9053
        %v9277 = vunpack.c.h.b16 %v9053
        %v9278 = vunpack.c.l.b16 %v9054
        %v9279 = vunpack.c.h.b16 %v9054
        %v9280 = vunpack.c.l.b16 %v9055
        %v9281 = vunpack.c.h.b16 %v9055
        %v9282 = vunpack.c.l.b16 %v9056
        %v9283 = vunpack.c.h.b16 %v9056
        %v9284 = vunpack.c.l.b16 %v9057
        %v9285 = vunpack.c.h.b16 %v9057
        %v9286 = vunpack.c.l.b16 %v9058
        %v9287 = vunpack.c.h.b16 %v9058
        %v9288 = vunpack.c.l.b16 %v9059
        %v9289 = vunpack.c.h.b16 %v9059
        %v9290 = vunpack.c.l.b16 %v9060
        %v9291 = vunpack.c.h.b16 %v9060
        %v9292 = vunpack.c.l.b16 %v9061
        %v9293 = vunpack.c.h.b16 %v9061
        %v9294 = vunpack.c.l.b16 %v9062
        %v9295 = vunpack.c.h.b16 %v9062
        %v9296 = vunpack.c.l.b16 %v9063
        %v9297 = vunpack.c.h.b16 %v9063
        %v9298 = vunpack.c.l.b16 %v9064
        %v9299 = vunpack.c.h.b16 %v9064
        %v9300 = vunpack.c.l.b16 %v9065
        %v9301 = vunpack.c.h.b16 %v9065
        %v9302 = vunpack.c.l.b16 %v9066
        %v9303 = vunpack.c.h.b16 %v9066
        %v9304 = vunpack.c.l.b16 %v9067
        %v9305 = vunpack.c.h.b16 %v9067
        %v9306 = vunpack.c.l.b16 %v9068
        %v9307 = vunpack.c.h.b16 %v9068
        %v9308 = vunpack.c.l.b16 %v9069
        %v9309 = vunpack.c.h.b16 %v9069
        %v9310 = vunpack.c.l.b16 %v9070
        %v9311 = vunpack.c.h.b16 %v9070
        %v9312 = vunpack.c.l.b16 %v9071
        %v9313 = vunpack.c.h.b16 %v9071
        %v9314 = vunpack.c.l.b16 %v9072
        %v9315 = vunpack.c.h.b16 %v9072
        %v9316 = vunpack.c.l.b16 %v9073
        %v9317 = vunpack.c.h.b16 %v9073
        %v9318 = vunpack.c.l.b16 %v9074
        %v9319 = vunpack.c.h.b16 %v9074
        %v9320 = vunpack.c.l.b16 %v9075
        %v9321 = vunpack.c.h.b16 %v9075
        %v9322 = vunpack.c.l.b16 %v9076
        %v9323 = vunpack.c.h.b16 %v9076
        %v9324 = vunpack.c.l.b16 %v9077
        %v9325 = vunpack.c.h.b16 %v9077
        %v9326 = vunpack.c.l.b16 %v9078
        %v9327 = vunpack.c.h.b16 %v9078
        %v9328 = vunpack.c.l.b16 %v9079
        %v9329 = vunpack.c.h.b16 %v9079
        %v9330 = vunpack.c.l.b16 %v9080
        %v9331 = vunpack.c.h.b16 %v9080
        %v9332 = vunpack.c.l.b16 %v9081
        %v9333 = vunpack.c.h.b16 %v9081
        %v9334 = vunpack.c.l.b16 %v9082
        %v9335 = vunpack.c.h.b16 %v9082
        %v9336 = vunpack.c.l.b16 %v9083
        %v9337 = vunpack.c.h.b16 %v9083
        %v9338 = vunpack.c.l.b16 %v9084
        %v9339 = vunpack.c.h.b16 %v9084
        %v9340 = vunpack.c.l.b16 %v9085
        %v9341 = vunpack.c.h.b16 %v9085
        %v9342 = vunpack.c.l.b16 %v9086
        %v9343 = vunpack.c.h.b16 %v9086
        %v9344 = vunpack.c.l.b16 %v9087
        %v9345 = vunpack.c.h.b16 %v9087
        %v9346 = vunpack.c.l.b16 %v9088
        %v9347 = vunpack.c.h.b16 %v9088
        %v9348 = vunpack.c.l.b16 %v9089
        %v9349 = vunpack.c.h.b16 %v9089
        %v9350 = vpack.c.b16 %v9226, %v9222
        %v9351 = vpack.c.b16 %v9227, %v9223
        %v9352 = vpack.c.b16 %v9228, %v9224
        %v9353 = vpack.c.b16 %v9229, %v9225
        %v9354 = vpack.c.b16 %v9234, %v9230
        %v9355 = vpack.c.b16 %v9235, %v9231
        %v9356 = vpack.c.b16 %v9236, %v9232
        %v9357 = vpack.c.b16 %v9237, %v9233
        %v9358 = vpack.c.b16 %v9242, %v9238
        %v9359 = vpack.c.b16 %v9243, %v9239
        %v9360 = vpack.c.b16 %v9244, %v9240
        %v9361 = vpack.c.b16 %v9245, %v9241
        %v9362 = vpack.c.b16 %v9250, %v9246
        %v9363 = vpack.c.b16 %v9251, %v9247
        %v9364 = vpack.c.b16 %v9252, %v9248
        %v9365 = vpack.c.b16 %v9253, %v9249
        %v9366 = vpack.c.b16 %v9258, %v9254
        %v9367 = vpack.c.b16 %v9259, %v9255
        %v9368 = vpack.c.b16 %v9260, %v9256
        %v9369 = vpack.c.b16 %v9261, %v9257
        %v9370 = vpack.c.b16 %v9266, %v9262
        %v9371 = vpack.c.b16 %v9267, %v9263
        %v9372 = vpack.c.b16 %v9268, %v9264
        %v9373 = vpack.c.b16 %v9269, %v9265
        %v9374 = vpack.c.b16 %v9274, %v9270
        %v9375 = vpack.c.b16 %v9275, %v9271
        %v9376 = vpack.c.b16 %v9276, %v9272
        %v9377 = vpack.c.b16 %v9277, %v9273
        %v9378 = vpack.c.b16 %v9282, %v9278
        %v9379 = vpack.c.b16 %v9283, %v9279
        %v9380 = vpack.c.b16 %v9284, %v9280
        %v9381 = vpack.c.b16 %v9285, %v9281
        %v9382 = vpack.c.b16 %v9290, %v9286
        %v9383 = vpack.c.b16 %v9291, %v9287
        %v9384 = vpack.c.b16 %v9292, %v9288
        %v9385 = vpack.c.b16 %v9293, %v9289
        %v9386 = vpack.c.b16 %v9298, %v9294
        %v9387 = vpack.c.b16 %v9299, %v9295
        %v9388 = vpack.c.b16 %v9300, %v9296
        %v9389 = vpack.c.b16 %v9301, %v9297
        %v9390 = vpack.c.b16 %v9306, %v9302
        %v9391 = vpack.c.b16 %v9307, %v9303
        %v9392 = vpack.c.b16 %v9308, %v9304
        %v9393 = vpack.c.b16 %v9309, %v9305
        %v9394 = vpack.c.b16 %v9314, %v9310
        %v9395 = vpack.c.b16 %v9315, %v9311
        %v9396 = vpack.c.b16 %v9316, %v9312
        %v9397 = vpack.c.b16 %v9317, %v9313
        %v9398 = vpack.c.b16 %v9322, %v9318
        %v9399 = vpack.c.b16 %v9323, %v9319
        %v9400 = vpack.c.b16 %v9324, %v9320
        %v9401 = vpack.c.b16 %v9325, %v9321
        %v9402 = vpack.c.b16 %v9330, %v9326
        %v9403 = vpack.c.b16 %v9331, %v9327
        %v9404 = vpack.c.b16 %v9332, %v9328
        %v9405 = vpack.c.b16 %v9333, %v9329
        %v9406 = vpack.c.b16 %v9338, %v9334
        %v9407 = vpack.c.b16 %v9339, %v9335
        %v9408 = vpack.c.b16 %v9340, %v9336
        %v9409 = vpack.c.b16 %v9341, %v9337
        %v9410 = vpack.c.b16 %v9346, %v9342
        %v9411 = vpack.c.b16 %v9347, %v9343
        %v9412 = vpack.c.b16 %v9348, %v9344
        %v9413 = vpack.c.b16 %v9349, %v9345
        %v9542 = vunpack.c.l.b16 %v9090
        %v9543 = vunpack.c.l.b16 %v9091
        %v9544 = vunpack.c.l.b16 %v9092
        %v9545 = vunpack.c.l.b16 %v9093
        %v9546 = vunpack.c.l.b16 %v9094
        %v9547 = vunpack.c.l.b16 %v9095
        %v9548 = vunpack.c.l.b16 %v9096
        %v9549 = vunpack.c.l.b16 %v9097
        %v9550 = vunpack.c.l.b16 %v9098
        %v9551 = vunpack.c.l.b16 %v9099
        %v9552 = vunpack.c.l.b16 %v9100
        %v9553 = vunpack.c.l.b16 %v9101
        %v9554 = vunpack.c.l.b16 %v9102
        %v9555 = vunpack.c.l.b16 %v9103
        %v9556 = vunpack.c.l.b16 %v9104
        %v9557 = vunpack.c.l.b16 %v9105
        %v9558 = vunpack.c.l.b16 %v9106
        %v9559 = vunpack.c.l.b16 %v9107
        %v9560 = vunpack.c.l.b16 %v9108
        %v9561 = vunpack.c.l.b16 %v9109
        %v9562 = vunpack.c.l.b16 %v9110
        %v9563 = vunpack.c.l.b16 %v9111
        %v9564 = vunpack.c.l.b16 %v9112
        %v9565 = vunpack.c.l.b16 %v9113
        %v9566 = vunpack.c.l.b16 %v9114
        %v9567 = vunpack.c.l.b16 %v9115
        %v9568 = vunpack.c.l.b16 %v9116
        %v9569 = vunpack.c.l.b16 %v9117
        %v9570 = vunpack.c.l.b16 %v9118
        %v9571 = vunpack.c.l.b16 %v9119
        %v9572 = vunpack.c.l.b16 %v9120
        %v9573 = vunpack.c.l.b16 %v9121
        %v9574 = vunpack.c.l.b16 %v9122
        %v9575 = vunpack.c.l.b16 %v9123
        %v9576 = vunpack.c.l.b16 %v9124
        %v9577 = vunpack.c.l.b16 %v9125
        %v9578 = vunpack.c.l.b16 %v9126
        %v9579 = vunpack.c.l.b16 %v9127
        %v9580 = vunpack.c.l.b16 %v9128
        %v9581 = vunpack.c.l.b16 %v9129
        %v9582 = vunpack.c.l.b16 %v9130
        %v9583 = vunpack.c.l.b16 %v9131
        %v9584 = vunpack.c.l.b16 %v9132
        %v9585 = vunpack.c.l.b16 %v9133
        %v9586 = vunpack.c.l.b16 %v9134
        %v9587 = vunpack.c.l.b16 %v9135
        %v9588 = vunpack.c.l.b16 %v9136
        %v9589 = vunpack.c.l.b16 %v9137
        %v9590 = vunpack.c.l.b16 %v9138
        %v9591 = vunpack.c.l.b16 %v9139
        %v9592 = vunpack.c.l.b16 %v9140
        %v9593 = vunpack.c.l.b16 %v9141
        %v9594 = vunpack.c.l.b16 %v9142
        %v9595 = vunpack.c.l.b16 %v9143
        %v9596 = vunpack.c.l.b16 %v9144
        %v9597 = vunpack.c.l.b16 %v9145
        %v9598 = vunpack.c.l.b16 %v9146
        %v9599 = vunpack.c.l.b16 %v9147
        %v9600 = vunpack.c.l.b16 %v9148
        %v9601 = vunpack.c.l.b16 %v9149
        %v9602 = vunpack.c.l.b16 %v9150
        %v9603 = vunpack.c.l.b16 %v9151
        %v9604 = vunpack.c.l.b16 %v9152
        %v9605 = vunpack.c.l.b16 %v9153
        %v9606 = vpack.c.b16 %v9543, %v9542
        %v9607 = vpack.c.b16 %v9545, %v9544
        %v9608 = vpack.c.b16 %v9547, %v9546
        %v9609 = vpack.c.b16 %v9549, %v9548
        %v9610 = vpack.c.b16 %v9551, %v9550
        %v9611 = vpack.c.b16 %v9553, %v9552
        %v9612 = vpack.c.b16 %v9555, %v9554
        %v9613 = vpack.c.b16 %v9557, %v9556
        %v9614 = vpack.c.b16 %v9559, %v9558
        %v9615 = vpack.c.b16 %v9561, %v9560
        %v9616 = vpack.c.b16 %v9563, %v9562
        %v9617 = vpack.c.b16 %v9565, %v9564
        %v9618 = vpack.c.b16 %v9567, %v9566
        %v9619 = vpack.c.b16 %v9569, %v9568
        %v9620 = vpack.c.b16 %v9571, %v9570
        %v9621 = vpack.c.b16 %v9573, %v9572
        %v9622 = vpack.c.b16 %v9575, %v9574
        %v9623 = vpack.c.b16 %v9577, %v9576
        %v9624 = vpack.c.b16 %v9579, %v9578
        %v9625 = vpack.c.b16 %v9581, %v9580
        %v9626 = vpack.c.b16 %v9583, %v9582
        %v9627 = vpack.c.b16 %v9585, %v9584
        %v9628 = vpack.c.b16 %v9587, %v9586
        %v9629 = vpack.c.b16 %v9589, %v9588
        %v9630 = vpack.c.b16 %v9591, %v9590
        %v9631 = vpack.c.b16 %v9593, %v9592
        %v9632 = vpack.c.b16 %v9595, %v9594
        %v9633 = vpack.c.b16 %v9597, %v9596
        %v9634 = vpack.c.b16 %v9599, %v9598
        %v9635 = vpack.c.b16 %v9601, %v9600
        %v9636 = vpack.c.b16 %v9603, %v9602
        %v9637 = vpack.c.b16 %v9605, %v9604
        %9670 = vmatpush.bf16.msra.mxu0 %v9613
        %9671 = vmatpush.bf16.msra.mxu0 %v9612
        %9672 = vmatpush.bf16.msra.mxu0 %v9611
        %9673 = vmatpush.bf16.msra.mxu0 %v9610
        %9674 = vmatpush.bf16.msra.mxu0 %v9609
        %9675 = vmatpush.bf16.msra.mxu0 %v9608
        %9676 = vmatpush.bf16.msra.mxu0 %v9607
        %9677 = vmatpush.bf16.msra.mxu0 %v9606
        %9678 = vmatmul.bf16.gmra.mxu0 %v9350
        %v9679 = vpop.f32.mrf.mxu0
        %v9680 = vadd.f32 %v9156, %v9679
        %v9681 = vpop.f32.mrf.mxu0
        %v9682 = vadd.f32 %v9156, %v9681
        %9683 = vmatmul.bf16.gmra.mxu0 %v9354
        %v9684 = vpop.f32.mrf.mxu0
        %v9685 = vadd.f32 %v9156, %v9684
        %v9686 = vpop.f32.mrf.mxu0
        %v9687 = vadd.f32 %v9156, %v9686
        %9688 = vmatmul.bf16.gmra.mxu0 %v9358
        %v9689 = vpop.f32.mrf.mxu0
        %v9690 = vadd.f32 %v9156, %v9689
        %v9691 = vpop.f32.mrf.mxu0
        %v9692 = vadd.f32 %v9156, %v9691
        %9693 = vmatmul.bf16.gmra.mxu0 %v9362
        %v9694 = vpop.f32.mrf.mxu0
        %v9695 = vadd.f32 %v9156, %v9694
        %v9696 = vpop.f32.mrf.mxu0
        %v9697 = vadd.f32 %v9156, %v9696
        %9698 = vmatmul.bf16.gmra.mxu0 %v9366
        %v9699 = vpop.f32.mrf.mxu0
        %v9700 = vadd.f32 %v9156, %v9699
        %v9701 = vpop.f32.mrf.mxu0
        %v9702 = vadd.f32 %v9156, %v9701
        %9703 = vmatmul.bf16.gmra.mxu0 %v9370
        %v9704 = vpop.f32.mrf.mxu0
        %v9705 = vadd.f32 %v9156, %v9704
        %v9706 = vpop.f32.mrf.mxu0
        %v9707 = vadd.f32 %v9156, %v9706
        %9708 = vmatmul.bf16.gmra.mxu0 %v9374
        %v9709 = vpop.f32.mrf.mxu0
        %v9710 = vadd.f32 %v9156, %v9709
        %v9711 = vpop.f32.mrf.mxu0
        %v9712 = vadd.f32 %v9156, %v9711
        %9713 = vmatmul.bf16.gmra.mxu0 %v9378
        %v9714 = vpop.f32.mrf.mxu0
        %v9715 = vadd.f32 %v9156, %v9714
        %v9716 = vpop.f32.mrf.mxu0
        %v9717 = vadd.f32 %v9156, %v9716
        %9718 = vmatmul.bf16.gmra.mxu0 %v9382
        %v9719 = vpop.f32.mrf.mxu0
        %v9720 = vadd.f32 %v9156, %v9719
        %v9721 = vpop.f32.mrf.mxu0
        %v9722 = vadd.f32 %v9156, %v9721
        %9723 = vmatmul.bf16.gmra.mxu0 %v9386
        %v9724 = vpop.f32.mrf.mxu0
        %v9725 = vadd.f32 %v9156, %v9724
        %v9726 = vpop.f32.mrf.mxu0
        %v9727 = vadd.f32 %v9156, %v9726
        %9728 = vmatmul.bf16.gmra.mxu0 %v9390
        %v9729 = vpop.f32.mrf.mxu0
        %v9730 = vadd.f32 %v9156, %v9729
        %v9731 = vpop.f32.mrf.mxu0
        %v9732 = vadd.f32 %v9156, %v9731
        %9733 = vmatmul.bf16.gmra.mxu0 %v9394
        %v9734 = vpop.f32.mrf.mxu0
        %v9735 = vadd.f32 %v9156, %v9734
        %v9736 = vpop.f32.mrf.mxu0
        %v9737 = vadd.f32 %v9156, %v9736
        %9738 = vmatmul.bf16.gmra.mxu0 %v9398
        %v9739 = vpop.f32.mrf.mxu0
        %v9740 = vadd.f32 %v9156, %v9739
        %v9741 = vpop.f32.mrf.mxu0
        %v9742 = vadd.f32 %v9156, %v9741
        %9743 = vmatmul.bf16.gmra.mxu0 %v9402
        %v9744 = vpop.f32.mrf.mxu0
        %v9745 = vadd.f32 %v9156, %v9744
        %v9746 = vpop.f32.mrf.mxu0
        %v9747 = vadd.f32 %v9156, %v9746
        %9748 = vmatmul.bf16.gmra.mxu0 %v9406
        %v9749 = vpop.f32.mrf.mxu0
        %v9750 = vadd.f32 %v9156, %v9749
        %v9751 = vpop.f32.mrf.mxu0
        %v9752 = vadd.f32 %v9156, %v9751
        %9753 = vmatmul.bf16.gmra.mxu0 %v9410
        %v9754 = vpop.f32.mrf.mxu0
        %v9755 = vadd.f32 %v9156, %v9754
        %v9756 = vpop.f32.mrf.mxu0
        %v9757 = vadd.f32 %v9156, %v9756
        %9758 = vdwg.mxu0
        %9759 = vmatpush.bf16.msra.mxu0 %v9621
        %9760 = vmatpush.bf16.msra.mxu0 %v9620
        %9761 = vmatpush.bf16.msra.mxu0 %v9619
        %9762 = vmatpush.bf16.msra.mxu0 %v9618
        %9763 = vmatpush.bf16.msra.mxu0 %v9617
        %9764 = vmatpush.bf16.msra.mxu0 %v9616
        %9765 = vmatpush.bf16.msra.mxu0 %v9615
        %9766 = vmatpush.bf16.msra.mxu0 %v9614
        %9767 = vmatmul.bf16.gmra.mxu0 %v9351
        %v9768 = vpop.f32.mrf.mxu0
        %v9769 = vadd.f32 %v9680, %v9768
        %v9770 = vpop.f32.mrf.mxu0
        %v9771 = vadd.f32 %v9682, %v9770
        %9772 = vmatmul.bf16.gmra.mxu0 %v9355
        %v9773 = vpop.f32.mrf.mxu0
        %v9774 = vadd.f32 %v9685, %v9773
        %v9775 = vpop.f32.mrf.mxu0
        %v9776 = vadd.f32 %v9687, %v9775
        %9777 = vmatmul.bf16.gmra.mxu0 %v9359
        %v9778 = vpop.f32.mrf.mxu0
        %v9779 = vadd.f32 %v9690, %v9778
        %v9780 = vpop.f32.mrf.mxu0
        %v9781 = vadd.f32 %v9692, %v9780
        %9782 = vmatmul.bf16.gmra.mxu0 %v9363
        %v9783 = vpop.f32.mrf.mxu0
        %v9784 = vadd.f32 %v9695, %v9783
        %v9785 = vpop.f32.mrf.mxu0
        %v9786 = vadd.f32 %v9697, %v9785
        %9787 = vmatmul.bf16.gmra.mxu0 %v9367
        %v9788 = vpop.f32.mrf.mxu0
        %v9789 = vadd.f32 %v9700, %v9788
        %v9790 = vpop.f32.mrf.mxu0
        %v9791 = vadd.f32 %v9702, %v9790
        %9792 = vmatmul.bf16.gmra.mxu0 %v9371
        %v9793 = vpop.f32.mrf.mxu0
        %v9794 = vadd.f32 %v9705, %v9793
        %v9795 = vpop.f32.mrf.mxu0
        %v9796 = vadd.f32 %v9707, %v9795
        %9797 = vmatmul.bf16.gmra.mxu0 %v9375
        %v9798 = vpop.f32.mrf.mxu0
        %v9799 = vadd.f32 %v9710, %v9798
        %v9800 = vpop.f32.mrf.mxu0
        %v9801 = vadd.f32 %v9712, %v9800
        %9802 = vmatmul.bf16.gmra.mxu0 %v9379
        %v9803 = vpop.f32.mrf.mxu0
        %v9804 = vadd.f32 %v9715, %v9803
        %v9805 = vpop.f32.mrf.mxu0
        %v9806 = vadd.f32 %v9717, %v9805
        %9807 = vmatmul.bf16.gmra.mxu0 %v9383
        %v9808 = vpop.f32.mrf.mxu0
        %v9809 = vadd.f32 %v9720, %v9808
        %v9810 = vpop.f32.mrf.mxu0
        %v9811 = vadd.f32 %v9722, %v9810
        %9812 = vmatmul.bf16.gmra.mxu0 %v9387
        %v9813 = vpop.f32.mrf.mxu0
        %v9814 = vadd.f32 %v9725, %v9813
        %v9815 = vpop.f32.mrf.mxu0
        %v9816 = vadd.f32 %v9727, %v9815
        %9817 = vmatmul.bf16.gmra.mxu0 %v9391
        %v9818 = vpop.f32.mrf.mxu0
        %v9819 = vadd.f32 %v9730, %v9818
        %v9820 = vpop.f32.mrf.mxu0
        %v9821 = vadd.f32 %v9732, %v9820
        %9822 = vmatmul.bf16.gmra.mxu0 %v9395
        %v9823 = vpop.f32.mrf.mxu0
        %v9824 = vadd.f32 %v9735, %v9823
        %v9825 = vpop.f32.mrf.mxu0
        %v9826 = vadd.f32 %v9737, %v9825
        %9827 = vmatmul.bf16.gmra.mxu0 %v9399
        %v9828 = vpop.f32.mrf.mxu0
        %v9829 = vadd.f32 %v9740, %v9828
        %v9830 = vpop.f32.mrf.mxu0
        %v9831 = vadd.f32 %v9742, %v9830
        %9832 = vmatmul.bf16.gmra.mxu0 %v9403
        %v9833 = vpop.f32.mrf.mxu0
        %v9834 = vadd.f32 %v9745, %v9833
        %v9835 = vpop.f32.mrf.mxu0
        %v9836 = vadd.f32 %v9747, %v9835
        %9837 = vmatmul.bf16.gmra.mxu0 %v9407
        %v9838 = vpop.f32.mrf.mxu0
        %v9839 = vadd.f32 %v9750, %v9838
        %v9840 = vpop.f32.mrf.mxu0
        %v9841 = vadd.f32 %v9752, %v9840
        %9842 = vmatmul.bf16.gmra.mxu0 %v9411
        %v9843 = vpop.f32.mrf.mxu0
        %v9844 = vadd.f32 %v9755, %v9843
        %v9845 = vpop.f32.mrf.mxu0
        %v9846 = vadd.f32 %v9757, %v9845
        %9847 = vdwg.mxu0
        %9848 = vmatpush.bf16.msra.mxu0 %v9629
        %9849 = vmatpush.bf16.msra.mxu0 %v9628
        %9850 = vmatpush.bf16.msra.mxu0 %v9627
        %9851 = vmatpush.bf16.msra.mxu0 %v9626
        %9852 = vmatpush.bf16.msra.mxu0 %v9625
        %9853 = vmatpush.bf16.msra.mxu0 %v9624
        %9854 = vmatpush.bf16.msra.mxu0 %v9623
        %9855 = vmatpush.bf16.msra.mxu0 %v9622
        %9856 = vmatmul.bf16.gmra.mxu0 %v9352
        %v9857 = vpop.f32.mrf.mxu0
        %v9858 = vadd.f32 %v9769, %v9857
        %v9859 = vpop.f32.mrf.mxu0
        %v9860 = vadd.f32 %v9771, %v9859
        %9861 = vmatmul.bf16.gmra.mxu0 %v9356
        %v9862 = vpop.f32.mrf.mxu0
        %v9863 = vadd.f32 %v9774, %v9862
        %v9864 = vpop.f32.mrf.mxu0
        %v9865 = vadd.f32 %v9776, %v9864
        %9866 = vmatmul.bf16.gmra.mxu0 %v9360
        %v9867 = vpop.f32.mrf.mxu0
        %v9868 = vadd.f32 %v9779, %v9867
        %v9869 = vpop.f32.mrf.mxu0
        %v9870 = vadd.f32 %v9781, %v9869
        %9871 = vmatmul.bf16.gmra.mxu0 %v9364
        %v9872 = vpop.f32.mrf.mxu0
        %v9873 = vadd.f32 %v9784, %v9872
        %v9874 = vpop.f32.mrf.mxu0
        %v9875 = vadd.f32 %v9786, %v9874
        %9876 = vmatmul.bf16.gmra.mxu0 %v9368
        %v9877 = vpop.f32.mrf.mxu0
        %v9878 = vadd.f32 %v9789, %v9877
        %v9879 = vpop.f32.mrf.mxu0
        %v9880 = vadd.f32 %v9791, %v9879
        %9881 = vmatmul.bf16.gmra.mxu0 %v9372
        %v9882 = vpop.f32.mrf.mxu0
        %v9883 = vadd.f32 %v9794, %v9882
        %v9884 = vpop.f32.mrf.mxu0
        %v9885 = vadd.f32 %v9796, %v9884
        %9886 = vmatmul.bf16.gmra.mxu0 %v9376
        %v9887 = vpop.f32.mrf.mxu0
        %v9888 = vadd.f32 %v9799, %v9887
        %v9889 = vpop.f32.mrf.mxu0
        %v9890 = vadd.f32 %v9801, %v9889
        %9891 = vmatmul.bf16.gmra.mxu0 %v9380
        %v9892 = vpop.f32.mrf.mxu0
        %v9893 = vadd.f32 %v9804, %v9892
        %v9894 = vpop.f32.mrf.mxu0
        %v9895 = vadd.f32 %v9806, %v9894
        %9896 = vmatmul.bf16.gmra.mxu0 %v9384
        %v9897 = vpop.f32.mrf.mxu0
        %v9898 = vadd.f32 %v9809, %v9897
        %v9899 = vpop.f32.mrf.mxu0
        %v9900 = vadd.f32 %v9811, %v9899
        %9901 = vmatmul.bf16.gmra.mxu0 %v9388
        %v9902 = vpop.f32.mrf.mxu0
        %v9903 = vadd.f32 %v9814, %v9902
        %v9904 = vpop.f32.mrf.mxu0
        %v9905 = vadd.f32 %v9816, %v9904
        %9906 = vmatmul.bf16.gmra.mxu0 %v9392
        %v9907 = vpop.f32.mrf.mxu0
        %v9908 = vadd.f32 %v9819, %v9907
        %v9909 = vpop.f32.mrf.mxu0
        %v9910 = vadd.f32 %v9821, %v9909
        %9911 = vmatmul.bf16.gmra.mxu0 %v9396
        %v9912 = vpop.f32.mrf.mxu0
        %v9913 = vadd.f32 %v9824, %v9912
        %v9914 = vpop.f32.mrf.mxu0
        %v9915 = vadd.f32 %v9826, %v9914
        %9916 = vmatmul.bf16.gmra.mxu0 %v9400
        %v9917 = vpop.f32.mrf.mxu0
        %v9918 = vadd.f32 %v9829, %v9917
        %v9919 = vpop.f32.mrf.mxu0
        %v9920 = vadd.f32 %v9831, %v9919
        %9921 = vmatmul.bf16.gmra.mxu0 %v9404
        %v9922 = vpop.f32.mrf.mxu0
        %v9923 = vadd.f32 %v9834, %v9922
        %v9924 = vpop.f32.mrf.mxu0
        %v9925 = vadd.f32 %v9836, %v9924
        %9926 = vmatmul.bf16.gmra.mxu0 %v9408
        %v9927 = vpop.f32.mrf.mxu0
        %v9928 = vadd.f32 %v9839, %v9927
        %v9929 = vpop.f32.mrf.mxu0
        %v9930 = vadd.f32 %v9841, %v9929
        %9931 = vmatmul.bf16.gmra.mxu0 %v9412
        %v9932 = vpop.f32.mrf.mxu0
        %v9933 = vadd.f32 %v9844, %v9932
        %v9934 = vpop.f32.mrf.mxu0
        %v9935 = vadd.f32 %v9846, %v9934
        %9936 = vdwg.mxu0
        %9937 = vmatpush.bf16.msra.mxu0 %v9637
        %9938 = vmatpush.bf16.msra.mxu0 %v9636
        %9939 = vmatpush.bf16.msra.mxu0 %v9635
        %9940 = vmatpush.bf16.msra.mxu0 %v9634
        %9941 = vmatpush.bf16.msra.mxu0 %v9633
        %9942 = vmatpush.bf16.msra.mxu0 %v9632
        %9943 = vmatpush.bf16.msra.mxu0 %v9631
        %9944 = vmatpush.bf16.msra.mxu0 %v9630
        %9945 = vmatmul.bf16.gmra.mxu0 %v9353
        %v9946 = vpop.f32.mrf.mxu0
        %v9947 = vadd.f32 %v9858, %v9946
        %v9948 = vpop.f32.mrf.mxu0
        %v9949 = vadd.f32 %v9860, %v9948
        %9950 = vmatmul.bf16.gmra.mxu0 %v9357
        %v9951 = vpop.f32.mrf.mxu0
        %v9952 = vadd.f32 %v9863, %v9951
        %v9953 = vpop.f32.mrf.mxu0
        %v9954 = vadd.f32 %v9865, %v9953
        %9955 = vmatmul.bf16.gmra.mxu0 %v9361
        %v9956 = vpop.f32.mrf.mxu0
        %v9957 = vadd.f32 %v9868, %v9956
        %v9958 = vpop.f32.mrf.mxu0
        %v9959 = vadd.f32 %v9870, %v9958
        %9960 = vmatmul.bf16.gmra.mxu0 %v9365
        %v9961 = vpop.f32.mrf.mxu0
        %v9962 = vadd.f32 %v9873, %v9961
        %v9963 = vpop.f32.mrf.mxu0
        %v9964 = vadd.f32 %v9875, %v9963
        %9965 = vmatmul.bf16.gmra.mxu0 %v9369
        %v9966 = vpop.f32.mrf.mxu0
        %v9967 = vadd.f32 %v9878, %v9966
        %v9968 = vpop.f32.mrf.mxu0
        %v9969 = vadd.f32 %v9880, %v9968
        %9970 = vmatmul.bf16.gmra.mxu0 %v9373
        %v9971 = vpop.f32.mrf.mxu0
        %v9972 = vadd.f32 %v9883, %v9971
        %v9973 = vpop.f32.mrf.mxu0
        %v9974 = vadd.f32 %v9885, %v9973
        %9975 = vmatmul.bf16.gmra.mxu0 %v9377
        %v9976 = vpop.f32.mrf.mxu0
        %v9977 = vadd.f32 %v9888, %v9976
        %v9978 = vpop.f32.mrf.mxu0
        %v9979 = vadd.f32 %v9890, %v9978
        %9980 = vmatmul.bf16.gmra.mxu0 %v9381
        %v9981 = vpop.f32.mrf.mxu0
        %v9982 = vadd.f32 %v9893, %v9981
        %v9983 = vpop.f32.mrf.mxu0
        %v9984 = vadd.f32 %v9895, %v9983
        %9985 = vmatmul.bf16.gmra.mxu0 %v9385
        %v9986 = vpop.f32.mrf.mxu0
        %v9987 = vadd.f32 %v9898, %v9986
        %v9988 = vpop.f32.mrf.mxu0
        %v9989 = vadd.f32 %v9900, %v9988
        %9990 = vmatmul.bf16.gmra.mxu0 %v9389
        %v9991 = vpop.f32.mrf.mxu0
        %v9992 = vadd.f32 %v9903, %v9991
        %v9993 = vpop.f32.mrf.mxu0
        %v9994 = vadd.f32 %v9905, %v9993
        %9995 = vmatmul.bf16.gmra.mxu0 %v9393
        %v9996 = vpop.f32.mrf.mxu0
        %v9997 = vadd.f32 %v9908, %v9996
        %v9998 = vpop.f32.mrf.mxu0
        %v9999 = vadd.f32 %v9910, %v9998
        %10000 = vmatmul.bf16.gmra.mxu0 %v9397
        %v10001 = vpop.f32.mrf.mxu0
        %v10002 = vadd.f32 %v9913, %v10001
        %v10003 = vpop.f32.mrf.mxu0
        %v10004 = vadd.f32 %v9915, %v10003
        %10005 = vmatmul.bf16.gmra.mxu0 %v9401
        %v10006 = vpop.f32.mrf.mxu0
        %v10007 = vadd.f32 %v9918, %v10006
        %v10008 = vpop.f32.mrf.mxu0
        %v10009 = vadd.f32 %v9920, %v10008
        %10010 = vmatmul.bf16.gmra.mxu0 %v9405
        %v10011 = vpop.f32.mrf.mxu0
        %v10012 = vadd.f32 %v9923, %v10011
        %v10013 = vpop.f32.mrf.mxu0
        %v10014 = vadd.f32 %v9925, %v10013
        %10015 = vmatmul.bf16.gmra.mxu0 %v9409
        %v10016 = vpop.f32.mrf.mxu0
        %v10017 = vadd.f32 %v9928, %v10016
        %v10018 = vpop.f32.mrf.mxu0
        %v10019 = vadd.f32 %v9930, %v10018
        %10020 = vmatmul.bf16.gmra.mxu0 %v9413
        %v10021 = vpop.f32.mrf.mxu0
        %v10022 = vadd.f32 %v9933, %v10021
        %v10023 = vpop.f32.mrf.mxu0
        %v10024 = vadd.f32 %v9935, %v10023
        %10025 = vdwg.mxu0
        %10026 = vst [vmem:[%s816] sm:$0xff] %v9947
        %10027 = vst [vmem:[%s816 + $0x8] sm:$0xff] %v9949
        %10028 = vst [vmem:[%s816 + $0x10] sm:$0xff] %v9952
        %10029 = vst [vmem:[%s816 + $0x18] sm:$0xff] %v9954
        %10030 = vst [vmem:[%s816 + $0x20] sm:$0xff] %v9957
        %10031 = vst [vmem:[%s816 + $0x28] sm:$0xff] %v9959
        %10032 = vst [vmem:[%s816 + $0x30] sm:$0xff] %v9962
        %10033 = vst [vmem:[%s816 + $0x38] sm:$0xff] %v9964
        %10034 = vst [vmem:[%s816 + $0x40] sm:$0xff] %v9967
        %10035 = vst [vmem:[%s816 + $0x48] sm:$0xff] %v9969
        %10036 = vst [vmem:[%s816 + $0x50] sm:$0xff] %v9972
        %10037 = vst [vmem:[%s816 + $0x58] sm:$0xff] %v9974
        %10038 = vst [vmem:[%s816 + $0x60] sm:$0xff] %v9977
        %10039 = vst [vmem:[%s816 + $0x68] sm:$0xff] %v9979
        %10040 = vst [vmem:[%s816 + $0x70] sm:$0xff] %v9982
        %10041 = vst [vmem:[%s816 + $0x78] sm:$0xff] %v9984
        %10042 = vst [vmem:[%s816 + $0x80] sm:$0xff] %v9987
        %10043 = vst [vmem:[%s816 + $0x88] sm:$0xff] %v9989
        %10044 = vst [vmem:[%s816 + $0x90] sm:$0xff] %v9992
        %10045 = vst [vmem:[%s816 + $0x98] sm:$0xff] %v9994
        %10046 = vst [vmem:[%s816 + $0xa0] sm:$0xff] %v9997
        %10047 = vst [vmem:[%s816 + $0xa8] sm:$0xff] %v9999
        %10048 = vst [vmem:[%s816 + $0xb0] sm:$0xff] %v10002
        %10049 = vst [vmem:[%s816 + $0xb8] sm:$0xff] %v10004
        %10050 = vst [vmem:[%s816 + $0xc0] sm:$0xff] %v10007
        %10051 = vst [vmem:[%s816 + $0xc8] sm:$0xff] %v10009
        %10052 = vst [vmem:[%s816 + $0xd0] sm:$0xff] %v10012
        %10053 = vst [vmem:[%s816 + $0xd8] sm:$0xff] %v10014
        %10054 = vst [vmem:[%s816 + $0xe0] sm:$0xff] %v10017
        %10055 = vst [vmem:[%s816 + $0xe8] sm:$0xff] %v10019
        %10056 = vst [vmem:[%s816 + $0xf0] sm:$0xff] %v10022
        %10057 = vst [vmem:[%s816 + $0xf8] sm:$0xff] %v10024
        %s10058 = smul.u32 32, %s38
        %p10059 = scmp.lt.s32.totalorder %s10058, 63
        %s10060 = scalar_select %p10059, %s10058, 63
        %s10061 = smul.addr %s10060, 8
        %s10062 = scalar_lea.vmem %s21, %s10061
        // Predicated region
        $region145: #{autoencoder_forward.1} parent=103 // pred_check
          %p10063 = pneg %p502
        $region146: #{autoencoder_forward.1} parent=103 // pred_check_branch
          %10065 = sbr.rel (%p10063) target = $region148
        $region147: #{autoencoder_forward.1} parent=103 // pred_region
          %s10066 = smul.u32 32, %s38
        $region148: #{autoencoder_forward.1} parent=103 // pred_fallthru
          _
      $region104: #{autoencoder_forward.1} parent=5 // pred_fallthru
        _
      %p10067 = scmp.le.s32.totalorder 2, %s33
      // Predicated region
      $region149: #{autoencoder_forward.1} parent=5 // pred_check
        %p10068 = pneg %p10067
      $region150: #{autoencoder_forward.1} parent=5 // pred_check_branch
        %10070 = sbr.rel (%p10068) target = $region152
      $region151: #{autoencoder_forward.1} parent=5 // pred_region
        %s10071 = ssub.s32 %s33, 2
        // Predicated region
        $region153: #{autoencoder_forward.1} parent=151 // pred_check
          %p10072 = pneg %p508
        $region154: #{autoencoder_forward.1} parent=151 // pred_check_branch
          %10074 = sbr.rel (%p10072) target = $region156
        $region155: #{autoencoder_forward.1} parent=151 // pred_region
          %s10075 = smul.u32 32, %s39
          %p10076 = scmp.lt.s32.totalorder %s10075, 63
          %s10077 = scalar_select %p10076, %s10075, 63
          %s10078 = smul.addr %s10077, 8
          %s10079 = scalar_lea.vmem %s21, %s10078
        $region156: #{autoencoder_forward.1} parent=151 // pred_fallthru
          _
      $region152: #{autoencoder_forward.1} parent=5 // pred_fallthru
        _
    $region6: #{autoencoder_forward.1} parent=1 // loop_footer
      %s37 = sadd.s32 1, %s33
    $region7: #{autoencoder_forward.1} parent=1 // loop_footer_branch
      %32 = sbr.rel target = $region3
    $region8: #{autoencoder_forward.1} parent=1 // loop_exit
      _
    %10080 = vsyncpa [#allocation3], 1
    %s10081 = scalar_lea.sflag [#allocation3], 1
    %10082 = vsyncpa %s10081, 1
    %10083 = vsyncpa [#allocation5], 1
    %10084 = vsyncpa [#allocation8], 1
    %10085 = vsyncpa [#allocation11], 1
    %10086 = vsyncpa [#allocation14], 1
    %10087 = vsyncpa [#allocation17], 1

</llo_original>
